<compile_context>
chip_gen: v5e
topology: v5e:2x2
jax: 0.10.0
libtpu: 0.0.40
codegen_flags: <defaults>
</compile_context>

<pallas_src>
import functools

import jax
import jax.numpy as jnp
from jax import lax
from jax.experimental import pallas as pl
from jax.experimental.pallas import tpu as pltpu


def _cab_kernel(x_ref, b1_ref, b2_ref, wd_ref, wu_ref, out_ref, pad_ref, res_ref,
                *, H, W, C, K, Nb):
    """One grid step processes Nb images, lane-dense (rows, W*C).

    x_ref   : (Nb, H, W*C)       f32 input images
    b1_ref  : (K, W*C, W*C)      conv1 banded weights, bf16
    b2_ref  : (K, W*C, W*C)      conv2 banded weights, bf16
    wd_ref  : (W*C, C//r)        CA squeeze weight, W-expanded, incl. 1/(H*W), f32
    wu_ref  : (C//r, W*C)        CA excite weight, W-tiled, f32
    out_ref : (Nb, H, W*C)
    pad_ref : (Nb*(H+2)+2, W*C)  bf16 scratch: H-padded activation slabs
    res_ref : (Nb*(H+2)+2, W*C)  f32 scratch: conv accumulator (same row index)
    """
    WC = W * C
    S = H + 2                # rows per image slot in the padded scratch
    R = Nb * S + 2           # +1 extra row top & bottom so a conv-result row
                             # shares the index of its padded-input row
    M = Nb * S               # rows of each fused matmul (= R - 2)

    zrow = jnp.zeros((1, WC), jnp.bfloat16)

    def zero_halos():
        for b in range(Nb):
            base = 1 + b * S
            pad_ref[base:base + 1, :] = zrow                 # top halo
            pad_ref[base + H + 1:base + H + 2, :] = zrow     # bottom halo

    def banded_conv(w_ref):
        # res[r] = sum_dh pad[r - 1 + dh] @ w[dh]   for r in [1, R-1)
        # Accumulate directly into VMEM so live f32 vreg pressure stays low.
        res_ref[1:R - 1, :] = jnp.dot(pad_ref[0:M, :], w_ref[0],
                                      preferred_element_type=jnp.float32)
        for dh in range(1, K):
            res_ref[1:R - 1, :] += jnp.dot(pad_ref[dh:dh + M, :], w_ref[dh],
                                           preferred_element_type=jnp.float32)

    # ---- stage x into the bf16 padded scratch (single cast per image) ------
    pad_ref[0:1, :] = zrow
    pad_ref[R - 1:R, :] = zrow
    for b in range(Nb):
        base = 1 + b * S
        pad_ref[base + 1:base + H + 1, :] = x_ref[b].astype(jnp.bfloat16)
    zero_halos()

    # ---- conv1 (3x3, SAME, no bias) + ReLU, written back as bf16 -----------
    banded_conv(b1_ref)
    # One bulk lane-dense ReLU+cast copy; halo rows receive relu(garbage) from
    # the fused matmul's discarded rows and are re-zeroed right after.
    pad_ref[1:R - 1, :] = jnp.maximum(res_ref[1:R - 1, :],
                                      0.0).astype(jnp.bfloat16)
    zero_halos()

    # ---- conv2 --------------------------------------------------------------
    banded_conv(b2_ref)

    # ---- CALayer: GAP -> 1x1 -> ReLU -> 1x1 -> sigmoid, batched over Nb ----
    # Row h of image b's conv2 output lives at res_ref[2 + b*S + h].
    gap = jnp.concatenate(
        [jnp.sum(res_ref[2 + b * S: 2 + b * S + H, :], axis=0, keepdims=True)
         for b in range(Nb)], axis=0)                                 # (Nb, WC)
    s = jnp.maximum(jnp.dot(gap, wd_ref[...],
                            preferred_element_type=jnp.float32), 0.0)  # (Nb, C/r)
    scale = jax.nn.sigmoid(jnp.dot(s, wu_ref[...],
                                   preferred_element_type=jnp.float32))  # (Nb, WC)

    # ---- scale + residual add + store (all lane-dense, f32) ----------------
    for b in range(Nb):
        r0 = 2 + b * S
        out_ref[b] = (res_ref[r0:r0 + H, :] * scale[b:b + 1, :]
                      + x_ref[b]).astype(out_ref.dtype)


def _banded_conv_weights(w_hwio, width):
    """Fold the dw taps and SAME zero padding along W into a banded matrix.

    w_hwio: (K, K, Cin, Cout).  Returns B of shape (K, width*Cin, width*Cout)
    with  B[dh, wi*Cin + ci, wo*Cout + co] = w_hwio[dh, wi - wo + K//2, ci, co]
    when that tap index is in [0, K) and 0 otherwise, so a SAME conv becomes
        out[h, :] = sum_dh  x_padH[h + dh, :] @ B[dh]
    with rows flattened to width*C (lane-dense).
    """
    K, _, Cin, Cout = w_hwio.shape
    p = K // 2
    wi = jnp.arange(width)[:, None]                      # input column
    wo = jnp.arange(width)[None, :]                      # output column
    dw = wi - wo + p                                     # (W, W) tap index
    valid = ((dw >= 0) & (dw < K)).astype(w_hwio.dtype)
    taps = w_hwio[:, jnp.clip(dw, 0, K - 1)]             # (K, W, W, Cin, Cout)
    taps = taps * valid[None, :, :, None, None]
    taps = jnp.transpose(taps, (0, 1, 3, 2, 4))          # (K, W, Cin, W, Cout)
    return taps.reshape(K, width * Cin, width * Cout)


def cab_pallas(x_nhwc, w1, w2, wd, wu, *, kernel_size=3, batch_block=None):
    """x_nhwc: (N, H, W, C) float32; w1/w2 HWIO; wd (C, C/r); wu (C/r, C)."""
    N, H, W, C = x_nhwc.shape
    K = kernel_size
    WC = W * C
    Cr = wd.shape[1]
    assert WC % 128 == 0, "W*C should be a multiple of 128 for lane-dense tiles"

    if batch_block is None:
        # Large enough to amortize per-step overhead and feed the MXU a big M,
        # small enough to keep >=2 grid steps (both v7x TensorCores busy).
        divisors = [d for d in range(1, min(N, 8) + 1) if N % d == 0]
        two_step = [d for d in divisors if N // d >= 2]
        Nb = max(two_step) if two_step else max(divisors)
    else:
        Nb = batch_block
    assert N % Nb == 0, "batch must be divisible by batch_block"

    S = H + 2
    R = Nb * S + 2

    # Lane-dense view of the activations (free reshape: last dims contiguous).
    x_flat = x_nhwc.reshape(N, H, WC)

    # Banded conv weights (tap + SAME W-padding folded in), bf16 for the MXU;
    # constant index maps => DMA'd once.
    b1 = _banded_conv_weights(w1, W).astype(jnp.bfloat16)
    b2 = _banded_conv_weights(w2, W).astype(jnp.bfloat16)

    # CA 1x1 weights pre-expanded along W so the kernel needs no reshape/tile:
    #   gap_row (1, WC) @ wd_rep == mean_{H,W}(res) @ wd       (incl. 1/(H*W))
    #   s (1, C/r) @ wu_rep      == lane-dense (1, WC) scale   (W-tiled)
    inv_hw = 1.0 / float(H * W)
    wd_rep = (jnp.tile(wd, (W, 1)) * inv_hw).astype(jnp.float32)   # (WC, C/r)
    wu_rep = jnp.tile(wu, (1, W)).astype(jnp.float32)              # (C/r, WC)

    kernel = functools.partial(_cab_kernel, H=H, W=W, C=C, K=K, Nb=Nb)

    # Explicit VMEM budget: single-buffered weights + double-buffered act I/O
    # + the two scratch slabs, with headroom; capped to fit every generation's
    # scoped VMEM (v7x has 64 MiB physical / 32 MiB scoped default).
    est = (2 * K * WC * WC * 2                     # b1 + b2 (bf16)
           + WC * max(Cr, 128) * 4 + 8 * WC * 4    # wd_rep / wu_rep (padded)
           + 2 * 2 * Nb * H * WC * 4               # x / out blocks, 2 buffers
           + R * WC * (2 + 4))                     # pad (bf16) + res (f32)
    vmem_limit = int(min(32 * 1024 * 1024, max(16 * 1024 * 1024, 2 * est)))

    def build(weights_pipeline_mode):
        def wspec(shape):
            index_map = (lambda n: (0, 0)) if len(shape) == 2 \
                else (lambda n: (0, 0, 0))
            if weights_pipeline_mode is None:
                return pl.BlockSpec(shape, index_map)
            return pl.BlockSpec(shape, index_map,
                                pipeline_mode=weights_pipeline_mode)

        return pl.pallas_call(
            kernel,
            out_shape=jax.ShapeDtypeStruct((N, H, WC), x_nhwc.dtype),
            grid_spec=pltpu.PrefetchScalarGridSpec(
                num_scalar_prefetch=0,
                grid=(N // Nb,),
                in_specs=[
                    pl.BlockSpec((Nb, H, WC), lambda n: (n, 0, 0)),
                    wspec((K, WC, WC)),
                    wspec((K, WC, WC)),
                    wspec((WC, Cr)),
                    wspec((Cr, WC)),
                ],
                out_specs=pl.BlockSpec((Nb, H, WC), lambda n: (n, 0, 0)),
                scratch_shapes=[
                    pltpu.VMEM((R, WC), jnp.bfloat16),   # padded activations
                    pltpu.VMEM((R, WC), jnp.float32),    # conv accumulator
                ],
            ),
            compiler_params=pltpu.CompilerParams(
                dimension_semantics=("parallel",),
                vmem_limit_bytes=vmem_limit),
        )

    # Constant-index weights only need one VMEM buffer; fall back to the
    # default double-buffered pipeline if this jax build rejects Buffered(1).
    out_flat = None
    err = None
    for mode_factory in (lambda: pl.Buffered(1), lambda: None):
        try:
            out_flat = build(mode_factory())(x_flat, b1, b2, wd_rep, wu_rep)
            break
        except Exception as e:   # noqa: BLE001 - deliberate graceful fallback
            err = e
    if out_flat is None:
        raise err

    return out_flat.reshape(N, H, W, C)


def cab_reference(x_nhwc, w1, w2, wd, wu):
    """Pure-JAX reference of the same forward pass (NHWC / HWIO), f32."""
    dn = ("NHWC", "HWIO", "NHWC")
    y = lax.conv_general_dilated(x_nhwc, w1, (1, 1), "SAME",
                                 dimension_numbers=dn)
    y = jnp.maximum(y, 0.0)
    y = lax.conv_general_dilated(y, w2, (1, 1), "SAME",
                                 dimension_numbers=dn)
    m = jnp.mean(y, axis=(1, 2), keepdims=True)          # (N,1,1,C)
    s = jnp.maximum(jnp.einsum("nijc,cd->nijd", m, wd), 0.0)
    s = jax.nn.sigmoid(jnp.einsum("nijd,dc->nijc", s, wu))
    return y * s + x_nhwc


if __name__ == "__main__":
    # Small shapes consistent with CAB(n_feat, kernel_size=3, reduction, ...).
    # N=8 so batch blocking (Nb=4, 2 grid steps) is exercised.
    N, H, W = 8, 16, 16
    n_feat, kernel_size, reduction = 16, 3, 4

    key = jax.random.PRNGKey(0)
    kx, k1, k2, kd, ku = jax.random.split(key, 5)

    x = jax.random.normal(kx, (N, H, W, n_feat), dtype=jnp.float32)
    # Deterministic synthetic weights (HWIO for 3x3; (Cin, Cout) for 1x1).
    w1 = 0.1 * jax.random.normal(k1, (kernel_size, kernel_size, n_feat, n_feat),
                                 dtype=jnp.float32)
    w2 = 0.1 * jax.random.normal(k2, (kernel_size, kernel_size, n_feat, n_feat),
                                 dtype=jnp.float32)
    wd = 0.1 * jax.random.normal(kd, (n_feat, n_feat // reduction),
                                 dtype=jnp.float32)
    wu = 0.1 * jax.random.normal(ku, (n_feat // reduction, n_feat),
                                 dtype=jnp.float32)

    out = cab_pallas(x, w1, w2, wd, wu, kernel_size=kernel_size)
    out = jax.block_until_ready(out)

    ref = jax.block_until_ready(cab_reference(x, w1, w2, wd, wu))
    assert out.shape == (N, H, W, n_feat)
    # Tolerance absorbs the bf16 matmul operands (accumulation is f32).
    assert jnp.allclose(out, ref, rtol=2e-2, atol=3e-2), (
        float(jnp.max(jnp.abs(out - ref))))

    print("KERNEL_OK")
</pallas_src>

<mosaic_0001>
module attributes {stable_mosaic.version = 11 : i64} {
  func.func @_cab_kernel(%arg0: i32, %arg1: memref<4x16x256xf32, #tpu.memory_space<vmem>>, %arg2: memref<3x256x256xbf16, #tpu.memory_space<vmem>>, %arg3: memref<3x256x256xbf16, #tpu.memory_space<vmem>>, %arg4: memref<256x4xf32, #tpu.memory_space<vmem>>, %arg5: memref<4x256xf32, #tpu.memory_space<vmem>>, %arg6: memref<4x16x256xf32, #tpu.memory_space<vmem>>, %arg7: memref<74x256xbf16, #tpu.memory_space<vmem>>, %arg8: memref<74x256xf32, #tpu.memory_space<vmem>>) attributes {dimension_semantics = [#tpu.dimension_semantics<parallel>], iteration_bounds = array<i64: 2>, scalar_prefetch = 0 : i64, scratch_operands = 2 : i64, tpu.core_type = #tpu.core_type<tc>, window_params = [{transform_indices = @transform_0, window_bounds = array<i64: 4, 16, 256>}, {pipeline_mode = #tpu.pipeline_mode<synchronous>, transform_indices = @transform_1, window_bounds = array<i64: 3, 256, 256>}, {pipeline_mode = #tpu.pipeline_mode<synchronous>, transform_indices = @transform_2, window_bounds = array<i64: 3, 256, 256>}, {pipeline_mode = #tpu.pipeline_mode<synchronous>, transform_indices = @transform_3, window_bounds = array<i64: 256, 4>}, {pipeline_mode = #tpu.pipeline_mode<synchronous>, transform_indices = @transform_4, window_bounds = array<i64: 4, 256>}, {transform_indices = @transform_5, window_bounds = array<i64: 4, 16, 256>}]} {
    %cst = arith.constant 0.000000e+00 : bf16
    %0 = vector.broadcast %cst : bf16 to vector<1x256xbf16>
    %c0 = arith.constant 0 : index
    %c0_0 = arith.constant 0 : index
    %1 = vector.load %arg7[%c0, %c0_0] : memref<74x256xbf16, #tpu.memory_space<vmem>>, vector<1x256xbf16>
    tpu.vector_store %arg7[%c0, %c0_0], %0 {strides = array<i32>} : memref<74x256xbf16, #tpu.memory_space<vmem>>, vector<1x256xbf16>,
    %c73 = arith.constant 73 : index
    %c0_1 = arith.constant 0 : index
    %2 = vector.load %arg7[%c73, %c0_1] : memref<74x256xbf16, #tpu.memory_space<vmem>>, vector<1x256xbf16>
    tpu.vector_store %arg7[%c73, %c0_1], %0 {strides = array<i32>} : memref<74x256xbf16, #tpu.memory_space<vmem>>, vector<1x256xbf16>,
    %c0_2 = arith.constant 0 : index
    %c0_3 = arith.constant 0 : index
    %c0_4 = arith.constant 0 : index
    %3 = vector.load %arg1[%c0_2, %c0_3, %c0_4] : memref<4x16x256xf32, #tpu.memory_space<vmem>>, vector<1x16x256xf32>
    %4 = vector.shape_cast %3 : vector<1x16x256xf32> to vector<16x256xf32>
    %5 = arith.truncf %4 : vector<16x256xf32> to vector<16x256xbf16>
    %c2 = arith.constant 2 : index
    %c0_5 = arith.constant 0 : index
    %6 = vector.load %arg7[%c2, %c0_5] : memref<74x256xbf16, #tpu.memory_space<vmem>>, vector<16x256xbf16>
    tpu.vector_store %arg7[%c2, %c0_5], %5 {strides = array<i32>} : memref<74x256xbf16, #tpu.memory_space<vmem>>, vector<16x256xbf16>,
    %c1 = arith.constant 1 : index
    %c0_6 = arith.constant 0 : index
    %c0_7 = arith.constant 0 : index
    %7 = vector.load %arg1[%c1, %c0_6, %c0_7] : memref<4x16x256xf32, #tpu.memory_space<vmem>>, vector<1x16x256xf32>
    %8 = vector.shape_cast %7 : vector<1x16x256xf32> to vector<16x256xf32>
    %9 = arith.truncf %8 : vector<16x256xf32> to vector<16x256xbf16>
    %c20 = arith.constant 20 : index
    %c0_8 = arith.constant 0 : index
    %10 = vector.load %arg7[%c20, %c0_8] : memref<74x256xbf16, #tpu.memory_space<vmem>>, vector<16x256xbf16>
    tpu.vector_store %arg7[%c20, %c0_8], %9 {strides = array<i32>} : memref<74x256xbf16, #tpu.memory_space<vmem>>, vector<16x256xbf16>,
    %c2_9 = arith.constant 2 : index
    %c0_10 = arith.constant 0 : index
    %c0_11 = arith.constant 0 : index
    %11 = vector.load %arg1[%c2_9, %c0_10, %c0_11] : memref<4x16x256xf32, #tpu.memory_space<vmem>>, vector<1x16x256xf32>
    %12 = vector.shape_cast %11 : vector<1x16x256xf32> to vector<16x256xf32>
    %13 = arith.truncf %12 : vector<16x256xf32> to vector<16x256xbf16>
    %c38 = arith.constant 38 : index
    %c0_12 = arith.constant 0 : index
    %14 = vector.load %arg7[%c38, %c0_12] : memref<74x256xbf16, #tpu.memory_space<vmem>>, vector<16x256xbf16>
    tpu.vector_store %arg7[%c38, %c0_12], %13 {strides = array<i32>} : memref<74x256xbf16, #tpu.memory_space<vmem>>, vector<16x256xbf16>,
    %c3 = arith.constant 3 : index
    %c0_13 = arith.constant 0 : index
    %c0_14 = arith.constant 0 : index
    %15 = vector.load %arg1[%c3, %c0_13, %c0_14] : memref<4x16x256xf32, #tpu.memory_space<vmem>>, vector<1x16x256xf32>
    %16 = vector.shape_cast %15 : vector<1x16x256xf32> to vector<16x256xf32>
    %17 = arith.truncf %16 : vector<16x256xf32> to vector<16x256xbf16>
    %c56 = arith.constant 56 : index
    %c0_15 = arith.constant 0 : index
    %18 = vector.load %arg7[%c56, %c0_15] : memref<74x256xbf16, #tpu.memory_space<vmem>>, vector<16x256xbf16>
    tpu.vector_store %arg7[%c56, %c0_15], %17 {strides = array<i32>} : memref<74x256xbf16, #tpu.memory_space<vmem>>, vector<16x256xbf16>,
    %c1_16 = arith.constant 1 : index
    %c0_17 = arith.constant 0 : index
    %19 = vector.load %arg7[%c1_16, %c0_17] : memref<74x256xbf16, #tpu.memory_space<vmem>>, vector<1x256xbf16>
    tpu.vector_store %arg7[%c1_16, %c0_17], %0 {strides = array<i32>} : memref<74x256xbf16, #tpu.memory_space<vmem>>, vector<1x256xbf16>,
    %c18 = arith.constant 18 : index
    %c0_18 = arith.constant 0 : index
    %20 = vector.load %arg7[%c18, %c0_18] : memref<74x256xbf16, #tpu.memory_space<vmem>>, vector<1x256xbf16>
    tpu.vector_store %arg7[%c18, %c0_18], %0 {strides = array<i32>} : memref<74x256xbf16, #tpu.memory_space<vmem>>, vector<1x256xbf16>,
    %c19 = arith.constant 19 : index
    %c0_19 = arith.constant 0 : index
    %21 = vector.load %arg7[%c19, %c0_19] : memref<74x256xbf16, #tpu.memory_space<vmem>>, vector<1x256xbf16>
    tpu.vector_store %arg7[%c19, %c0_19], %0 {strides = array<i32>} : memref<74x256xbf16, #tpu.memory_space<vmem>>, vector<1x256xbf16>,
    %c36 = arith.constant 36 : index
    %c0_20 = arith.constant 0 : index
    %22 = vector.load %arg7[%c36, %c0_20] : memref<74x256xbf16, #tpu.memory_space<vmem>>, vector<1x256xbf16>
    tpu.vector_store %arg7[%c36, %c0_20], %0 {strides = array<i32>} : memref<74x256xbf16, #tpu.memory_space<vmem>>, vector<1x256xbf16>,
    %c37 = arith.constant 37 : index
    %c0_21 = arith.constant 0 : index
    %23 = vector.load %arg7[%c37, %c0_21] : memref<74x256xbf16, #tpu.memory_space<vmem>>, vector<1x256xbf16>
    tpu.vector_store %arg7[%c37, %c0_21], %0 {strides = array<i32>} : memref<74x256xbf16, #tpu.memory_space<vmem>>, vector<1x256xbf16>,
    %c54 = arith.constant 54 : index
    %c0_22 = arith.constant 0 : index
    %24 = vector.load %arg7[%c54, %c0_22] : memref<74x256xbf16, #tpu.memory_space<vmem>>, vector<1x256xbf16>
    tpu.vector_store %arg7[%c54, %c0_22], %0 {strides = array<i32>} : memref<74x256xbf16, #tpu.memory_space<vmem>>, vector<1x256xbf16>,
    %c55 = arith.constant 55 : index
    %c0_23 = arith.constant 0 : index
    %25 = vector.load %arg7[%c55, %c0_23] : memref<74x256xbf16, #tpu.memory_space<vmem>>, vector<1x256xbf16>
    tpu.vector_store %arg7[%c55, %c0_23], %0 {strides = array<i32>} : memref<74x256xbf16, #tpu.memory_space<vmem>>, vector<1x256xbf16>,
    %c72 = arith.constant 72 : index
    %c0_24 = arith.constant 0 : index
    %26 = vector.load %arg7[%c72, %c0_24] : memref<74x256xbf16, #tpu.memory_space<vmem>>, vector<1x256xbf16>
    tpu.vector_store %arg7[%c72, %c0_24], %0 {strides = array<i32>} : memref<74x256xbf16, #tpu.memory_space<vmem>>, vector<1x256xbf16>,
    %c0_25 = arith.constant 0 : index
    %c0_26 = arith.constant 0 : index
    %27 = vector.load %arg7[%c0_25, %c0_26] : memref<74x256xbf16, #tpu.memory_space<vmem>>, vector<72x256xbf16>
    %c0_27 = arith.constant 0 : index
    %c0_28 = arith.constant 0 : index
    %c0_29 = arith.constant 0 : index
    %28 = vector.load %arg2[%c0_27, %c0_28, %c0_29] : memref<3x256x256xbf16, #tpu.memory_space<vmem>>, vector<1x256x256xbf16>
    %29 = vector.shape_cast %28 : vector<1x256x256xbf16> to vector<256x256xbf16>
    %cst_30 = arith.constant dense<0.000000e+00> : vector<72x256xf32>
    %30 = tpu.matmul %27, %29, %cst_30 {dimension_numbers = #tpu.dot_dimension_numbers<[1], [0], [0], [1], [0, 0, 1, 1], [], []>} : vector<72x256xbf16>, vector<256x256xbf16>, vector<72x256xf32> -> vector<72x256xf32>
    %c1_31 = arith.constant 1 : index
    %c0_32 = arith.constant 0 : index
    %31 = vector.load %arg8[%c1_31, %c0_32] : memref<74x256xf32, #tpu.memory_space<vmem>>, vector<72x256xf32>
    tpu.vector_store %arg8[%c1_31, %c0_32], %30 {strides = array<i32>} : memref<74x256xf32, #tpu.memory_space<vmem>>, vector<72x256xf32>,
    %c1_33 = arith.constant 1 : index
    %c0_34 = arith.constant 0 : index
    %32 = vector.load %arg8[%c1_33, %c0_34] : memref<74x256xf32, #tpu.memory_space<vmem>>, vector<72x256xf32>
    %c1_35 = arith.constant 1 : index
    %c0_36 = arith.constant 0 : index
    %33 = vector.load %arg7[%c1_35, %c0_36] : memref<74x256xbf16, #tpu.memory_space<vmem>>, vector<72x256xbf16>
    %c1_37 = arith.constant 1 : index
    %c0_38 = arith.constant 0 : index
    %c0_39 = arith.constant 0 : index
    %34 = vector.load %arg2[%c1_37, %c0_38, %c0_39] : memref<3x256x256xbf16, #tpu.memory_space<vmem>>, vector<1x256x256xbf16>
    %35 = vector.shape_cast %34 : vector<1x256x256xbf16> to vector<256x256xbf16>
    %cst_40 = arith.constant dense<0.000000e+00> : vector<72x256xf32>
    %36 = tpu.matmul %33, %35, %cst_40 {dimension_numbers = #tpu.dot_dimension_numbers<[1], [0], [0], [1], [0, 0, 1, 1], [], []>} : vector<72x256xbf16>, vector<256x256xbf16>, vector<72x256xf32> -> vector<72x256xf32>
    %37 = arith.addf %32, %36 : vector<72x256xf32>
    %c1_41 = arith.constant 1 : index
    %c0_42 = arith.constant 0 : index
    %38 = vector.load %arg8[%c1_41, %c0_42] : memref<74x256xf32, #tpu.memory_space<vmem>>, vector<72x256xf32>
    tpu.vector_store %arg8[%c1_41, %c0_42], %37 {strides = array<i32>} : memref<74x256xf32, #tpu.memory_space<vmem>>, vector<72x256xf32>,
    %c1_43 = arith.constant 1 : index
    %c0_44 = arith.constant 0 : index
    %39 = vector.load %arg8[%c1_43, %c0_44] : memref<74x256xf32, #tpu.memory_space<vmem>>, vector<72x256xf32>
    %c2_45 = arith.constant 2 : index
    %c0_46 = arith.constant 0 : index
    %40 = vector.load %arg7[%c2_45, %c0_46] : memref<74x256xbf16, #tpu.memory_space<vmem>>, vector<72x256xbf16>
    %c2_47 = arith.constant 2 : index
    %c0_48 = arith.constant 0 : index
    %c0_49 = arith.constant 0 : index
    %41 = vector.load %arg2[%c2_47, %c0_48, %c0_49] : memref<3x256x256xbf16, #tpu.memory_space<vmem>>, vector<1x256x256xbf16>
    %42 = vector.shape_cast %41 : vector<1x256x256xbf16> to vector<256x256xbf16>
    %cst_50 = arith.constant dense<0.000000e+00> : vector<72x256xf32>
    %43 = tpu.matmul %40, %42, %cst_50 {dimension_numbers = #tpu.dot_dimension_numbers<[1], [0], [0], [1], [0, 0, 1, 1], [], []>} : vector<72x256xbf16>, vector<256x256xbf16>, vector<72x256xf32> -> vector<72x256xf32>
    %44 = arith.addf %39, %43 : vector<72x256xf32>
    %c1_51 = arith.constant 1 : index
    %c0_52 = arith.constant 0 : index
    %45 = vector.load %arg8[%c1_51, %c0_52] : memref<74x256xf32, #tpu.memory_space<vmem>>, vector<72x256xf32>
    tpu.vector_store %arg8[%c1_51, %c0_52], %44 {strides = array<i32>} : memref<74x256xf32, #tpu.memory_space<vmem>>, vector<72x256xf32>,
    %c1_53 = arith.constant 1 : index
    %c0_54 = arith.constant 0 : index
    %46 = vector.load %arg8[%c1_53, %c0_54] : memref<74x256xf32, #tpu.memory_space<vmem>>, vector<72x256xf32>
    %cst_55 = arith.constant 0.000000e+00 : f32
    %47 = vector.broadcast %cst_55 : f32 to vector<72x256xf32>
    %48 = arith.maximumf %46, %47 : vector<72x256xf32>
    %49 = arith.truncf %48 : vector<72x256xf32> to vector<72x256xbf16>
    %c1_56 = arith.constant 1 : index
    %c0_57 = arith.constant 0 : index
    %50 = vector.load %arg7[%c1_56, %c0_57] : memref<74x256xbf16, #tpu.memory_space<vmem>>, vector<72x256xbf16>
    tpu.vector_store %arg7[%c1_56, %c0_57], %49 {strides = array<i32>} : memref<74x256xbf16, #tpu.memory_space<vmem>>, vector<72x256xbf16>,
    %c1_58 = arith.constant 1 : index
    %c0_59 = arith.constant 0 : index
    %51 = vector.load %arg7[%c1_58, %c0_59] : memref<74x256xbf16, #tpu.memory_space<vmem>>, vector<1x256xbf16>
    tpu.vector_store %arg7[%c1_58, %c0_59], %0 {strides = array<i32>} : memref<74x256xbf16, #tpu.memory_space<vmem>>, vector<1x256xbf16>,
    %c18_60 = arith.constant 18 : index
    %c0_61 = arith.constant 0 : index
    %52 = vector.load %arg7[%c18_60, %c0_61] : memref<74x256xbf16, #tpu.memory_space<vmem>>, vector<1x256xbf16>
    tpu.vector_store %arg7[%c18_60, %c0_61], %0 {strides = array<i32>} : memref<74x256xbf16, #tpu.memory_space<vmem>>, vector<1x256xbf16>,
    %c19_62 = arith.constant 19 : index
    %c0_63 = arith.constant 0 : index
    %53 = vector.load %arg7[%c19_62, %c0_63] : memref<74x256xbf16, #tpu.memory_space<vmem>>, vector<1x256xbf16>
    tpu.vector_store %arg7[%c19_62, %c0_63], %0 {strides = array<i32>} : memref<74x256xbf16, #tpu.memory_space<vmem>>, vector<1x256xbf16>,
    %c36_64 = arith.constant 36 : index
    %c0_65 = arith.constant 0 : index
    %54 = vector.load %arg7[%c36_64, %c0_65] : memref<74x256xbf16, #tpu.memory_space<vmem>>, vector<1x256xbf16>
    tpu.vector_store %arg7[%c36_64, %c0_65], %0 {strides = array<i32>} : memref<74x256xbf16, #tpu.memory_space<vmem>>, vector<1x256xbf16>,
    %c37_66 = arith.constant 37 : index
    %c0_67 = arith.constant 0 : index
    %55 = vector.load %arg7[%c37_66, %c0_67] : memref<74x256xbf16, #tpu.memory_space<vmem>>, vector<1x256xbf16>
    tpu.vector_store %arg7[%c37_66, %c0_67], %0 {strides = array<i32>} : memref<74x256xbf16, #tpu.memory_space<vmem>>, vector<1x256xbf16>,
    %c54_68 = arith.constant 54 : index
    %c0_69 = arith.constant 0 : index
    %56 = vector.load %arg7[%c54_68, %c0_69] : memref<74x256xbf16, #tpu.memory_space<vmem>>, vector<1x256xbf16>
    tpu.vector_store %arg7[%c54_68, %c0_69], %0 {strides = array<i32>} : memref<74x256xbf16, #tpu.memory_space<vmem>>, vector<1x256xbf16>,
    %c55_70 = arith.constant 55 : index
    %c0_71 = arith.constant 0 : index
    %57 = vector.load %arg7[%c55_70, %c0_71] : memref<74x256xbf16, #tpu.memory_space<vmem>>, vector<1x256xbf16>
    tpu.vector_store %arg7[%c55_70, %c0_71], %0 {strides = array<i32>} : memref<74x256xbf16, #tpu.memory_space<vmem>>, vector<1x256xbf16>,
    %c72_72 = arith.constant 72 : index
    %c0_73 = arith.constant 0 : index
    %58 = vector.load %arg7[%c72_72, %c0_73] : memref<74x256xbf16, #tpu.memory_space<vmem>>, vector<1x256xbf16>
    tpu.vector_store %arg7[%c72_72, %c0_73], %0 {strides = array<i32>} : memref<74x256xbf16, #tpu.memory_space<vmem>>, vector<1x256xbf16>,
    %c0_74 = arith.constant 0 : index
    %c0_75 = arith.constant 0 : index
    %59 = vector.load %arg7[%c0_74, %c0_75] : memref<74x256xbf16, #tpu.memory_space<vmem>>, vector<72x256xbf16>
    %c0_76 = arith.constant 0 : index
    %c0_77 = arith.constant 0 : index
    %c0_78 = arith.constant 0 : index
    %60 = vector.load %arg3[%c0_76, %c0_77, %c0_78] : memref<3x256x256xbf16, #tpu.memory_space<vmem>>, vector<1x256x256xbf16>
    %61 = vector.shape_cast %60 : vector<1x256x256xbf16> to vector<256x256xbf16>
    %cst_79 = arith.constant dense<0.000000e+00> : vector<72x256xf32>
    %62 = tpu.matmul %59, %61, %cst_79 {dimension_numbers = #tpu.dot_dimension_numbers<[1], [0], [0], [1], [0, 0, 1, 1], [], []>} : vector<72x256xbf16>, vector<256x256xbf16>, vector<72x256xf32> -> vector<72x256xf32>
    %c1_80 = arith.constant 1 : index
    %c0_81 = arith.constant 0 : index
    %63 = vector.load %arg8[%c1_80, %c0_81] : memref<74x256xf32, #tpu.memory_space<vmem>>, vector<72x256xf32>
    tpu.vector_store %arg8[%c1_80, %c0_81], %62 {strides = array<i32>} : memref<74x256xf32, #tpu.memory_space<vmem>>, vector<72x256xf32>,
    %c1_82 = arith.constant 1 : index
    %c0_83 = arith.constant 0 : index
    %64 = vector.load %arg8[%c1_82, %c0_83] : memref<74x256xf32, #tpu.memory_space<vmem>>, vector<72x256xf32>
    %c1_84 = arith.constant 1 : index
    %c0_85 = arith.constant 0 : index
    %65 = vector.load %arg7[%c1_84, %c0_85] : memref<74x256xbf16, #tpu.memory_space<vmem>>, vector<72x256xbf16>
    %c1_86 = arith.constant 1 : index
    %c0_87 = arith.constant 0 : index
    %c0_88 = arith.constant 0 : index
    %66 = vector.load %arg3[%c1_86, %c0_87, %c0_88] : memref<3x256x256xbf16, #tpu.memory_space<vmem>>, vector<1x256x256xbf16>
    %67 = vector.shape_cast %66 : vector<1x256x256xbf16> to vector<256x256xbf16>
    %cst_89 = arith.constant dense<0.000000e+00> : vector<72x256xf32>
    %68 = tpu.matmul %65, %67, %cst_89 {dimension_numbers = #tpu.dot_dimension_numbers<[1], [0], [0], [1], [0, 0, 1, 1], [], []>} : vector<72x256xbf16>, vector<256x256xbf16>, vector<72x256xf32> -> vector<72x256xf32>
    %69 = arith.addf %64, %68 : vector<72x256xf32>
    %c1_90 = arith.constant 1 : index
    %c0_91 = arith.constant 0 : index
    %70 = vector.load %arg8[%c1_90, %c0_91] : memref<74x256xf32, #tpu.memory_space<vmem>>, vector<72x256xf32>
    tpu.vector_store %arg8[%c1_90, %c0_91], %69 {strides = array<i32>} : memref<74x256xf32, #tpu.memory_space<vmem>>, vector<72x256xf32>,
    %c1_92 = arith.constant 1 : index
    %c0_93 = arith.constant 0 : index
    %71 = vector.load %arg8[%c1_92, %c0_93] : memref<74x256xf32, #tpu.memory_space<vmem>>, vector<72x256xf32>
    %c2_94 = arith.constant 2 : index
    %c0_95 = arith.constant 0 : index
    %72 = vector.load %arg7[%c2_94, %c0_95] : memref<74x256xbf16, #tpu.memory_space<vmem>>, vector<72x256xbf16>
    %c2_96 = arith.constant 2 : index
    %c0_97 = arith.constant 0 : index
    %c0_98 = arith.constant 0 : index
    %73 = vector.load %arg3[%c2_96, %c0_97, %c0_98] : memref<3x256x256xbf16, #tpu.memory_space<vmem>>, vector<1x256x256xbf16>
    %74 = vector.shape_cast %73 : vector<1x256x256xbf16> to vector<256x256xbf16>
    %cst_99 = arith.constant dense<0.000000e+00> : vector<72x256xf32>
    %75 = tpu.matmul %72, %74, %cst_99 {dimension_numbers = #tpu.dot_dimension_numbers<[1], [0], [0], [1], [0, 0, 1, 1], [], []>} : vector<72x256xbf16>, vector<256x256xbf16>, vector<72x256xf32> -> vector<72x256xf32>
    %76 = arith.addf %71, %75 : vector<72x256xf32>
    %c1_100 = arith.constant 1 : index
    %c0_101 = arith.constant 0 : index
    %77 = vector.load %arg8[%c1_100, %c0_101] : memref<74x256xf32, #tpu.memory_space<vmem>>, vector<72x256xf32>
    tpu.vector_store %arg8[%c1_100, %c0_101], %76 {strides = array<i32>} : memref<74x256xf32, #tpu.memory_space<vmem>>, vector<72x256xf32>,
    %c2_102 = arith.constant 2 : index
    %c0_103 = arith.constant 0 : index
    %78 = vector.load %arg8[%c2_102, %c0_103] : memref<74x256xf32, #tpu.memory_space<vmem>>, vector<16x256xf32>
    %cst_104 = arith.constant dense<0.000000e+00> : vector<256xf32>
    %79 = vector.multi_reduction <add>, %78, %cst_104 [0] : vector<16x256xf32> to vector<256xf32>
    %80 = vector.shape_cast %79 : vector<256xf32> to vector<1x256xf32>
    %c20_105 = arith.constant 20 : index
    %c0_106 = arith.constant 0 : index
    %81 = vector.load %arg8[%c20_105, %c0_106] : memref<74x256xf32, #tpu.memory_space<vmem>>, vector<16x256xf32>
    %cst_107 = arith.constant dense<0.000000e+00> : vector<256xf32>
    %82 = vector.multi_reduction <add>, %81, %cst_107 [0] : vector<16x256xf32> to vector<256xf32>
    %83 = vector.shape_cast %82 : vector<256xf32> to vector<1x256xf32>
    %c38_108 = arith.constant 38 : index
    %c0_109 = arith.constant 0 : index
    %84 = vector.load %arg8[%c38_108, %c0_109] : memref<74x256xf32, #tpu.memory_space<vmem>>, vector<16x256xf32>
    %cst_110 = arith.constant dense<0.000000e+00> : vector<256xf32>
    %85 = vector.multi_reduction <add>, %84, %cst_110 [0] : vector<16x256xf32> to vector<256xf32>
    %86 = vector.shape_cast %85 : vector<256xf32> to vector<1x256xf32>
    %c56_111 = arith.constant 56 : index
    %c0_112 = arith.constant 0 : index
    %87 = vector.load %arg8[%c56_111, %c0_112] : memref<74x256xf32, #tpu.memory_space<vmem>>, vector<16x256xf32>
    %cst_113 = arith.constant dense<0.000000e+00> : vector<256xf32>
    %88 = vector.multi_reduction <add>, %87, %cst_113 [0] : vector<16x256xf32> to vector<256xf32>
    %89 = vector.shape_cast %88 : vector<256xf32> to vector<1x256xf32>
    %90 = tpu.concatenate %80, %83, %86, %89 in 0 : vector<1x256xf32>, vector<1x256xf32>, vector<1x256xf32>, vector<1x256xf32> -> vector<4x256xf32>
    %c0_114 = arith.constant 0 : index
    %c0_115 = arith.constant 0 : index
    %91 = vector.load %arg4[%c0_114, %c0_115] : memref<256x4xf32, #tpu.memory_space<vmem>>, vector<256x4xf32>
    %cst_116 = arith.constant dense<0.000000e+00> : vector<4x4xf32>
    %92 = tpu.matmul %90, %91, %cst_116 {dimension_numbers = #tpu.dot_dimension_numbers<[1], [0], [0], [1], [0, 0, 1, 1], [], []>} : vector<4x256xf32>, vector<256x4xf32>, vector<4x4xf32> -> vector<4x4xf32>
    %cst_117 = arith.constant 0.000000e+00 : f32
    %93 = vector.broadcast %cst_117 : f32 to vector<4x4xf32>
    %94 = arith.maximumf %92, %93 : vector<4x4xf32>
    %c0_118 = arith.constant 0 : index
    %c0_119 = arith.constant 0 : index
    %95 = vector.load %arg5[%c0_118, %c0_119] : memref<4x256xf32, #tpu.memory_space<vmem>>, vector<4x256xf32>
    %cst_120 = arith.constant dense<0.000000e+00> : vector<4x256xf32>
    %96 = tpu.matmul %94, %95, %cst_120 {dimension_numbers = #tpu.dot_dimension_numbers<[1], [0], [0], [1], [0, 0, 1, 1], [], []>} : vector<4x4xf32>, vector<4x256xf32>, vector<4x256xf32> -> vector<4x256xf32>
    %97 = arith.negf %96 : vector<4x256xf32>
    %98 = math.exp %97 : vector<4x256xf32>
    %cst_121 = arith.constant 1.000000e+00 : f32
    %99 = vector.broadcast %cst_121 : f32 to vector<4x256xf32>
    %100 = arith.addf %99, %98 : vector<4x256xf32>
    %101 = arith.divf %99, %100 : vector<4x256xf32>
    %c2_122 = arith.constant 2 : index
    %c0_123 = arith.constant 0 : index
    %102 = vector.load %arg8[%c2_122, %c0_123] : memref<74x256xf32, #tpu.memory_space<vmem>>, vector<16x256xf32>
    %103 = vector.extract_strided_slice %101 {offsets = [0, 0], sizes = [1, 256], strides = [1, 1]} : vector<4x256xf32> to vector<1x256xf32>
    %104 = vector.broadcast %103 : vector<1x256xf32> to vector<16x256xf32>
    %105 = arith.mulf %102, %104 : vector<16x256xf32>
    %c0_124 = arith.constant 0 : index
    %c0_125 = arith.constant 0 : index
    %c0_126 = arith.constant 0 : index
    %106 = vector.load %arg1[%c0_124, %c0_125, %c0_126] : memref<4x16x256xf32, #tpu.memory_space<vmem>>, vector<1x16x256xf32>
    %107 = vector.shape_cast %106 : vector<1x16x256xf32> to vector<16x256xf32>
    %108 = arith.addf %105, %107 : vector<16x256xf32>
    %c0_127 = arith.constant 0 : index
    %c0_128 = arith.constant 0 : index
    %c0_129 = arith.constant 0 : index
    %109 = vector.load %arg6[%c0_127, %c0_128, %c0_129] : memref<4x16x256xf32, #tpu.memory_space<vmem>>, vector<1x16x256xf32>
    %110 = vector.shape_cast %109 : vector<1x16x256xf32> to vector<16x256xf32>
    %111 = vector.shape_cast %108 : vector<16x256xf32> to vector<1x16x256xf32>
    tpu.vector_store %arg6[%c0_127, %c0_128, %c0_129], %111 {strides = array<i32>} : memref<4x16x256xf32, #tpu.memory_space<vmem>>, vector<1x16x256xf32>,
    %c20_130 = arith.constant 20 : index
    %c0_131 = arith.constant 0 : index
    %112 = vector.load %arg8[%c20_130, %c0_131] : memref<74x256xf32, #tpu.memory_space<vmem>>, vector<16x256xf32>
    %113 = vector.extract_strided_slice %101 {offsets = [1, 0], sizes = [1, 256], strides = [1, 1]} : vector<4x256xf32> to vector<1x256xf32>
    %114 = vector.broadcast %113 : vector<1x256xf32> to vector<16x256xf32>
    %115 = arith.mulf %112, %114 : vector<16x256xf32>
    %c1_132 = arith.constant 1 : index
    %c0_133 = arith.constant 0 : index
    %c0_134 = arith.constant 0 : index
    %116 = vector.load %arg1[%c1_132, %c0_133, %c0_134] : memref<4x16x256xf32, #tpu.memory_space<vmem>>, vector<1x16x256xf32>
    %117 = vector.shape_cast %116 : vector<1x16x256xf32> to vector<16x256xf32>
    %118 = arith.addf %115, %117 : vector<16x256xf32>
    %c1_135 = arith.constant 1 : index
    %c0_136 = arith.constant 0 : index
    %c0_137 = arith.constant 0 : index
    %119 = vector.load %arg6[%c1_135, %c0_136, %c0_137] : memref<4x16x256xf32, #tpu.memory_space<vmem>>, vector<1x16x256xf32>
    %120 = vector.shape_cast %119 : vector<1x16x256xf32> to vector<16x256xf32>
    %121 = vector.shape_cast %118 : vector<16x256xf32> to vector<1x16x256xf32>
    tpu.vector_store %arg6[%c1_135, %c0_136, %c0_137], %121 {strides = array<i32>} : memref<4x16x256xf32, #tpu.memory_space<vmem>>, vector<1x16x256xf32>,
    %c38_138 = arith.constant 38 : index
    %c0_139 = arith.constant 0 : index
    %122 = vector.load %arg8[%c38_138, %c0_139] : memref<74x256xf32, #tpu.memory_space<vmem>>, vector<16x256xf32>
    %123 = vector.extract_strided_slice %101 {offsets = [2, 0], sizes = [1, 256], strides = [1, 1]} : vector<4x256xf32> to vector<1x256xf32>
    %124 = vector.broadcast %123 : vector<1x256xf32> to vector<16x256xf32>
    %125 = arith.mulf %122, %124 : vector<16x256xf32>
    %c2_140 = arith.constant 2 : index
    %c0_141 = arith.constant 0 : index
    %c0_142 = arith.constant 0 : index
    %126 = vector.load %arg1[%c2_140, %c0_141, %c0_142] : memref<4x16x256xf32, #tpu.memory_space<vmem>>, vector<1x16x256xf32>
    %127 = vector.shape_cast %126 : vector<1x16x256xf32> to vector<16x256xf32>
    %128 = arith.addf %125, %127 : vector<16x256xf32>
    %c2_143 = arith.constant 2 : index
    %c0_144 = arith.constant 0 : index
    %c0_145 = arith.constant 0 : index
    %129 = vector.load %arg6[%c2_143, %c0_144, %c0_145] : memref<4x16x256xf32, #tpu.memory_space<vmem>>, vector<1x16x256xf32>
    %130 = vector.shape_cast %129 : vector<1x16x256xf32> to vector<16x256xf32>
    %131 = vector.shape_cast %128 : vector<16x256xf32> to vector<1x16x256xf32>
    tpu.vector_store %arg6[%c2_143, %c0_144, %c0_145], %131 {strides = array<i32>} : memref<4x16x256xf32, #tpu.memory_space<vmem>>, vector<1x16x256xf32>,
    %c56_146 = arith.constant 56 : index
    %c0_147 = arith.constant 0 : index
    %132 = vector.load %arg8[%c56_146, %c0_147] : memref<74x256xf32, #tpu.memory_space<vmem>>, vector<16x256xf32>
    %133 = vector.extract_strided_slice %101 {offsets = [3, 0], sizes = [1, 256], strides = [1, 1]} : vector<4x256xf32> to vector<1x256xf32>
    %134 = vector.broadcast %133 : vector<1x256xf32> to vector<16x256xf32>
    %135 = arith.mulf %132, %134 : vector<16x256xf32>
    %c3_148 = arith.constant 3 : index
    %c0_149 = arith.constant 0 : index
    %c0_150 = arith.constant 0 : index
    %136 = vector.load %arg1[%c3_148, %c0_149, %c0_150] : memref<4x16x256xf32, #tpu.memory_space<vmem>>, vector<1x16x256xf32>
    %137 = vector.shape_cast %136 : vector<1x16x256xf32> to vector<16x256xf32>
    %138 = arith.addf %135, %137 : vector<16x256xf32>
    %c3_151 = arith.constant 3 : index
    %c0_152 = arith.constant 0 : index
    %c0_153 = arith.constant 0 : index
    %139 = vector.load %arg6[%c3_151, %c0_152, %c0_153] : memref<4x16x256xf32, #tpu.memory_space<vmem>>, vector<1x16x256xf32>
    %140 = vector.shape_cast %139 : vector<1x16x256xf32> to vector<16x256xf32>
    %141 = vector.shape_cast %138 : vector<16x256xf32> to vector<1x16x256xf32>
    tpu.vector_store %arg6[%c3_151, %c0_152, %c0_153], %141 {strides = array<i32>} : memref<4x16x256xf32, #tpu.memory_space<vmem>>, vector<1x16x256xf32>,
    return
  }
  func.func @transform_0(%arg0: i32) -> (i32, i32, i32) {
    %c0_i32 = arith.constant 0 : i32
    %c0_i32_0 = arith.constant 0 : i32
    %c0_i32_1 = arith.constant 0 : i32
    return %arg0, %c0_i32, %c0_i32_0 : i32, i32, i32
  }
  func.func @transform_1(%arg0: i32) -> (i32, i32, i32) {
    %c0_i32 = arith.constant 0 : i32
    %c0_i32_0 = arith.constant 0 : i32
    %c0_i32_1 = arith.constant 0 : i32
    %c0_i32_2 = arith.constant 0 : i32
    return %c0_i32, %c0_i32_0, %c0_i32_1 : i32, i32, i32
  }
  func.func @transform_2(%arg0: i32) -> (i32, i32, i32) {
    %c0_i32 = arith.constant 0 : i32
    %c0_i32_0 = arith.constant 0 : i32
    %c0_i32_1 = arith.constant 0 : i32
    %c0_i32_2 = arith.constant 0 : i32
    return %c0_i32, %c0_i32_0, %c0_i32_1 : i32, i32, i32
  }
  func.func @transform_3(%arg0: i32) -> (i32, i32) {
    %c0_i32 = arith.constant 0 : i32
    %c0_i32_0 = arith.constant 0 : i32
    %c0_i32_1 = arith.constant 0 : i32
    return %c0_i32, %c0_i32_0 : i32, i32
  }
  func.func @transform_4(%arg0: i32) -> (i32, i32) {
    %c0_i32 = arith.constant 0 : i32
    %c0_i32_0 = arith.constant 0 : i32
    %c0_i32_1 = arith.constant 0 : i32
    return %c0_i32, %c0_i32_0 : i32, i32
  }
  func.func @transform_5(%arg0: i32) -> (i32, i32, i32) {
    %c0_i32 = arith.constant 0 : i32
    %c0_i32_0 = arith.constant 0 : i32
    %c0_i32_1 = arith.constant 0 : i32
    return %arg0, %c0_i32, %c0_i32_0 : i32, i32, i32
  }
}

module attributes {stable_mosaic.version = 11 : i64} {
  func.func @_cab_kernel(%arg0: i32, %arg1: memref<4x16x256xf32, #tpu.memory_space<vmem>>, %arg2: memref<3x256x256xbf16, #tpu.memory_space<vmem>>, %arg3: memref<3x256x256xbf16, #tpu.memory_space<vmem>>, %arg4: memref<256x4xf32, #tpu.memory_space<vmem>>, %arg5: memref<4x256xf32, #tpu.memory_space<vmem>>, %arg6: memref<4x16x256xf32, #tpu.memory_space<vmem>>, %arg7: memref<74x256xbf16, #tpu.memory_space<vmem>>, %arg8: memref<74x256xf32, #tpu.memory_space<vmem>>) attributes {dimension_semantics = [#tpu.dimension_semantics<parallel>], iteration_bounds = array<i64: 2>, scalar_prefetch = 0 : i64, scratch_operands = 2 : i64, tpu.core_type = #tpu.core_type<tc>, window_params = [{transform_indices = @transform_0, window_bounds = array<i64: 4, 16, 256>}, {pipeline_mode = #tpu.pipeline_mode<synchronous>, transform_indices = @transform_1, window_bounds = array<i64: 3, 256, 256>}, {pipeline_mode = #tpu.pipeline_mode<synchronous>, transform_indices = @transform_2, window_bounds = array<i64: 3, 256, 256>}, {pipeline_mode = #tpu.pipeline_mode<synchronous>, transform_indices = @transform_3, window_bounds = array<i64: 256, 4>}, {pipeline_mode = #tpu.pipeline_mode<synchronous>, transform_indices = @transform_4, window_bounds = array<i64: 4, 256>}, {transform_indices = @transform_5, window_bounds = array<i64: 4, 16, 256>}]} {
    %cst = arith.constant 0.000000e+00 : bf16
    %0 = vector.broadcast %cst : bf16 to vector<1x256xbf16>
    %c0 = arith.constant 0 : index
    %c0_0 = arith.constant 0 : index
    %1 = vector.load %arg7[%c0, %c0_0] : memref<74x256xbf16, #tpu.memory_space<vmem>>, vector<1x256xbf16>
    tpu.vector_store %arg7[%c0, %c0_0], %0 {strides = array<i32>} : memref<74x256xbf16, #tpu.memory_space<vmem>>, vector<1x256xbf16>,
    %c73 = arith.constant 73 : index
    %c0_1 = arith.constant 0 : index
    %2 = vector.load %arg7[%c73, %c0_1] : memref<74x256xbf16, #tpu.memory_space<vmem>>, vector<1x256xbf16>
    tpu.vector_store %arg7[%c73, %c0_1], %0 {strides = array<i32>} : memref<74x256xbf16, #tpu.memory_space<vmem>>, vector<1x256xbf16>,
    %c0_2 = arith.constant 0 : index
    %c0_3 = arith.constant 0 : index
    %c0_4 = arith.constant 0 : index
    %3 = vector.load %arg1[%c0_2, %c0_3, %c0_4] : memref<4x16x256xf32, #tpu.memory_space<vmem>>, vector<1x16x256xf32>
    %4 = vector.shape_cast %3 : vector<1x16x256xf32> to vector<16x256xf32>
    %5 = arith.truncf %4 : vector<16x256xf32> to vector<16x256xbf16>
    %c2 = arith.constant 2 : index
    %c0_5 = arith.constant 0 : index
    %6 = vector.load %arg7[%c2, %c0_5] : memref<74x256xbf16, #tpu.memory_space<vmem>>, vector<16x256xbf16>
    tpu.vector_store %arg7[%c2, %c0_5], %5 {strides = array<i32>} : memref<74x256xbf16, #tpu.memory_space<vmem>>, vector<16x256xbf16>,
    %c1 = arith.constant 1 : index
    %c0_6 = arith.constant 0 : index
    %c0_7 = arith.constant 0 : index
    %7 = vector.load %arg1[%c1, %c0_6, %c0_7] : memref<4x16x256xf32, #tpu.memory_space<vmem>>, vector<1x16x256xf32>
    %8 = vector.shape_cast %7 : vector<1x16x256xf32> to vector<16x256xf32>
    %9 = arith.truncf %8 : vector<16x256xf32> to vector<16x256xbf16>
    %c20 = arith.constant 20 : index
    %c0_8 = arith.constant 0 : index
    %10 = vector.load %arg7[%c20, %c0_8] : memref<74x256xbf16, #tpu.memory_space<vmem>>, vector<16x256xbf16>
    tpu.vector_store %arg7[%c20, %c0_8], %9 {strides = array<i32>} : memref<74x256xbf16, #tpu.memory_space<vmem>>, vector<16x256xbf16>,
    %c2_9 = arith.constant 2 : index
    %c0_10 = arith.constant 0 : index
    %c0_11 = arith.constant 0 : index
    %11 = vector.load %arg1[%c2_9, %c0_10, %c0_11] : memref<4x16x256xf32, #tpu.memory_space<vmem>>, vector<1x16x256xf32>
    %12 = vector.shape_cast %11 : vector<1x16x256xf32> to vector<16x256xf32>
    %13 = arith.truncf %12 : vector<16x256xf32> to vector<16x256xbf16>
    %c38 = arith.constant 38 : index
    %c0_12 = arith.constant 0 : index
    %14 = vector.load %arg7[%c38, %c0_12] : memref<74x256xbf16, #tpu.memory_space<vmem>>, vector<16x256xbf16>
    tpu.vector_store %arg7[%c38, %c0_12], %13 {strides = array<i32>} : memref<74x256xbf16, #tpu.memory_space<vmem>>, vector<16x256xbf16>,
    %c3 = arith.constant 3 : index
    %c0_13 = arith.constant 0 : index
    %c0_14 = arith.constant 0 : index
    %15 = vector.load %arg1[%c3, %c0_13, %c0_14] : memref<4x16x256xf32, #tpu.memory_space<vmem>>, vector<1x16x256xf32>
    %16 = vector.shape_cast %15 : vector<1x16x256xf32> to vector<16x256xf32>
    %17 = arith.truncf %16 : vector<16x256xf32> to vector<16x256xbf16>
    %c56 = arith.constant 56 : index
    %c0_15 = arith.constant 0 : index
    %18 = vector.load %arg7[%c56, %c0_15] : memref<74x256xbf16, #tpu.memory_space<vmem>>, vector<16x256xbf16>
    tpu.vector_store %arg7[%c56, %c0_15], %17 {strides = array<i32>} : memref<74x256xbf16, #tpu.memory_space<vmem>>, vector<16x256xbf16>,
    %c1_16 = arith.constant 1 : index
    %c0_17 = arith.constant 0 : index
    %19 = vector.load %arg7[%c1_16, %c0_17] : memref<74x256xbf16, #tpu.memory_space<vmem>>, vector<1x256xbf16>
    tpu.vector_store %arg7[%c1_16, %c0_17], %0 {strides = array<i32>} : memref<74x256xbf16, #tpu.memory_space<vmem>>, vector<1x256xbf16>,
    %c18 = arith.constant 18 : index
    %c0_18 = arith.constant 0 : index
    %20 = vector.load %arg7[%c18, %c0_18] : memref<74x256xbf16, #tpu.memory_space<vmem>>, vector<1x256xbf16>
    tpu.vector_store %arg7[%c18, %c0_18], %0 {strides = array<i32>} : memref<74x256xbf16, #tpu.memory_space<vmem>>, vector<1x256xbf16>,
    %c19 = arith.constant 19 : index
    %c0_19 = arith.constant 0 : index
    %21 = vector.load %arg7[%c19, %c0_19] : memref<74x256xbf16, #tpu.memory_space<vmem>>, vector<1x256xbf16>
    tpu.vector_store %arg7[%c19, %c0_19], %0 {strides = array<i32>} : memref<74x256xbf16, #tpu.memory_space<vmem>>, vector<1x256xbf16>,
    %c36 = arith.constant 36 : index
    %c0_20 = arith.constant 0 : index
    %22 = vector.load %arg7[%c36, %c0_20] : memref<74x256xbf16, #tpu.memory_space<vmem>>, vector<1x256xbf16>
    tpu.vector_store %arg7[%c36, %c0_20], %0 {strides = array<i32>} : memref<74x256xbf16, #tpu.memory_space<vmem>>, vector<1x256xbf16>,
    %c37 = arith.constant 37 : index
    %c0_21 = arith.constant 0 : index
    %23 = vector.load %arg7[%c37, %c0_21] : memref<74x256xbf16, #tpu.memory_space<vmem>>, vector<1x256xbf16>
    tpu.vector_store %arg7[%c37, %c0_21], %0 {strides = array<i32>} : memref<74x256xbf16, #tpu.memory_space<vmem>>, vector<1x256xbf16>,
    %c54 = arith.constant 54 : index
    %c0_22 = arith.constant 0 : index
    %24 = vector.load %arg7[%c54, %c0_22] : memref<74x256xbf16, #tpu.memory_space<vmem>>, vector<1x256xbf16>
    tpu.vector_store %arg7[%c54, %c0_22], %0 {strides = array<i32>} : memref<74x256xbf16, #tpu.memory_space<vmem>>, vector<1x256xbf16>,
    %c55 = arith.constant 55 : index
    %c0_23 = arith.constant 0 : index
    %25 = vector.load %arg7[%c55, %c0_23] : memref<74x256xbf16, #tpu.memory_space<vmem>>, vector<1x256xbf16>
    tpu.vector_store %arg7[%c55, %c0_23], %0 {strides = array<i32>} : memref<74x256xbf16, #tpu.memory_space<vmem>>, vector<1x256xbf16>,
    %c72 = arith.constant 72 : index
    %c0_24 = arith.constant 0 : index
    %26 = vector.load %arg7[%c72, %c0_24] : memref<74x256xbf16, #tpu.memory_space<vmem>>, vector<1x256xbf16>
    tpu.vector_store %arg7[%c72, %c0_24], %0 {strides = array<i32>} : memref<74x256xbf16, #tpu.memory_space<vmem>>, vector<1x256xbf16>,
    %c0_25 = arith.constant 0 : index
    %c0_26 = arith.constant 0 : index
    %27 = vector.load %arg7[%c0_25, %c0_26] : memref<74x256xbf16, #tpu.memory_space<vmem>>, vector<72x256xbf16>
    %c0_27 = arith.constant 0 : index
    %c0_28 = arith.constant 0 : index
    %c0_29 = arith.constant 0 : index
    %28 = vector.load %arg2[%c0_27, %c0_28, %c0_29] : memref<3x256x256xbf16, #tpu.memory_space<vmem>>, vector<1x256x256xbf16>
    %29 = vector.shape_cast %28 : vector<1x256x256xbf16> to vector<256x256xbf16>
    %cst_30 = arith.constant dense<0.000000e+00> : vector<72x256xf32>
    %30 = tpu.matmul %27, %29, %cst_30 {dimension_numbers = #tpu.dot_dimension_numbers<[1], [0], [0], [1], [0, 0, 1, 1], [], []>} : vector<72x256xbf16>, vector<256x256xbf16>, vector<72x256xf32> -> vector<72x256xf32>
    %c1_31 = arith.constant 1 : index
    %c0_32 = arith.constant 0 : index
    %31 = vector.load %arg8[%c1_31, %c0_32] : memref<74x256xf32, #tpu.memory_space<vmem>>, vector<72x256xf32>
    tpu.vector_store %arg8[%c1_31, %c0_32], %30 {strides = array<i32>} : memref<74x256xf32, #tpu.memory_space<vmem>>, vector<72x256xf32>,
    %c1_33 = arith.constant 1 : index
    %c0_34 = arith.constant 0 : index
    %32 = vector.load %arg8[%c1_33, %c0_34] : memref<74x256xf32, #tpu.memory_space<vmem>>, vector<72x256xf32>
    %c1_35 = arith.constant 1 : index
    %c0_36 = arith.constant 0 : index
    %33 = vector.load %arg7[%c1_35, %c0_36] : memref<74x256xbf16, #tpu.memory_space<vmem>>, vector<72x256xbf16>
    %c1_37 = arith.constant 1 : index
    %c0_38 = arith.constant 0 : index
    %c0_39 = arith.constant 0 : index
    %34 = vector.load %arg2[%c1_37, %c0_38, %c0_39] : memref<3x256x256xbf16, #tpu.memory_space<vmem>>, vector<1x256x256xbf16>
    %35 = vector.shape_cast %34 : vector<1x256x256xbf16> to vector<256x256xbf16>
    %cst_40 = arith.constant dense<0.000000e+00> : vector<72x256xf32>
    %36 = tpu.matmul %33, %35, %cst_40 {dimension_numbers = #tpu.dot_dimension_numbers<[1], [0], [0], [1], [0, 0, 1, 1], [], []>} : vector<72x256xbf16>, vector<256x256xbf16>, vector<72x256xf32> -> vector<72x256xf32>
    %37 = arith.addf %32, %36 : vector<72x256xf32>
    %c1_41 = arith.constant 1 : index
    %c0_42 = arith.constant 0 : index
    %38 = vector.load %arg8[%c1_41, %c0_42] : memref<74x256xf32, #tpu.memory_space<vmem>>, vector<72x256xf32>
    tpu.vector_store %arg8[%c1_41, %c0_42], %37 {strides = array<i32>} : memref<74x256xf32, #tpu.memory_space<vmem>>, vector<72x256xf32>,
    %c1_43 = arith.constant 1 : index
    %c0_44 = arith.constant 0 : index
    %39 = vector.load %arg8[%c1_43, %c0_44] : memref<74x256xf32, #tpu.memory_space<vmem>>, vector<72x256xf32>
    %c2_45 = arith.constant 2 : index
    %c0_46 = arith.constant 0 : index
    %40 = vector.load %arg7[%c2_45, %c0_46] : memref<74x256xbf16, #tpu.memory_space<vmem>>, vector<72x256xbf16>
    %c2_47 = arith.constant 2 : index
    %c0_48 = arith.constant 0 : index
    %c0_49 = arith.constant 0 : index
    %41 = vector.load %arg2[%c2_47, %c0_48, %c0_49] : memref<3x256x256xbf16, #tpu.memory_space<vmem>>, vector<1x256x256xbf16>
    %42 = vector.shape_cast %41 : vector<1x256x256xbf16> to vector<256x256xbf16>
    %cst_50 = arith.constant dense<0.000000e+00> : vector<72x256xf32>
    %43 = tpu.matmul %40, %42, %cst_50 {dimension_numbers = #tpu.dot_dimension_numbers<[1], [0], [0], [1], [0, 0, 1, 1], [], []>} : vector<72x256xbf16>, vector<256x256xbf16>, vector<72x256xf32> -> vector<72x256xf32>
    %44 = arith.addf %39, %43 : vector<72x256xf32>
    %c1_51 = arith.constant 1 : index
    %c0_52 = arith.constant 0 : index
    %45 = vector.load %arg8[%c1_51, %c0_52] : memref<74x256xf32, #tpu.memory_space<vmem>>, vector<72x256xf32>
    tpu.vector_store %arg8[%c1_51, %c0_52], %44 {strides = array<i32>} : memref<74x256xf32, #tpu.memory_space<vmem>>, vector<72x256xf32>,
    %c1_53 = arith.constant 1 : index
    %c0_54 = arith.constant 0 : index
    %46 = vector.load %arg8[%c1_53, %c0_54] : memref<74x256xf32, #tpu.memory_space<vmem>>, vector<72x256xf32>
    %cst_55 = arith.constant 0.000000e+00 : f32
    %47 = vector.broadcast %cst_55 : f32 to vector<72x256xf32>
    %48 = arith.maximumf %46, %47 : vector<72x256xf32>
    %49 = arith.truncf %48 : vector<72x256xf32> to vector<72x256xbf16>
    %c1_56 = arith.constant 1 : index
    %c0_57 = arith.constant 0 : index
    %50 = vector.load %arg7[%c1_56, %c0_57] : memref<74x256xbf16, #tpu.memory_space<vmem>>, vector<72x256xbf16>
    tpu.vector_store %arg7[%c1_56, %c0_57], %49 {strides = array<i32>} : memref<74x256xbf16, #tpu.memory_space<vmem>>, vector<72x256xbf16>,
    %c1_58 = arith.constant 1 : index
    %c0_59 = arith.constant 0 : index
    %51 = vector.load %arg7[%c1_58, %c0_59] : memref<74x256xbf16, #tpu.memory_space<vmem>>, vector<1x256xbf16>
    tpu.vector_store %arg7[%c1_58, %c0_59], %0 {strides = array<i32>} : memref<74x256xbf16, #tpu.memory_space<vmem>>, vector<1x256xbf16>,
    %c18_60 = arith.constant 18 : index
    %c0_61 = arith.constant 0 : index
    %52 = vector.load %arg7[%c18_60, %c0_61] : memref<74x256xbf16, #tpu.memory_space<vmem>>, vector<1x256xbf16>
    tpu.vector_store %arg7[%c18_60, %c0_61], %0 {strides = array<i32>} : memref<74x256xbf16, #tpu.memory_space<vmem>>, vector<1x256xbf16>,
    %c19_62 = arith.constant 19 : index
    %c0_63 = arith.constant 0 : index
    %53 = vector.load %arg7[%c19_62, %c0_63] : memref<74x256xbf16, #tpu.memory_space<vmem>>, vector<1x256xbf16>
    tpu.vector_store %arg7[%c19_62, %c0_63], %0 {strides = array<i32>} : memref<74x256xbf16, #tpu.memory_space<vmem>>, vector<1x256xbf16>,
    %c36_64 = arith.constant 36 : index
    %c0_65 = arith.constant 0 : index
    %54 = vector.load %arg7[%c36_64, %c0_65] : memref<74x256xbf16, #tpu.memory_space<vmem>>, vector<1x256xbf16>
    tpu.vector_store %arg7[%c36_64, %c0_65], %0 {strides = array<i32>} : memref<74x256xbf16, #tpu.memory_space<vmem>>, vector<1x256xbf16>,
    %c37_66 = arith.constant 37 : index
    %c0_67 = arith.constant 0 : index
    %55 = vector.load %arg7[%c37_66, %c0_67] : memref<74x256xbf16, #tpu.memory_space<vmem>>, vector<1x256xbf16>
    tpu.vector_store %arg7[%c37_66, %c0_67], %0 {strides = array<i32>} : memref<74x256xbf16, #tpu.memory_space<vmem>>, vector<1x256xbf16>,
    %c54_68 = arith.constant 54 : index
    %c0_69 = arith.constant 0 : index
    %56 = vector.load %arg7[%c54_68, %c0_69] : memref<74x256xbf16, #tpu.memory_space<vmem>>, vector<1x256xbf16>
    tpu.vector_store %arg7[%c54_68, %c0_69], %0 {strides = array<i32>} : memref<74x256xbf16, #tpu.memory_space<vmem>>, vector<1x256xbf16>,
    %c55_70 = arith.constant 55 : index
    %c0_71 = arith.constant 0 : index
    %57 = vector.load %arg7[%c55_70, %c0_71] : memref<74x256xbf16, #tpu.memory_space<vmem>>, vector<1x256xbf16>
    tpu.vector_store %arg7[%c55_70, %c0_71], %0 {strides = array<i32>} : memref<74x256xbf16, #tpu.memory_space<vmem>>, vector<1x256xbf16>,
    %c72_72 = arith.constant 72 : index
    %c0_73 = arith.constant 0 : index
    %58 = vector.load %arg7[%c72_72, %c0_73] : memref<74x256xbf16, #tpu.memory_space<vmem>>, vector<1x256xbf16>
    tpu.vector_store %arg7[%c72_72, %c0_73], %0 {strides = array<i32>} : memref<74x256xbf16, #tpu.memory_space<vmem>>, vector<1x256xbf16>,
    %c0_74 = arith.constant 0 : index
    %c0_75 = arith.constant 0 : index
    %59 = vector.load %arg7[%c0_74, %c0_75] : memref<74x256xbf16, #tpu.memory_space<vmem>>, vector<72x256xbf16>
    %c0_76 = arith.constant 0 : index
    %c0_77 = arith.constant 0 : index
    %c0_78 = arith.constant 0 : index
    %60 = vector.load %arg3[%c0_76, %c0_77, %c0_78] : memref<3x256x256xbf16, #tpu.memory_space<vmem>>, vector<1x256x256xbf16>
    %61 = vector.shape_cast %60 : vector<1x256x256xbf16> to vector<256x256xbf16>
    %cst_79 = arith.constant dense<0.000000e+00> : vector<72x256xf32>
    %62 = tpu.matmul %59, %61, %cst_79 {dimension_numbers = #tpu.dot_dimension_numbers<[1], [0], [0], [1], [0, 0, 1, 1], [], []>} : vector<72x256xbf16>, vector<256x256xbf16>, vector<72x256xf32> -> vector<72x256xf32>
    %c1_80 = arith.constant 1 : index
    %c0_81 = arith.constant 0 : index
    %63 = vector.load %arg8[%c1_80, %c0_81] : memref<74x256xf32, #tpu.memory_space<vmem>>, vector<72x256xf32>
    tpu.vector_store %arg8[%c1_80, %c0_81], %62 {strides = array<i32>} : memref<74x256xf32, #tpu.memory_space<vmem>>, vector<72x256xf32>,
    %c1_82 = arith.constant 1 : index
    %c0_83 = arith.constant 0 : index
    %64 = vector.load %arg8[%c1_82, %c0_83] : memref<74x256xf32, #tpu.memory_space<vmem>>, vector<72x256xf32>
    %c1_84 = arith.constant 1 : index
    %c0_85 = arith.constant 0 : index
    %65 = vector.load %arg7[%c1_84, %c0_85] : memref<74x256xbf16, #tpu.memory_space<vmem>>, vector<72x256xbf16>
    %c1_86 = arith.constant 1 : index
    %c0_87 = arith.constant 0 : index
    %c0_88 = arith.constant 0 : index
    %66 = vector.load %arg3[%c1_86, %c0_87, %c0_88] : memref<3x256x256xbf16, #tpu.memory_space<vmem>>, vector<1x256x256xbf16>
    %67 = vector.shape_cast %66 : vector<1x256x256xbf16> to vector<256x256xbf16>
    %cst_89 = arith.constant dense<0.000000e+00> : vector<72x256xf32>
    %68 = tpu.matmul %65, %67, %cst_89 {dimension_numbers = #tpu.dot_dimension_numbers<[1], [0], [0], [1], [0, 0, 1, 1], [], []>} : vector<72x256xbf16>, vector<256x256xbf16>, vector<72x256xf32> -> vector<72x256xf32>
    %69 = arith.addf %64, %68 : vector<72x256xf32>
    %c1_90 = arith.constant 1 : index
    %c0_91 = arith.constant 0 : index
    %70 = vector.load %arg8[%c1_90, %c0_91] : memref<74x256xf32, #tpu.memory_space<vmem>>, vector<72x256xf32>
    tpu.vector_store %arg8[%c1_90, %c0_91], %69 {strides = array<i32>} : memref<74x256xf32, #tpu.memory_space<vmem>>, vector<72x256xf32>,
    %c1_92 = arith.constant 1 : index
    %c0_93 = arith.constant 0 : index
    %71 = vector.load %arg8[%c1_92, %c0_93] : memref<74x256xf32, #tpu.memory_space<vmem>>, vector<72x256xf32>
    %c2_94 = arith.constant 2 : index
    %c0_95 = arith.constant 0 : index
    %72 = vector.load %arg7[%c2_94, %c0_95] : memref<74x256xbf16, #tpu.memory_space<vmem>>, vector<72x256xbf16>
    %c2_96 = arith.constant 2 : index
    %c0_97 = arith.constant 0 : index
    %c0_98 = arith.constant 0 : index
    %73 = vector.load %arg3[%c2_96, %c0_97, %c0_98] : memref<3x256x256xbf16, #tpu.memory_space<vmem>>, vector<1x256x256xbf16>
    %74 = vector.shape_cast %73 : vector<1x256x256xbf16> to vector<256x256xbf16>
    %cst_99 = arith.constant dense<0.000000e+00> : vector<72x256xf32>
    %75 = tpu.matmul %72, %74, %cst_99 {dimension_numbers = #tpu.dot_dimension_numbers<[1], [0], [0], [1], [0, 0, 1, 1], [], []>} : vector<72x256xbf16>, vector<256x256xbf16>, vector<72x256xf32> -> vector<72x256xf32>
    %76 = arith.addf %71, %75 : vector<72x256xf32>
    %c1_100 = arith.constant 1 : index
    %c0_101 = arith.constant 0 : index
    %77 = vector.load %arg8[%c1_100, %c0_101] : memref<74x256xf32, #tpu.memory_space<vmem>>, vector<72x256xf32>
    tpu.vector_store %arg8[%c1_100, %c0_101], %76 {strides = array<i32>} : memref<74x256xf32, #tpu.memory_space<vmem>>, vector<72x256xf32>,
    %c2_102 = arith.constant 2 : index
    %c0_103 = arith.constant 0 : index
    %78 = vector.load %arg8[%c2_102, %c0_103] : memref<74x256xf32, #tpu.memory_space<vmem>>, vector<16x256xf32>
    %cst_104 = arith.constant dense<0.000000e+00> : vector<256xf32>
    %79 = vector.multi_reduction <add>, %78, %cst_104 [0] : vector<16x256xf32> to vector<256xf32>
    %80 = vector.shape_cast %79 : vector<256xf32> to vector<1x256xf32>
    %c20_105 = arith.constant 20 : index
    %c0_106 = arith.constant 0 : index
    %81 = vector.load %arg8[%c20_105, %c0_106] : memref<74x256xf32, #tpu.memory_space<vmem>>, vector<16x256xf32>
    %cst_107 = arith.constant dense<0.000000e+00> : vector<256xf32>
    %82 = vector.multi_reduction <add>, %81, %cst_107 [0] : vector<16x256xf32> to vector<256xf32>
    %83 = vector.shape_cast %82 : vector<256xf32> to vector<1x256xf32>
    %c38_108 = arith.constant 38 : index
    %c0_109 = arith.constant 0 : index
    %84 = vector.load %arg8[%c38_108, %c0_109] : memref<74x256xf32, #tpu.memory_space<vmem>>, vector<16x256xf32>
    %cst_110 = arith.constant dense<0.000000e+00> : vector<256xf32>
    %85 = vector.multi_reduction <add>, %84, %cst_110 [0] : vector<16x256xf32> to vector<256xf32>
    %86 = vector.shape_cast %85 : vector<256xf32> to vector<1x256xf32>
    %c56_111 = arith.constant 56 : index
    %c0_112 = arith.constant 0 : index
    %87 = vector.load %arg8[%c56_111, %c0_112] : memref<74x256xf32, #tpu.memory_space<vmem>>, vector<16x256xf32>
    %cst_113 = arith.constant dense<0.000000e+00> : vector<256xf32>
    %88 = vector.multi_reduction <add>, %87, %cst_113 [0] : vector<16x256xf32> to vector<256xf32>
    %89 = vector.shape_cast %88 : vector<256xf32> to vector<1x256xf32>
    %90 = tpu.concatenate %80, %83, %86, %89 in 0 : vector<1x256xf32>, vector<1x256xf32>, vector<1x256xf32>, vector<1x256xf32> -> vector<4x256xf32>
    %c0_114 = arith.constant 0 : index
    %c0_115 = arith.constant 0 : index
    %91 = vector.load %arg4[%c0_114, %c0_115] : memref<256x4xf32, #tpu.memory_space<vmem>>, vector<256x4xf32>
    %cst_116 = arith.constant dense<0.000000e+00> : vector<4x4xf32>
    %92 = tpu.matmul %90, %91, %cst_116 {dimension_numbers = #tpu.dot_dimension_numbers<[1], [0], [0], [1], [0, 0, 1, 1], [], []>} : vector<4x256xf32>, vector<256x4xf32>, vector<4x4xf32> -> vector<4x4xf32>
    %cst_117 = arith.constant 0.000000e+00 : f32
    %93 = vector.broadcast %cst_117 : f32 to vector<4x4xf32>
    %94 = arith.maximumf %92, %93 : vector<4x4xf32>
    %c0_118 = arith.constant 0 : index
    %c0_119 = arith.constant 0 : index
    %95 = vector.load %arg5[%c0_118, %c0_119] : memref<4x256xf32, #tpu.memory_space<vmem>>, vector<4x256xf32>
    %cst_120 = arith.constant dense<0.000000e+00> : vector<4x256xf32>
    %96 = tpu.matmul %94, %95, %cst_120 {dimension_numbers = #tpu.dot_dimension_numbers<[1], [0], [0], [1], [0, 0, 1, 1], [], []>} : vector<4x4xf32>, vector<4x256xf32>, vector<4x256xf32> -> vector<4x256xf32>
    %97 = arith.negf %96 : vector<4x256xf32>
    %98 = math.exp %97 : vector<4x256xf32>
    %cst_121 = arith.constant 1.000000e+00 : f32
    %99 = vector.broadcast %cst_121 : f32 to vector<4x256xf32>
    %100 = arith.addf %99, %98 : vector<4x256xf32>
    %101 = arith.divf %99, %100 : vector<4x256xf32>
    %c2_122 = arith.constant 2 : index
    %c0_123 = arith.constant 0 : index
    %102 = vector.load %arg8[%c2_122, %c0_123] : memref<74x256xf32, #tpu.memory_space<vmem>>, vector<16x256xf32>
    %103 = vector.extract_strided_slice %101 {offsets = [0, 0], sizes = [1, 256], strides = [1, 1]} : vector<4x256xf32> to vector<1x256xf32>
    %104 = vector.broadcast %103 : vector<1x256xf32> to vector<16x256xf32>
    %105 = arith.mulf %102, %104 : vector<16x256xf32>
    %c0_124 = arith.constant 0 : index
    %c0_125 = arith.constant 0 : index
    %c0_126 = arith.constant 0 : index
    %106 = vector.load %arg1[%c0_124, %c0_125, %c0_126] : memref<4x16x256xf32, #tpu.memory_space<vmem>>, vector<1x16x256xf32>
    %107 = vector.shape_cast %106 : vector<1x16x256xf32> to vector<16x256xf32>
    %108 = arith.addf %105, %107 : vector<16x256xf32>
    %c0_127 = arith.constant 0 : index
    %c0_128 = arith.constant 0 : index
    %c0_129 = arith.constant 0 : index
    %109 = vector.load %arg6[%c0_127, %c0_128, %c0_129] : memref<4x16x256xf32, #tpu.memory_space<vmem>>, vector<1x16x256xf32>
    %110 = vector.shape_cast %109 : vector<1x16x256xf32> to vector<16x256xf32>
    %111 = vector.shape_cast %108 : vector<16x256xf32> to vector<1x16x256xf32>
    tpu.vector_store %arg6[%c0_127, %c0_128, %c0_129], %111 {strides = array<i32>} : memref<4x16x256xf32, #tpu.memory_space<vmem>>, vector<1x16x256xf32>,
    %c20_130 = arith.constant 20 : index
    %c0_131 = arith.constant 0 : index
    %112 = vector.load %arg8[%c20_130, %c0_131] : memref<74x256xf32, #tpu.memory_space<vmem>>, vector<16x256xf32>
    %113 = vector.extract_strided_slice %101 {offsets = [1, 0], sizes = [1, 256], strides = [1, 1]} : vector<4x256xf32> to vector<1x256xf32>
    %114 = vector.broadcast %113 : vector<1x256xf32> to vector<16x256xf32>
    %115 = arith.mulf %112, %114 : vector<16x256xf32>
    %c1_132 = arith.constant 1 : index
    %c0_133 = arith.constant 0 : index
    %c0_134 = arith.constant 0 : index
    %116 = vector.load %arg1[%c1_132, %c0_133, %c0_134] : memref<4x16x256xf32, #tpu.memory_space<vmem>>, vector<1x16x256xf32>
    %117 = vector.shape_cast %116 : vector<1x16x256xf32> to vector<16x256xf32>
    %118 = arith.addf %115, %117 : vector<16x256xf32>
    %c1_135 = arith.constant 1 : index
    %c0_136 = arith.constant 0 : index
    %c0_137 = arith.constant 0 : index
    %119 = vector.load %arg6[%c1_135, %c0_136, %c0_137] : memref<4x16x256xf32, #tpu.memory_space<vmem>>, vector<1x16x256xf32>
    %120 = vector.shape_cast %119 : vector<1x16x256xf32> to vector<16x256xf32>
    %121 = vector.shape_cast %118 : vector<16x256xf32> to vector<1x16x256xf32>
    tpu.vector_store %arg6[%c1_135, %c0_136, %c0_137], %121 {strides = array<i32>} : memref<4x16x256xf32, #tpu.memory_space<vmem>>, vector<1x16x256xf32>,
    %c38_138 = arith.constant 38 : index
    %c0_139 = arith.constant 0 : index
    %122 = vector.load %arg8[%c38_138, %c0_139] : memref<74x256xf32, #tpu.memory_space<vmem>>, vector<16x256xf32>
    %123 = vector.extract_strided_slice %101 {offsets = [2, 0], sizes = [1, 256], strides = [1, 1]} : vector<4x256xf32> to vector<1x256xf32>
    %124 = vector.broadcast %123 : vector<1x256xf32> to vector<16x256xf32>
    %125 = arith.mulf %122, %124 : vector<16x256xf32>
    %c2_140 = arith.constant 2 : index
    %c0_141 = arith.constant 0 : index
    %c0_142 = arith.constant 0 : index
    %126 = vector.load %arg1[%c2_140, %c0_141, %c0_142] : memref<4x16x256xf32, #tpu.memory_space<vmem>>, vector<1x16x256xf32>
    %127 = vector.shape_cast %126 : vector<1x16x256xf32> to vector<16x256xf32>
    %128 = arith.addf %125, %127 : vector<16x256xf32>
    %c2_143 = arith.constant 2 : index
    %c0_144 = arith.constant 0 : index
    %c0_145 = arith.constant 0 : index
    %129 = vector.load %arg6[%c2_143, %c0_144, %c0_145] : memref<4x16x256xf32, #tpu.memory_space<vmem>>, vector<1x16x256xf32>
    %130 = vector.shape_cast %129 : vector<1x16x256xf32> to vector<16x256xf32>
    %131 = vector.shape_cast %128 : vector<16x256xf32> to vector<1x16x256xf32>
    tpu.vector_store %arg6[%c2_143, %c0_144, %c0_145], %131 {strides = array<i32>} : memref<4x16x256xf32, #tpu.memory_space<vmem>>, vector<1x16x256xf32>,
    %c56_146 = arith.constant 56 : index
    %c0_147 = arith.constant 0 : index
    %132 = vector.load %arg8[%c56_146, %c0_147] : memref<74x256xf32, #tpu.memory_space<vmem>>, vector<16x256xf32>
    %133 = vector.extract_strided_slice %101 {offsets = [3, 0], sizes = [1, 256], strides = [1, 1]} : vector<4x256xf32> to vector<1x256xf32>
    %134 = vector.broadcast %133 : vector<1x256xf32> to vector<16x256xf32>
    %135 = arith.mulf %132, %134 : vector<16x256xf32>
    %c3_148 = arith.constant 3 : index
    %c0_149 = arith.constant 0 : index
    %c0_150 = arith.constant 0 : index
    %136 = vector.load %arg1[%c3_148, %c0_149, %c0_150] : memref<4x16x256xf32, #tpu.memory_space<vmem>>, vector<1x16x256xf32>
    %137 = vector.shape_cast %136 : vector<1x16x256xf32> to vector<16x256xf32>
    %138 = arith.addf %135, %137 : vector<16x256xf32>
    %c3_151 = arith.constant 3 : index
    %c0_152 = arith.constant 0 : index
    %c0_153 = arith.constant 0 : index
    %139 = vector.load %arg6[%c3_151, %c0_152, %c0_153] : memref<4x16x256xf32, #tpu.memory_space<vmem>>, vector<1x16x256xf32>
    %140 = vector.shape_cast %139 : vector<1x16x256xf32> to vector<16x256xf32>
    %141 = vector.shape_cast %138 : vector<16x256xf32> to vector<1x16x256xf32>
    tpu.vector_store %arg6[%c3_151, %c0_152, %c0_153], %141 {strides = array<i32>} : memref<4x16x256xf32, #tpu.memory_space<vmem>>, vector<1x16x256xf32>,
    return
  }
  func.func @transform_0(%arg0: i32) -> (i32, i32, i32) {
    %c0_i32 = arith.constant 0 : i32
    %c0_i32_0 = arith.constant 0 : i32
    %c0_i32_1 = arith.constant 0 : i32
    return %arg0, %c0_i32, %c0_i32_0 : i32, i32, i32
  }
  func.func @transform_1(%arg0: i32) -> (i32, i32, i32) {
    %c0_i32 = arith.constant 0 : i32
    %c0_i32_0 = arith.constant 0 : i32
    %c0_i32_1 = arith.constant 0 : i32
    %c0_i32_2 = arith.constant 0 : i32
    return %c0_i32, %c0_i32_0, %c0_i32_1 : i32, i32, i32
  }
  func.func @transform_2(%arg0: i32) -> (i32, i32, i32) {
    %c0_i32 = arith.constant 0 : i32
    %c0_i32_0 = arith.constant 0 : i32
    %c0_i32_1 = arith.constant 0 : i32
    %c0_i32_2 = arith.constant 0 : i32
    return %c0_i32, %c0_i32_0, %c0_i32_1 : i32, i32, i32
  }
  func.func @transform_3(%arg0: i32) -> (i32, i32) {
    %c0_i32 = arith.constant 0 : i32
    %c0_i32_0 = arith.constant 0 : i32
    %c0_i32_1 = arith.constant 0 : i32
    return %c0_i32, %c0_i32_0 : i32, i32
  }
  func.func @transform_4(%arg0: i32) -> (i32, i32) {
    %c0_i32 = arith.constant 0 : i32
    %c0_i32_0 = arith.constant 0 : i32
    %c0_i32_1 = arith.constant 0 : i32
    return %c0_i32, %c0_i32_0 : i32, i32
  }
  func.func @transform_5(%arg0: i32) -> (i32, i32, i32) {
    %c0_i32 = arith.constant 0 : i32
    %c0_i32_0 = arith.constant 0 : i32
    %c0_i32_1 = arith.constant 0 : i32
    return %arg0, %c0_i32, %c0_i32_0 : i32, i32, i32
  }
}

</mosaic_0001>

<llo_original>
// kernel: tpu_custom_call.1
$region0: #{tpu_custom_call.1}
  #allocation0 [shape = 'u32[]', space=smem, size = 0x4, offset = 0x4, fixed_abs, tag = 'smem constant byte address 0x4 - core index']
  #allocation1 [shape = 'u32[72,128]{1,0:T(1,128)}', space=vmem, size = 0x9000, scoped, tag = 'internal scratch']
  #allocation2 [shape = 'bf16[74,256]{1,0:T(8,128)(2,1)}', space=vmem, size = 0xa000, scoped, tag = 'scratch operand']
  #allocation3 [shape = 'f32[74,256]{1,0:T(8,128)}', space=vmem, size = 0x14000, scoped, tag = 'scratch operand']
  %s0 = inlined_call_operand.vmem [shape: f32[8,16,256], index: 0, kind: input, shape index: {}]
  %s1 = inlined_call_operand.hbm [shape: bf16[3,256,256], index: 1, kind: input, shape index: {}]
  %s2 = inlined_call_operand.hbm [shape: bf16[3,256,256], index: 2, kind: input, shape index: {}]
  %s3 = inlined_call_operand.vmem [shape: f32[256,4], index: 3, kind: input, shape index: {}]
  %s4 = inlined_call_operand.vmem [shape: f32[4,256], index: 4, kind: input, shape index: {}]
  %s5 = inlined_call_operand.hbm [shape: f32[8,16,256], index: 5, kind: output, shape index: {}]
  %s6 = sld [smem:[#allocation0]]
  $region61: #{tpu_custom_call.1} parent=0
    _
  %s8 = ssub.s32 1, %s6
  %s9 = scalar_select 0, %s8, %s6
  $region1: #{tpu_custom_call.1} parent=0
    #allocation4 [shape = 'u8[393216]{0}', space=vmem, size = 0x60000, scoped, tag = 'input window, operand 1, single buffered']
    #allocation5 [shape = 's32[2]{0}', space=sflag, size = 0x8, scoped, tag = 'scoped memory for tpu_custom_call.1']
    #allocation6 [shape = 's32[2]{0}', space=sflag, size = 0x8, scoped, tag = 'scoped memory for tpu_custom_call.1']
    #allocation7 [shape = 'u8[393216]{0}', space=vmem, size = 0x60000, scoped, tag = 'input window, operand 2, single buffered']
    #allocation8 [shape = 's32[1]{0}', space=sflag, size = 0x4, scoped, tag = 'scoped memory for tpu_custom_call.1']
    #allocation9 [shape = 'u8[131072]{0}', space=vmem, size = 0x20000, scoped, tag = 'output window, operand 0']
    %10 = vsyncpa [#allocation5], 0
    %11 = vsyncpa [#allocation8], 0
    %12 = vsyncpa [#allocation6], 0
    %s13 = scalar_lea.sflag [#allocation6], 1
    %14 = vsyncpa %s13, 0
    loop: start=0, step=1, limit=4
    $region2: #{tpu_custom_call.1} parent=1 // loop_pre_header
      _
    $region3: #{tpu_custom_call.1} parent=1 // loop_header
      %s16 = sphi 0, %s20
      %p17 = scmp.ge.s32.totalorder %s16, 4
      %s26 = sphi 0, %s28
      %s29 = sphi 0, %s26
      %s30 = sphi 0, %s29
      %s46 = sphi 0, %s30
      %s50 = sphi 0, %s50
      %s52 = sphi 0, %s50
      %s53 = sphi 0, %s52
      %s67 = sphi 0, %s53
      %s71 = sphi 0, %s71
      %s73 = sphi 0, %s71
      %s74 = sphi 0, %s73
      %s88 = sphi 0, %s74
      %s92 = sphi 0, %s92
      %s94 = sphi 0, %s92
      %s95 = sphi 0, %s94
      %s109 = sphi 0, %s95
      %s113 = sphi 0, %s113
      %s115 = sphi 0, %s113
      %s116 = sphi 0, %s115
      %s130 = sphi 0, %s116
      %s136 = sphi 0, %s138
      %s139 = sphi 0, %s136
      %s140 = sphi 0, %s139
      %s156 = sphi 0, %s140
    $region4: #{tpu_custom_call.1} parent=1 // loop_header_branch
      %19 = sbr.rel (%p17) target = $region8
    $region5: #{tpu_custom_call.1} parent=1 // loop_body
      %s21 = ssub.s32 %s16, 1
      %s22 = ssub.s32 %s16, 2
      %s23 = sadd.s32 %s16, 1
      %s24 = ssub.s32 %s16, %s23
      %p25 = scmp.eq.s32.totalorder %s24, 0
      %s27 = sadd.s32 %s26, 1
      %s28 = scalar_select %p25, %s26, %s27
      %p31 = pneg %p25
      %p32 = scmp.eq.s32.totalorder %s16, 1
      %p33 = por %p31, %p32
      %p34 = scmp.ne.s32.totalorder %s26, %s29
      %p35 = scmp.eq.s32.totalorder %s16, 0
      %p36 = por %p34, %p35
      %p37 = scmp.ne.s32.totalorder %s26, %s29
      %p38 = scmp.eq.s32.totalorder %s21, 1
      %p39 = por %p37, %p38
      %p40 = scmp.ne.s32.totalorder %s29, %s30
      %p41 = scmp.eq.s32.totalorder %s21, 0
      %p42 = por %p40, %p41
      %p43 = scmp.ne.s32.totalorder %s29, %s30
      %p44 = scmp.eq.s32.totalorder %s22, 1
      %p45 = por %p43, %p44
      %p47 = scmp.ne.s32.totalorder %s30, %s46
      %p48 = scmp.eq.s32.totalorder %s22, 0
      %p49 = por %p47, %p48
      %s51 = sadd.s32 %s50, 1
      %p54 = scmp.eq.s32.totalorder %s16, 1
      %p55 = scmp.ne.s32.totalorder %s50, %s52
      %p56 = scmp.eq.s32.totalorder %s16, 0
      %p57 = por %p55, %p56
      %p58 = scmp.ne.s32.totalorder %s50, %s52
      %p59 = scmp.eq.s32.totalorder %s21, 1
      %p60 = por %p58, %p59
      %p61 = scmp.ne.s32.totalorder %s52, %s53
      %p62 = scmp.eq.s32.totalorder %s21, 0
      %p63 = por %p61, %p62
      %p64 = scmp.ne.s32.totalorder %s52, %s53
      %p65 = scmp.eq.s32.totalorder %s22, 1
      %p66 = por %p64, %p65
      %p68 = scmp.ne.s32.totalorder %s53, %s67
      %p69 = scmp.eq.s32.totalorder %s22, 0
      %p70 = por %p68, %p69
      %s72 = sadd.s32 %s71, 1
      %p75 = scmp.eq.s32.totalorder %s16, 1
      %p76 = scmp.ne.s32.totalorder %s71, %s73
      %p77 = scmp.eq.s32.totalorder %s16, 0
      %p78 = por %p76, %p77
      %p79 = scmp.ne.s32.totalorder %s71, %s73
      %p80 = scmp.eq.s32.totalorder %s21, 1
      %p81 = por %p79, %p80
      %p82 = scmp.ne.s32.totalorder %s73, %s74
      %p83 = scmp.eq.s32.totalorder %s21, 0
      %p84 = por %p82, %p83
      %p85 = scmp.ne.s32.totalorder %s73, %s74
      %p86 = scmp.eq.s32.totalorder %s22, 1
      %p87 = por %p85, %p86
      %p89 = scmp.ne.s32.totalorder %s74, %s88
      %p90 = scmp.eq.s32.totalorder %s22, 0
      %p91 = por %p89, %p90
      %s93 = sadd.s32 %s92, 1
      %p96 = scmp.eq.s32.totalorder %s16, 1
      %p97 = scmp.ne.s32.totalorder %s92, %s94
      %p98 = scmp.eq.s32.totalorder %s16, 0
      %p99 = por %p97, %p98
      %p100 = scmp.ne.s32.totalorder %s92, %s94
      %p101 = scmp.eq.s32.totalorder %s21, 1
      %p102 = por %p100, %p101
      %p103 = scmp.ne.s32.totalorder %s94, %s95
      %p104 = scmp.eq.s32.totalorder %s21, 0
      %p105 = por %p103, %p104
      %p106 = scmp.ne.s32.totalorder %s94, %s95
      %p107 = scmp.eq.s32.totalorder %s22, 1
      %p108 = por %p106, %p107
      %p110 = scmp.ne.s32.totalorder %s95, %s109
      %p111 = scmp.eq.s32.totalorder %s22, 0
      %p112 = por %p110, %p111
      %s114 = sadd.s32 %s113, 1
      %p117 = scmp.eq.s32.totalorder %s16, 1
      %p118 = scmp.ne.s32.totalorder %s113, %s115
      %p119 = scmp.eq.s32.totalorder %s16, 0
      %p120 = por %p118, %p119
      %p121 = scmp.ne.s32.totalorder %s113, %s115
      %p122 = scmp.eq.s32.totalorder %s21, 1
      %p123 = por %p121, %p122
      %p124 = scmp.ne.s32.totalorder %s115, %s116
      %p125 = scmp.eq.s32.totalorder %s21, 0
      %p126 = por %p124, %p125
      %p127 = scmp.ne.s32.totalorder %s115, %s116
      %p128 = scmp.eq.s32.totalorder %s22, 1
      %p129 = por %p127, %p128
      %p131 = scmp.ne.s32.totalorder %s116, %s130
      %p132 = scmp.eq.s32.totalorder %s22, 0
      %p133 = por %p131, %p132
      %s134 = ssub.s32 %s16, %s23
      %p135 = scmp.eq.s32.totalorder %s134, 0
      %s137 = sadd.s32 %s136, 1
      %s138 = scalar_select %p135, %s136, %s137
      %p141 = pneg %p135
      %p142 = scmp.eq.s32.totalorder %s16, 1
      %p143 = por %p141, %p142
      %p144 = scmp.ne.s32.totalorder %s136, %s139
      %p145 = scmp.eq.s32.totalorder %s16, 0
      %p146 = por %p144, %p145
      %p147 = scmp.ne.s32.totalorder %s136, %s139
      %p148 = scmp.eq.s32.totalorder %s21, 1
      %p149 = por %p147, %p148
      %p150 = scmp.ne.s32.totalorder %s139, %s140
      %p151 = scmp.eq.s32.totalorder %s21, 0
      %p152 = por %p150, %p151
      %p153 = scmp.ne.s32.totalorder %s139, %s140
      %p154 = scmp.eq.s32.totalorder %s22, 1
      %p155 = por %p153, %p154
      %p157 = scmp.ne.s32.totalorder %s140, %s156
      %p158 = scmp.eq.s32.totalorder %s22, 0
      %p159 = por %p157, %p158
      %p160 = scmp.le.s32.totalorder 1, %s16
      %p161 = scmp.lt.s32.totalorder %s16, 3
      %p162 = pnand %p160, %p161
      %p163 = pneg %p162
      // Predicated region
      $region9: #{tpu_custom_call.1} parent=5 // pred_check
        _
      $region10: #{tpu_custom_call.1} parent=5 // pred_check_branch
        %165 = sbr.rel (%p162) target = $region12
      $region11: #{tpu_custom_call.1} parent=5 // pred_region
        %s166 = ssub.s32 %s16, 1
        // Predicated region
        $region13: #{tpu_custom_call.1} parent=11 // pred_check
          %p167 = pneg %p63
        $region14: #{tpu_custom_call.1} parent=11 // pred_check_branch
          %169 = sbr.rel (%p167) target = $region16
        $region15: #{tpu_custom_call.1} parent=11 // pred_region
          %171 = vsyncadd [#allocation5], 0
          %s172 = sshll.u32 %s1, 4
          %s173 = int_to_ptr.hbm [resolvable:$true] %s172
          %s174 = sshll.u32 [#allocation4], 4
          %s175 = int_to_ptr.vmem [resolvable:$true] %s174
          %180 = dma.hbm_to_vmem [thread:$0]  %s173, 12288, %s175, [#allocation5], 128, 128, 8
        $region16: #{tpu_custom_call.1} parent=11 // pred_fallthru
          _
        // Predicated region
        $region17: #{tpu_custom_call.1} parent=11 // pred_check
          %p181 = pneg %p84
        $region18: #{tpu_custom_call.1} parent=11 // pred_check_branch
          %183 = sbr.rel (%p181) target = $region20
        $region19: #{tpu_custom_call.1} parent=11 // pred_region
          %185 = vsyncadd [#allocation8], 0
          %s186 = sshll.u32 %s2, 4
          %s187 = int_to_ptr.hbm [resolvable:$true] %s186
          %s188 = sshll.u32 [#allocation7], 4
          %s189 = int_to_ptr.vmem [resolvable:$true] %s188
          %194 = dma.hbm_to_vmem [thread:$0]  %s187, 12288, %s189, [#allocation8], 128, 128, 8
        $region20: #{tpu_custom_call.1} parent=11 // pred_fallthru
          _
        // Predicated region
        $region21: #{tpu_custom_call.1} parent=11 // pred_check
          %p195 = pneg %p105
        $region22: #{tpu_custom_call.1} parent=11 // pred_check_branch
          %197 = sbr.rel (%p195) target = $region24
        $region23: #{tpu_custom_call.1} parent=11 // pred_region
          _
        $region24: #{tpu_custom_call.1} parent=11 // pred_fallthru
          _
        // Predicated region
        $region25: #{tpu_custom_call.1} parent=11 // pred_check
          %p198 = pneg %p126
        $region26: #{tpu_custom_call.1} parent=11 // pred_check_branch
          %200 = sbr.rel (%p198) target = $region28
        $region27: #{tpu_custom_call.1} parent=11 // pred_region
          _
        $region28: #{tpu_custom_call.1} parent=11 // pred_fallthru
          _
      $region12: #{tpu_custom_call.1} parent=5 // pred_fallthru
        _
      %p201 = scmp.lt.s32.totalorder %s16, 2
      // Predicated region
      $region29: #{tpu_custom_call.1} parent=5 // pred_check
        %p202 = pneg %p201
      $region30: #{tpu_custom_call.1} parent=5 // pred_check_branch
        %204 = sbr.rel (%p202) target = $region32
      $region31: #{tpu_custom_call.1} parent=5 // pred_region
        // Predicated region
        $region33: #{tpu_custom_call.1} parent=31 // pred_check
          %p205 = pneg %p36
        $region34: #{tpu_custom_call.1} parent=31 // pred_check_branch
          %207 = sbr.rel (%p205) target = $region36
        $region35: #{tpu_custom_call.1} parent=31 // pred_region
          %s208 = smul.u32 4, %s16
          %p209 = scmp.lt.s32.totalorder %s208, 7
          %s210 = scalar_select %p209, %s208, 7
          %s211 = smul.addr %s210, 4
          %s212 = smul.addr %s211, 8
          %s213 = scalar_lea.vmem %s0, %s212
          %s214 = smul.u32 4, %s16
        $region36: #{tpu_custom_call.1} parent=31 // pred_fallthru
          _
      $region32: #{tpu_custom_call.1} parent=5 // pred_fallthru
        _
      %p215 = scmp.le.s32.totalorder 1, %s16
      %p216 = scmp.lt.s32.totalorder %s16, 3
      %p217 = pnand %p215, %p216
      %p218 = pneg %p217
      // Predicated region
      $region37: #{tpu_custom_call.1} parent=5 // pred_check
        _
      $region38: #{tpu_custom_call.1} parent=5 // pred_check_branch
        %220 = sbr.rel (%p217) target = $region40
      $region39: #{tpu_custom_call.1} parent=5 // pred_region
        %s221 = ssub.s32 %s16, 1
        // Predicated region
        $region41: #{tpu_custom_call.1} parent=39 // pred_check
          %p222 = pneg %p63
        $region42: #{tpu_custom_call.1} parent=39 // pred_check_branch
          %224 = sbr.rel (%p222) target = $region44
        $region43: #{tpu_custom_call.1} parent=39 // pred_region
          %226 = dma.done [#allocation5], 12288
        $region44: #{tpu_custom_call.1} parent=39 // pred_fallthru
          _
        // Predicated region
        $region45: #{tpu_custom_call.1} parent=39 // pred_check
          %p227 = pneg %p84
        $region46: #{tpu_custom_call.1} parent=39 // pred_check_branch
          %229 = sbr.rel (%p227) target = $region48
        $region47: #{tpu_custom_call.1} parent=39 // pred_region
          %231 = dma.done [#allocation8], 12288
        $region48: #{tpu_custom_call.1} parent=39 // pred_fallthru
          _
        %s232 = smul.u32 4, %s21
        %p233 = scmp.lt.s32.totalorder %s232, 7
        %s234 = scalar_select %p233, %s232, 7
        %s235 = smul.addr %s234, 4
        %s236 = smul.addr %s235, 8
        %s237 = scalar_lea.vmem %s0, %s236
        %p238 = pneg %p42
        %p239 = pneg %p39
        %p240 = pneg %p63
        %p241 = pneg %p60
        %p242 = pneg %p84
        %p243 = pneg %p81
        %p244 = pneg %p105
        %p245 = pneg %p102
        %p246 = pneg %p126
        %p247 = pneg %p123
        %p248 = pneg %p152
        %p249 = pneg %p149
        %s250 = sand.u32 %s139, 1
        %s251 = scalar_lea.sflag [#allocation6], %s250
        %s252 = sand.u32 %s139, 1
        %s253 = smul.addr %s252, 128
        %s254 = scalar_lea.vmem [#allocation9], %s253
        %s255 = smul.u32 4, %s21
        %p256 = scmp.lt.s32.totalorder %s255, 7
        %s257 = scalar_select %p256, %s255, 7
        %s258 = smul.addr %s257, 4
        %s259 = smul.addr %s258, 8
        %s260 = scalar_lea.vmem %s0, %s259
        %s261 = smul.u32 4, %s21
        %s262 = smul.u32 4, %s21
        %vm264 = vcmask 1040384
        %vm265 = vsmask.f32 256
        %vm266 = vmand %vm264, %vm265
        %vm267 = vcmask 1044484
        %vm268 = vsmask.f32 4352
        %vm269 = vmand %vm267, %vm268
        %vm270 = vmor %vm269, %vm266
        %v271 = vld [vmem:[#allocation2] sm:$0x11]
        %v272 = vsel %vm270, 0, %v271
        %273 = vst [vmem:[#allocation2] sm:$0x11] %v272
        %vm274 = vsmask.f32 7938
        %vm275 = vmand %vm264, %vm274
        %vm276 = vsmask.f32 7954
        %vm277 = vmand %vm267, %vm276
        %vm278 = vmor %vm277, %vm275
        %v279 = vld [vmem:[#allocation2 + $0x48] sm:$0x11]
        %v280 = vsel %vm278, 0, %v279
        %281 = vst [vmem:[#allocation2 + $0x48] sm:$0x11] %v280
        %v282 = vld [vmem:[%s260] sm:$0xff]
        %v283 = vld [vmem:[%s260 + $0x8] sm:$0xff]
        %v284 = vld [vmem:[%s260 + $0x10] sm:$0xff]
        %v285 = vld [vmem:[%s260 + $0x18] sm:$0xff]
        %v286 = vpack.c.bf16 %v283, %v282
        %v287 = vpack.c.bf16 %v285, %v284
        %vm290 = vmor %vm264, %vm267
        %v291 = vrot.slane %v286, 7
        %v292 = vrot.slane %v291, 4
        %v293 = vrot.slane %v287, 7
        %v294 = vsel %vm290, %v292, %v293
        %v295 = vrot.slane %v293, 4
        %299 = vst [vmem:[#allocation2] sm:$0xee] %v291
        %300 = vst [vmem:[#allocation2 + $0x8] sm:$0xff] %v294
        %301 = vst [vmem:[#allocation2 + $0x10] sm:$0x11] %v295
        %s302 = scalar_lea.vmem %s260, 32
        %v303 = vld [vmem:[%s302] sm:$0xff]
        %v304 = vld [vmem:[%s302 + $0x8] sm:$0xff]
        %v305 = vld [vmem:[%s302 + $0x10] sm:$0xff]
        %v306 = vld [vmem:[%s302 + $0x18] sm:$0xff]
        %v307 = vpack.c.bf16 %v304, %v303
        %v308 = vpack.c.bf16 %v306, %v305
        %vm311 = vcmask 1041408
        %vm312 = vcmask 1045508
        %vm313 = vmor %vm311, %vm312
        %v314 = vrot.slane %v307, 6
        %v315 = vrot.slane %v314, 4
        %v316 = vrot.slane %v308, 6
        %v317 = vsel %vm313, %v315, %v316
        %v318 = vrot.slane %v316, 4
        %322 = vst [vmem:[#allocation2 + $0x10] sm:$0xcc] %v314
        %323 = vst [vmem:[#allocation2 + $0x18] sm:$0xff] %v317
        %324 = vst [vmem:[#allocation2 + $0x20] sm:$0x33] %v318
        %s325 = scalar_lea.vmem %s260, 64
        %v326 = vld [vmem:[%s325] sm:$0xff]
        %v327 = vld [vmem:[%s325 + $0x8] sm:$0xff]
        %v328 = vld [vmem:[%s325 + $0x10] sm:$0xff]
        %v329 = vld [vmem:[%s325 + $0x18] sm:$0xff]
        %v330 = vpack.c.bf16 %v327, %v326
        %v331 = vpack.c.bf16 %v329, %v328
        %vm334 = vcmask 1042432
        %vm335 = vcmask 1046532
        %vm336 = vmor %vm334, %vm335
        %v337 = vrot.slane %v330, 5
        %v338 = vrot.slane %v337, 4
        %v339 = vrot.slane %v331, 5
        %v340 = vsel %vm336, %v338, %v339
        %v341 = vrot.slane %v339, 4
        %345 = vst [vmem:[#allocation2 + $0x20] sm:$0x88] %v337
        %346 = vst [vmem:[#allocation2 + $0x28] sm:$0xff] %v340
        %347 = vst [vmem:[#allocation2 + $0x30] sm:$0x77] %v341
        %s348 = scalar_lea.vmem %s260, 96
        %v349 = vld [vmem:[%s348] sm:$0xff]
        %v350 = vld [vmem:[%s348 + $0x8] sm:$0xff]
        %v351 = vld [vmem:[%s348 + $0x10] sm:$0xff]
        %v352 = vld [vmem:[%s348 + $0x18] sm:$0xff]
        %v353 = vpack.c.bf16 %v350, %v349
        %v354 = vpack.c.bf16 %v352, %v351
        %355 = vst [vmem:[#allocation2 + $0x38] sm:$0xff] %v353
        %356 = vst [vmem:[#allocation2 + $0x40] sm:$0xff] %v354
        %v357 = vld [vmem:[#allocation2] sm:$0x11]
        %v358 = vsel %vm278, 0, %v357
        %359 = vst [vmem:[#allocation2] sm:$0x11] %v358
        %vm360 = vcmask 1041409
        %vm361 = vsmask.f32 1280
        %vm362 = vmand %vm360, %vm361
        %vm363 = vcmask 1045509
        %vm364 = vsmask.f32 5376
        %vm365 = vmand %vm363, %vm364
        %vm366 = vmor %vm365, %vm362
        %v367 = vld [vmem:[#allocation2 + $0x10] sm:$0x22]
        %v368 = vsel %vm366, 0, %v367
        %369 = vst [vmem:[#allocation2 + $0x10] sm:$0x22] %v368
        %vm370 = vsmask.f32 7942
        %vm371 = vmand %vm360, %vm370
        %vm372 = vsmask.f32 7958
        %vm373 = vmand %vm363, %vm372
        %vm374 = vmor %vm373, %vm371
        %v375 = vld [vmem:[#allocation2 + $0x10] sm:$0x22]
        %v376 = vsel %vm374, 0, %v375
        %377 = vst [vmem:[#allocation2 + $0x10] sm:$0x22] %v376
        %vm378 = vcmask 1042434
        %vm379 = vsmask.f32 2304
        %vm380 = vmand %vm378, %vm379
        %vm381 = vcmask 1046534
        %vm382 = vsmask.f32 6400
        %vm383 = vmand %vm381, %vm382
        %vm384 = vmor %vm383, %vm380
        %v385 = vld [vmem:[#allocation2 + $0x20] sm:$0x44]
        %v386 = vsel %vm384, 0, %v385
        %387 = vst [vmem:[#allocation2 + $0x20] sm:$0x44] %v386
        %vm388 = vsmask.f32 7946
        %vm389 = vmand %vm378, %vm388
        %vm390 = vsmask.f32 7962
        %vm391 = vmand %vm381, %vm390
        %vm392 = vmor %vm391, %vm389
        %v393 = vld [vmem:[#allocation2 + $0x20] sm:$0x44]
        %v394 = vsel %vm392, 0, %v393
        %395 = vst [vmem:[#allocation2 + $0x20] sm:$0x44] %v394
        %vm396 = vcmask 1043459
        %vm397 = vsmask.f32 3328
        %vm398 = vmand %vm396, %vm397
        %vm399 = vcmask 1047559
        %vm400 = vsmask.f32 7424
        %vm401 = vmand %vm399, %vm400
        %vm402 = vmor %vm401, %vm398
        %v403 = vld [vmem:[#allocation2 + $0x30] sm:$0x88]
        %v404 = vsel %vm402, 0, %v403
        %405 = vst [vmem:[#allocation2 + $0x30] sm:$0x88] %v404
        %vm406 = vsmask.f32 7950
        %vm407 = vmand %vm396, %vm406
        %vm408 = vsmask.f32 7966
        %vm409 = vmand %vm399, %vm408
        %vm410 = vmor %vm409, %vm407
        %v411 = vld [vmem:[#allocation2 + $0x30] sm:$0x88]
        %v412 = vsel %vm410, 0, %v411
        %413 = vst [vmem:[#allocation2 + $0x30] sm:$0x88] %v412
        %v414 = vld [vmem:[#allocation2 + $0x48] sm:$0x11]
        %v415 = vsel %vm270, 0, %v414
        %416 = vst [vmem:[#allocation2 + $0x48] sm:$0x11] %v415
        %v417 = vld [vmem:[#allocation2] sm:$0xff]
        %v418 = vld [vmem:[#allocation2 + $0x8] sm:$0xff]
        %v419 = vld [vmem:[#allocation2 + $0x10] sm:$0xff]
        %v420 = vld [vmem:[#allocation2 + $0x18] sm:$0xff]
        %v421 = vld [vmem:[#allocation2 + $0x20] sm:$0xff]
        %v422 = vld [vmem:[#allocation2 + $0x28] sm:$0xff]
        %v423 = vld [vmem:[#allocation2 + $0x30] sm:$0xff]
        %v424 = vld [vmem:[#allocation2 + $0x38] sm:$0xff]
        %v425 = vld [vmem:[#allocation2 + $0x40] sm:$0xff]
        %v426 = vld [vmem:[#allocation4] sm:$0xff]
        %v427 = vld [vmem:[#allocation4 + $0x8] sm:$0xff]
        %v428 = vld [vmem:[#allocation4 + $0x10] sm:$0xff]
        %v429 = vld [vmem:[#allocation4 + $0x18] sm:$0xff]
        %v430 = vld [vmem:[#allocation4 + $0x20] sm:$0xff]
        %v431 = vld [vmem:[#allocation4 + $0x28] sm:$0xff]
        %v432 = vld [vmem:[#allocation4 + $0x30] sm:$0xff]
        %v433 = vld [vmem:[#allocation4 + $0x38] sm:$0xff]
        %v434 = vld [vmem:[#allocation4 + $0x40] sm:$0xff]
        %v435 = vld [vmem:[#allocation4 + $0x48] sm:$0xff]
        %v436 = vld [vmem:[#allocation4 + $0x50] sm:$0xff]
        %v437 = vld [vmem:[#allocation4 + $0x58] sm:$0xff]
        %v438 = vld [vmem:[#allocation4 + $0x60] sm:$0xff]
        %v439 = vld [vmem:[#allocation4 + $0x68] sm:$0xff]
        %v440 = vld [vmem:[#allocation4 + $0x70] sm:$0xff]
        %v441 = vld [vmem:[#allocation4 + $0x78] sm:$0xff]
        %v442 = vld [vmem:[#allocation4 + $0x80] sm:$0xff]
        %v443 = vld [vmem:[#allocation4 + $0x88] sm:$0xff]
        %v444 = vld [vmem:[#allocation4 + $0x90] sm:$0xff]
        %v445 = vld [vmem:[#allocation4 + $0x98] sm:$0xff]
        %v446 = vld [vmem:[#allocation4 + $0xa0] sm:$0xff]
        %v447 = vld [vmem:[#allocation4 + $0xa8] sm:$0xff]
        %v448 = vld [vmem:[#allocation4 + $0xb0] sm:$0xff]
        %v449 = vld [vmem:[#allocation4 + $0xb8] sm:$0xff]
        %v450 = vld [vmem:[#allocation4 + $0xc0] sm:$0xff]
        %v451 = vld [vmem:[#allocation4 + $0xc8] sm:$0xff]
        %v452 = vld [vmem:[#allocation4 + $0xd0] sm:$0xff]
        %v453 = vld [vmem:[#allocation4 + $0xd8] sm:$0xff]
        %v454 = vld [vmem:[#allocation4 + $0xe0] sm:$0xff]
        %v455 = vld [vmem:[#allocation4 + $0xe8] sm:$0xff]
        %v456 = vld [vmem:[#allocation4 + $0xf0] sm:$0xff]
        %v457 = vld [vmem:[#allocation4 + $0xf8] sm:$0xff]
        %v467 = vunpack.c.l.b16 %v417
        %v468 = vunpack.c.h.b16 %v417
        %v469 = vunpack.c.l.b16 %v418
        %v470 = vunpack.c.h.b16 %v418
        %v471 = vunpack.c.l.b16 %v419
        %v472 = vunpack.c.h.b16 %v419
        %v473 = vunpack.c.l.b16 %v420
        %v474 = vunpack.c.h.b16 %v420
        %v475 = vunpack.c.l.b16 %v421
        %v476 = vunpack.c.h.b16 %v421
        %v477 = vunpack.c.l.b16 %v422
        %v478 = vunpack.c.h.b16 %v422
        %v479 = vunpack.c.l.b16 %v423
        %v480 = vunpack.c.h.b16 %v423
        %v481 = vunpack.c.l.b16 %v424
        %v482 = vunpack.c.h.b16 %v424
        %v483 = vunpack.c.l.b16 %v425
        %v484 = vunpack.c.h.b16 %v425
        %v485 = vpack.c.b16 %v469, %v467
        %v486 = vpack.c.b16 %v470, %v468
        %v487 = vpack.c.b16 %v473, %v471
        %v488 = vpack.c.b16 %v474, %v472
        %v489 = vpack.c.b16 %v477, %v475
        %v490 = vpack.c.b16 %v478, %v476
        %v491 = vpack.c.b16 %v481, %v479
        %v492 = vpack.c.b16 %v482, %v480
        %v493 = vpack.c.b16 %v483, %v483
        %v494 = vpack.c.b16 %v484, %v484
        %v537 = vunpack.c.l.b16 %v426
        %v538 = vunpack.c.h.b16 %v426
        %v539 = vunpack.c.l.b16 %v427
        %v540 = vunpack.c.h.b16 %v427
        %v541 = vunpack.c.l.b16 %v428
        %v542 = vunpack.c.h.b16 %v428
        %v543 = vunpack.c.l.b16 %v429
        %v544 = vunpack.c.h.b16 %v429
        %v545 = vunpack.c.l.b16 %v430
        %v546 = vunpack.c.h.b16 %v430
        %v547 = vunpack.c.l.b16 %v431
        %v548 = vunpack.c.h.b16 %v431
        %v549 = vunpack.c.l.b16 %v432
        %v550 = vunpack.c.h.b16 %v432
        %v551 = vunpack.c.l.b16 %v433
        %v552 = vunpack.c.h.b16 %v433
        %v553 = vunpack.c.l.b16 %v434
        %v554 = vunpack.c.h.b16 %v434
        %v555 = vunpack.c.l.b16 %v435
        %v556 = vunpack.c.h.b16 %v435
        %v557 = vunpack.c.l.b16 %v436
        %v558 = vunpack.c.h.b16 %v436
        %v559 = vunpack.c.l.b16 %v437
        %v560 = vunpack.c.h.b16 %v437
        %v561 = vunpack.c.l.b16 %v438
        %v562 = vunpack.c.h.b16 %v438
        %v563 = vunpack.c.l.b16 %v439
        %v564 = vunpack.c.h.b16 %v439
        %v565 = vunpack.c.l.b16 %v440
        %v566 = vunpack.c.h.b16 %v440
        %v567 = vunpack.c.l.b16 %v441
        %v568 = vunpack.c.h.b16 %v441
        %v569 = vunpack.c.l.b16 %v442
        %v570 = vunpack.c.h.b16 %v442
        %v571 = vunpack.c.l.b16 %v443
        %v572 = vunpack.c.h.b16 %v443
        %v573 = vunpack.c.l.b16 %v444
        %v574 = vunpack.c.h.b16 %v444
        %v575 = vunpack.c.l.b16 %v445
        %v576 = vunpack.c.h.b16 %v445
        %v577 = vunpack.c.l.b16 %v446
        %v578 = vunpack.c.h.b16 %v446
        %v579 = vunpack.c.l.b16 %v447
        %v580 = vunpack.c.h.b16 %v447
        %v581 = vunpack.c.l.b16 %v448
        %v582 = vunpack.c.h.b16 %v448
        %v583 = vunpack.c.l.b16 %v449
        %v584 = vunpack.c.h.b16 %v449
        %v585 = vunpack.c.l.b16 %v450
        %v586 = vunpack.c.h.b16 %v450
        %v587 = vunpack.c.l.b16 %v451
        %v588 = vunpack.c.h.b16 %v451
        %v589 = vunpack.c.l.b16 %v452
        %v590 = vunpack.c.h.b16 %v452
        %v591 = vunpack.c.l.b16 %v453
        %v592 = vunpack.c.h.b16 %v453
        %v593 = vunpack.c.l.b16 %v454
        %v594 = vunpack.c.h.b16 %v454
        %v595 = vunpack.c.l.b16 %v455
        %v596 = vunpack.c.h.b16 %v455
        %v597 = vunpack.c.l.b16 %v456
        %v598 = vunpack.c.h.b16 %v456
        %v599 = vunpack.c.l.b16 %v457
        %v600 = vunpack.c.h.b16 %v457
        %v601 = vpack.c.b16 %v539, %v537
        %v602 = vpack.c.b16 %v540, %v538
        %v603 = vpack.c.b16 %v543, %v541
        %v604 = vpack.c.b16 %v544, %v542
        %v605 = vpack.c.b16 %v547, %v545
        %v606 = vpack.c.b16 %v548, %v546
        %v607 = vpack.c.b16 %v551, %v549
        %v608 = vpack.c.b16 %v552, %v550
        %v609 = vpack.c.b16 %v555, %v553
        %v610 = vpack.c.b16 %v556, %v554
        %v611 = vpack.c.b16 %v559, %v557
        %v612 = vpack.c.b16 %v560, %v558
        %v613 = vpack.c.b16 %v563, %v561
        %v614 = vpack.c.b16 %v564, %v562
        %v615 = vpack.c.b16 %v567, %v565
        %v616 = vpack.c.b16 %v568, %v566
        %v617 = vpack.c.b16 %v571, %v569
        %v618 = vpack.c.b16 %v572, %v570
        %v619 = vpack.c.b16 %v575, %v573
        %v620 = vpack.c.b16 %v576, %v574
        %v621 = vpack.c.b16 %v579, %v577
        %v622 = vpack.c.b16 %v580, %v578
        %v623 = vpack.c.b16 %v583, %v581
        %v624 = vpack.c.b16 %v584, %v582
        %v625 = vpack.c.b16 %v587, %v585
        %v626 = vpack.c.b16 %v588, %v586
        %v627 = vpack.c.b16 %v591, %v589
        %v628 = vpack.c.b16 %v592, %v590
        %v629 = vpack.c.b16 %v595, %v593
        %v630 = vpack.c.b16 %v596, %v594
        %v631 = vpack.c.b16 %v599, %v597
        %v632 = vpack.c.b16 %v600, %v598
        %665 = vmatpush.bf16.msra.mxu0 %v615
        %666 = vmatpush.bf16.msra.mxu0 %v613
        %667 = vmatpush.bf16.msra.mxu0 %v611
        %668 = vmatpush.bf16.msra.mxu0 %v609
        %669 = vmatpush.bf16.msra.mxu0 %v607
        %670 = vmatpush.bf16.msra.mxu0 %v605
        %671 = vmatpush.bf16.msra.mxu0 %v603
        %672 = vmatpush.bf16.msra.mxu0 %v601
        %673 = vmatmul.bf16.gmra.mxu0 %v485
        %v674 = vpop.f32.mrf.mxu0
        %v675 = vadd.f32 0.0, %v674
        %v676 = vpop.f32.mrf.mxu0
        %v677 = vadd.f32 0.0, %v676
        %678 = vmatmul.bf16.gmra.mxu0 %v487
        %v679 = vpop.f32.mrf.mxu0
        %v680 = vadd.f32 0.0, %v679
        %v681 = vpop.f32.mrf.mxu0
        %v682 = vadd.f32 0.0, %v681
        %683 = vmatmul.bf16.gmra.mxu0 %v489
        %v684 = vpop.f32.mrf.mxu0
        %v685 = vadd.f32 0.0, %v684
        %v686 = vpop.f32.mrf.mxu0
        %v687 = vadd.f32 0.0, %v686
        %688 = vmatmul.bf16.gmra.mxu0 %v491
        %v689 = vpop.f32.mrf.mxu0
        %v690 = vadd.f32 0.0, %v689
        %v691 = vpop.f32.mrf.mxu0
        %v692 = vadd.f32 0.0, %v691
        %693 = vmatmul.bf16.gmra.mxu0 %v493
        %v694 = vpop.f32.mrf.mxu0
        %v695 = vadd.f32 0.0, %v694
        %v696 = vpop.f32.mrf.mxu0
        %697 = vdwg.mxu0
        %698 = vmatpush.bf16.msra.mxu0 %v631
        %699 = vmatpush.bf16.msra.mxu0 %v629
        %700 = vmatpush.bf16.msra.mxu0 %v627
        %701 = vmatpush.bf16.msra.mxu0 %v625
        %702 = vmatpush.bf16.msra.mxu0 %v623
        %703 = vmatpush.bf16.msra.mxu0 %v621
        %704 = vmatpush.bf16.msra.mxu0 %v619
        %705 = vmatpush.bf16.msra.mxu0 %v617
        %706 = vmatmul.bf16.gmra.mxu0 %v486
        %v707 = vpop.f32.mrf.mxu0
        %v708 = vadd.f32 %v675, %v707
        %v709 = vpop.f32.mrf.mxu0
        %v710 = vadd.f32 %v677, %v709
        %711 = vmatmul.bf16.gmra.mxu0 %v488
        %v712 = vpop.f32.mrf.mxu0
        %v713 = vadd.f32 %v680, %v712
        %v714 = vpop.f32.mrf.mxu0
        %v715 = vadd.f32 %v682, %v714
        %716 = vmatmul.bf16.gmra.mxu0 %v490
        %v717 = vpop.f32.mrf.mxu0
        %v718 = vadd.f32 %v685, %v717
        %v719 = vpop.f32.mrf.mxu0
        %v720 = vadd.f32 %v687, %v719
        %721 = vmatmul.bf16.gmra.mxu0 %v492
        %v722 = vpop.f32.mrf.mxu0
        %v723 = vadd.f32 %v690, %v722
        %v724 = vpop.f32.mrf.mxu0
        %v725 = vadd.f32 %v692, %v724
        %726 = vmatmul.bf16.gmra.mxu0 %v494
        %v727 = vpop.f32.mrf.mxu0
        %v728 = vadd.f32 %v695, %v727
        %v729 = vpop.f32.mrf.mxu0
        %730 = vdwg.mxu0
        %731 = vmatpush.bf16.msra.mxu0 %v616
        %732 = vmatpush.bf16.msra.mxu0 %v614
        %733 = vmatpush.bf16.msra.mxu0 %v612
        %734 = vmatpush.bf16.msra.mxu0 %v610
        %735 = vmatpush.bf16.msra.mxu0 %v608
        %736 = vmatpush.bf16.msra.mxu0 %v606
        %737 = vmatpush.bf16.msra.mxu0 %v604
        %738 = vmatpush.bf16.msra.mxu0 %v602
        %739 = vmatmul.bf16.gmra.mxu0 %v485
        %v740 = vpop.f32.mrf.mxu0
        %v741 = vadd.f32 0.0, %v740
        %v742 = vpop.f32.mrf.mxu0
        %v743 = vadd.f32 0.0, %v742
        %744 = vmatmul.bf16.gmra.mxu0 %v487
        %v745 = vpop.f32.mrf.mxu0
        %v746 = vadd.f32 0.0, %v745
        %v747 = vpop.f32.mrf.mxu0
        %v748 = vadd.f32 0.0, %v747
        %749 = vmatmul.bf16.gmra.mxu0 %v489
        %v750 = vpop.f32.mrf.mxu0
        %v751 = vadd.f32 0.0, %v750
        %v752 = vpop.f32.mrf.mxu0
        %v753 = vadd.f32 0.0, %v752
        %754 = vmatmul.bf16.gmra.mxu0 %v491
        %v755 = vpop.f32.mrf.mxu0
        %v756 = vadd.f32 0.0, %v755
        %v757 = vpop.f32.mrf.mxu0
        %v758 = vadd.f32 0.0, %v757
        %759 = vmatmul.bf16.gmra.mxu0 %v493
        %v760 = vpop.f32.mrf.mxu0
        %v761 = vadd.f32 0.0, %v760
        %v762 = vpop.f32.mrf.mxu0
        %763 = vdwg.mxu0
        %764 = vmatpush.bf16.msra.mxu0 %v632
        %765 = vmatpush.bf16.msra.mxu0 %v630
        %766 = vmatpush.bf16.msra.mxu0 %v628
        %767 = vmatpush.bf16.msra.mxu0 %v626
        %768 = vmatpush.bf16.msra.mxu0 %v624
        %769 = vmatpush.bf16.msra.mxu0 %v622
        %770 = vmatpush.bf16.msra.mxu0 %v620
        %771 = vmatpush.bf16.msra.mxu0 %v618
        %772 = vmatmul.bf16.gmra.mxu0 %v486
        %v773 = vpop.f32.mrf.mxu0
        %v774 = vadd.f32 %v741, %v773
        %v775 = vpop.f32.mrf.mxu0
        %v776 = vadd.f32 %v743, %v775
        %777 = vmatmul.bf16.gmra.mxu0 %v488
        %v778 = vpop.f32.mrf.mxu0
        %v779 = vadd.f32 %v746, %v778
        %v780 = vpop.f32.mrf.mxu0
        %v781 = vadd.f32 %v748, %v780
        %782 = vmatmul.bf16.gmra.mxu0 %v490
        %v783 = vpop.f32.mrf.mxu0
        %v784 = vadd.f32 %v751, %v783
        %v785 = vpop.f32.mrf.mxu0
        %v786 = vadd.f32 %v753, %v785
        %787 = vmatmul.bf16.gmra.mxu0 %v492
        %v788 = vpop.f32.mrf.mxu0
        %v789 = vadd.f32 %v756, %v788
        %v790 = vpop.f32.mrf.mxu0
        %v791 = vadd.f32 %v758, %v790
        %792 = vmatmul.bf16.gmra.mxu0 %v494
        %v793 = vpop.f32.mrf.mxu0
        %v794 = vadd.f32 %v761, %v793
        %v795 = vpop.f32.mrf.mxu0
        %796 = vdwg.mxu0
        %vm815 = vcmask 1040384
        %v816 = vrot.slane %v708, 7
        %v817 = vrot.slane %v774, 7
        %v818 = vrot.slane %v710, 7
        %v819 = vsel %vm815, %v816, %v818
        %v820 = vrot.slane %v776, 7
        %v821 = vsel %vm815, %v817, %v820
        %v822 = vrot.slane %v713, 7
        %v823 = vsel %vm815, %v818, %v822
        %v824 = vrot.slane %v779, 7
        %v825 = vsel %vm815, %v820, %v824
        %v826 = vrot.slane %v715, 7
        %v827 = vsel %vm815, %v822, %v826
        %v828 = vrot.slane %v781, 7
        %v829 = vsel %vm815, %v824, %v828
        %v830 = vrot.slane %v718, 7
        %v831 = vsel %vm815, %v826, %v830
        %v832 = vrot.slane %v784, 7
        %v833 = vsel %vm815, %v828, %v832
        %v834 = vrot.slane %v720, 7
        %v835 = vsel %vm815, %v830, %v834
        %v836 = vrot.slane %v786, 7
        %v837 = vsel %vm815, %v832, %v836
        %v838 = vrot.slane %v723, 7
        %v839 = vsel %vm815, %v834, %v838
        %v840 = vrot.slane %v789, 7
        %v841 = vsel %vm815, %v836, %v840
        %v842 = vrot.slane %v725, 7
        %v843 = vsel %vm815, %v838, %v842
        %v844 = vrot.slane %v791, 7
        %v845 = vsel %vm815, %v840, %v844
        %v846 = vrot.slane %v728, 7
        %v847 = vsel %vm815, %v842, %v846
        %v848 = vrot.slane %v794, 7
        %v849 = vsel %vm815, %v844, %v848
        %870 = vst [vmem:[#allocation3] sm:$0xfe] %v816
        %871 = vst [vmem:[#allocation3 + $0x8] sm:$0xfe] %v817
        %872 = vst [vmem:[#allocation3 + $0x10] sm:$0xff] %v819
        %873 = vst [vmem:[#allocation3 + $0x18] sm:$0xff] %v821
        %874 = vst [vmem:[#allocation3 + $0x20] sm:$0xff] %v823
        %875 = vst [vmem:[#allocation3 + $0x28] sm:$0xff] %v825
        %876 = vst [vmem:[#allocation3 + $0x30] sm:$0xff] %v827
        %877 = vst [vmem:[#allocation3 + $0x38] sm:$0xff] %v829
        %878 = vst [vmem:[#allocation3 + $0x40] sm:$0xff] %v831
        %879 = vst [vmem:[#allocation3 + $0x48] sm:$0xff] %v833
        %880 = vst [vmem:[#allocation3 + $0x50] sm:$0xff] %v835
        %881 = vst [vmem:[#allocation3 + $0x58] sm:$0xff] %v837
        %882 = vst [vmem:[#allocation3 + $0x60] sm:$0xff] %v839
        %883 = vst [vmem:[#allocation3 + $0x68] sm:$0xff] %v841
        %884 = vst [vmem:[#allocation3 + $0x70] sm:$0xff] %v843
        %885 = vst [vmem:[#allocation3 + $0x78] sm:$0xff] %v845
        %886 = vst [vmem:[#allocation3 + $0x80] sm:$0xff] %v847
        %887 = vst [vmem:[#allocation3 + $0x88] sm:$0xff] %v849
        %888 = vst [vmem:[#allocation3 + $0x90] sm:$0x1] %v846
        %889 = vst [vmem:[#allocation3 + $0x98] sm:$0x1] %v848
        %v890 = vld [vmem:[#allocation3] sm:$0xfe]
        %v891 = vld [vmem:[#allocation3 + $0x8] sm:$0xfe]
        %v892 = vld [vmem:[#allocation3 + $0x10] sm:$0xff]
        %v893 = vld [vmem:[#allocation3 + $0x18] sm:$0xff]
        %v894 = vld [vmem:[#allocation3 + $0x20] sm:$0xff]
        %v895 = vld [vmem:[#allocation3 + $0x28] sm:$0xff]
        %v896 = vld [vmem:[#allocation3 + $0x30] sm:$0xff]
        %v897 = vld [vmem:[#allocation3 + $0x38] sm:$0xff]
        %v898 = vld [vmem:[#allocation3 + $0x40] sm:$0xff]
        %v899 = vld [vmem:[#allocation3 + $0x48] sm:$0xff]
        %v900 = vld [vmem:[#allocation3 + $0x50] sm:$0xff]
        %v901 = vld [vmem:[#allocation3 + $0x58] sm:$0xff]
        %v902 = vld [vmem:[#allocation3 + $0x60] sm:$0xff]
        %v903 = vld [vmem:[#allocation3 + $0x68] sm:$0xff]
        %v904 = vld [vmem:[#allocation3 + $0x70] sm:$0xff]
        %v905 = vld [vmem:[#allocation3 + $0x78] sm:$0xff]
        %v906 = vld [vmem:[#allocation3 + $0x80] sm:$0xff]
        %v907 = vld [vmem:[#allocation3 + $0x88] sm:$0xff]
        %v908 = vld [vmem:[#allocation3 + $0x90] sm:$0x1]
        %v909 = vld [vmem:[#allocation3 + $0x98] sm:$0x1]
        %v910 = vld [vmem:[#allocation2] sm:$0xff]
        %v911 = vld [vmem:[#allocation2 + $0x8] sm:$0xff]
        %v912 = vld [vmem:[#allocation2 + $0x10] sm:$0xff]
        %v913 = vld [vmem:[#allocation2 + $0x18] sm:$0xff]
        %v914 = vld [vmem:[#allocation2 + $0x20] sm:$0xff]
        %v915 = vld [vmem:[#allocation2 + $0x28] sm:$0xff]
        %v916 = vld [vmem:[#allocation2 + $0x30] sm:$0xff]
        %v917 = vld [vmem:[#allocation2 + $0x38] sm:$0xff]
        %v918 = vld [vmem:[#allocation2 + $0x40] sm:$0xff]
        %v919 = vld [vmem:[#allocation2 + $0x48] sm:$0x11]
        %s920 = scalar_lea.vmem [#allocation4], 256
        %v921 = vld [vmem:[%s920] sm:$0xff]
        %v922 = vld [vmem:[%s920 + $0x8] sm:$0xff]
        %v923 = vld [vmem:[%s920 + $0x10] sm:$0xff]
        %v924 = vld [vmem:[%s920 + $0x18] sm:$0xff]
        %v925 = vld [vmem:[%s920 + $0x20] sm:$0xff]
        %v926 = vld [vmem:[%s920 + $0x28] sm:$0xff]
        %v927 = vld [vmem:[%s920 + $0x30] sm:$0xff]
        %v928 = vld [vmem:[%s920 + $0x38] sm:$0xff]
        %v929 = vld [vmem:[%s920 + $0x40] sm:$0xff]
        %v930 = vld [vmem:[%s920 + $0x48] sm:$0xff]
        %v931 = vld [vmem:[%s920 + $0x50] sm:$0xff]
        %v932 = vld [vmem:[%s920 + $0x58] sm:$0xff]
        %v933 = vld [vmem:[%s920 + $0x60] sm:$0xff]
        %v934 = vld [vmem:[%s920 + $0x68] sm:$0xff]
        %v935 = vld [vmem:[%s920 + $0x70] sm:$0xff]
        %v936 = vld [vmem:[%s920 + $0x78] sm:$0xff]
        %v937 = vld [vmem:[%s920 + $0x80] sm:$0xff]
        %v938 = vld [vmem:[%s920 + $0x88] sm:$0xff]
        %v939 = vld [vmem:[%s920 + $0x90] sm:$0xff]
        %v940 = vld [vmem:[%s920 + $0x98] sm:$0xff]
        %v941 = vld [vmem:[%s920 + $0xa0] sm:$0xff]
        %v942 = vld [vmem:[%s920 + $0xa8] sm:$0xff]
        %v943 = vld [vmem:[%s920 + $0xb0] sm:$0xff]
        %v944 = vld [vmem:[%s920 + $0xb8] sm:$0xff]
        %v945 = vld [vmem:[%s920 + $0xc0] sm:$0xff]
        %v946 = vld [vmem:[%s920 + $0xc8] sm:$0xff]
        %v947 = vld [vmem:[%s920 + $0xd0] sm:$0xff]
        %v948 = vld [vmem:[%s920 + $0xd8] sm:$0xff]
        %v949 = vld [vmem:[%s920 + $0xe0] sm:$0xff]
        %v950 = vld [vmem:[%s920 + $0xe8] sm:$0xff]
        %v951 = vld [vmem:[%s920 + $0xf0] sm:$0xff]
        %v952 = vld [vmem:[%s920 + $0xf8] sm:$0xff]
        %v963 = vunpack.c.l.b16 %v910
        %v964 = vunpack.c.h.b16 %v910
        %v965 = vunpack.c.l.b16 %v911
        %v966 = vunpack.c.h.b16 %v911
        %v967 = vunpack.c.l.b16 %v912
        %v968 = vunpack.c.h.b16 %v912
        %v969 = vunpack.c.l.b16 %v913
        %v970 = vunpack.c.h.b16 %v913
        %v971 = vunpack.c.l.b16 %v914
        %v972 = vunpack.c.h.b16 %v914
        %v973 = vunpack.c.l.b16 %v915
        %v974 = vunpack.c.h.b16 %v915
        %v975 = vunpack.c.l.b16 %v916
        %v976 = vunpack.c.h.b16 %v916
        %v977 = vunpack.c.l.b16 %v917
        %v978 = vunpack.c.h.b16 %v917
        %v979 = vunpack.c.l.b16 %v918
        %v980 = vunpack.c.h.b16 %v918
        %v981 = vunpack.c.l.b16 %v919
        %v982 = vunpack.c.h.b16 %v919
        %v983 = vpack.c.b16 %v965, %v963
        %v984 = vpack.c.b16 %v966, %v964
        %v985 = vpack.c.b16 %v969, %v967
        %v986 = vpack.c.b16 %v970, %v968
        %v987 = vpack.c.b16 %v973, %v971
        %v988 = vpack.c.b16 %v974, %v972
        %v989 = vpack.c.b16 %v977, %v975
        %v990 = vpack.c.b16 %v978, %v976
        %v991 = vpack.c.b16 %v981, %v979
        %v992 = vpack.c.b16 %v982, %v980
        %v994 = vshrl.u32 %v983, 16
        %v996 = vshll.u32 %v983, 16
        %v998 = vrot.slane %v996, 1
        %v999 = vor.u32 %v994, %v998
        %v1001 = vshll.u32 %v985, 16
        %v1003 = vrot.slane %v1001, 1
        %v1004 = vsel %vm400, %v999, %v1003
        %v1006 = vshrl.u32 %v984, 16
        %v1008 = vshll.u32 %v984, 16
        %v1010 = vrot.slane %v1008, 1
        %v1011 = vor.u32 %v1006, %v1010
        %v1013 = vshll.u32 %v986, 16
        %v1015 = vrot.slane %v1013, 1
        %v1016 = vsel %vm400, %v1011, %v1015
        %v1017 = vshrl.u32 %v985, 16
        %v1019 = vor.u32 %v1017, %v1003
        %v1021 = vshll.u32 %v987, 16
        %v1023 = vrot.slane %v1021, 1
        %v1024 = vsel %vm400, %v1019, %v1023
        %v1025 = vshrl.u32 %v986, 16
        %v1027 = vor.u32 %v1025, %v1015
        %v1029 = vshll.u32 %v988, 16
        %v1031 = vrot.slane %v1029, 1
        %v1032 = vsel %vm400, %v1027, %v1031
        %v1033 = vshrl.u32 %v987, 16
        %v1035 = vor.u32 %v1033, %v1023
        %v1037 = vshll.u32 %v989, 16
        %v1039 = vrot.slane %v1037, 1
        %v1040 = vsel %vm400, %v1035, %v1039
        %v1041 = vshrl.u32 %v988, 16
        %v1043 = vor.u32 %v1041, %v1031
        %v1045 = vshll.u32 %v990, 16
        %v1047 = vrot.slane %v1045, 1
        %v1048 = vsel %vm400, %v1043, %v1047
        %v1049 = vshrl.u32 %v989, 16
        %v1051 = vor.u32 %v1049, %v1039
        %v1053 = vshll.u32 %v991, 16
        %v1055 = vrot.slane %v1053, 1
        %v1056 = vsel %vm400, %v1051, %v1055
        %v1057 = vshrl.u32 %v990, 16
        %v1059 = vor.u32 %v1057, %v1047
        %v1061 = vshll.u32 %v992, 16
        %v1063 = vrot.slane %v1061, 1
        %v1064 = vsel %vm400, %v1059, %v1063
        %v1065 = vshrl.u32 %v991, 16
        %v1067 = vor.u32 %v1065, %v1055
        %v1068 = vshrl.u32 %v992, 16
        %v1070 = vor.u32 %v1068, %v1063
        %v1113 = vunpack.c.l.b16 %v921
        %v1114 = vunpack.c.h.b16 %v921
        %v1115 = vunpack.c.l.b16 %v922
        %v1116 = vunpack.c.h.b16 %v922
        %v1117 = vunpack.c.l.b16 %v923
        %v1118 = vunpack.c.h.b16 %v923
        %v1119 = vunpack.c.l.b16 %v924
        %v1120 = vunpack.c.h.b16 %v924
        %v1121 = vunpack.c.l.b16 %v925
        %v1122 = vunpack.c.h.b16 %v925
        %v1123 = vunpack.c.l.b16 %v926
        %v1124 = vunpack.c.h.b16 %v926
        %v1125 = vunpack.c.l.b16 %v927
        %v1126 = vunpack.c.h.b16 %v927
        %v1127 = vunpack.c.l.b16 %v928
        %v1128 = vunpack.c.h.b16 %v928
        %v1129 = vunpack.c.l.b16 %v929
        %v1130 = vunpack.c.h.b16 %v929
        %v1131 = vunpack.c.l.b16 %v930
        %v1132 = vunpack.c.h.b16 %v930
        %v1133 = vunpack.c.l.b16 %v931
        %v1134 = vunpack.c.h.b16 %v931
        %v1135 = vunpack.c.l.b16 %v932
        %v1136 = vunpack.c.h.b16 %v932
        %v1137 = vunpack.c.l.b16 %v933
        %v1138 = vunpack.c.h.b16 %v933
        %v1139 = vunpack.c.l.b16 %v934
        %v1140 = vunpack.c.h.b16 %v934
        %v1141 = vunpack.c.l.b16 %v935
        %v1142 = vunpack.c.h.b16 %v935
        %v1143 = vunpack.c.l.b16 %v936
        %v1144 = vunpack.c.h.b16 %v936
        %v1145 = vunpack.c.l.b16 %v937
        %v1146 = vunpack.c.h.b16 %v937
        %v1147 = vunpack.c.l.b16 %v938
        %v1148 = vunpack.c.h.b16 %v938
        %v1149 = vunpack.c.l.b16 %v939
        %v1150 = vunpack.c.h.b16 %v939
        %v1151 = vunpack.c.l.b16 %v940
        %v1152 = vunpack.c.h.b16 %v940
        %v1153 = vunpack.c.l.b16 %v941
        %v1154 = vunpack.c.h.b16 %v941
        %v1155 = vunpack.c.l.b16 %v942
        %v1156 = vunpack.c.h.b16 %v942
        %v1157 = vunpack.c.l.b16 %v943
        %v1158 = vunpack.c.h.b16 %v943
        %v1159 = vunpack.c.l.b16 %v944
        %v1160 = vunpack.c.h.b16 %v944
        %v1161 = vunpack.c.l.b16 %v945
        %v1162 = vunpack.c.h.b16 %v945
        %v1163 = vunpack.c.l.b16 %v946
        %v1164 = vunpack.c.h.b16 %v946
        %v1165 = vunpack.c.l.b16 %v947
        %v1166 = vunpack.c.h.b16 %v947
        %v1167 = vunpack.c.l.b16 %v948
        %v1168 = vunpack.c.h.b16 %v948
        %v1169 = vunpack.c.l.b16 %v949
        %v1170 = vunpack.c.h.b16 %v949
        %v1171 = vunpack.c.l.b16 %v950
        %v1172 = vunpack.c.h.b16 %v950
        %v1173 = vunpack.c.l.b16 %v951
        %v1174 = vunpack.c.h.b16 %v951
        %v1175 = vunpack.c.l.b16 %v952
        %v1176 = vunpack.c.h.b16 %v952
        %v1177 = vpack.c.b16 %v1115, %v1113
        %v1178 = vpack.c.b16 %v1116, %v1114
        %v1179 = vpack.c.b16 %v1119, %v1117
        %v1180 = vpack.c.b16 %v1120, %v1118
        %v1181 = vpack.c.b16 %v1123, %v1121
        %v1182 = vpack.c.b16 %v1124, %v1122
        %v1183 = vpack.c.b16 %v1127, %v1125
        %v1184 = vpack.c.b16 %v1128, %v1126
        %v1185 = vpack.c.b16 %v1131, %v1129
        %v1186 = vpack.c.b16 %v1132, %v1130
        %v1187 = vpack.c.b16 %v1135, %v1133
        %v1188 = vpack.c.b16 %v1136, %v1134
        %v1189 = vpack.c.b16 %v1139, %v1137
        %v1190 = vpack.c.b16 %v1140, %v1138
        %v1191 = vpack.c.b16 %v1143, %v1141
        %v1192 = vpack.c.b16 %v1144, %v1142
        %v1193 = vpack.c.b16 %v1147, %v1145
        %v1194 = vpack.c.b16 %v1148, %v1146
        %v1195 = vpack.c.b16 %v1151, %v1149
        %v1196 = vpack.c.b16 %v1152, %v1150
        %v1197 = vpack.c.b16 %v1155, %v1153
        %v1198 = vpack.c.b16 %v1156, %v1154
        %v1199 = vpack.c.b16 %v1159, %v1157
        %v1200 = vpack.c.b16 %v1160, %v1158
        %v1201 = vpack.c.b16 %v1163, %v1161
        %v1202 = vpack.c.b16 %v1164, %v1162
        %v1203 = vpack.c.b16 %v1167, %v1165
        %v1204 = vpack.c.b16 %v1168, %v1166
        %v1205 = vpack.c.b16 %v1171, %v1169
        %v1206 = vpack.c.b16 %v1172, %v1170
        %v1207 = vpack.c.b16 %v1175, %v1173
        %v1208 = vpack.c.b16 %v1176, %v1174
        %1241 = vmatpush.bf16.msra.mxu0 %v1191
        %1242 = vmatpush.bf16.msra.mxu0 %v1189
        %1243 = vmatpush.bf16.msra.mxu0 %v1187
        %1244 = vmatpush.bf16.msra.mxu0 %v1185
        %1245 = vmatpush.bf16.msra.mxu0 %v1183
        %1246 = vmatpush.bf16.msra.mxu0 %v1181
        %1247 = vmatpush.bf16.msra.mxu0 %v1179
        %1248 = vmatpush.bf16.msra.mxu0 %v1177
        %1249 = vmatmul.bf16.gmra.mxu0 %v1004
        %v1250 = vpop.f32.mrf.mxu0
        %v1251 = vadd.f32 0.0, %v1250
        %v1252 = vpop.f32.mrf.mxu0
        %v1253 = vadd.f32 0.0, %v1252
        %1254 = vmatmul.bf16.gmra.mxu0 %v1024
        %v1255 = vpop.f32.mrf.mxu0
        %v1256 = vadd.f32 0.0, %v1255
        %v1257 = vpop.f32.mrf.mxu0
        %v1258 = vadd.f32 0.0, %v1257
        %1259 = vmatmul.bf16.gmra.mxu0 %v1040
        %v1260 = vpop.f32.mrf.mxu0
        %v1261 = vadd.f32 0.0, %v1260
        %v1262 = vpop.f32.mrf.mxu0
        %v1263 = vadd.f32 0.0, %v1262
        %1264 = vmatmul.bf16.gmra.mxu0 %v1056
        %v1265 = vpop.f32.mrf.mxu0
        %v1266 = vadd.f32 0.0, %v1265
        %v1267 = vpop.f32.mrf.mxu0
        %v1268 = vadd.f32 0.0, %v1267
        %1269 = vmatmul.bf16.gmra.mxu0 %v1067
        %v1270 = vpop.f32.mrf.mxu0
        %v1271 = vadd.f32 0.0, %v1270
        %v1272 = vpop.f32.mrf.mxu0
        %1273 = vdwg.mxu0
        %1274 = vmatpush.bf16.msra.mxu0 %v1207
        %1275 = vmatpush.bf16.msra.mxu0 %v1205
        %1276 = vmatpush.bf16.msra.mxu0 %v1203
        %1277 = vmatpush.bf16.msra.mxu0 %v1201
        %1278 = vmatpush.bf16.msra.mxu0 %v1199
        %1279 = vmatpush.bf16.msra.mxu0 %v1197
        %1280 = vmatpush.bf16.msra.mxu0 %v1195
        %1281 = vmatpush.bf16.msra.mxu0 %v1193
        %1282 = vmatmul.bf16.gmra.mxu0 %v1016
        %v1283 = vpop.f32.mrf.mxu0
        %v1284 = vadd.f32 %v1251, %v1283
        %v1285 = vpop.f32.mrf.mxu0
        %v1286 = vadd.f32 %v1253, %v1285
        %1287 = vmatmul.bf16.gmra.mxu0 %v1032
        %v1288 = vpop.f32.mrf.mxu0
        %v1289 = vadd.f32 %v1256, %v1288
        %v1290 = vpop.f32.mrf.mxu0
        %v1291 = vadd.f32 %v1258, %v1290
        %1292 = vmatmul.bf16.gmra.mxu0 %v1048
        %v1293 = vpop.f32.mrf.mxu0
        %v1294 = vadd.f32 %v1261, %v1293
        %v1295 = vpop.f32.mrf.mxu0
        %v1296 = vadd.f32 %v1263, %v1295
        %1297 = vmatmul.bf16.gmra.mxu0 %v1064
        %v1298 = vpop.f32.mrf.mxu0
        %v1299 = vadd.f32 %v1266, %v1298
        %v1300 = vpop.f32.mrf.mxu0
        %v1301 = vadd.f32 %v1268, %v1300
        %1302 = vmatmul.bf16.gmra.mxu0 %v1070
        %v1303 = vpop.f32.mrf.mxu0
        %v1304 = vadd.f32 %v1271, %v1303
        %v1305 = vpop.f32.mrf.mxu0
        %1306 = vdwg.mxu0
        %1307 = vmatpush.bf16.msra.mxu0 %v1192
        %1308 = vmatpush.bf16.msra.mxu0 %v1190
        %1309 = vmatpush.bf16.msra.mxu0 %v1188
        %1310 = vmatpush.bf16.msra.mxu0 %v1186
        %1311 = vmatpush.bf16.msra.mxu0 %v1184
        %1312 = vmatpush.bf16.msra.mxu0 %v1182
        %1313 = vmatpush.bf16.msra.mxu0 %v1180
        %1314 = vmatpush.bf16.msra.mxu0 %v1178
        %1315 = vmatmul.bf16.gmra.mxu0 %v1004
        %v1316 = vpop.f32.mrf.mxu0
        %v1317 = vadd.f32 0.0, %v1316
        %v1318 = vpop.f32.mrf.mxu0
        %v1319 = vadd.f32 0.0, %v1318
        %1320 = vmatmul.bf16.gmra.mxu0 %v1024
        %v1321 = vpop.f32.mrf.mxu0
        %v1322 = vadd.f32 0.0, %v1321
        %v1323 = vpop.f32.mrf.mxu0
        %v1324 = vadd.f32 0.0, %v1323
        %1325 = vmatmul.bf16.gmra.mxu0 %v1040
        %v1326 = vpop.f32.mrf.mxu0
        %v1327 = vadd.f32 0.0, %v1326
        %v1328 = vpop.f32.mrf.mxu0
        %v1329 = vadd.f32 0.0, %v1328
        %1330 = vmatmul.bf16.gmra.mxu0 %v1056
        %v1331 = vpop.f32.mrf.mxu0
        %v1332 = vadd.f32 0.0, %v1331
        %v1333 = vpop.f32.mrf.mxu0
        %v1334 = vadd.f32 0.0, %v1333
        %1335 = vmatmul.bf16.gmra.mxu0 %v1067
        %v1336 = vpop.f32.mrf.mxu0
        %v1337 = vadd.f32 0.0, %v1336
        %v1338 = vpop.f32.mrf.mxu0
        %1339 = vdwg.mxu0
        %1340 = vmatpush.bf16.msra.mxu0 %v1208
        %1341 = vmatpush.bf16.msra.mxu0 %v1206
        %1342 = vmatpush.bf16.msra.mxu0 %v1204
        %1343 = vmatpush.bf16.msra.mxu0 %v1202
        %1344 = vmatpush.bf16.msra.mxu0 %v1200
        %1345 = vmatpush.bf16.msra.mxu0 %v1198
        %1346 = vmatpush.bf16.msra.mxu0 %v1196
        %1347 = vmatpush.bf16.msra.mxu0 %v1194
        %1348 = vmatmul.bf16.gmra.mxu0 %v1016
        %v1349 = vpop.f32.mrf.mxu0
        %v1350 = vadd.f32 %v1317, %v1349
        %v1351 = vpop.f32.mrf.mxu0
        %v1352 = vadd.f32 %v1319, %v1351
        %1353 = vmatmul.bf16.gmra.mxu0 %v1032
        %v1354 = vpop.f32.mrf.mxu0
        %v1355 = vadd.f32 %v1322, %v1354
        %v1356 = vpop.f32.mrf.mxu0
        %v1357 = vadd.f32 %v1324, %v1356
        %1358 = vmatmul.bf16.gmra.mxu0 %v1048
        %v1359 = vpop.f32.mrf.mxu0
        %v1360 = vadd.f32 %v1327, %v1359
        %v1361 = vpop.f32.mrf.mxu0
        %v1362 = vadd.f32 %v1329, %v1361
        %1363 = vmatmul.bf16.gmra.mxu0 %v1064
        %v1364 = vpop.f32.mrf.mxu0
        %v1365 = vadd.f32 %v1332, %v1364
        %v1366 = vpop.f32.mrf.mxu0
        %v1367 = vadd.f32 %v1334, %v1366
        %1368 = vmatmul.bf16.gmra.mxu0 %v1070
        %v1369 = vpop.f32.mrf.mxu0
        %v1370 = vadd.f32 %v1337, %v1369
        %v1371 = vpop.f32.mrf.mxu0
        %1372 = vdwg.mxu0
        %v1391 = vrot.slane %v1284, 7
        %v1392 = vrot.slane %v1350, 7
        %v1393 = vrot.slane %v1286, 7
        %v1394 = vsel %vm815, %v1391, %v1393
        %v1395 = vrot.slane %v1352, 7
        %v1396 = vsel %vm815, %v1392, %v1395
        %v1397 = vrot.slane %v1289, 7
        %v1398 = vsel %vm815, %v1393, %v1397
        %v1399 = vrot.slane %v1355, 7
        %v1400 = vsel %vm815, %v1395, %v1399
        %v1401 = vrot.slane %v1291, 7
        %v1402 = vsel %vm815, %v1397, %v1401
        %v1403 = vrot.slane %v1357, 7
        %v1404 = vsel %vm815, %v1399, %v1403
        %v1405 = vrot.slane %v1294, 7
        %v1406 = vsel %vm815, %v1401, %v1405
        %v1407 = vrot.slane %v1360, 7
        %v1408 = vsel %vm815, %v1403, %v1407
        %v1409 = vrot.slane %v1296, 7
        %v1410 = vsel %vm815, %v1405, %v1409
        %v1411 = vrot.slane %v1362, 7
        %v1412 = vsel %vm815, %v1407, %v1411
        %v1413 = vrot.slane %v1299, 7
        %v1414 = vsel %vm815, %v1409, %v1413
        %v1415 = vrot.slane %v1365, 7
        %v1416 = vsel %vm815, %v1411, %v1415
        %v1417 = vrot.slane %v1301, 7
        %v1418 = vsel %vm815, %v1413, %v1417
        %v1419 = vrot.slane %v1367, 7
        %v1420 = vsel %vm815, %v1415, %v1419
        %v1421 = vrot.slane %v1304, 7
        %v1422 = vsel %vm815, %v1417, %v1421
        %v1423 = vrot.slane %v1370, 7
        %v1424 = vsel %vm815, %v1419, %v1423
        %v1445 = vadd.f32 %v890, %v1391
        %v1446 = vadd.f32 %v891, %v1392
        %v1447 = vadd.f32 %v892, %v1394
        %v1448 = vadd.f32 %v893, %v1396
        %v1449 = vadd.f32 %v894, %v1398
        %v1450 = vadd.f32 %v895, %v1400
        %v1451 = vadd.f32 %v896, %v1402
        %v1452 = vadd.f32 %v897, %v1404
        %v1453 = vadd.f32 %v898, %v1406
        %v1454 = vadd.f32 %v899, %v1408
        %v1455 = vadd.f32 %v900, %v1410
        %v1456 = vadd.f32 %v901, %v1412
        %v1457 = vadd.f32 %v902, %v1414
        %v1458 = vadd.f32 %v903, %v1416
        %v1459 = vadd.f32 %v904, %v1418
        %v1460 = vadd.f32 %v905, %v1420
        %v1461 = vadd.f32 %v906, %v1422
        %v1462 = vadd.f32 %v907, %v1424
        %v1463 = vadd.f32 %v908, %v1421
        %v1464 = vadd.f32 %v909, %v1423
        %1465 = vst [vmem:[#allocation3] sm:$0xfe] %v1445
        %1466 = vst [vmem:[#allocation3 + $0x8] sm:$0xfe] %v1446
        %1467 = vst [vmem:[#allocation3 + $0x10] sm:$0xff] %v1447
        %1468 = vst [vmem:[#allocation3 + $0x18] sm:$0xff] %v1448
        %1469 = vst [vmem:[#allocation3 + $0x20] sm:$0xff] %v1449
        %1470 = vst [vmem:[#allocation3 + $0x28] sm:$0xff] %v1450
        %1471 = vst [vmem:[#allocation3 + $0x30] sm:$0xff] %v1451
        %1472 = vst [vmem:[#allocation3 + $0x38] sm:$0xff] %v1452
        %1473 = vst [vmem:[#allocation3 + $0x40] sm:$0xff] %v1453
        %1474 = vst [vmem:[#allocation3 + $0x48] sm:$0xff] %v1454
        %1475 = vst [vmem:[#allocation3 + $0x50] sm:$0xff] %v1455
        %1476 = vst [vmem:[#allocation3 + $0x58] sm:$0xff] %v1456
        %1477 = vst [vmem:[#allocation3 + $0x60] sm:$0xff] %v1457
        %1478 = vst [vmem:[#allocation3 + $0x68] sm:$0xff] %v1458
        %1479 = vst [vmem:[#allocation3 + $0x70] sm:$0xff] %v1459
        %1480 = vst [vmem:[#allocation3 + $0x78] sm:$0xff] %v1460
        %1481 = vst [vmem:[#allocation3 + $0x80] sm:$0xff] %v1461
        %1482 = vst [vmem:[#allocation3 + $0x88] sm:$0xff] %v1462
        %1483 = vst [vmem:[#allocation3 + $0x90] sm:$0x1] %v1463
        %1484 = vst [vmem:[#allocation3 + $0x98] sm:$0x1] %v1464
        %v1485 = vld [vmem:[#allocation3] sm:$0xfe]
        %v1486 = vld [vmem:[#allocation3 + $0x8] sm:$0xfe]
        %v1487 = vld [vmem:[#allocation3 + $0x10] sm:$0xff]
        %v1488 = vld [vmem:[#allocation3 + $0x18] sm:$0xff]
        %v1489 = vld [vmem:[#allocation3 + $0x20] sm:$0xff]
        %v1490 = vld [vmem:[#allocation3 + $0x28] sm:$0xff]
        %v1491 = vld [vmem:[#allocation3 + $0x30] sm:$0xff]
        %v1492 = vld [vmem:[#allocation3 + $0x38] sm:$0xff]
        %v1493 = vld [vmem:[#allocation3 + $0x40] sm:$0xff]
        %v1494 = vld [vmem:[#allocation3 + $0x48] sm:$0xff]
        %v1495 = vld [vmem:[#allocation3 + $0x50] sm:$0xff]
        %v1496 = vld [vmem:[#allocation3 + $0x58] sm:$0xff]
        %v1497 = vld [vmem:[#allocation3 + $0x60] sm:$0xff]
        %v1498 = vld [vmem:[#allocation3 + $0x68] sm:$0xff]
        %v1499 = vld [vmem:[#allocation3 + $0x70] sm:$0xff]
        %v1500 = vld [vmem:[#allocation3 + $0x78] sm:$0xff]
        %v1501 = vld [vmem:[#allocation3 + $0x80] sm:$0xff]
        %v1502 = vld [vmem:[#allocation3 + $0x88] sm:$0xff]
        %v1503 = vld [vmem:[#allocation3 + $0x90] sm:$0x1]
        %v1504 = vld [vmem:[#allocation3 + $0x98] sm:$0x1]
        %v1505 = vld [vmem:[#allocation2] sm:$0xee]
        %v1506 = vld [vmem:[#allocation2 + $0x8] sm:$0xff]
        %v1507 = vld [vmem:[#allocation2 + $0x10] sm:$0xff]
        %v1508 = vld [vmem:[#allocation2 + $0x18] sm:$0xff]
        %v1509 = vld [vmem:[#allocation2 + $0x20] sm:$0xff]
        %v1510 = vld [vmem:[#allocation2 + $0x28] sm:$0xff]
        %v1511 = vld [vmem:[#allocation2 + $0x30] sm:$0xff]
        %v1512 = vld [vmem:[#allocation2 + $0x38] sm:$0xff]
        %v1513 = vld [vmem:[#allocation2 + $0x40] sm:$0xff]
        %v1514 = vld [vmem:[#allocation2 + $0x48] sm:$0x11]
        %s1515 = scalar_lea.vmem [#allocation4], 512
        %v1516 = vld [vmem:[%s1515] sm:$0xff]
        %v1517 = vld [vmem:[%s1515 + $0x8] sm:$0xff]
        %v1518 = vld [vmem:[%s1515 + $0x10] sm:$0xff]
        %v1519 = vld [vmem:[%s1515 + $0x18] sm:$0xff]
        %v1520 = vld [vmem:[%s1515 + $0x20] sm:$0xff]
        %v1521 = vld [vmem:[%s1515 + $0x28] sm:$0xff]
        %v1522 = vld [vmem:[%s1515 + $0x30] sm:$0xff]
        %v1523 = vld [vmem:[%s1515 + $0x38] sm:$0xff]
        %v1524 = vld [vmem:[%s1515 + $0x40] sm:$0xff]
        %v1525 = vld [vmem:[%s1515 + $0x48] sm:$0xff]
        %v1526 = vld [vmem:[%s1515 + $0x50] sm:$0xff]
        %v1527 = vld [vmem:[%s1515 + $0x58] sm:$0xff]
        %v1528 = vld [vmem:[%s1515 + $0x60] sm:$0xff]
        %v1529 = vld [vmem:[%s1515 + $0x68] sm:$0xff]
        %v1530 = vld [vmem:[%s1515 + $0x70] sm:$0xff]
        %v1531 = vld [vmem:[%s1515 + $0x78] sm:$0xff]
        %v1532 = vld [vmem:[%s1515 + $0x80] sm:$0xff]
        %v1533 = vld [vmem:[%s1515 + $0x88] sm:$0xff]
        %v1534 = vld [vmem:[%s1515 + $0x90] sm:$0xff]
        %v1535 = vld [vmem:[%s1515 + $0x98] sm:$0xff]
        %v1536 = vld [vmem:[%s1515 + $0xa0] sm:$0xff]
        %v1537 = vld [vmem:[%s1515 + $0xa8] sm:$0xff]
        %v1538 = vld [vmem:[%s1515 + $0xb0] sm:$0xff]
        %v1539 = vld [vmem:[%s1515 + $0xb8] sm:$0xff]
        %v1540 = vld [vmem:[%s1515 + $0xc0] sm:$0xff]
        %v1541 = vld [vmem:[%s1515 + $0xc8] sm:$0xff]
        %v1542 = vld [vmem:[%s1515 + $0xd0] sm:$0xff]
        %v1543 = vld [vmem:[%s1515 + $0xd8] sm:$0xff]
        %v1544 = vld [vmem:[%s1515 + $0xe0] sm:$0xff]
        %v1545 = vld [vmem:[%s1515 + $0xe8] sm:$0xff]
        %v1546 = vld [vmem:[%s1515 + $0xf0] sm:$0xff]
        %v1547 = vld [vmem:[%s1515 + $0xf8] sm:$0xff]
        %v1558 = vunpack.c.l.b16 %v1505
        %v1559 = vunpack.c.h.b16 %v1505
        %v1560 = vunpack.c.l.b16 %v1506
        %v1561 = vunpack.c.h.b16 %v1506
        %v1562 = vunpack.c.l.b16 %v1507
        %v1563 = vunpack.c.h.b16 %v1507
        %v1564 = vunpack.c.l.b16 %v1508
        %v1565 = vunpack.c.h.b16 %v1508
        %v1566 = vunpack.c.l.b16 %v1509
        %v1567 = vunpack.c.h.b16 %v1509
        %v1568 = vunpack.c.l.b16 %v1510
        %v1569 = vunpack.c.h.b16 %v1510
        %v1570 = vunpack.c.l.b16 %v1511
        %v1571 = vunpack.c.h.b16 %v1511
        %v1572 = vunpack.c.l.b16 %v1512
        %v1573 = vunpack.c.h.b16 %v1512
        %v1574 = vunpack.c.l.b16 %v1513
        %v1575 = vunpack.c.h.b16 %v1513
        %v1576 = vunpack.c.l.b16 %v1514
        %v1577 = vunpack.c.h.b16 %v1514
        %v1578 = vpack.c.b16 %v1560, %v1558
        %v1579 = vpack.c.b16 %v1561, %v1559
        %v1580 = vpack.c.b16 %v1564, %v1562
        %v1581 = vpack.c.b16 %v1565, %v1563
        %v1582 = vpack.c.b16 %v1568, %v1566
        %v1583 = vpack.c.b16 %v1569, %v1567
        %v1584 = vpack.c.b16 %v1572, %v1570
        %v1585 = vpack.c.b16 %v1573, %v1571
        %v1586 = vpack.c.b16 %v1576, %v1574
        %v1587 = vpack.c.b16 %v1577, %v1575
        %vm1588 = vcmask 1046528
        %v1589 = vrot.slane %v1578, 1
        %v1590 = vrot.slane %v1580, 1
        %v1591 = vsel %vm1588, %v1589, %v1590
        %v1592 = vrot.slane %v1579, 1
        %v1593 = vrot.slane %v1581, 1
        %v1594 = vsel %vm1588, %v1592, %v1593
        %v1595 = vrot.slane %v1582, 1
        %v1596 = vsel %vm1588, %v1590, %v1595
        %v1597 = vrot.slane %v1583, 1
        %v1598 = vsel %vm1588, %v1593, %v1597
        %v1599 = vrot.slane %v1584, 1
        %v1600 = vsel %vm1588, %v1595, %v1599
        %v1601 = vrot.slane %v1585, 1
        %v1602 = vsel %vm1588, %v1597, %v1601
        %v1603 = vrot.slane %v1586, 1
        %v1604 = vsel %vm1588, %v1599, %v1603
        %v1605 = vrot.slane %v1587, 1
        %v1606 = vsel %vm1588, %v1601, %v1605
        %v1649 = vunpack.c.l.b16 %v1516
        %v1650 = vunpack.c.h.b16 %v1516
        %v1651 = vunpack.c.l.b16 %v1517
        %v1652 = vunpack.c.h.b16 %v1517
        %v1653 = vunpack.c.l.b16 %v1518
        %v1654 = vunpack.c.h.b16 %v1518
        %v1655 = vunpack.c.l.b16 %v1519
        %v1656 = vunpack.c.h.b16 %v1519
        %v1657 = vunpack.c.l.b16 %v1520
        %v1658 = vunpack.c.h.b16 %v1520
        %v1659 = vunpack.c.l.b16 %v1521
        %v1660 = vunpack.c.h.b16 %v1521
        %v1661 = vunpack.c.l.b16 %v1522
        %v1662 = vunpack.c.h.b16 %v1522
        %v1663 = vunpack.c.l.b16 %v1523
        %v1664 = vunpack.c.h.b16 %v1523
        %v1665 = vunpack.c.l.b16 %v1524
        %v1666 = vunpack.c.h.b16 %v1524
        %v1667 = vunpack.c.l.b16 %v1525
        %v1668 = vunpack.c.h.b16 %v1525
        %v1669 = vunpack.c.l.b16 %v1526
        %v1670 = vunpack.c.h.b16 %v1526
        %v1671 = vunpack.c.l.b16 %v1527
        %v1672 = vunpack.c.h.b16 %v1527
        %v1673 = vunpack.c.l.b16 %v1528
        %v1674 = vunpack.c.h.b16 %v1528
        %v1675 = vunpack.c.l.b16 %v1529
        %v1676 = vunpack.c.h.b16 %v1529
        %v1677 = vunpack.c.l.b16 %v1530
        %v1678 = vunpack.c.h.b16 %v1530
        %v1679 = vunpack.c.l.b16 %v1531
        %v1680 = vunpack.c.h.b16 %v1531
        %v1681 = vunpack.c.l.b16 %v1532
        %v1682 = vunpack.c.h.b16 %v1532
        %v1683 = vunpack.c.l.b16 %v1533
        %v1684 = vunpack.c.h.b16 %v1533
        %v1685 = vunpack.c.l.b16 %v1534
        %v1686 = vunpack.c.h.b16 %v1534
        %v1687 = vunpack.c.l.b16 %v1535
        %v1688 = vunpack.c.h.b16 %v1535
        %v1689 = vunpack.c.l.b16 %v1536
        %v1690 = vunpack.c.h.b16 %v1536
        %v1691 = vunpack.c.l.b16 %v1537
        %v1692 = vunpack.c.h.b16 %v1537
        %v1693 = vunpack.c.l.b16 %v1538
        %v1694 = vunpack.c.h.b16 %v1538
        %v1695 = vunpack.c.l.b16 %v1539
        %v1696 = vunpack.c.h.b16 %v1539
        %v1697 = vunpack.c.l.b16 %v1540
        %v1698 = vunpack.c.h.b16 %v1540
        %v1699 = vunpack.c.l.b16 %v1541
        %v1700 = vunpack.c.h.b16 %v1541
        %v1701 = vunpack.c.l.b16 %v1542
        %v1702 = vunpack.c.h.b16 %v1542
        %v1703 = vunpack.c.l.b16 %v1543
        %v1704 = vunpack.c.h.b16 %v1543
        %v1705 = vunpack.c.l.b16 %v1544
        %v1706 = vunpack.c.h.b16 %v1544
        %v1707 = vunpack.c.l.b16 %v1545
        %v1708 = vunpack.c.h.b16 %v1545
        %v1709 = vunpack.c.l.b16 %v1546
        %v1710 = vunpack.c.h.b16 %v1546
        %v1711 = vunpack.c.l.b16 %v1547
        %v1712 = vunpack.c.h.b16 %v1547
        %v1713 = vpack.c.b16 %v1651, %v1649
        %v1714 = vpack.c.b16 %v1652, %v1650
        %v1715 = vpack.c.b16 %v1655, %v1653
        %v1716 = vpack.c.b16 %v1656, %v1654
        %v1717 = vpack.c.b16 %v1659, %v1657
        %v1718 = vpack.c.b16 %v1660, %v1658
        %v1719 = vpack.c.b16 %v1663, %v1661
        %v1720 = vpack.c.b16 %v1664, %v1662
        %v1721 = vpack.c.b16 %v1667, %v1665
        %v1722 = vpack.c.b16 %v1668, %v1666
        %v1723 = vpack.c.b16 %v1671, %v1669
        %v1724 = vpack.c.b16 %v1672, %v1670
        %v1725 = vpack.c.b16 %v1675, %v1673
        %v1726 = vpack.c.b16 %v1676, %v1674
        %v1727 = vpack.c.b16 %v1679, %v1677
        %v1728 = vpack.c.b16 %v1680, %v1678
        %v1729 = vpack.c.b16 %v1683, %v1681
        %v1730 = vpack.c.b16 %v1684, %v1682
        %v1731 = vpack.c.b16 %v1687, %v1685
        %v1732 = vpack.c.b16 %v1688, %v1686
        %v1733 = vpack.c.b16 %v1691, %v1689
        %v1734 = vpack.c.b16 %v1692, %v1690
        %v1735 = vpack.c.b16 %v1695, %v1693
        %v1736 = vpack.c.b16 %v1696, %v1694
        %v1737 = vpack.c.b16 %v1699, %v1697
        %v1738 = vpack.c.b16 %v1700, %v1698
        %v1739 = vpack.c.b16 %v1703, %v1701
        %v1740 = vpack.c.b16 %v1704, %v1702
        %v1741 = vpack.c.b16 %v1707, %v1705
        %v1742 = vpack.c.b16 %v1708, %v1706
        %v1743 = vpack.c.b16 %v1711, %v1709
        %v1744 = vpack.c.b16 %v1712, %v1710
        %1777 = vmatpush.bf16.msra.mxu0 %v1727
        %1778 = vmatpush.bf16.msra.mxu0 %v1725
        %1779 = vmatpush.bf16.msra.mxu0 %v1723
        %1780 = vmatpush.bf16.msra.mxu0 %v1721
        %1781 = vmatpush.bf16.msra.mxu0 %v1719
        %1782 = vmatpush.bf16.msra.mxu0 %v1717
        %1783 = vmatpush.bf16.msra.mxu0 %v1715
        %1784 = vmatpush.bf16.msra.mxu0 %v1713
        %1785 = vmatmul.bf16.gmra.mxu0 %v1591
        %v1786 = vpop.f32.mrf.mxu0
        %v1787 = vadd.f32 0.0, %v1786
        %v1788 = vpop.f32.mrf.mxu0
        %v1789 = vadd.f32 0.0, %v1788
        %1790 = vmatmul.bf16.gmra.mxu0 %v1596
        %v1791 = vpop.f32.mrf.mxu0
        %v1792 = vadd.f32 0.0, %v1791
        %v1793 = vpop.f32.mrf.mxu0
        %v1794 = vadd.f32 0.0, %v1793
        %1795 = vmatmul.bf16.gmra.mxu0 %v1600
        %v1796 = vpop.f32.mrf.mxu0
        %v1797 = vadd.f32 0.0, %v1796
        %v1798 = vpop.f32.mrf.mxu0
        %v1799 = vadd.f32 0.0, %v1798
        %1800 = vmatmul.bf16.gmra.mxu0 %v1604
        %v1801 = vpop.f32.mrf.mxu0
        %v1802 = vadd.f32 0.0, %v1801
        %v1803 = vpop.f32.mrf.mxu0
        %v1804 = vadd.f32 0.0, %v1803
        %1805 = vmatmul.bf16.gmra.mxu0 %v1603
        %v1806 = vpop.f32.mrf.mxu0
        %v1807 = vadd.f32 0.0, %v1806
        %v1808 = vpop.f32.mrf.mxu0
        %1809 = vdwg.mxu0
        %1810 = vmatpush.bf16.msra.mxu0 %v1743
        %1811 = vmatpush.bf16.msra.mxu0 %v1741
        %1812 = vmatpush.bf16.msra.mxu0 %v1739
        %1813 = vmatpush.bf16.msra.mxu0 %v1737
        %1814 = vmatpush.bf16.msra.mxu0 %v1735
        %1815 = vmatpush.bf16.msra.mxu0 %v1733
        %1816 = vmatpush.bf16.msra.mxu0 %v1731
        %1817 = vmatpush.bf16.msra.mxu0 %v1729
        %1818 = vmatmul.bf16.gmra.mxu0 %v1594
        %v1819 = vpop.f32.mrf.mxu0
        %v1820 = vadd.f32 %v1787, %v1819
        %v1821 = vpop.f32.mrf.mxu0
        %v1822 = vadd.f32 %v1789, %v1821
        %1823 = vmatmul.bf16.gmra.mxu0 %v1598
        %v1824 = vpop.f32.mrf.mxu0
        %v1825 = vadd.f32 %v1792, %v1824
        %v1826 = vpop.f32.mrf.mxu0
        %v1827 = vadd.f32 %v1794, %v1826
        %1828 = vmatmul.bf16.gmra.mxu0 %v1602
        %v1829 = vpop.f32.mrf.mxu0
        %v1830 = vadd.f32 %v1797, %v1829
        %v1831 = vpop.f32.mrf.mxu0
        %v1832 = vadd.f32 %v1799, %v1831
        %1833 = vmatmul.bf16.gmra.mxu0 %v1606
        %v1834 = vpop.f32.mrf.mxu0
        %v1835 = vadd.f32 %v1802, %v1834
        %v1836 = vpop.f32.mrf.mxu0
        %v1837 = vadd.f32 %v1804, %v1836
        %1838 = vmatmul.bf16.gmra.mxu0 %v1605
        %v1839 = vpop.f32.mrf.mxu0
        %v1840 = vadd.f32 %v1807, %v1839
        %v1841 = vpop.f32.mrf.mxu0
        %1842 = vdwg.mxu0
        %1843 = vmatpush.bf16.msra.mxu0 %v1728
        %1844 = vmatpush.bf16.msra.mxu0 %v1726
        %1845 = vmatpush.bf16.msra.mxu0 %v1724
        %1846 = vmatpush.bf16.msra.mxu0 %v1722
        %1847 = vmatpush.bf16.msra.mxu0 %v1720
        %1848 = vmatpush.bf16.msra.mxu0 %v1718
        %1849 = vmatpush.bf16.msra.mxu0 %v1716
        %1850 = vmatpush.bf16.msra.mxu0 %v1714
        %1851 = vmatmul.bf16.gmra.mxu0 %v1591
        %v1852 = vpop.f32.mrf.mxu0
        %v1853 = vadd.f32 0.0, %v1852
        %v1854 = vpop.f32.mrf.mxu0
        %v1855 = vadd.f32 0.0, %v1854
        %1856 = vmatmul.bf16.gmra.mxu0 %v1596
        %v1857 = vpop.f32.mrf.mxu0
        %v1858 = vadd.f32 0.0, %v1857
        %v1859 = vpop.f32.mrf.mxu0
        %v1860 = vadd.f32 0.0, %v1859
        %1861 = vmatmul.bf16.gmra.mxu0 %v1600
        %v1862 = vpop.f32.mrf.mxu0
        %v1863 = vadd.f32 0.0, %v1862
        %v1864 = vpop.f32.mrf.mxu0
        %v1865 = vadd.f32 0.0, %v1864
        %1866 = vmatmul.bf16.gmra.mxu0 %v1604
        %v1867 = vpop.f32.mrf.mxu0
        %v1868 = vadd.f32 0.0, %v1867
        %v1869 = vpop.f32.mrf.mxu0
        %v1870 = vadd.f32 0.0, %v1869
        %1871 = vmatmul.bf16.gmra.mxu0 %v1603
        %v1872 = vpop.f32.mrf.mxu0
        %v1873 = vadd.f32 0.0, %v1872
        %v1874 = vpop.f32.mrf.mxu0
        %1875 = vdwg.mxu0
        %1876 = vmatpush.bf16.msra.mxu0 %v1744
        %1877 = vmatpush.bf16.msra.mxu0 %v1742
        %1878 = vmatpush.bf16.msra.mxu0 %v1740
        %1879 = vmatpush.bf16.msra.mxu0 %v1738
        %1880 = vmatpush.bf16.msra.mxu0 %v1736
        %1881 = vmatpush.bf16.msra.mxu0 %v1734
        %1882 = vmatpush.bf16.msra.mxu0 %v1732
        %1883 = vmatpush.bf16.msra.mxu0 %v1730
        %1884 = vmatmul.bf16.gmra.mxu0 %v1594
        %v1885 = vpop.f32.mrf.mxu0
        %v1886 = vadd.f32 %v1853, %v1885
        %v1887 = vpop.f32.mrf.mxu0
        %v1888 = vadd.f32 %v1855, %v1887
        %1889 = vmatmul.bf16.gmra.mxu0 %v1598
        %v1890 = vpop.f32.mrf.mxu0
        %v1891 = vadd.f32 %v1858, %v1890
        %v1892 = vpop.f32.mrf.mxu0
        %v1893 = vadd.f32 %v1860, %v1892
        %1894 = vmatmul.bf16.gmra.mxu0 %v1602
        %v1895 = vpop.f32.mrf.mxu0
        %v1896 = vadd.f32 %v1863, %v1895
        %v1897 = vpop.f32.mrf.mxu0
        %v1898 = vadd.f32 %v1865, %v1897
        %1899 = vmatmul.bf16.gmra.mxu0 %v1606
        %v1900 = vpop.f32.mrf.mxu0
        %v1901 = vadd.f32 %v1868, %v1900
        %v1902 = vpop.f32.mrf.mxu0
        %v1903 = vadd.f32 %v1870, %v1902
        %1904 = vmatmul.bf16.gmra.mxu0 %v1605
        %v1905 = vpop.f32.mrf.mxu0
        %v1906 = vadd.f32 %v1873, %v1905
        %v1907 = vpop.f32.mrf.mxu0
        %1908 = vdwg.mxu0
        %v1927 = vrot.slane %v1820, 7
        %v1928 = vrot.slane %v1886, 7
        %v1929 = vrot.slane %v1822, 7
        %v1930 = vsel %vm815, %v1927, %v1929
        %v1931 = vrot.slane %v1888, 7
        %v1932 = vsel %vm815, %v1928, %v1931
        %v1933 = vrot.slane %v1825, 7
        %v1934 = vsel %vm815, %v1929, %v1933
        %v1935 = vrot.slane %v1891, 7
        %v1936 = vsel %vm815, %v1931, %v1935
        %v1937 = vrot.slane %v1827, 7
        %v1938 = vsel %vm815, %v1933, %v1937
        %v1939 = vrot.slane %v1893, 7
        %v1940 = vsel %vm815, %v1935, %v1939
        %v1941 = vrot.slane %v1830, 7
        %v1942 = vsel %vm815, %v1937, %v1941
        %v1943 = vrot.slane %v1896, 7
        %v1944 = vsel %vm815, %v1939, %v1943
        %v1945 = vrot.slane %v1832, 7
        %v1946 = vsel %vm815, %v1941, %v1945
        %v1947 = vrot.slane %v1898, 7
        %v1948 = vsel %vm815, %v1943, %v1947
        %v1949 = vrot.slane %v1835, 7
        %v1950 = vsel %vm815, %v1945, %v1949
        %v1951 = vrot.slane %v1901, 7
        %v1952 = vsel %vm815, %v1947, %v1951
        %v1953 = vrot.slane %v1837, 7
        %v1954 = vsel %vm815, %v1949, %v1953
        %v1955 = vrot.slane %v1903, 7
        %v1956 = vsel %vm815, %v1951, %v1955
        %v1957 = vrot.slane %v1840, 7
        %v1958 = vsel %vm815, %v1953, %v1957
        %v1959 = vrot.slane %v1906, 7
        %v1960 = vsel %vm815, %v1955, %v1959
        %v1981 = vadd.f32 %v1485, %v1927
        %v1982 = vadd.f32 %v1486, %v1928
        %v1983 = vadd.f32 %v1487, %v1930
        %v1984 = vadd.f32 %v1488, %v1932
        %v1985 = vadd.f32 %v1489, %v1934
        %v1986 = vadd.f32 %v1490, %v1936
        %v1987 = vadd.f32 %v1491, %v1938
        %v1988 = vadd.f32 %v1492, %v1940
        %v1989 = vadd.f32 %v1493, %v1942
        %v1990 = vadd.f32 %v1494, %v1944
        %v1991 = vadd.f32 %v1495, %v1946
        %v1992 = vadd.f32 %v1496, %v1948
        %v1993 = vadd.f32 %v1497, %v1950
        %v1994 = vadd.f32 %v1498, %v1952
        %v1995 = vadd.f32 %v1499, %v1954
        %v1996 = vadd.f32 %v1500, %v1956
        %v1997 = vadd.f32 %v1501, %v1958
        %v1998 = vadd.f32 %v1502, %v1960
        %v1999 = vadd.f32 %v1503, %v1957
        %v2000 = vadd.f32 %v1504, %v1959
        %2001 = vst [vmem:[#allocation3] sm:$0xfe] %v1981
        %2002 = vst [vmem:[#allocation3 + $0x8] sm:$0xfe] %v1982
        %2003 = vst [vmem:[#allocation3 + $0x10] sm:$0xff] %v1983
        %2004 = vst [vmem:[#allocation3 + $0x18] sm:$0xff] %v1984
        %2005 = vst [vmem:[#allocation3 + $0x20] sm:$0xff] %v1985
        %2006 = vst [vmem:[#allocation3 + $0x28] sm:$0xff] %v1986
        %2007 = vst [vmem:[#allocation3 + $0x30] sm:$0xff] %v1987
        %2008 = vst [vmem:[#allocation3 + $0x38] sm:$0xff] %v1988
        %2009 = vst [vmem:[#allocation3 + $0x40] sm:$0xff] %v1989
        %2010 = vst [vmem:[#allocation3 + $0x48] sm:$0xff] %v1990
        %2011 = vst [vmem:[#allocation3 + $0x50] sm:$0xff] %v1991
        %2012 = vst [vmem:[#allocation3 + $0x58] sm:$0xff] %v1992
        %2013 = vst [vmem:[#allocation3 + $0x60] sm:$0xff] %v1993
        %2014 = vst [vmem:[#allocation3 + $0x68] sm:$0xff] %v1994
        %2015 = vst [vmem:[#allocation3 + $0x70] sm:$0xff] %v1995
        %2016 = vst [vmem:[#allocation3 + $0x78] sm:$0xff] %v1996
        %2017 = vst [vmem:[#allocation3 + $0x80] sm:$0xff] %v1997
        %2018 = vst [vmem:[#allocation3 + $0x88] sm:$0xff] %v1998
        %2019 = vst [vmem:[#allocation3 + $0x90] sm:$0x1] %v1999
        %2020 = vst [vmem:[#allocation3 + $0x98] sm:$0x1] %v2000
        %v2021 = vld [vmem:[#allocation3] sm:$0xfe]
        %v2022 = vld [vmem:[#allocation3 + $0x8] sm:$0xfe]
        %v2023 = vld [vmem:[#allocation3 + $0x10] sm:$0xff]
        %v2024 = vld [vmem:[#allocation3 + $0x18] sm:$0xff]
        %v2025 = vld [vmem:[#allocation3 + $0x20] sm:$0xff]
        %v2026 = vld [vmem:[#allocation3 + $0x28] sm:$0xff]
        %v2027 = vld [vmem:[#allocation3 + $0x30] sm:$0xff]
        %v2028 = vld [vmem:[#allocation3 + $0x38] sm:$0xff]
        %v2029 = vld [vmem:[#allocation3 + $0x40] sm:$0xff]
        %v2030 = vld [vmem:[#allocation3 + $0x48] sm:$0xff]
        %v2031 = vld [vmem:[#allocation3 + $0x50] sm:$0xff]
        %v2032 = vld [vmem:[#allocation3 + $0x58] sm:$0xff]
        %v2033 = vld [vmem:[#allocation3 + $0x60] sm:$0xff]
        %v2034 = vld [vmem:[#allocation3 + $0x68] sm:$0xff]
        %v2035 = vld [vmem:[#allocation3 + $0x70] sm:$0xff]
        %v2036 = vld [vmem:[#allocation3 + $0x78] sm:$0xff]
        %v2037 = vld [vmem:[#allocation3 + $0x80] sm:$0xff]
        %v2038 = vld [vmem:[#allocation3 + $0x88] sm:$0xff]
        %v2039 = vld [vmem:[#allocation3 + $0x90] sm:$0x1]
        %v2040 = vld [vmem:[#allocation3 + $0x98] sm:$0x1]
        %v2041 = vmax.f32 %v2021, 0.0
        %v2042 = vmax.f32 %v2022, 0.0
        %v2043 = vmax.f32 %v2023, 0.0
        %v2044 = vmax.f32 %v2024, 0.0
        %v2045 = vmax.f32 %v2025, 0.0
        %v2046 = vmax.f32 %v2026, 0.0
        %v2047 = vmax.f32 %v2027, 0.0
        %v2048 = vmax.f32 %v2028, 0.0
        %v2049 = vmax.f32 %v2029, 0.0
        %v2050 = vmax.f32 %v2030, 0.0
        %v2051 = vmax.f32 %v2031, 0.0
        %v2052 = vmax.f32 %v2032, 0.0
        %v2053 = vmax.f32 %v2033, 0.0
        %v2054 = vmax.f32 %v2034, 0.0
        %v2055 = vmax.f32 %v2035, 0.0
        %v2056 = vmax.f32 %v2036, 0.0
        %v2057 = vmax.f32 %v2037, 0.0
        %v2058 = vmax.f32 %v2038, 0.0
        %v2059 = vmax.f32 %v2039, 0.0
        %v2060 = vmax.f32 %v2040, 0.0
        %v2061 = vpack.c.bf16 %v2042, %v2041
        %v2062 = vpack.c.bf16 %v2044, %v2043
        %v2063 = vpack.c.bf16 %v2046, %v2045
        %v2064 = vpack.c.bf16 %v2048, %v2047
        %v2065 = vpack.c.bf16 %v2050, %v2049
        %v2066 = vpack.c.bf16 %v2052, %v2051
        %v2067 = vpack.c.bf16 %v2054, %v2053
        %v2068 = vpack.c.bf16 %v2056, %v2055
        %v2069 = vpack.c.bf16 %v2058, %v2057
        %v2070 = vpack.c.bf16 %v2060, %v2059
        %vm2071 = vcmask 1043456
        %vm2072 = vmand %vm2071, %vm274
        %vm2073 = vcmask 1047556
        %vm2074 = vmand %vm2073, %vm276
        %vm2075 = vmor %vm2074, %vm2072
        %v2076 = vld [vmem:[#allocation2] sm:$0xff]
        %v2077 = vsel %vm2075, %v2061, %v2076
        %2078 = vst [vmem:[#allocation2] sm:$0xff] %v2077
        %2079 = vst [vmem:[#allocation2 + $0x8] sm:$0xff] %v2062
        %2080 = vst [vmem:[#allocation2 + $0x10] sm:$0xff] %v2063
        %2081 = vst [vmem:[#allocation2 + $0x18] sm:$0xff] %v2064
        %2082 = vst [vmem:[#allocation2 + $0x20] sm:$0xff] %v2065
        %2083 = vst [vmem:[#allocation2 + $0x28] sm:$0xff] %v2066
        %2084 = vst [vmem:[#allocation2 + $0x30] sm:$0xff] %v2067
        %2085 = vst [vmem:[#allocation2 + $0x38] sm:$0xff] %v2068
        %2086 = vst [vmem:[#allocation2 + $0x40] sm:$0xff] %v2069
        %v2087 = vld [vmem:[#allocation2 + $0x48] sm:$0x11]
        %v2088 = vsel %vm270, %v2070, %v2087
        %2089 = vst [vmem:[#allocation2 + $0x48] sm:$0x11] %v2088
        %v2090 = vld [vmem:[#allocation2] sm:$0x11]
        %v2091 = vsel %vm278, 0, %v2090
        %2092 = vst [vmem:[#allocation2] sm:$0x11] %v2091
        %v2093 = vld [vmem:[#allocation2 + $0x10] sm:$0x22]
        %v2094 = vsel %vm366, 0, %v2093
        %2095 = vst [vmem:[#allocation2 + $0x10] sm:$0x22] %v2094
        %v2096 = vld [vmem:[#allocation2 + $0x10] sm:$0x22]
        %v2097 = vsel %vm374, 0, %v2096
        %2098 = vst [vmem:[#allocation2 + $0x10] sm:$0x22] %v2097
        %v2099 = vld [vmem:[#allocation2 + $0x20] sm:$0x44]
        %v2100 = vsel %vm384, 0, %v2099
        %2101 = vst [vmem:[#allocation2 + $0x20] sm:$0x44] %v2100
        %v2102 = vld [vmem:[#allocation2 + $0x20] sm:$0x44]
        %v2103 = vsel %vm392, 0, %v2102
        %2104 = vst [vmem:[#allocation2 + $0x20] sm:$0x44] %v2103
        %v2105 = vld [vmem:[#allocation2 + $0x30] sm:$0x88]
        %v2106 = vsel %vm402, 0, %v2105
        %2107 = vst [vmem:[#allocation2 + $0x30] sm:$0x88] %v2106
        %v2108 = vld [vmem:[#allocation2 + $0x30] sm:$0x88]
        %v2109 = vsel %vm410, 0, %v2108
        %2110 = vst [vmem:[#allocation2 + $0x30] sm:$0x88] %v2109
        %v2111 = vld [vmem:[#allocation2 + $0x48] sm:$0x11]
        %v2112 = vsel %vm270, 0, %v2111
        %2113 = vst [vmem:[#allocation2 + $0x48] sm:$0x11] %v2112
        %v2114 = vld [vmem:[#allocation2] sm:$0xff]
        %v2115 = vld [vmem:[#allocation2 + $0x8] sm:$0xff]
        %v2116 = vld [vmem:[#allocation2 + $0x10] sm:$0xff]
        %v2117 = vld [vmem:[#allocation2 + $0x18] sm:$0xff]
        %v2118 = vld [vmem:[#allocation2 + $0x20] sm:$0xff]
        %v2119 = vld [vmem:[#allocation2 + $0x28] sm:$0xff]
        %v2120 = vld [vmem:[#allocation2 + $0x30] sm:$0xff]
        %v2121 = vld [vmem:[#allocation2 + $0x38] sm:$0xff]
        %v2122 = vld [vmem:[#allocation2 + $0x40] sm:$0xff]
        %v2123 = vld [vmem:[#allocation7] sm:$0xff]
        %v2124 = vld [vmem:[#allocation7 + $0x8] sm:$0xff]
        %v2125 = vld [vmem:[#allocation7 + $0x10] sm:$0xff]
        %v2126 = vld [vmem:[#allocation7 + $0x18] sm:$0xff]
        %v2127 = vld [vmem:[#allocation7 + $0x20] sm:$0xff]
        %v2128 = vld [vmem:[#allocation7 + $0x28] sm:$0xff]
        %v2129 = vld [vmem:[#allocation7 + $0x30] sm:$0xff]
        %v2130 = vld [vmem:[#allocation7 + $0x38] sm:$0xff]
        %v2131 = vld [vmem:[#allocation7 + $0x40] sm:$0xff]
        %v2132 = vld [vmem:[#allocation7 + $0x48] sm:$0xff]
        %v2133 = vld [vmem:[#allocation7 + $0x50] sm:$0xff]
        %v2134 = vld [vmem:[#allocation7 + $0x58] sm:$0xff]
        %v2135 = vld [vmem:[#allocation7 + $0x60] sm:$0xff]
        %v2136 = vld [vmem:[#allocation7 + $0x68] sm:$0xff]
        %v2137 = vld [vmem:[#allocation7 + $0x70] sm:$0xff]
        %v2138 = vld [vmem:[#allocation7 + $0x78] sm:$0xff]
        %v2139 = vld [vmem:[#allocation7 + $0x80] sm:$0xff]
        %v2140 = vld [vmem:[#allocation7 + $0x88] sm:$0xff]
        %v2141 = vld [vmem:[#allocation7 + $0x90] sm:$0xff]
        %v2142 = vld [vmem:[#allocation7 + $0x98] sm:$0xff]
        %v2143 = vld [vmem:[#allocation7 + $0xa0] sm:$0xff]
        %v2144 = vld [vmem:[#allocation7 + $0xa8] sm:$0xff]
        %v2145 = vld [vmem:[#allocation7 + $0xb0] sm:$0xff]
        %v2146 = vld [vmem:[#allocation7 + $0xb8] sm:$0xff]
        %v2147 = vld [vmem:[#allocation7 + $0xc0] sm:$0xff]
        %v2148 = vld [vmem:[#allocation7 + $0xc8] sm:$0xff]
        %v2149 = vld [vmem:[#allocation7 + $0xd0] sm:$0xff]
        %v2150 = vld [vmem:[#allocation7 + $0xd8] sm:$0xff]
        %v2151 = vld [vmem:[#allocation7 + $0xe0] sm:$0xff]
        %v2152 = vld [vmem:[#allocation7 + $0xe8] sm:$0xff]
        %v2153 = vld [vmem:[#allocation7 + $0xf0] sm:$0xff]
        %v2154 = vld [vmem:[#allocation7 + $0xf8] sm:$0xff]
        %v2164 = vunpack.c.l.b16 %v2114
        %v2165 = vunpack.c.h.b16 %v2114
        %v2166 = vunpack.c.l.b16 %v2115
        %v2167 = vunpack.c.h.b16 %v2115
        %v2168 = vunpack.c.l.b16 %v2116
        %v2169 = vunpack.c.h.b16 %v2116
        %v2170 = vunpack.c.l.b16 %v2117
        %v2171 = vunpack.c.h.b16 %v2117
        %v2172 = vunpack.c.l.b16 %v2118
        %v2173 = vunpack.c.h.b16 %v2118
        %v2174 = vunpack.c.l.b16 %v2119
        %v2175 = vunpack.c.h.b16 %v2119
        %v2176 = vunpack.c.l.b16 %v2120
        %v2177 = vunpack.c.h.b16 %v2120
        %v2178 = vunpack.c.l.b16 %v2121
        %v2179 = vunpack.c.h.b16 %v2121
        %v2180 = vunpack.c.l.b16 %v2122
        %v2181 = vunpack.c.h.b16 %v2122
        %v2182 = vpack.c.b16 %v2166, %v2164
        %v2183 = vpack.c.b16 %v2167, %v2165
        %v2184 = vpack.c.b16 %v2170, %v2168
        %v2185 = vpack.c.b16 %v2171, %v2169
        %v2186 = vpack.c.b16 %v2174, %v2172
        %v2187 = vpack.c.b16 %v2175, %v2173
        %v2188 = vpack.c.b16 %v2178, %v2176
        %v2189 = vpack.c.b16 %v2179, %v2177
        %v2190 = vpack.c.b16 %v2180, %v2180
        %v2191 = vpack.c.b16 %v2181, %v2181
        %v2234 = vunpack.c.l.b16 %v2123
        %v2235 = vunpack.c.h.b16 %v2123
        %v2236 = vunpack.c.l.b16 %v2124
        %v2237 = vunpack.c.h.b16 %v2124
        %v2238 = vunpack.c.l.b16 %v2125
        %v2239 = vunpack.c.h.b16 %v2125
        %v2240 = vunpack.c.l.b16 %v2126
        %v2241 = vunpack.c.h.b16 %v2126
        %v2242 = vunpack.c.l.b16 %v2127
        %v2243 = vunpack.c.h.b16 %v2127
        %v2244 = vunpack.c.l.b16 %v2128
        %v2245 = vunpack.c.h.b16 %v2128
        %v2246 = vunpack.c.l.b16 %v2129
        %v2247 = vunpack.c.h.b16 %v2129
        %v2248 = vunpack.c.l.b16 %v2130
        %v2249 = vunpack.c.h.b16 %v2130
        %v2250 = vunpack.c.l.b16 %v2131
        %v2251 = vunpack.c.h.b16 %v2131
        %v2252 = vunpack.c.l.b16 %v2132
        %v2253 = vunpack.c.h.b16 %v2132
        %v2254 = vunpack.c.l.b16 %v2133
        %v2255 = vunpack.c.h.b16 %v2133
        %v2256 = vunpack.c.l.b16 %v2134
        %v2257 = vunpack.c.h.b16 %v2134
        %v2258 = vunpack.c.l.b16 %v2135
        %v2259 = vunpack.c.h.b16 %v2135
        %v2260 = vunpack.c.l.b16 %v2136
        %v2261 = vunpack.c.h.b16 %v2136
        %v2262 = vunpack.c.l.b16 %v2137
        %v2263 = vunpack.c.h.b16 %v2137
        %v2264 = vunpack.c.l.b16 %v2138
        %v2265 = vunpack.c.h.b16 %v2138
        %v2266 = vunpack.c.l.b16 %v2139
        %v2267 = vunpack.c.h.b16 %v2139
        %v2268 = vunpack.c.l.b16 %v2140
        %v2269 = vunpack.c.h.b16 %v2140
        %v2270 = vunpack.c.l.b16 %v2141
        %v2271 = vunpack.c.h.b16 %v2141
        %v2272 = vunpack.c.l.b16 %v2142
        %v2273 = vunpack.c.h.b16 %v2142
        %v2274 = vunpack.c.l.b16 %v2143
        %v2275 = vunpack.c.h.b16 %v2143
        %v2276 = vunpack.c.l.b16 %v2144
        %v2277 = vunpack.c.h.b16 %v2144
        %v2278 = vunpack.c.l.b16 %v2145
        %v2279 = vunpack.c.h.b16 %v2145
        %v2280 = vunpack.c.l.b16 %v2146
        %v2281 = vunpack.c.h.b16 %v2146
        %v2282 = vunpack.c.l.b16 %v2147
        %v2283 = vunpack.c.h.b16 %v2147
        %v2284 = vunpack.c.l.b16 %v2148
        %v2285 = vunpack.c.h.b16 %v2148
        %v2286 = vunpack.c.l.b16 %v2149
        %v2287 = vunpack.c.h.b16 %v2149
        %v2288 = vunpack.c.l.b16 %v2150
        %v2289 = vunpack.c.h.b16 %v2150
        %v2290 = vunpack.c.l.b16 %v2151
        %v2291 = vunpack.c.h.b16 %v2151
        %v2292 = vunpack.c.l.b16 %v2152
        %v2293 = vunpack.c.h.b16 %v2152
        %v2294 = vunpack.c.l.b16 %v2153
        %v2295 = vunpack.c.h.b16 %v2153
        %v2296 = vunpack.c.l.b16 %v2154
        %v2297 = vunpack.c.h.b16 %v2154
        %v2298 = vpack.c.b16 %v2236, %v2234
        %v2299 = vpack.c.b16 %v2237, %v2235
        %v2300 = vpack.c.b16 %v2240, %v2238
        %v2301 = vpack.c.b16 %v2241, %v2239
        %v2302 = vpack.c.b16 %v2244, %v2242
        %v2303 = vpack.c.b16 %v2245, %v2243
        %v2304 = vpack.c.b16 %v2248, %v2246
        %v2305 = vpack.c.b16 %v2249, %v2247
        %v2306 = vpack.c.b16 %v2252, %v2250
        %v2307 = vpack.c.b16 %v2253, %v2251
        %v2308 = vpack.c.b16 %v2256, %v2254
        %v2309 = vpack.c.b16 %v2257, %v2255
        %v2310 = vpack.c.b16 %v2260, %v2258
        %v2311 = vpack.c.b16 %v2261, %v2259
        %v2312 = vpack.c.b16 %v2264, %v2262
        %v2313 = vpack.c.b16 %v2265, %v2263
        %v2314 = vpack.c.b16 %v2268, %v2266
        %v2315 = vpack.c.b16 %v2269, %v2267
        %v2316 = vpack.c.b16 %v2272, %v2270
        %v2317 = vpack.c.b16 %v2273, %v2271
        %v2318 = vpack.c.b16 %v2276, %v2274
        %v2319 = vpack.c.b16 %v2277, %v2275
        %v2320 = vpack.c.b16 %v2280, %v2278
        %v2321 = vpack.c.b16 %v2281, %v2279
        %v2322 = vpack.c.b16 %v2284, %v2282
        %v2323 = vpack.c.b16 %v2285, %v2283
        %v2324 = vpack.c.b16 %v2288, %v2286
        %v2325 = vpack.c.b16 %v2289, %v2287
        %v2326 = vpack.c.b16 %v2292, %v2290
        %v2327 = vpack.c.b16 %v2293, %v2291
        %v2328 = vpack.c.b16 %v2296, %v2294
        %v2329 = vpack.c.b16 %v2297, %v2295
        %2362 = vmatpush.bf16.msra.mxu0 %v2312
        %2363 = vmatpush.bf16.msra.mxu0 %v2310
        %2364 = vmatpush.bf16.msra.mxu0 %v2308
        %2365 = vmatpush.bf16.msra.mxu0 %v2306
        %2366 = vmatpush.bf16.msra.mxu0 %v2304
        %2367 = vmatpush.bf16.msra.mxu0 %v2302
        %2368 = vmatpush.bf16.msra.mxu0 %v2300
        %2369 = vmatpush.bf16.msra.mxu0 %v2298
        %2370 = vmatmul.bf16.gmra.mxu0 %v2182
        %v2371 = vpop.f32.mrf.mxu0
        %v2372 = vadd.f32 0.0, %v2371
        %v2373 = vpop.f32.mrf.mxu0
        %v2374 = vadd.f32 0.0, %v2373
        %2375 = vmatmul.bf16.gmra.mxu0 %v2184
        %v2376 = vpop.f32.mrf.mxu0
        %v2377 = vadd.f32 0.0, %v2376
        %v2378 = vpop.f32.mrf.mxu0
        %v2379 = vadd.f32 0.0, %v2378
        %2380 = vmatmul.bf16.gmra.mxu0 %v2186
        %v2381 = vpop.f32.mrf.mxu0
        %v2382 = vadd.f32 0.0, %v2381
        %v2383 = vpop.f32.mrf.mxu0
        %v2384 = vadd.f32 0.0, %v2383
        %2385 = vmatmul.bf16.gmra.mxu0 %v2188
        %v2386 = vpop.f32.mrf.mxu0
        %v2387 = vadd.f32 0.0, %v2386
        %v2388 = vpop.f32.mrf.mxu0
        %v2389 = vadd.f32 0.0, %v2388
        %2390 = vmatmul.bf16.gmra.mxu0 %v2190
        %v2391 = vpop.f32.mrf.mxu0
        %v2392 = vadd.f32 0.0, %v2391
        %v2393 = vpop.f32.mrf.mxu0
        %2394 = vdwg.mxu0
        %2395 = vmatpush.bf16.msra.mxu0 %v2328
        %2396 = vmatpush.bf16.msra.mxu0 %v2326
        %2397 = vmatpush.bf16.msra.mxu0 %v2324
        %2398 = vmatpush.bf16.msra.mxu0 %v2322
        %2399 = vmatpush.bf16.msra.mxu0 %v2320
        %2400 = vmatpush.bf16.msra.mxu0 %v2318
        %2401 = vmatpush.bf16.msra.mxu0 %v2316
        %2402 = vmatpush.bf16.msra.mxu0 %v2314
        %2403 = vmatmul.bf16.gmra.mxu0 %v2183
        %v2404 = vpop.f32.mrf.mxu0
        %v2405 = vadd.f32 %v2372, %v2404
        %v2406 = vpop.f32.mrf.mxu0
        %v2407 = vadd.f32 %v2374, %v2406
        %2408 = vmatmul.bf16.gmra.mxu0 %v2185
        %v2409 = vpop.f32.mrf.mxu0
        %v2410 = vadd.f32 %v2377, %v2409
        %v2411 = vpop.f32.mrf.mxu0
        %v2412 = vadd.f32 %v2379, %v2411
        %2413 = vmatmul.bf16.gmra.mxu0 %v2187
        %v2414 = vpop.f32.mrf.mxu0
        %v2415 = vadd.f32 %v2382, %v2414
        %v2416 = vpop.f32.mrf.mxu0
        %v2417 = vadd.f32 %v2384, %v2416
        %2418 = vmatmul.bf16.gmra.mxu0 %v2189
        %v2419 = vpop.f32.mrf.mxu0
        %v2420 = vadd.f32 %v2387, %v2419
        %v2421 = vpop.f32.mrf.mxu0
        %v2422 = vadd.f32 %v2389, %v2421
        %2423 = vmatmul.bf16.gmra.mxu0 %v2191
        %v2424 = vpop.f32.mrf.mxu0
        %v2425 = vadd.f32 %v2392, %v2424
        %v2426 = vpop.f32.mrf.mxu0
        %2427 = vdwg.mxu0
        %2428 = vmatpush.bf16.msra.mxu0 %v2313
        %2429 = vmatpush.bf16.msra.mxu0 %v2311
        %2430 = vmatpush.bf16.msra.mxu0 %v2309
        %2431 = vmatpush.bf16.msra.mxu0 %v2307
        %2432 = vmatpush.bf16.msra.mxu0 %v2305
        %2433 = vmatpush.bf16.msra.mxu0 %v2303
        %2434 = vmatpush.bf16.msra.mxu0 %v2301
        %2435 = vmatpush.bf16.msra.mxu0 %v2299
        %2436 = vmatmul.bf16.gmra.mxu0 %v2182
        %v2437 = vpop.f32.mrf.mxu0
        %v2438 = vadd.f32 0.0, %v2437
        %v2439 = vpop.f32.mrf.mxu0
        %v2440 = vadd.f32 0.0, %v2439
        %2441 = vmatmul.bf16.gmra.mxu0 %v2184
        %v2442 = vpop.f32.mrf.mxu0
        %v2443 = vadd.f32 0.0, %v2442
        %v2444 = vpop.f32.mrf.mxu0
        %v2445 = vadd.f32 0.0, %v2444
        %2446 = vmatmul.bf16.gmra.mxu0 %v2186
        %v2447 = vpop.f32.mrf.mxu0
        %v2448 = vadd.f32 0.0, %v2447
        %v2449 = vpop.f32.mrf.mxu0
        %v2450 = vadd.f32 0.0, %v2449
        %2451 = vmatmul.bf16.gmra.mxu0 %v2188
        %v2452 = vpop.f32.mrf.mxu0
        %v2453 = vadd.f32 0.0, %v2452
        %v2454 = vpop.f32.mrf.mxu0
        %v2455 = vadd.f32 0.0, %v2454
        %2456 = vmatmul.bf16.gmra.mxu0 %v2190
        %v2457 = vpop.f32.mrf.mxu0
        %v2458 = vadd.f32 0.0, %v2457
        %v2459 = vpop.f32.mrf.mxu0
        %2460 = vdwg.mxu0
        %2461 = vmatpush.bf16.msra.mxu0 %v2329
        %2462 = vmatpush.bf16.msra.mxu0 %v2327
        %2463 = vmatpush.bf16.msra.mxu0 %v2325
        %2464 = vmatpush.bf16.msra.mxu0 %v2323
        %2465 = vmatpush.bf16.msra.mxu0 %v2321
        %2466 = vmatpush.bf16.msra.mxu0 %v2319
        %2467 = vmatpush.bf16.msra.mxu0 %v2317
        %2468 = vmatpush.bf16.msra.mxu0 %v2315
        %2469 = vmatmul.bf16.gmra.mxu0 %v2183
        %v2470 = vpop.f32.mrf.mxu0
        %v2471 = vadd.f32 %v2438, %v2470
        %v2472 = vpop.f32.mrf.mxu0
        %v2473 = vadd.f32 %v2440, %v2472
        %2474 = vmatmul.bf16.gmra.mxu0 %v2185
        %v2475 = vpop.f32.mrf.mxu0
        %v2476 = vadd.f32 %v2443, %v2475
        %v2477 = vpop.f32.mrf.mxu0
        %v2478 = vadd.f32 %v2445, %v2477
        %2479 = vmatmul.bf16.gmra.mxu0 %v2187
        %v2480 = vpop.f32.mrf.mxu0
        %v2481 = vadd.f32 %v2448, %v2480
        %v2482 = vpop.f32.mrf.mxu0
        %v2483 = vadd.f32 %v2450, %v2482
        %2484 = vmatmul.bf16.gmra.mxu0 %v2189
        %v2485 = vpop.f32.mrf.mxu0
        %v2486 = vadd.f32 %v2453, %v2485
        %v2487 = vpop.f32.mrf.mxu0
        %v2488 = vadd.f32 %v2455, %v2487
        %2489 = vmatmul.bf16.gmra.mxu0 %v2191
        %v2490 = vpop.f32.mrf.mxu0
        %v2491 = vadd.f32 %v2458, %v2490
        %v2492 = vpop.f32.mrf.mxu0
        %2493 = vdwg.mxu0
        %v2512 = vrot.slane %v2405, 7
        %v2513 = vrot.slane %v2471, 7
        %v2514 = vrot.slane %v2407, 7
        %v2515 = vsel %vm815, %v2512, %v2514
        %v2516 = vrot.slane %v2473, 7
        %v2517 = vsel %vm815, %v2513, %v2516
        %v2518 = vrot.slane %v2410, 7
        %v2519 = vsel %vm815, %v2514, %v2518
        %v2520 = vrot.slane %v2476, 7
        %v2521 = vsel %vm815, %v2516, %v2520
        %v2522 = vrot.slane %v2412, 7
        %v2523 = vsel %vm815, %v2518, %v2522
        %v2524 = vrot.slane %v2478, 7
        %v2525 = vsel %vm815, %v2520, %v2524
        %v2526 = vrot.slane %v2415, 7
        %v2527 = vsel %vm815, %v2522, %v2526
        %v2528 = vrot.slane %v2481, 7
        %v2529 = vsel %vm815, %v2524, %v2528
        %v2530 = vrot.slane %v2417, 7
        %v2531 = vsel %vm815, %v2526, %v2530
        %v2532 = vrot.slane %v2483, 7
        %v2533 = vsel %vm815, %v2528, %v2532
        %v2534 = vrot.slane %v2420, 7
        %v2535 = vsel %vm815, %v2530, %v2534
        %v2536 = vrot.slane %v2486, 7
        %v2537 = vsel %vm815, %v2532, %v2536
        %v2538 = vrot.slane %v2422, 7
        %v2539 = vsel %vm815, %v2534, %v2538
        %v2540 = vrot.slane %v2488, 7
        %v2541 = vsel %vm815, %v2536, %v2540
        %v2542 = vrot.slane %v2425, 7
        %v2543 = vsel %vm815, %v2538, %v2542
        %v2544 = vrot.slane %v2491, 7
        %v2545 = vsel %vm815, %v2540, %v2544
        %2566 = vst [vmem:[#allocation3] sm:$0xfe] %v2512
        %2567 = vst [vmem:[#allocation3 + $0x8] sm:$0xfe] %v2513
        %2568 = vst [vmem:[#allocation3 + $0x10] sm:$0xff] %v2515
        %2569 = vst [vmem:[#allocation3 + $0x18] sm:$0xff] %v2517
        %2570 = vst [vmem:[#allocation3 + $0x20] sm:$0xff] %v2519
        %2571 = vst [vmem:[#allocation3 + $0x28] sm:$0xff] %v2521
        %2572 = vst [vmem:[#allocation3 + $0x30] sm:$0xff] %v2523
        %2573 = vst [vmem:[#allocation3 + $0x38] sm:$0xff] %v2525
        %2574 = vst [vmem:[#allocation3 + $0x40] sm:$0xff] %v2527
        %2575 = vst [vmem:[#allocation3 + $0x48] sm:$0xff] %v2529
        %2576 = vst [vmem:[#allocation3 + $0x50] sm:$0xff] %v2531
        %2577 = vst [vmem:[#allocation3 + $0x58] sm:$0xff] %v2533
        %2578 = vst [vmem:[#allocation3 + $0x60] sm:$0xff] %v2535
        %2579 = vst [vmem:[#allocation3 + $0x68] sm:$0xff] %v2537
        %2580 = vst [vmem:[#allocation3 + $0x70] sm:$0xff] %v2539
        %2581 = vst [vmem:[#allocation3 + $0x78] sm:$0xff] %v2541
        %2582 = vst [vmem:[#allocation3 + $0x80] sm:$0xff] %v2543
        %2583 = vst [vmem:[#allocation3 + $0x88] sm:$0xff] %v2545
        %2584 = vst [vmem:[#allocation3 + $0x90] sm:$0x1] %v2542
        %2585 = vst [vmem:[#allocation3 + $0x98] sm:$0x1] %v2544
        %v2586 = vld [vmem:[#allocation3] sm:$0xfe]
        %v2587 = vld [vmem:[#allocation3 + $0x8] sm:$0xfe]
        %v2588 = vld [vmem:[#allocation3 + $0x10] sm:$0xff]
        %v2589 = vld [vmem:[#allocation3 + $0x18] sm:$0xff]
        %v2590 = vld [vmem:[#allocation3 + $0x20] sm:$0xff]
        %v2591 = vld [vmem:[#allocation3 + $0x28] sm:$0xff]
        %v2592 = vld [vmem:[#allocation3 + $0x30] sm:$0xff]
        %v2593 = vld [vmem:[#allocation3 + $0x38] sm:$0xff]
        %v2594 = vld [vmem:[#allocation3 + $0x40] sm:$0xff]
        %v2595 = vld [vmem:[#allocation3 + $0x48] sm:$0xff]
        %v2596 = vld [vmem:[#allocation3 + $0x50] sm:$0xff]
        %v2597 = vld [vmem:[#allocation3 + $0x58] sm:$0xff]
        %v2598 = vld [vmem:[#allocation3 + $0x60] sm:$0xff]
        %v2599 = vld [vmem:[#allocation3 + $0x68] sm:$0xff]
        %v2600 = vld [vmem:[#allocation3 + $0x70] sm:$0xff]
        %v2601 = vld [vmem:[#allocation3 + $0x78] sm:$0xff]
        %v2602 = vld [vmem:[#allocation3 + $0x80] sm:$0xff]
        %v2603 = vld [vmem:[#allocation3 + $0x88] sm:$0xff]
        %v2604 = vld [vmem:[#allocation3 + $0x90] sm:$0x1]
        %v2605 = vld [vmem:[#allocation3 + $0x98] sm:$0x1]
        %v2606 = vld [vmem:[#allocation2] sm:$0xff]
        %v2607 = vld [vmem:[#allocation2 + $0x8] sm:$0xff]
        %v2608 = vld [vmem:[#allocation2 + $0x10] sm:$0xff]
        %v2609 = vld [vmem:[#allocation2 + $0x18] sm:$0xff]
        %v2610 = vld [vmem:[#allocation2 + $0x20] sm:$0xff]
        %v2611 = vld [vmem:[#allocation2 + $0x28] sm:$0xff]
        %v2612 = vld [vmem:[#allocation2 + $0x30] sm:$0xff]
        %v2613 = vld [vmem:[#allocation2 + $0x38] sm:$0xff]
        %v2614 = vld [vmem:[#allocation2 + $0x40] sm:$0xff]
        %v2615 = vld [vmem:[#allocation2 + $0x48] sm:$0x11]
        %s2616 = scalar_lea.vmem [#allocation7], 256
        %v2617 = vld [vmem:[%s2616] sm:$0xff]
        %v2618 = vld [vmem:[%s2616 + $0x8] sm:$0xff]
        %v2619 = vld [vmem:[%s2616 + $0x10] sm:$0xff]
        %v2620 = vld [vmem:[%s2616 + $0x18] sm:$0xff]
        %v2621 = vld [vmem:[%s2616 + $0x20] sm:$0xff]
        %v2622 = vld [vmem:[%s2616 + $0x28] sm:$0xff]
        %v2623 = vld [vmem:[%s2616 + $0x30] sm:$0xff]
        %v2624 = vld [vmem:[%s2616 + $0x38] sm:$0xff]
        %v2625 = vld [vmem:[%s2616 + $0x40] sm:$0xff]
        %v2626 = vld [vmem:[%s2616 + $0x48] sm:$0xff]
        %v2627 = vld [vmem:[%s2616 + $0x50] sm:$0xff]
        %v2628 = vld [vmem:[%s2616 + $0x58] sm:$0xff]
        %v2629 = vld [vmem:[%s2616 + $0x60] sm:$0xff]
        %v2630 = vld [vmem:[%s2616 + $0x68] sm:$0xff]
        %v2631 = vld [vmem:[%s2616 + $0x70] sm:$0xff]
        %v2632 = vld [vmem:[%s2616 + $0x78] sm:$0xff]
        %v2633 = vld [vmem:[%s2616 + $0x80] sm:$0xff]
        %v2634 = vld [vmem:[%s2616 + $0x88] sm:$0xff]
        %v2635 = vld [vmem:[%s2616 + $0x90] sm:$0xff]
        %v2636 = vld [vmem:[%s2616 + $0x98] sm:$0xff]
        %v2637 = vld [vmem:[%s2616 + $0xa0] sm:$0xff]
        %v2638 = vld [vmem:[%s2616 + $0xa8] sm:$0xff]
        %v2639 = vld [vmem:[%s2616 + $0xb0] sm:$0xff]
        %v2640 = vld [vmem:[%s2616 + $0xb8] sm:$0xff]
        %v2641 = vld [vmem:[%s2616 + $0xc0] sm:$0xff]
        %v2642 = vld [vmem:[%s2616 + $0xc8] sm:$0xff]
        %v2643 = vld [vmem:[%s2616 + $0xd0] sm:$0xff]
        %v2644 = vld [vmem:[%s2616 + $0xd8] sm:$0xff]
        %v2645 = vld [vmem:[%s2616 + $0xe0] sm:$0xff]
        %v2646 = vld [vmem:[%s2616 + $0xe8] sm:$0xff]
        %v2647 = vld [vmem:[%s2616 + $0xf0] sm:$0xff]
        %v2648 = vld [vmem:[%s2616 + $0xf8] sm:$0xff]
        %v2659 = vunpack.c.l.b16 %v2606
        %v2660 = vunpack.c.h.b16 %v2606
        %v2661 = vunpack.c.l.b16 %v2607
        %v2662 = vunpack.c.h.b16 %v2607
        %v2663 = vunpack.c.l.b16 %v2608
        %v2664 = vunpack.c.h.b16 %v2608
        %v2665 = vunpack.c.l.b16 %v2609
        %v2666 = vunpack.c.h.b16 %v2609
        %v2667 = vunpack.c.l.b16 %v2610
        %v2668 = vunpack.c.h.b16 %v2610
        %v2669 = vunpack.c.l.b16 %v2611
        %v2670 = vunpack.c.h.b16 %v2611
        %v2671 = vunpack.c.l.b16 %v2612
        %v2672 = vunpack.c.h.b16 %v2612
        %v2673 = vunpack.c.l.b16 %v2613
        %v2674 = vunpack.c.h.b16 %v2613
        %v2675 = vunpack.c.l.b16 %v2614
        %v2676 = vunpack.c.h.b16 %v2614
        %v2677 = vunpack.c.l.b16 %v2615
        %v2678 = vunpack.c.h.b16 %v2615
        %v2679 = vpack.c.b16 %v2661, %v2659
        %v2680 = vpack.c.b16 %v2662, %v2660
        %v2681 = vpack.c.b16 %v2665, %v2663
        %v2682 = vpack.c.b16 %v2666, %v2664
        %v2683 = vpack.c.b16 %v2669, %v2667
        %v2684 = vpack.c.b16 %v2670, %v2668
        %v2685 = vpack.c.b16 %v2673, %v2671
        %v2686 = vpack.c.b16 %v2674, %v2672
        %v2687 = vpack.c.b16 %v2677, %v2675
        %v2688 = vpack.c.b16 %v2678, %v2676
        %v2690 = vshrl.u32 %v2679, 16
        %v2692 = vshll.u32 %v2679, 16
        %v2694 = vrot.slane %v2692, 1
        %v2695 = vor.u32 %v2690, %v2694
        %v2697 = vshll.u32 %v2681, 16
        %v2699 = vrot.slane %v2697, 1
        %v2700 = vsel %vm400, %v2695, %v2699
        %v2702 = vshrl.u32 %v2680, 16
        %v2704 = vshll.u32 %v2680, 16
        %v2706 = vrot.slane %v2704, 1
        %v2707 = vor.u32 %v2702, %v2706
        %v2709 = vshll.u32 %v2682, 16
        %v2711 = vrot.slane %v2709, 1
        %v2712 = vsel %vm400, %v2707, %v2711
        %v2713 = vshrl.u32 %v2681, 16
        %v2715 = vor.u32 %v2713, %v2699
        %v2717 = vshll.u32 %v2683, 16
        %v2719 = vrot.slane %v2717, 1
        %v2720 = vsel %vm400, %v2715, %v2719
        %v2721 = vshrl.u32 %v2682, 16
        %v2723 = vor.u32 %v2721, %v2711
        %v2725 = vshll.u32 %v2684, 16
        %v2727 = vrot.slane %v2725, 1
        %v2728 = vsel %vm400, %v2723, %v2727
        %v2729 = vshrl.u32 %v2683, 16
        %v2731 = vor.u32 %v2729, %v2719
        %v2733 = vshll.u32 %v2685, 16
        %v2735 = vrot.slane %v2733, 1
        %v2736 = vsel %vm400, %v2731, %v2735
        %v2737 = vshrl.u32 %v2684, 16
        %v2739 = vor.u32 %v2737, %v2727
        %v2741 = vshll.u32 %v2686, 16
        %v2743 = vrot.slane %v2741, 1
        %v2744 = vsel %vm400, %v2739, %v2743
        %v2745 = vshrl.u32 %v2685, 16
        %v2747 = vor.u32 %v2745, %v2735
        %v2749 = vshll.u32 %v2687, 16
        %v2751 = vrot.slane %v2749, 1
        %v2752 = vsel %vm400, %v2747, %v2751
        %v2753 = vshrl.u32 %v2686, 16
        %v2755 = vor.u32 %v2753, %v2743
        %v2757 = vshll.u32 %v2688, 16
        %v2759 = vrot.slane %v2757, 1
        %v2760 = vsel %vm400, %v2755, %v2759
        %v2761 = vshrl.u32 %v2687, 16
        %v2763 = vor.u32 %v2761, %v2751
        %v2764 = vshrl.u32 %v2688, 16
        %v2766 = vor.u32 %v2764, %v2759
        %v2809 = vunpack.c.l.b16 %v2617
        %v2810 = vunpack.c.h.b16 %v2617
        %v2811 = vunpack.c.l.b16 %v2618
        %v2812 = vunpack.c.h.b16 %v2618
        %v2813 = vunpack.c.l.b16 %v2619
        %v2814 = vunpack.c.h.b16 %v2619
        %v2815 = vunpack.c.l.b16 %v2620
        %v2816 = vunpack.c.h.b16 %v2620
        %v2817 = vunpack.c.l.b16 %v2621
        %v2818 = vunpack.c.h.b16 %v2621
        %v2819 = vunpack.c.l.b16 %v2622
        %v2820 = vunpack.c.h.b16 %v2622
        %v2821 = vunpack.c.l.b16 %v2623
        %v2822 = vunpack.c.h.b16 %v2623
        %v2823 = vunpack.c.l.b16 %v2624
        %v2824 = vunpack.c.h.b16 %v2624
        %v2825 = vunpack.c.l.b16 %v2625
        %v2826 = vunpack.c.h.b16 %v2625
        %v2827 = vunpack.c.l.b16 %v2626
        %v2828 = vunpack.c.h.b16 %v2626
        %v2829 = vunpack.c.l.b16 %v2627
        %v2830 = vunpack.c.h.b16 %v2627
        %v2831 = vunpack.c.l.b16 %v2628
        %v2832 = vunpack.c.h.b16 %v2628
        %v2833 = vunpack.c.l.b16 %v2629
        %v2834 = vunpack.c.h.b16 %v2629
        %v2835 = vunpack.c.l.b16 %v2630
        %v2836 = vunpack.c.h.b16 %v2630
        %v2837 = vunpack.c.l.b16 %v2631
        %v2838 = vunpack.c.h.b16 %v2631
        %v2839 = vunpack.c.l.b16 %v2632
        %v2840 = vunpack.c.h.b16 %v2632
        %v2841 = vunpack.c.l.b16 %v2633
        %v2842 = vunpack.c.h.b16 %v2633
        %v2843 = vunpack.c.l.b16 %v2634
        %v2844 = vunpack.c.h.b16 %v2634
        %v2845 = vunpack.c.l.b16 %v2635
        %v2846 = vunpack.c.h.b16 %v2635
        %v2847 = vunpack.c.l.b16 %v2636
        %v2848 = vunpack.c.h.b16 %v2636
        %v2849 = vunpack.c.l.b16 %v2637
        %v2850 = vunpack.c.h.b16 %v2637
        %v2851 = vunpack.c.l.b16 %v2638
        %v2852 = vunpack.c.h.b16 %v2638
        %v2853 = vunpack.c.l.b16 %v2639
        %v2854 = vunpack.c.h.b16 %v2639
        %v2855 = vunpack.c.l.b16 %v2640
        %v2856 = vunpack.c.h.b16 %v2640
        %v2857 = vunpack.c.l.b16 %v2641
        %v2858 = vunpack.c.h.b16 %v2641
        %v2859 = vunpack.c.l.b16 %v2642
        %v2860 = vunpack.c.h.b16 %v2642
        %v2861 = vunpack.c.l.b16 %v2643
        %v2862 = vunpack.c.h.b16 %v2643
        %v2863 = vunpack.c.l.b16 %v2644
        %v2864 = vunpack.c.h.b16 %v2644
        %v2865 = vunpack.c.l.b16 %v2645
        %v2866 = vunpack.c.h.b16 %v2645
        %v2867 = vunpack.c.l.b16 %v2646
        %v2868 = vunpack.c.h.b16 %v2646
        %v2869 = vunpack.c.l.b16 %v2647
        %v2870 = vunpack.c.h.b16 %v2647
        %v2871 = vunpack.c.l.b16 %v2648
        %v2872 = vunpack.c.h.b16 %v2648
        %v2873 = vpack.c.b16 %v2811, %v2809
        %v2874 = vpack.c.b16 %v2812, %v2810
        %v2875 = vpack.c.b16 %v2815, %v2813
        %v2876 = vpack.c.b16 %v2816, %v2814
        %v2877 = vpack.c.b16 %v2819, %v2817
        %v2878 = vpack.c.b16 %v2820, %v2818
        %v2879 = vpack.c.b16 %v2823, %v2821
        %v2880 = vpack.c.b16 %v2824, %v2822
        %v2881 = vpack.c.b16 %v2827, %v2825
        %v2882 = vpack.c.b16 %v2828, %v2826
        %v2883 = vpack.c.b16 %v2831, %v2829
        %v2884 = vpack.c.b16 %v2832, %v2830
        %v2885 = vpack.c.b16 %v2835, %v2833
        %v2886 = vpack.c.b16 %v2836, %v2834
        %v2887 = vpack.c.b16 %v2839, %v2837
        %v2888 = vpack.c.b16 %v2840, %v2838
        %v2889 = vpack.c.b16 %v2843, %v2841
        %v2890 = vpack.c.b16 %v2844, %v2842
        %v2891 = vpack.c.b16 %v2847, %v2845
        %v2892 = vpack.c.b16 %v2848, %v2846
        %v2893 = vpack.c.b16 %v2851, %v2849
        %v2894 = vpack.c.b16 %v2852, %v2850
        %v2895 = vpack.c.b16 %v2855, %v2853
        %v2896 = vpack.c.b16 %v2856, %v2854
        %v2897 = vpack.c.b16 %v2859, %v2857
        %v2898 = vpack.c.b16 %v2860, %v2858
        %v2899 = vpack.c.b16 %v2863, %v2861
        %v2900 = vpack.c.b16 %v2864, %v2862
        %v2901 = vpack.c.b16 %v2867, %v2865
        %v2902 = vpack.c.b16 %v2868, %v2866
        %v2903 = vpack.c.b16 %v2871, %v2869
        %v2904 = vpack.c.b16 %v2872, %v2870
        %2937 = vmatpush.bf16.msra.mxu0 %v2887
        %2938 = vmatpush.bf16.msra.mxu0 %v2885
        %2939 = vmatpush.bf16.msra.mxu0 %v2883
        %2940 = vmatpush.bf16.msra.mxu0 %v2881
        %2941 = vmatpush.bf16.msra.mxu0 %v2879
        %2942 = vmatpush.bf16.msra.mxu0 %v2877
        %2943 = vmatpush.bf16.msra.mxu0 %v2875
        %2944 = vmatpush.bf16.msra.mxu0 %v2873
        %2945 = vmatmul.bf16.gmra.mxu0 %v2700
        %v2946 = vpop.f32.mrf.mxu0
        %v2947 = vadd.f32 0.0, %v2946
        %v2948 = vpop.f32.mrf.mxu0
        %v2949 = vadd.f32 0.0, %v2948
        %2950 = vmatmul.bf16.gmra.mxu0 %v2720
        %v2951 = vpop.f32.mrf.mxu0
        %v2952 = vadd.f32 0.0, %v2951
        %v2953 = vpop.f32.mrf.mxu0
        %v2954 = vadd.f32 0.0, %v2953
        %2955 = vmatmul.bf16.gmra.mxu0 %v2736
        %v2956 = vpop.f32.mrf.mxu0
        %v2957 = vadd.f32 0.0, %v2956
        %v2958 = vpop.f32.mrf.mxu0
        %v2959 = vadd.f32 0.0, %v2958
        %2960 = vmatmul.bf16.gmra.mxu0 %v2752
        %v2961 = vpop.f32.mrf.mxu0
        %v2962 = vadd.f32 0.0, %v2961
        %v2963 = vpop.f32.mrf.mxu0
        %v2964 = vadd.f32 0.0, %v2963
        %2965 = vmatmul.bf16.gmra.mxu0 %v2763
        %v2966 = vpop.f32.mrf.mxu0
        %v2967 = vadd.f32 0.0, %v2966
        %v2968 = vpop.f32.mrf.mxu0
        %2969 = vdwg.mxu0
        %2970 = vmatpush.bf16.msra.mxu0 %v2903
        %2971 = vmatpush.bf16.msra.mxu0 %v2901
        %2972 = vmatpush.bf16.msra.mxu0 %v2899
        %2973 = vmatpush.bf16.msra.mxu0 %v2897
        %2974 = vmatpush.bf16.msra.mxu0 %v2895
        %2975 = vmatpush.bf16.msra.mxu0 %v2893
        %2976 = vmatpush.bf16.msra.mxu0 %v2891
        %2977 = vmatpush.bf16.msra.mxu0 %v2889
        %2978 = vmatmul.bf16.gmra.mxu0 %v2712
        %v2979 = vpop.f32.mrf.mxu0
        %v2980 = vadd.f32 %v2947, %v2979
        %v2981 = vpop.f32.mrf.mxu0
        %v2982 = vadd.f32 %v2949, %v2981
        %2983 = vmatmul.bf16.gmra.mxu0 %v2728
        %v2984 = vpop.f32.mrf.mxu0
        %v2985 = vadd.f32 %v2952, %v2984
        %v2986 = vpop.f32.mrf.mxu0
        %v2987 = vadd.f32 %v2954, %v2986
        %2988 = vmatmul.bf16.gmra.mxu0 %v2744
        %v2989 = vpop.f32.mrf.mxu0
        %v2990 = vadd.f32 %v2957, %v2989
        %v2991 = vpop.f32.mrf.mxu0
        %v2992 = vadd.f32 %v2959, %v2991
        %2993 = vmatmul.bf16.gmra.mxu0 %v2760
        %v2994 = vpop.f32.mrf.mxu0
        %v2995 = vadd.f32 %v2962, %v2994
        %v2996 = vpop.f32.mrf.mxu0
        %v2997 = vadd.f32 %v2964, %v2996
        %2998 = vmatmul.bf16.gmra.mxu0 %v2766
        %v2999 = vpop.f32.mrf.mxu0
        %v3000 = vadd.f32 %v2967, %v2999
        %v3001 = vpop.f32.mrf.mxu0
        %3002 = vdwg.mxu0
        %3003 = vmatpush.bf16.msra.mxu0 %v2888
        %3004 = vmatpush.bf16.msra.mxu0 %v2886
        %3005 = vmatpush.bf16.msra.mxu0 %v2884
        %3006 = vmatpush.bf16.msra.mxu0 %v2882
        %3007 = vmatpush.bf16.msra.mxu0 %v2880
        %3008 = vmatpush.bf16.msra.mxu0 %v2878
        %3009 = vmatpush.bf16.msra.mxu0 %v2876
        %3010 = vmatpush.bf16.msra.mxu0 %v2874
        %3011 = vmatmul.bf16.gmra.mxu0 %v2700
        %v3012 = vpop.f32.mrf.mxu0
        %v3013 = vadd.f32 0.0, %v3012
        %v3014 = vpop.f32.mrf.mxu0
        %v3015 = vadd.f32 0.0, %v3014
        %3016 = vmatmul.bf16.gmra.mxu0 %v2720
        %v3017 = vpop.f32.mrf.mxu0
        %v3018 = vadd.f32 0.0, %v3017
        %v3019 = vpop.f32.mrf.mxu0
        %v3020 = vadd.f32 0.0, %v3019
        %3021 = vmatmul.bf16.gmra.mxu0 %v2736
        %v3022 = vpop.f32.mrf.mxu0
        %v3023 = vadd.f32 0.0, %v3022
        %v3024 = vpop.f32.mrf.mxu0
        %v3025 = vadd.f32 0.0, %v3024
        %3026 = vmatmul.bf16.gmra.mxu0 %v2752
        %v3027 = vpop.f32.mrf.mxu0
        %v3028 = vadd.f32 0.0, %v3027
        %v3029 = vpop.f32.mrf.mxu0
        %v3030 = vadd.f32 0.0, %v3029
        %3031 = vmatmul.bf16.gmra.mxu0 %v2763
        %v3032 = vpop.f32.mrf.mxu0
        %v3033 = vadd.f32 0.0, %v3032
        %v3034 = vpop.f32.mrf.mxu0
        %3035 = vdwg.mxu0
        %3036 = vmatpush.bf16.msra.mxu0 %v2904
        %3037 = vmatpush.bf16.msra.mxu0 %v2902
        %3038 = vmatpush.bf16.msra.mxu0 %v2900
        %3039 = vmatpush.bf16.msra.mxu0 %v2898
        %3040 = vmatpush.bf16.msra.mxu0 %v2896
        %3041 = vmatpush.bf16.msra.mxu0 %v2894
        %3042 = vmatpush.bf16.msra.mxu0 %v2892
        %3043 = vmatpush.bf16.msra.mxu0 %v2890
        %3044 = vmatmul.bf16.gmra.mxu0 %v2712
        %v3045 = vpop.f32.mrf.mxu0
        %v3046 = vadd.f32 %v3013, %v3045
        %v3047 = vpop.f32.mrf.mxu0
        %v3048 = vadd.f32 %v3015, %v3047
        %3049 = vmatmul.bf16.gmra.mxu0 %v2728
        %v3050 = vpop.f32.mrf.mxu0
        %v3051 = vadd.f32 %v3018, %v3050
        %v3052 = vpop.f32.mrf.mxu0
        %v3053 = vadd.f32 %v3020, %v3052
        %3054 = vmatmul.bf16.gmra.mxu0 %v2744
        %v3055 = vpop.f32.mrf.mxu0
        %v3056 = vadd.f32 %v3023, %v3055
        %v3057 = vpop.f32.mrf.mxu0
        %v3058 = vadd.f32 %v3025, %v3057
        %3059 = vmatmul.bf16.gmra.mxu0 %v2760
        %v3060 = vpop.f32.mrf.mxu0
        %v3061 = vadd.f32 %v3028, %v3060
        %v3062 = vpop.f32.mrf.mxu0
        %v3063 = vadd.f32 %v3030, %v3062
        %3064 = vmatmul.bf16.gmra.mxu0 %v2766
        %v3065 = vpop.f32.mrf.mxu0
        %v3066 = vadd.f32 %v3033, %v3065
        %v3067 = vpop.f32.mrf.mxu0
        %3068 = vdwg.mxu0
        %v3087 = vrot.slane %v2980, 7
        %v3088 = vrot.slane %v3046, 7
        %v3089 = vrot.slane %v2982, 7
        %v3090 = vsel %vm815, %v3087, %v3089
        %v3091 = vrot.slane %v3048, 7
        %v3092 = vsel %vm815, %v3088, %v3091
        %v3093 = vrot.slane %v2985, 7
        %v3094 = vsel %vm815, %v3089, %v3093
        %v3095 = vrot.slane %v3051, 7
        %v3096 = vsel %vm815, %v3091, %v3095
        %v3097 = vrot.slane %v2987, 7
        %v3098 = vsel %vm815, %v3093, %v3097
        %v3099 = vrot.slane %v3053, 7
        %v3100 = vsel %vm815, %v3095, %v3099
        %v3101 = vrot.slane %v2990, 7
        %v3102 = vsel %vm815, %v3097, %v3101
        %v3103 = vrot.slane %v3056, 7
        %v3104 = vsel %vm815, %v3099, %v3103
        %v3105 = vrot.slane %v2992, 7
        %v3106 = vsel %vm815, %v3101, %v3105
        %v3107 = vrot.slane %v3058, 7
        %v3108 = vsel %vm815, %v3103, %v3107
        %v3109 = vrot.slane %v2995, 7
        %v3110 = vsel %vm815, %v3105, %v3109
        %v3111 = vrot.slane %v3061, 7
        %v3112 = vsel %vm815, %v3107, %v3111
        %v3113 = vrot.slane %v2997, 7
        %v3114 = vsel %vm815, %v3109, %v3113
        %v3115 = vrot.slane %v3063, 7
        %v3116 = vsel %vm815, %v3111, %v3115
        %v3117 = vrot.slane %v3000, 7
        %v3118 = vsel %vm815, %v3113, %v3117
        %v3119 = vrot.slane %v3066, 7
        %v3120 = vsel %vm815, %v3115, %v3119
        %v3141 = vadd.f32 %v2586, %v3087
        %v3142 = vadd.f32 %v2587, %v3088
        %v3143 = vadd.f32 %v2588, %v3090
        %v3144 = vadd.f32 %v2589, %v3092
        %v3145 = vadd.f32 %v2590, %v3094
        %v3146 = vadd.f32 %v2591, %v3096
        %v3147 = vadd.f32 %v2592, %v3098
        %v3148 = vadd.f32 %v2593, %v3100
        %v3149 = vadd.f32 %v2594, %v3102
        %v3150 = vadd.f32 %v2595, %v3104
        %v3151 = vadd.f32 %v2596, %v3106
        %v3152 = vadd.f32 %v2597, %v3108
        %v3153 = vadd.f32 %v2598, %v3110
        %v3154 = vadd.f32 %v2599, %v3112
        %v3155 = vadd.f32 %v2600, %v3114
        %v3156 = vadd.f32 %v2601, %v3116
        %v3157 = vadd.f32 %v2602, %v3118
        %v3158 = vadd.f32 %v2603, %v3120
        %v3159 = vadd.f32 %v2604, %v3117
        %v3160 = vadd.f32 %v2605, %v3119
        %3161 = vst [vmem:[#allocation3] sm:$0xfe] %v3141
        %3162 = vst [vmem:[#allocation3 + $0x8] sm:$0xfe] %v3142
        %3163 = vst [vmem:[#allocation3 + $0x10] sm:$0xff] %v3143
        %3164 = vst [vmem:[#allocation3 + $0x18] sm:$0xff] %v3144
        %3165 = vst [vmem:[#allocation3 + $0x20] sm:$0xff] %v3145
        %3166 = vst [vmem:[#allocation3 + $0x28] sm:$0xff] %v3146
        %3167 = vst [vmem:[#allocation3 + $0x30] sm:$0xff] %v3147
        %3168 = vst [vmem:[#allocation3 + $0x38] sm:$0xff] %v3148
        %3169 = vst [vmem:[#allocation3 + $0x40] sm:$0xff] %v3149
        %3170 = vst [vmem:[#allocation3 + $0x48] sm:$0xff] %v3150
        %3171 = vst [vmem:[#allocation3 + $0x50] sm:$0xff] %v3151
        %3172 = vst [vmem:[#allocation3 + $0x58] sm:$0xff] %v3152
        %3173 = vst [vmem:[#allocation3 + $0x60] sm:$0xff] %v3153
        %3174 = vst [vmem:[#allocation3 + $0x68] sm:$0xff] %v3154
        %3175 = vst [vmem:[#allocation3 + $0x70] sm:$0xff] %v3155
        %3176 = vst [vmem:[#allocation3 + $0x78] sm:$0xff] %v3156
        %3177 = vst [vmem:[#allocation3 + $0x80] sm:$0xff] %v3157
        %3178 = vst [vmem:[#allocation3 + $0x88] sm:$0xff] %v3158
        %3179 = vst [vmem:[#allocation3 + $0x90] sm:$0x1] %v3159
        %3180 = vst [vmem:[#allocation3 + $0x98] sm:$0x1] %v3160
        %v3181 = vld [vmem:[#allocation3] sm:$0xfe]
        %v3182 = vld [vmem:[#allocation3 + $0x8] sm:$0xfe]
        %v3183 = vld [vmem:[#allocation3 + $0x10] sm:$0xff]
        %v3184 = vld [vmem:[#allocation3 + $0x18] sm:$0xff]
        %v3185 = vld [vmem:[#allocation3 + $0x20] sm:$0xff]
        %v3186 = vld [vmem:[#allocation3 + $0x28] sm:$0xff]
        %v3187 = vld [vmem:[#allocation3 + $0x30] sm:$0xff]
        %v3188 = vld [vmem:[#allocation3 + $0x38] sm:$0xff]
        %v3189 = vld [vmem:[#allocation3 + $0x40] sm:$0xff]
        %v3190 = vld [vmem:[#allocation3 + $0x48] sm:$0xff]
        %v3191 = vld [vmem:[#allocation3 + $0x50] sm:$0xff]
        %v3192 = vld [vmem:[#allocation3 + $0x58] sm:$0xff]
        %v3193 = vld [vmem:[#allocation3 + $0x60] sm:$0xff]
        %v3194 = vld [vmem:[#allocation3 + $0x68] sm:$0xff]
        %v3195 = vld [vmem:[#allocation3 + $0x70] sm:$0xff]
        %v3196 = vld [vmem:[#allocation3 + $0x78] sm:$0xff]
        %v3197 = vld [vmem:[#allocation3 + $0x80] sm:$0xff]
        %v3198 = vld [vmem:[#allocation3 + $0x88] sm:$0xff]
        %v3199 = vld [vmem:[#allocation3 + $0x90] sm:$0x1]
        %v3200 = vld [vmem:[#allocation3 + $0x98] sm:$0x1]
        %v3201 = vld [vmem:[#allocation2] sm:$0xee]
        %v3202 = vld [vmem:[#allocation2 + $0x8] sm:$0xff]
        %v3203 = vld [vmem:[#allocation2 + $0x10] sm:$0xff]
        %v3204 = vld [vmem:[#allocation2 + $0x18] sm:$0xff]
        %v3205 = vld [vmem:[#allocation2 + $0x20] sm:$0xff]
        %v3206 = vld [vmem:[#allocation2 + $0x28] sm:$0xff]
        %v3207 = vld [vmem:[#allocation2 + $0x30] sm:$0xff]
        %v3208 = vld [vmem:[#allocation2 + $0x38] sm:$0xff]
        %v3209 = vld [vmem:[#allocation2 + $0x40] sm:$0xff]
        %v3210 = vld [vmem:[#allocation2 + $0x48] sm:$0x11]
        %s3211 = scalar_lea.vmem [#allocation7], 512
        %v3212 = vld [vmem:[%s3211] sm:$0xff]
        %v3213 = vld [vmem:[%s3211 + $0x8] sm:$0xff]
        %v3214 = vld [vmem:[%s3211 + $0x10] sm:$0xff]
        %v3215 = vld [vmem:[%s3211 + $0x18] sm:$0xff]
        %v3216 = vld [vmem:[%s3211 + $0x20] sm:$0xff]
        %v3217 = vld [vmem:[%s3211 + $0x28] sm:$0xff]
        %v3218 = vld [vmem:[%s3211 + $0x30] sm:$0xff]
        %v3219 = vld [vmem:[%s3211 + $0x38] sm:$0xff]
        %v3220 = vld [vmem:[%s3211 + $0x40] sm:$0xff]
        %v3221 = vld [vmem:[%s3211 + $0x48] sm:$0xff]
        %v3222 = vld [vmem:[%s3211 + $0x50] sm:$0xff]
        %v3223 = vld [vmem:[%s3211 + $0x58] sm:$0xff]
        %v3224 = vld [vmem:[%s3211 + $0x60] sm:$0xff]
        %v3225 = vld [vmem:[%s3211 + $0x68] sm:$0xff]
        %v3226 = vld [vmem:[%s3211 + $0x70] sm:$0xff]
        %v3227 = vld [vmem:[%s3211 + $0x78] sm:$0xff]
        %v3228 = vld [vmem:[%s3211 + $0x80] sm:$0xff]
        %v3229 = vld [vmem:[%s3211 + $0x88] sm:$0xff]
        %v3230 = vld [vmem:[%s3211 + $0x90] sm:$0xff]
        %v3231 = vld [vmem:[%s3211 + $0x98] sm:$0xff]
        %v3232 = vld [vmem:[%s3211 + $0xa0] sm:$0xff]
        %v3233 = vld [vmem:[%s3211 + $0xa8] sm:$0xff]
        %v3234 = vld [vmem:[%s3211 + $0xb0] sm:$0xff]
        %v3235 = vld [vmem:[%s3211 + $0xb8] sm:$0xff]
        %v3236 = vld [vmem:[%s3211 + $0xc0] sm:$0xff]
        %v3237 = vld [vmem:[%s3211 + $0xc8] sm:$0xff]
        %v3238 = vld [vmem:[%s3211 + $0xd0] sm:$0xff]
        %v3239 = vld [vmem:[%s3211 + $0xd8] sm:$0xff]
        %v3240 = vld [vmem:[%s3211 + $0xe0] sm:$0xff]
        %v3241 = vld [vmem:[%s3211 + $0xe8] sm:$0xff]
        %v3242 = vld [vmem:[%s3211 + $0xf0] sm:$0xff]
        %v3243 = vld [vmem:[%s3211 + $0xf8] sm:$0xff]
        %v3254 = vunpack.c.l.b16 %v3201
        %v3255 = vunpack.c.h.b16 %v3201
        %v3256 = vunpack.c.l.b16 %v3202
        %v3257 = vunpack.c.h.b16 %v3202
        %v3258 = vunpack.c.l.b16 %v3203
        %v3259 = vunpack.c.h.b16 %v3203
        %v3260 = vunpack.c.l.b16 %v3204
        %v3261 = vunpack.c.h.b16 %v3204
        %v3262 = vunpack.c.l.b16 %v3205
        %v3263 = vunpack.c.h.b16 %v3205
        %v3264 = vunpack.c.l.b16 %v3206
        %v3265 = vunpack.c.h.b16 %v3206
        %v3266 = vunpack.c.l.b16 %v3207
        %v3267 = vunpack.c.h.b16 %v3207
        %v3268 = vunpack.c.l.b16 %v3208
        %v3269 = vunpack.c.h.b16 %v3208
        %v3270 = vunpack.c.l.b16 %v3209
        %v3271 = vunpack.c.h.b16 %v3209
        %v3272 = vunpack.c.l.b16 %v3210
        %v3273 = vunpack.c.h.b16 %v3210
        %v3274 = vpack.c.b16 %v3256, %v3254
        %v3275 = vpack.c.b16 %v3257, %v3255
        %v3276 = vpack.c.b16 %v3260, %v3258
        %v3277 = vpack.c.b16 %v3261, %v3259
        %v3278 = vpack.c.b16 %v3264, %v3262
        %v3279 = vpack.c.b16 %v3265, %v3263
        %v3280 = vpack.c.b16 %v3268, %v3266
        %v3281 = vpack.c.b16 %v3269, %v3267
        %v3282 = vpack.c.b16 %v3272, %v3270
        %v3283 = vpack.c.b16 %v3273, %v3271
        %v3284 = vrot.slane %v3274, 1
        %v3285 = vrot.slane %v3276, 1
        %v3286 = vsel %vm1588, %v3284, %v3285
        %v3287 = vrot.slane %v3275, 1
        %v3288 = vrot.slane %v3277, 1
        %v3289 = vsel %vm1588, %v3287, %v3288
        %v3290 = vrot.slane %v3278, 1
        %v3291 = vsel %vm1588, %v3285, %v3290
        %v3292 = vrot.slane %v3279, 1
        %v3293 = vsel %vm1588, %v3288, %v3292
        %v3294 = vrot.slane %v3280, 1
        %v3295 = vsel %vm1588, %v3290, %v3294
        %v3296 = vrot.slane %v3281, 1
        %v3297 = vsel %vm1588, %v3292, %v3296
        %v3298 = vrot.slane %v3282, 1
        %v3299 = vsel %vm1588, %v3294, %v3298
        %v3300 = vrot.slane %v3283, 1
        %v3301 = vsel %vm1588, %v3296, %v3300
        %v3344 = vunpack.c.l.b16 %v3212
        %v3345 = vunpack.c.h.b16 %v3212
        %v3346 = vunpack.c.l.b16 %v3213
        %v3347 = vunpack.c.h.b16 %v3213
        %v3348 = vunpack.c.l.b16 %v3214
        %v3349 = vunpack.c.h.b16 %v3214
        %v3350 = vunpack.c.l.b16 %v3215
        %v3351 = vunpack.c.h.b16 %v3215
        %v3352 = vunpack.c.l.b16 %v3216
        %v3353 = vunpack.c.h.b16 %v3216
        %v3354 = vunpack.c.l.b16 %v3217
        %v3355 = vunpack.c.h.b16 %v3217
        %v3356 = vunpack.c.l.b16 %v3218
        %v3357 = vunpack.c.h.b16 %v3218
        %v3358 = vunpack.c.l.b16 %v3219
        %v3359 = vunpack.c.h.b16 %v3219
        %v3360 = vunpack.c.l.b16 %v3220
        %v3361 = vunpack.c.h.b16 %v3220
        %v3362 = vunpack.c.l.b16 %v3221
        %v3363 = vunpack.c.h.b16 %v3221
        %v3364 = vunpack.c.l.b16 %v3222
        %v3365 = vunpack.c.h.b16 %v3222
        %v3366 = vunpack.c.l.b16 %v3223
        %v3367 = vunpack.c.h.b16 %v3223
        %v3368 = vunpack.c.l.b16 %v3224
        %v3369 = vunpack.c.h.b16 %v3224
        %v3370 = vunpack.c.l.b16 %v3225
        %v3371 = vunpack.c.h.b16 %v3225
        %v3372 = vunpack.c.l.b16 %v3226
        %v3373 = vunpack.c.h.b16 %v3226
        %v3374 = vunpack.c.l.b16 %v3227
        %v3375 = vunpack.c.h.b16 %v3227
        %v3376 = vunpack.c.l.b16 %v3228
        %v3377 = vunpack.c.h.b16 %v3228
        %v3378 = vunpack.c.l.b16 %v3229
        %v3379 = vunpack.c.h.b16 %v3229
        %v3380 = vunpack.c.l.b16 %v3230
        %v3381 = vunpack.c.h.b16 %v3230
        %v3382 = vunpack.c.l.b16 %v3231
        %v3383 = vunpack.c.h.b16 %v3231
        %v3384 = vunpack.c.l.b16 %v3232
        %v3385 = vunpack.c.h.b16 %v3232
        %v3386 = vunpack.c.l.b16 %v3233
        %v3387 = vunpack.c.h.b16 %v3233
        %v3388 = vunpack.c.l.b16 %v3234
        %v3389 = vunpack.c.h.b16 %v3234
        %v3390 = vunpack.c.l.b16 %v3235
        %v3391 = vunpack.c.h.b16 %v3235
        %v3392 = vunpack.c.l.b16 %v3236
        %v3393 = vunpack.c.h.b16 %v3236
        %v3394 = vunpack.c.l.b16 %v3237
        %v3395 = vunpack.c.h.b16 %v3237
        %v3396 = vunpack.c.l.b16 %v3238
        %v3397 = vunpack.c.h.b16 %v3238
        %v3398 = vunpack.c.l.b16 %v3239
        %v3399 = vunpack.c.h.b16 %v3239
        %v3400 = vunpack.c.l.b16 %v3240
        %v3401 = vunpack.c.h.b16 %v3240
        %v3402 = vunpack.c.l.b16 %v3241
        %v3403 = vunpack.c.h.b16 %v3241
        %v3404 = vunpack.c.l.b16 %v3242
        %v3405 = vunpack.c.h.b16 %v3242
        %v3406 = vunpack.c.l.b16 %v3243
        %v3407 = vunpack.c.h.b16 %v3243
        %v3408 = vpack.c.b16 %v3346, %v3344
        %v3409 = vpack.c.b16 %v3347, %v3345
        %v3410 = vpack.c.b16 %v3350, %v3348
        %v3411 = vpack.c.b16 %v3351, %v3349
        %v3412 = vpack.c.b16 %v3354, %v3352
        %v3413 = vpack.c.b16 %v3355, %v3353
        %v3414 = vpack.c.b16 %v3358, %v3356
        %v3415 = vpack.c.b16 %v3359, %v3357
        %v3416 = vpack.c.b16 %v3362, %v3360
        %v3417 = vpack.c.b16 %v3363, %v3361
        %v3418 = vpack.c.b16 %v3366, %v3364
        %v3419 = vpack.c.b16 %v3367, %v3365
        %v3420 = vpack.c.b16 %v3370, %v3368
        %v3421 = vpack.c.b16 %v3371, %v3369
        %v3422 = vpack.c.b16 %v3374, %v3372
        %v3423 = vpack.c.b16 %v3375, %v3373
        %v3424 = vpack.c.b16 %v3378, %v3376
        %v3425 = vpack.c.b16 %v3379, %v3377
        %v3426 = vpack.c.b16 %v3382, %v3380
        %v3427 = vpack.c.b16 %v3383, %v3381
        %v3428 = vpack.c.b16 %v3386, %v3384
        %v3429 = vpack.c.b16 %v3387, %v3385
        %v3430 = vpack.c.b16 %v3390, %v3388
        %v3431 = vpack.c.b16 %v3391, %v3389
        %v3432 = vpack.c.b16 %v3394, %v3392
        %v3433 = vpack.c.b16 %v3395, %v3393
        %v3434 = vpack.c.b16 %v3398, %v3396
        %v3435 = vpack.c.b16 %v3399, %v3397
        %v3436 = vpack.c.b16 %v3402, %v3400
        %v3437 = vpack.c.b16 %v3403, %v3401
        %v3438 = vpack.c.b16 %v3406, %v3404
        %v3439 = vpack.c.b16 %v3407, %v3405
        %3472 = vmatpush.bf16.msra.mxu0 %v3422
        %3473 = vmatpush.bf16.msra.mxu0 %v3420
        %3474 = vmatpush.bf16.msra.mxu0 %v3418
        %3475 = vmatpush.bf16.msra.mxu0 %v3416
        %3476 = vmatpush.bf16.msra.mxu0 %v3414
        %3477 = vmatpush.bf16.msra.mxu0 %v3412
        %3478 = vmatpush.bf16.msra.mxu0 %v3410
        %3479 = vmatpush.bf16.msra.mxu0 %v3408
        %3480 = vmatmul.bf16.gmra.mxu0 %v3286
        %v3481 = vpop.f32.mrf.mxu0
        %v3482 = vadd.f32 0.0, %v3481
        %v3483 = vpop.f32.mrf.mxu0
        %v3484 = vadd.f32 0.0, %v3483
        %3485 = vmatmul.bf16.gmra.mxu0 %v3291
        %v3486 = vpop.f32.mrf.mxu0
        %v3487 = vadd.f32 0.0, %v3486
        %v3488 = vpop.f32.mrf.mxu0
        %v3489 = vadd.f32 0.0, %v3488
        %3490 = vmatmul.bf16.gmra.mxu0 %v3295
        %v3491 = vpop.f32.mrf.mxu0
        %v3492 = vadd.f32 0.0, %v3491
        %v3493 = vpop.f32.mrf.mxu0
        %v3494 = vadd.f32 0.0, %v3493
        %3495 = vmatmul.bf16.gmra.mxu0 %v3299
        %v3496 = vpop.f32.mrf.mxu0
        %v3497 = vadd.f32 0.0, %v3496
        %v3498 = vpop.f32.mrf.mxu0
        %v3499 = vadd.f32 0.0, %v3498
        %3500 = vmatmul.bf16.gmra.mxu0 %v3298
        %v3501 = vpop.f32.mrf.mxu0
        %v3502 = vadd.f32 0.0, %v3501
        %v3503 = vpop.f32.mrf.mxu0
        %3504 = vdwg.mxu0
        %3505 = vmatpush.bf16.msra.mxu0 %v3438
        %3506 = vmatpush.bf16.msra.mxu0 %v3436
        %3507 = vmatpush.bf16.msra.mxu0 %v3434
        %3508 = vmatpush.bf16.msra.mxu0 %v3432
        %3509 = vmatpush.bf16.msra.mxu0 %v3430
        %3510 = vmatpush.bf16.msra.mxu0 %v3428
        %3511 = vmatpush.bf16.msra.mxu0 %v3426
        %3512 = vmatpush.bf16.msra.mxu0 %v3424
        %3513 = vmatmul.bf16.gmra.mxu0 %v3289
        %v3514 = vpop.f32.mrf.mxu0
        %v3515 = vadd.f32 %v3482, %v3514
        %v3516 = vpop.f32.mrf.mxu0
        %v3517 = vadd.f32 %v3484, %v3516
        %3518 = vmatmul.bf16.gmra.mxu0 %v3293
        %v3519 = vpop.f32.mrf.mxu0
        %v3520 = vadd.f32 %v3487, %v3519
        %v3521 = vpop.f32.mrf.mxu0
        %v3522 = vadd.f32 %v3489, %v3521
        %3523 = vmatmul.bf16.gmra.mxu0 %v3297
        %v3524 = vpop.f32.mrf.mxu0
        %v3525 = vadd.f32 %v3492, %v3524
        %v3526 = vpop.f32.mrf.mxu0
        %v3527 = vadd.f32 %v3494, %v3526
        %3528 = vmatmul.bf16.gmra.mxu0 %v3301
        %v3529 = vpop.f32.mrf.mxu0
        %v3530 = vadd.f32 %v3497, %v3529
        %v3531 = vpop.f32.mrf.mxu0
        %v3532 = vadd.f32 %v3499, %v3531
        %3533 = vmatmul.bf16.gmra.mxu0 %v3300
        %v3534 = vpop.f32.mrf.mxu0
        %v3535 = vadd.f32 %v3502, %v3534
        %v3536 = vpop.f32.mrf.mxu0
        %3537 = vdwg.mxu0
        %3538 = vmatpush.bf16.msra.mxu0 %v3423
        %3539 = vmatpush.bf16.msra.mxu0 %v3421
        %3540 = vmatpush.bf16.msra.mxu0 %v3419
        %3541 = vmatpush.bf16.msra.mxu0 %v3417
        %3542 = vmatpush.bf16.msra.mxu0 %v3415
        %3543 = vmatpush.bf16.msra.mxu0 %v3413
        %3544 = vmatpush.bf16.msra.mxu0 %v3411
        %3545 = vmatpush.bf16.msra.mxu0 %v3409
        %3546 = vmatmul.bf16.gmra.mxu0 %v3286
        %v3547 = vpop.f32.mrf.mxu0
        %v3548 = vadd.f32 0.0, %v3547
        %v3549 = vpop.f32.mrf.mxu0
        %v3550 = vadd.f32 0.0, %v3549
        %3551 = vmatmul.bf16.gmra.mxu0 %v3291
        %v3552 = vpop.f32.mrf.mxu0
        %v3553 = vadd.f32 0.0, %v3552
        %v3554 = vpop.f32.mrf.mxu0
        %v3555 = vadd.f32 0.0, %v3554
        %3556 = vmatmul.bf16.gmra.mxu0 %v3295
        %v3557 = vpop.f32.mrf.mxu0
        %v3558 = vadd.f32 0.0, %v3557
        %v3559 = vpop.f32.mrf.mxu0
        %v3560 = vadd.f32 0.0, %v3559
        %3561 = vmatmul.bf16.gmra.mxu0 %v3299
        %v3562 = vpop.f32.mrf.mxu0
        %v3563 = vadd.f32 0.0, %v3562
        %v3564 = vpop.f32.mrf.mxu0
        %v3565 = vadd.f32 0.0, %v3564
        %3566 = vmatmul.bf16.gmra.mxu0 %v3298
        %v3567 = vpop.f32.mrf.mxu0
        %v3568 = vadd.f32 0.0, %v3567
        %v3569 = vpop.f32.mrf.mxu0
        %3570 = vdwg.mxu0
        %3571 = vmatpush.bf16.msra.mxu0 %v3439
        %3572 = vmatpush.bf16.msra.mxu0 %v3437
        %3573 = vmatpush.bf16.msra.mxu0 %v3435
        %3574 = vmatpush.bf16.msra.mxu0 %v3433
        %3575 = vmatpush.bf16.msra.mxu0 %v3431
        %3576 = vmatpush.bf16.msra.mxu0 %v3429
        %3577 = vmatpush.bf16.msra.mxu0 %v3427
        %3578 = vmatpush.bf16.msra.mxu0 %v3425
        %3579 = vmatmul.bf16.gmra.mxu0 %v3289
        %v3580 = vpop.f32.mrf.mxu0
        %v3581 = vadd.f32 %v3548, %v3580
        %v3582 = vpop.f32.mrf.mxu0
        %v3583 = vadd.f32 %v3550, %v3582
        %3584 = vmatmul.bf16.gmra.mxu0 %v3293
        %v3585 = vpop.f32.mrf.mxu0
        %v3586 = vadd.f32 %v3553, %v3585
        %v3587 = vpop.f32.mrf.mxu0
        %v3588 = vadd.f32 %v3555, %v3587
        %3589 = vmatmul.bf16.gmra.mxu0 %v3297
        %v3590 = vpop.f32.mrf.mxu0
        %v3591 = vadd.f32 %v3558, %v3590
        %v3592 = vpop.f32.mrf.mxu0
        %v3593 = vadd.f32 %v3560, %v3592
        %3594 = vmatmul.bf16.gmra.mxu0 %v3301
        %v3595 = vpop.f32.mrf.mxu0
        %v3596 = vadd.f32 %v3563, %v3595
        %v3597 = vpop.f32.mrf.mxu0
        %v3598 = vadd.f32 %v3565, %v3597
        %3599 = vmatmul.bf16.gmra.mxu0 %v3300
        %v3600 = vpop.f32.mrf.mxu0
        %v3601 = vadd.f32 %v3568, %v3600
        %v3602 = vpop.f32.mrf.mxu0
        %3603 = vdwg.mxu0
        %v3622 = vrot.slane %v3515, 7
        %v3623 = vrot.slane %v3581, 7
        %v3624 = vrot.slane %v3517, 7
        %v3625 = vsel %vm815, %v3622, %v3624
        %v3626 = vrot.slane %v3583, 7
        %v3627 = vsel %vm815, %v3623, %v3626
        %v3628 = vrot.slane %v3520, 7
        %v3629 = vsel %vm815, %v3624, %v3628
        %v3630 = vrot.slane %v3586, 7
        %v3631 = vsel %vm815, %v3626, %v3630
        %v3632 = vrot.slane %v3522, 7
        %v3633 = vsel %vm815, %v3628, %v3632
        %v3634 = vrot.slane %v3588, 7
        %v3635 = vsel %vm815, %v3630, %v3634
        %v3636 = vrot.slane %v3525, 7
        %v3637 = vsel %vm815, %v3632, %v3636
        %v3638 = vrot.slane %v3591, 7
        %v3639 = vsel %vm815, %v3634, %v3638
        %v3640 = vrot.slane %v3527, 7
        %v3641 = vsel %vm815, %v3636, %v3640
        %v3642 = vrot.slane %v3593, 7
        %v3643 = vsel %vm815, %v3638, %v3642
        %v3644 = vrot.slane %v3530, 7
        %v3645 = vsel %vm815, %v3640, %v3644
        %v3646 = vrot.slane %v3596, 7
        %v3647 = vsel %vm815, %v3642, %v3646
        %v3648 = vrot.slane %v3532, 7
        %v3649 = vsel %vm815, %v3644, %v3648
        %v3650 = vrot.slane %v3598, 7
        %v3651 = vsel %vm815, %v3646, %v3650
        %v3652 = vrot.slane %v3535, 7
        %v3653 = vsel %vm815, %v3648, %v3652
        %v3654 = vrot.slane %v3601, 7
        %v3655 = vsel %vm815, %v3650, %v3654
        %v3676 = vadd.f32 %v3181, %v3622
        %v3677 = vadd.f32 %v3182, %v3623
        %v3678 = vadd.f32 %v3183, %v3625
        %v3679 = vadd.f32 %v3184, %v3627
        %v3680 = vadd.f32 %v3185, %v3629
        %v3681 = vadd.f32 %v3186, %v3631
        %v3682 = vadd.f32 %v3187, %v3633
        %v3683 = vadd.f32 %v3188, %v3635
        %v3684 = vadd.f32 %v3189, %v3637
        %v3685 = vadd.f32 %v3190, %v3639
        %v3686 = vadd.f32 %v3191, %v3641
        %v3687 = vadd.f32 %v3192, %v3643
        %v3688 = vadd.f32 %v3193, %v3645
        %v3689 = vadd.f32 %v3194, %v3647
        %v3690 = vadd.f32 %v3195, %v3649
        %v3691 = vadd.f32 %v3196, %v3651
        %v3692 = vadd.f32 %v3197, %v3653
        %v3693 = vadd.f32 %v3198, %v3655
        %v3694 = vadd.f32 %v3199, %v3652
        %v3695 = vadd.f32 %v3200, %v3654
        %3696 = vst [vmem:[#allocation3] sm:$0xfe] %v3676
        %3697 = vst [vmem:[#allocation3 + $0x8] sm:$0xfe] %v3677
        %3698 = vst [vmem:[#allocation3 + $0x10] sm:$0xff] %v3678
        %3699 = vst [vmem:[#allocation3 + $0x18] sm:$0xff] %v3679
        %3700 = vst [vmem:[#allocation3 + $0x20] sm:$0xff] %v3680
        %3701 = vst [vmem:[#allocation3 + $0x28] sm:$0xff] %v3681
        %3702 = vst [vmem:[#allocation3 + $0x30] sm:$0xff] %v3682
        %3703 = vst [vmem:[#allocation3 + $0x38] sm:$0xff] %v3683
        %3704 = vst [vmem:[#allocation3 + $0x40] sm:$0xff] %v3684
        %3705 = vst [vmem:[#allocation3 + $0x48] sm:$0xff] %v3685
        %3706 = vst [vmem:[#allocation3 + $0x50] sm:$0xff] %v3686
        %3707 = vst [vmem:[#allocation3 + $0x58] sm:$0xff] %v3687
        %3708 = vst [vmem:[#allocation3 + $0x60] sm:$0xff] %v3688
        %3709 = vst [vmem:[#allocation3 + $0x68] sm:$0xff] %v3689
        %3710 = vst [vmem:[#allocation3 + $0x70] sm:$0xff] %v3690
        %3711 = vst [vmem:[#allocation3 + $0x78] sm:$0xff] %v3691
        %3712 = vst [vmem:[#allocation3 + $0x80] sm:$0xff] %v3692
        %3713 = vst [vmem:[#allocation3 + $0x88] sm:$0xff] %v3693
        %3714 = vst [vmem:[#allocation3 + $0x90] sm:$0x1] %v3694
        %3715 = vst [vmem:[#allocation3 + $0x98] sm:$0x1] %v3695
        %v3716 = vld [vmem:[#allocation3] sm:$0xfc]
        %v3717 = vld [vmem:[#allocation3 + $0x8] sm:$0xfc]
        %v3718 = vld [vmem:[#allocation3 + $0x10] sm:$0xff]
        %v3719 = vld [vmem:[#allocation3 + $0x18] sm:$0xff]
        %v3720 = vld [vmem:[#allocation3 + $0x20] sm:$0x3]
        %v3721 = vld [vmem:[#allocation3 + $0x28] sm:$0x3]
        %vm3728 = vcmask 1045504
        %v3729 = vrot.slane %v3716, 2
        %v3730 = vrot.slane %v3718, 2
        %v3731 = vsel %vm3728, %v3729, %v3730
        %v3732 = vrot.slane %v3717, 2
        %v3733 = vrot.slane %v3719, 2
        %v3734 = vsel %vm3728, %v3732, %v3733
        %v3735 = vrot.slane %v3720, 2
        %v3736 = vsel %vm3728, %v3730, %v3735
        %v3737 = vrot.slane %v3721, 2
        %v3738 = vsel %vm3728, %v3733, %v3737
        %v3743 = vadd.f32 %v3731, %v3736
        %v3744 = vrot.slane %v3743, 4
        %v3745 = vadd.f32 %v3743, %v3744
        %v3746 = vrot.slane %v3745, 2
        %v3747 = vadd.f32 %v3745, %v3746
        %v3748 = vrot.slane %v3747, 1
        %v3749 = vadd.f32 %v3747, %v3748
        %v3750 = vadd.f32 %v3734, %v3738
        %v3751 = vrot.slane %v3750, 4
        %v3752 = vadd.f32 %v3750, %v3751
        %v3753 = vrot.slane %v3752, 2
        %v3754 = vadd.f32 %v3752, %v3753
        %v3755 = vrot.slane %v3754, 1
        %v3756 = vadd.f32 %v3754, %v3755
        %v3757 = vld [vmem:[#allocation3 + $0x20] sm:$0xf0]
        %v3758 = vld [vmem:[#allocation3 + $0x28] sm:$0xf0]
        %v3759 = vld [vmem:[#allocation3 + $0x30] sm:$0xff]
        %v3760 = vld [vmem:[#allocation3 + $0x38] sm:$0xff]
        %v3761 = vld [vmem:[#allocation3 + $0x40] sm:$0xf]
        %v3762 = vld [vmem:[#allocation3 + $0x48] sm:$0xf]
        %vm3769 = vcmask 1043456
        %v3770 = vrot.slane %v3757, 4
        %v3771 = vrot.slane %v3759, 4
        %v3772 = vsel %vm3769, %v3770, %v3771
        %v3773 = vrot.slane %v3758, 4
        %v3774 = vrot.slane %v3760, 4
        %v3775 = vsel %vm3769, %v3773, %v3774
        %v3776 = vrot.slane %v3761, 4
        %v3777 = vsel %vm3769, %v3771, %v3776
        %v3778 = vrot.slane %v3762, 4
        %v3779 = vsel %vm3769, %v3774, %v3778
        %v3784 = vadd.f32 %v3772, %v3777
        %v3785 = vrot.slane %v3784, 4
        %v3786 = vadd.f32 %v3784, %v3785
        %v3787 = vrot.slane %v3786, 2
        %v3788 = vadd.f32 %v3786, %v3787
        %v3789 = vrot.slane %v3788, 1
        %v3790 = vadd.f32 %v3788, %v3789
        %v3791 = vadd.f32 %v3775, %v3779
        %v3792 = vrot.slane %v3791, 4
        %v3793 = vadd.f32 %v3791, %v3792
        %v3794 = vrot.slane %v3793, 2
        %v3795 = vadd.f32 %v3793, %v3794
        %v3796 = vrot.slane %v3795, 1
        %v3797 = vadd.f32 %v3795, %v3796
        %v3798 = vld [vmem:[#allocation3 + $0x40] sm:$0xc0]
        %v3799 = vld [vmem:[#allocation3 + $0x48] sm:$0xc0]
        %v3800 = vld [vmem:[#allocation3 + $0x50] sm:$0xff]
        %v3801 = vld [vmem:[#allocation3 + $0x58] sm:$0xff]
        %v3802 = vld [vmem:[#allocation3 + $0x60] sm:$0x3f]
        %v3803 = vld [vmem:[#allocation3 + $0x68] sm:$0x3f]
        %vm3810 = vcmask 1041408
        %v3811 = vrot.slane %v3798, 6
        %v3812 = vrot.slane %v3800, 6
        %v3813 = vsel %vm3810, %v3811, %v3812
        %v3814 = vrot.slane %v3799, 6
        %v3815 = vrot.slane %v3801, 6
        %v3816 = vsel %vm3810, %v3814, %v3815
        %v3817 = vrot.slane %v3802, 6
        %v3818 = vsel %vm3810, %v3812, %v3817
        %v3819 = vrot.slane %v3803, 6
        %v3820 = vsel %vm3810, %v3815, %v3819
        %v3825 = vadd.f32 %v3813, %v3818
        %v3826 = vrot.slane %v3825, 4
        %v3827 = vadd.f32 %v3825, %v3826
        %v3828 = vrot.slane %v3827, 2
        %v3829 = vadd.f32 %v3827, %v3828
        %v3830 = vrot.slane %v3829, 1
        %v3831 = vadd.f32 %v3829, %v3830
        %v3832 = vadd.f32 %v3816, %v3820
        %v3833 = vrot.slane %v3832, 4
        %v3834 = vadd.f32 %v3832, %v3833
        %v3835 = vrot.slane %v3834, 2
        %v3836 = vadd.f32 %v3834, %v3835
        %v3837 = vrot.slane %v3836, 1
        %v3838 = vadd.f32 %v3836, %v3837
        %v3839 = vld [vmem:[#allocation3 + $0x70] sm:$0xff]
        %v3840 = vld [vmem:[#allocation3 + $0x78] sm:$0xff]
        %v3841 = vld [vmem:[#allocation3 + $0x80] sm:$0xff]
        %v3842 = vld [vmem:[#allocation3 + $0x88] sm:$0xff]
        %v3843 = vadd.f32 %v3839, %v3841
        %v3844 = vrot.slane %v3843, 4
        %v3845 = vadd.f32 %v3843, %v3844
        %v3846 = vrot.slane %v3845, 2
        %v3847 = vadd.f32 %v3845, %v3846
        %v3848 = vrot.slane %v3847, 1
        %v3849 = vadd.f32 %v3847, %v3848
        %v3850 = vadd.f32 %v3840, %v3842
        %v3851 = vrot.slane %v3850, 4
        %v3852 = vadd.f32 %v3850, %v3851
        %v3853 = vrot.slane %v3852, 2
        %v3854 = vadd.f32 %v3852, %v3853
        %v3855 = vrot.slane %v3854, 1
        %v3856 = vadd.f32 %v3854, %v3855
        %v3857 = vsel %vm815, %v3749, %v3790
        %v3858 = vsel %vm815, %v3756, %v3797
        %v3859 = vsel %vm3810, %v3857, %v3831
        %v3860 = vsel %vm3810, %v3858, %v3838
        %vm3861 = vcmask 1042432
        %v3862 = vsel %vm3861, %v3859, %v3849
        %v3863 = vsel %vm3861, %v3860, %v3856
        %v3864 = vld [vmem:[%s3] sm:$0xff]
        %v3865 = vld [vmem:[%s3 + $0x8] sm:$0xff]
        %v3866 = vld [vmem:[%s3 + $0x10] sm:$0xff]
        %v3867 = vld [vmem:[%s3 + $0x18] sm:$0xff]
        %v3868 = vld [vmem:[%s3 + $0x20] sm:$0xff]
        %v3869 = vld [vmem:[%s3 + $0x28] sm:$0xff]
        %v3870 = vld [vmem:[%s3 + $0x30] sm:$0xff]
        %v3871 = vld [vmem:[%s3 + $0x38] sm:$0xff]
        %v3872 = vld [vmem:[%s3 + $0x40] sm:$0xff]
        %v3873 = vld [vmem:[%s3 + $0x48] sm:$0xff]
        %v3874 = vld [vmem:[%s3 + $0x50] sm:$0xff]
        %v3875 = vld [vmem:[%s3 + $0x58] sm:$0xff]
        %v3876 = vld [vmem:[%s3 + $0x60] sm:$0xff]
        %v3877 = vld [vmem:[%s3 + $0x68] sm:$0xff]
        %v3878 = vld [vmem:[%s3 + $0x70] sm:$0xff]
        %v3879 = vld [vmem:[%s3 + $0x78] sm:$0xff]
        %v3880 = vld [vmem:[%s3 + $0x80] sm:$0xff]
        %v3881 = vld [vmem:[%s3 + $0x88] sm:$0xff]
        %v3882 = vld [vmem:[%s3 + $0x90] sm:$0xff]
        %v3883 = vld [vmem:[%s3 + $0x98] sm:$0xff]
        %v3884 = vld [vmem:[%s3 + $0xa0] sm:$0xff]
        %v3885 = vld [vmem:[%s3 + $0xa8] sm:$0xff]
        %v3886 = vld [vmem:[%s3 + $0xb0] sm:$0xff]
        %v3887 = vld [vmem:[%s3 + $0xb8] sm:$0xff]
        %v3888 = vld [vmem:[%s3 + $0xc0] sm:$0xff]
        %v3889 = vld [vmem:[%s3 + $0xc8] sm:$0xff]
        %v3890 = vld [vmem:[%s3 + $0xd0] sm:$0xff]
        %v3891 = vld [vmem:[%s3 + $0xd8] sm:$0xff]
        %v3892 = vld [vmem:[%s3 + $0xe0] sm:$0xff]
        %v3893 = vld [vmem:[%s3 + $0xe8] sm:$0xff]
        %v3894 = vld [vmem:[%s3 + $0xf0] sm:$0xff]
        %v3895 = vld [vmem:[%s3 + $0xf8] sm:$0xff]
        %3896 = vmatpush.msra.mxu0 %v3879
        %3897 = vmatpush.msra.mxu0 %v3878
        %3898 = vmatpush.msra.mxu0 %v3877
        %3899 = vmatpush.msra.mxu0 %v3876
        %3900 = vmatpush.msra.mxu0 %v3875
        %3901 = vmatpush.msra.mxu0 %v3874
        %3902 = vmatpush.msra.mxu0 %v3873
        %3903 = vmatpush.msra.mxu0 %v3872
        %3904 = vmatpush.msra.mxu0 %v3871
        %3905 = vmatpush.msra.mxu0 %v3870
        %3906 = vmatpush.msra.mxu0 %v3869
        %3907 = vmatpush.msra.mxu0 %v3868
        %3908 = vmatpush.msra.mxu0 %v3867
        %3909 = vmatpush.msra.mxu0 %v3866
        %3910 = vmatpush.msra.mxu0 %v3865
        %3911 = vmatpush.msra.mxu0 %v3864
        %3912 = vmatmul.f32.gmra.mxu0 %v3862
        %v3913 = vpop.f32.mrf.mxu0
        %v3914 = vadd.f32 0.0, %v3913
        %3915 = vdwg.mxu0
        %3916 = vmatpush.msra.mxu0 %v3895
        %3917 = vmatpush.msra.mxu0 %v3894
        %3918 = vmatpush.msra.mxu0 %v3893
        %3919 = vmatpush.msra.mxu0 %v3892
        %3920 = vmatpush.msra.mxu0 %v3891
        %3921 = vmatpush.msra.mxu0 %v3890
        %3922 = vmatpush.msra.mxu0 %v3889
        %3923 = vmatpush.msra.mxu0 %v3888
        %3924 = vmatpush.msra.mxu0 %v3887
        %3925 = vmatpush.msra.mxu0 %v3886
        %3926 = vmatpush.msra.mxu0 %v3885
        %3927 = vmatpush.msra.mxu0 %v3884
        %3928 = vmatpush.msra.mxu0 %v3883
        %3929 = vmatpush.msra.mxu0 %v3882
        %3930 = vmatpush.msra.mxu0 %v3881
        %3931 = vmatpush.msra.mxu0 %v3880
        %3932 = vmatmul.f32.gmra.mxu0 %v3863
        %v3933 = vpop.f32.mrf.mxu0
        %v3934 = vadd.f32 %v3914, %v3933
        %3935 = vdwg.mxu0
        %v3936 = vmax.f32 %v3934, 0.0
        %v3937 = vld [vmem:[%s4] sm:$0xff]
        %3939 = vst [vmem:[#allocation1] ss:$2 sm:$0xff] %v3937
        %v3940 = vld.sshfl [vmem:[#allocation1] sm:$0xff pattern:$0x75316420]
        %v3941 = vld.sshfl [vmem:[#allocation1 + $0x8] sm:$0xff pattern:$0x75316420]
        %vm3942 = vcmask 31744
        %v3944 = vsel %vm3942, %v3936, 0
        %v3946 = vsel %vm3769, %v3940, 0
        %v3948 = vsel %vm3769, %v3941, 0
        %3950 = vmatpush.msra.mxu0 0.0
        %3951 = vmatpush.msra.mxu0 0.0
        %3952 = vmatpush.msra.mxu0 0.0
        %3953 = vmatpush.msra.mxu0 0.0
        %3954 = vmatpush.msra.mxu0 0.0
        %3955 = vmatpush.msra.mxu0 0.0
        %3956 = vmatpush.msra.mxu0 0.0
        %3957 = vmatpush.msra.mxu0 0.0
        %3958 = vmatpush.msra.mxu0 0.0
        %3959 = vmatpush.msra.mxu0 0.0
        %3960 = vmatpush.msra.mxu0 0.0
        %3961 = vmatpush.msra.mxu0 0.0
        %3962 = vmatpush.msra.mxu0 0.0
        %3963 = vmatpush.msra.mxu0 0.0
        %3964 = vmatpush.msra.mxu0 0.0
        %3965 = vmatpush.msra.mxu0 %v3946
        %3966 = vmatmul.f32.gmra.mxu0 %v3944
        %v3967 = vpop.f32.mrf.mxu0
        %v3968 = vadd.f32 0.0, %v3967
        %3969 = vdwg.mxu0
        %3970 = vmatpush.msra.mxu0 0.0
        %3971 = vmatpush.msra.mxu0 0.0
        %3972 = vmatpush.msra.mxu0 0.0
        %3973 = vmatpush.msra.mxu0 0.0
        %3974 = vmatpush.msra.mxu0 0.0
        %3975 = vmatpush.msra.mxu0 0.0
        %3976 = vmatpush.msra.mxu0 0.0
        %3977 = vmatpush.msra.mxu0 0.0
        %3978 = vmatpush.msra.mxu0 0.0
        %3979 = vmatpush.msra.mxu0 0.0
        %3980 = vmatpush.msra.mxu0 0.0
        %3981 = vmatpush.msra.mxu0 0.0
        %3982 = vmatpush.msra.mxu0 0.0
        %3983 = vmatpush.msra.mxu0 0.0
        %3984 = vmatpush.msra.mxu0 0.0
        %3985 = vmatpush.msra.mxu0 %v3948
        %3986 = vmatmul.f32.gmra.mxu0 %v3944
        %v3987 = vpop.f32.mrf.mxu0
        %v3988 = vadd.f32 0.0, %v3987
        %3989 = vdwg.mxu0
        %v3990 = vxor.u32 %v3968, 2147483648
        %v3991 = vxor.u32 %v3988, 2147483648
        %v3992 = vmul.f32 %v3990, 1.442695
        %v3993 = vpow.pop %v3992
        %v3994 = vmul.f32 %v3991, 1.442695
        %v3995 = vpow.pop %v3994
        %v3996 = vadd.f32 %v3993, 1.0
        %v3997 = vadd.f32 %v3995, 1.0
        %v3998 = vrcp.pop %v3996
        %v3999 = vmul.f32 %v3996, %v3998
        %v4000 = vsub.f32 1.0, %v3999
        %v4001 = vmul.f32 %v3998, %v4000
        %v4002 = vadd.f32 %v3998, %v4001
        %vm4003 = vweird.f32 %v3996
        %vm4004 = vweird.f32 %v3998
        %vm4005 = vmor %vm4003, %vm4004
        %v4006 = vsel %vm4005, %v3998, %v4002
        %v4007 = vand.u32 2147483647, %v3996
        %vm4008 = vcmp.eq.f32.partialorder %v4007, 8.507059e+37
        %v4009 = vand.u32 %v3996, 2147483648
        %v4010 = vor.u32 1.1754944e-38, %v4009
        %v4011 = vsel %vm4008, %v4010, %v4006
        %v4012 = vmul.f32 1.0, %v4011
        %v4013 = vrcp.pop %v3997
        %v4014 = vmul.f32 %v3997, %v4013
        %v4015 = vsub.f32 1.0, %v4014
        %v4016 = vmul.f32 %v4013, %v4015
        %v4017 = vadd.f32 %v4013, %v4016
        %vm4018 = vweird.f32 %v3997
        %vm4019 = vweird.f32 %v4013
        %vm4020 = vmor %vm4018, %vm4019
        %v4021 = vsel %vm4020, %v4013, %v4017
        %v4022 = vand.u32 2147483647, %v3997
        %vm4023 = vcmp.eq.f32.partialorder %v4022, 8.507059e+37
        %v4024 = vand.u32 %v3997, 2147483648
        %v4025 = vor.u32 1.1754944e-38, %v4024
        %v4026 = vsel %vm4023, %v4025, %v4021
        %v4027 = vmul.f32 1.0, %v4026
        %v4028 = vperm.slane %v4012, 0
        %v4029 = vperm.slane %v4027, 0
        %v4030 = vmul.f32 %v3716, %v4028
        %v4031 = vmul.f32 %v3717, %v4029
        %v4032 = vmul.f32 %v3718, %v4028
        %v4033 = vmul.f32 %v3719, %v4029
        %v4034 = vmul.f32 %v3720, %v4028
        %v4035 = vmul.f32 %v3721, %v4029
        %v4036 = vld [vmem:[%s260] sm:$0xff]
        %v4037 = vld [vmem:[%s260 + $0x8] sm:$0xff]
        %v4038 = vld [vmem:[%s260 + $0x10] sm:$0xff]
        %v4039 = vld [vmem:[%s260 + $0x18] sm:$0xff]
        %v4044 = vrot.slane %v4036, 6
        %v4045 = vrot.slane %v4037, 6
        %v4046 = vrot.slane %v4038, 6
        %v4047 = vsel %vm3810, %v4044, %v4046
        %v4048 = vrot.slane %v4039, 6
        %v4049 = vsel %vm3810, %v4045, %v4048
        %v4056 = vadd.f32 %v4030, %v4044
        %v4057 = vadd.f32 %v4031, %v4045
        %v4058 = vadd.f32 %v4032, %v4047
        %v4059 = vadd.f32 %v4033, %v4049
        %v4060 = vadd.f32 %v4034, %v4046
        %v4061 = vadd.f32 %v4035, %v4048
        %v4068 = vrot.slane %v4056, 2
        %v4069 = vrot.slane %v4058, 2
        %v4070 = vsel %vm3728, %v4068, %v4069
        %v4071 = vrot.slane %v4057, 2
        %v4072 = vrot.slane %v4059, 2
        %v4073 = vsel %vm3728, %v4071, %v4072
        %v4074 = vrot.slane %v4060, 2
        %v4075 = vsel %vm3728, %v4069, %v4074
        %v4076 = vrot.slane %v4061, 2
        %v4077 = vsel %vm3728, %v4072, %v4076
        %4082 = vst [vmem:[%s254] sm:$0xff] %v4070
        %4083 = vst [vmem:[%s254 + $0x8] sm:$0xff] %v4073
        %4084 = vst [vmem:[%s254 + $0x10] sm:$0xff] %v4075
        %4085 = vst [vmem:[%s254 + $0x18] sm:$0xff] %v4077
        %v4086 = vld [vmem:[#allocation3 + $0x20] sm:$0xf0]
        %v4087 = vld [vmem:[#allocation3 + $0x28] sm:$0xf0]
        %v4088 = vld [vmem:[#allocation3 + $0x30] sm:$0xff]
        %v4089 = vld [vmem:[#allocation3 + $0x38] sm:$0xff]
        %v4090 = vld [vmem:[#allocation3 + $0x40] sm:$0xf]
        %v4091 = vld [vmem:[#allocation3 + $0x48] sm:$0xf]
        %v4092 = vperm.slane %v4012, 1
        %v4093 = vperm.slane %v4027, 1
        %v4094 = vmul.f32 %v4086, %v4092
        %v4095 = vmul.f32 %v4087, %v4093
        %v4096 = vmul.f32 %v4088, %v4092
        %v4097 = vmul.f32 %v4089, %v4093
        %v4098 = vmul.f32 %v4090, %v4092
        %v4099 = vmul.f32 %v4091, %v4093
        %v4100 = vld [vmem:[%s302] sm:$0xff]
        %v4101 = vld [vmem:[%s302 + $0x8] sm:$0xff]
        %v4102 = vld [vmem:[%s302 + $0x10] sm:$0xff]
        %v4103 = vld [vmem:[%s302 + $0x18] sm:$0xff]
        %v4108 = vrot.slane %v4100, 4
        %v4109 = vrot.slane %v4101, 4
        %v4110 = vrot.slane %v4102, 4
        %v4111 = vsel %vm3769, %v4108, %v4110
        %v4112 = vrot.slane %v4103, 4
        %v4113 = vsel %vm3769, %v4109, %v4112
        %v4120 = vadd.f32 %v4094, %v4108
        %v4121 = vadd.f32 %v4095, %v4109
        %v4122 = vadd.f32 %v4096, %v4111
        %v4123 = vadd.f32 %v4097, %v4113
        %v4124 = vadd.f32 %v4098, %v4110
        %v4125 = vadd.f32 %v4099, %v4112
        %v4132 = vrot.slane %v4120, 4
        %v4133 = vrot.slane %v4122, 4
        %v4134 = vsel %vm3769, %v4132, %v4133
        %v4135 = vrot.slane %v4121, 4
        %v4136 = vrot.slane %v4123, 4
        %v4137 = vsel %vm3769, %v4135, %v4136
        %v4138 = vrot.slane %v4124, 4
        %v4139 = vsel %vm3769, %v4133, %v4138
        %v4140 = vrot.slane %v4125, 4
        %v4141 = vsel %vm3769, %v4136, %v4140
        %s4146 = scalar_lea.vmem %s254, 32 [#allocation9]
        %4147 = vst [vmem:[%s4146] sm:$0xff] %v4134
        %4148 = vst [vmem:[%s4146 + $0x8] sm:$0xff] %v4137
        %4149 = vst [vmem:[%s4146 + $0x10] sm:$0xff] %v4139
        %4150 = vst [vmem:[%s4146 + $0x18] sm:$0xff] %v4141
        %v4151 = vld [vmem:[#allocation3 + $0x40] sm:$0xc0]
        %v4152 = vld [vmem:[#allocation3 + $0x48] sm:$0xc0]
        %v4153 = vld [vmem:[#allocation3 + $0x50] sm:$0xff]
        %v4154 = vld [vmem:[#allocation3 + $0x58] sm:$0xff]
        %v4155 = vld [vmem:[#allocation3 + $0x60] sm:$0x3f]
        %v4156 = vld [vmem:[#allocation3 + $0x68] sm:$0x3f]
        %v4157 = vperm.slane %v4012, 2
        %v4158 = vperm.slane %v4027, 2
        %v4159 = vmul.f32 %v4151, %v4157
        %v4160 = vmul.f32 %v4152, %v4158
        %v4161 = vmul.f32 %v4153, %v4157
        %v4162 = vmul.f32 %v4154, %v4158
        %v4163 = vmul.f32 %v4155, %v4157
        %v4164 = vmul.f32 %v4156, %v4158
        %v4165 = vld [vmem:[%s325] sm:$0xff]
        %v4166 = vld [vmem:[%s325 + $0x8] sm:$0xff]
        %v4167 = vld [vmem:[%s325 + $0x10] sm:$0xff]
        %v4168 = vld [vmem:[%s325 + $0x18] sm:$0xff]
        %v4173 = vrot.slane %v4165, 2
        %v4174 = vrot.slane %v4166, 2
        %v4175 = vrot.slane %v4167, 2
        %v4176 = vsel %vm3728, %v4173, %v4175
        %v4177 = vrot.slane %v4168, 2
        %v4178 = vsel %vm3728, %v4174, %v4177
        %v4185 = vadd.f32 %v4159, %v4173
        %v4186 = vadd.f32 %v4160, %v4174
        %v4187 = vadd.f32 %v4161, %v4176
        %v4188 = vadd.f32 %v4162, %v4178
        %v4189 = vadd.f32 %v4163, %v4175
        %v4190 = vadd.f32 %v4164, %v4177
        %v4197 = vrot.slane %v4185, 6
        %v4198 = vrot.slane %v4187, 6
        %v4199 = vsel %vm3810, %v4197, %v4198
        %v4200 = vrot.slane %v4186, 6
        %v4201 = vrot.slane %v4188, 6
        %v4202 = vsel %vm3810, %v4200, %v4201
        %v4203 = vrot.slane %v4189, 6
        %v4204 = vsel %vm3810, %v4198, %v4203
        %v4205 = vrot.slane %v4190, 6
        %v4206 = vsel %vm3810, %v4201, %v4205
        %s4211 = scalar_lea.vmem %s254, 64 [#allocation9]
        %4212 = vst [vmem:[%s4211] sm:$0xff] %v4199
        %4213 = vst [vmem:[%s4211 + $0x8] sm:$0xff] %v4202
        %4214 = vst [vmem:[%s4211 + $0x10] sm:$0xff] %v4204
        %4215 = vst [vmem:[%s4211 + $0x18] sm:$0xff] %v4206
        %v4216 = vld [vmem:[#allocation3 + $0x70] sm:$0xff]
        %v4217 = vld [vmem:[#allocation3 + $0x78] sm:$0xff]
        %v4218 = vld [vmem:[#allocation3 + $0x80] sm:$0xff]
        %v4219 = vld [vmem:[#allocation3 + $0x88] sm:$0xff]
        %v4220 = vperm.slane %v4012, 3
        %v4221 = vperm.slane %v4027, 3
        %v4222 = vmul.f32 %v4216, %v4220
        %v4223 = vmul.f32 %v4217, %v4221
        %v4224 = vmul.f32 %v4218, %v4220
        %v4225 = vmul.f32 %v4219, %v4221
        %v4226 = vld [vmem:[%s348] sm:$0xff]
        %v4227 = vld [vmem:[%s348 + $0x8] sm:$0xff]
        %v4228 = vld [vmem:[%s348 + $0x10] sm:$0xff]
        %v4229 = vld [vmem:[%s348 + $0x18] sm:$0xff]
        %v4230 = vadd.f32 %v4222, %v4226
        %v4231 = vadd.f32 %v4223, %v4227
        %v4232 = vadd.f32 %v4224, %v4228
        %v4233 = vadd.f32 %v4225, %v4229
        %s4234 = scalar_lea.vmem %s254, 96 [#allocation9]
        %4235 = vst [vmem:[%s4234] sm:$0xff] %v4230
        %4236 = vst [vmem:[%s4234 + $0x8] sm:$0xff] %v4231
        %4237 = vst [vmem:[%s4234 + $0x10] sm:$0xff] %v4232
        %4238 = vst [vmem:[%s4234 + $0x18] sm:$0xff] %v4233
        %s4239 = sand.u32 %s139, 1
        %s4240 = scalar_lea.sflag [#allocation6], %s4239
        %s4241 = sand.u32 %s139, 1
        %s4242 = smul.addr %s4241, 128
        %s4243 = scalar_lea.vmem [#allocation9], %s4242
        // Predicated region
        $region49: #{tpu_custom_call.1} parent=39 // pred_check
          %p4244 = pneg %p149
        $region50: #{tpu_custom_call.1} parent=39 // pred_check_branch
          %4246 = sbr.rel (%p4244) target = $region52
        $region51: #{tpu_custom_call.1} parent=39 // pred_region
          %s4247 = smul.u32 4, %s21
          %4249 = vsyncadd %s4240, 0
          %s4250 = smul.addr %s4247, 4
          %s4251 = smul.addr %s4250, 8
          %s4252 = scalar_lea.hbm %s5, %s4251
          %s4253 = sshll.u32 %s4243, 4
          %s4254 = int_to_ptr.vmem [resolvable:$true] %s4253
          %s4255 = sshll.u32 %s4252, 4
          %s4256 = int_to_ptr.hbm [resolvable:$true] %s4255
          %4261 = dma.vmem_to_hbm [thread:$0]  %s4254, 2048, %s4256, %s4240, 256, 256, 16
        $region52: #{tpu_custom_call.1} parent=39 // pred_fallthru
          _
      $region40: #{tpu_custom_call.1} parent=5 // pred_fallthru
        _
      %p4262 = scmp.le.s32.totalorder 2, %s16
      // Predicated region
      $region53: #{tpu_custom_call.1} parent=5 // pred_check
        %p4263 = pneg %p4262
      $region54: #{tpu_custom_call.1} parent=5 // pred_check_branch
        %4265 = sbr.rel (%p4263) target = $region56
      $region55: #{tpu_custom_call.1} parent=5 // pred_region
        %s4266 = ssub.s32 %s16, 2
        // Predicated region
        $region57: #{tpu_custom_call.1} parent=55 // pred_check
          %p4267 = pneg %p155
        $region58: #{tpu_custom_call.1} parent=55 // pred_check_branch
          %4269 = sbr.rel (%p4267) target = $region60
        $region59: #{tpu_custom_call.1} parent=55 // pred_region
          %s4270 = sand.u32 %s140, 1
          %s4271 = scalar_lea.sflag [#allocation6], %s4270
          %s4272 = sand.u32 %s140, 1
          %s4273 = smul.addr %s4272, 128
          %s4274 = scalar_lea.vmem [#allocation9], %s4273
          %4276 = dma.done %s4271, 2048
        $region60: #{tpu_custom_call.1} parent=55 // pred_fallthru
          _
      $region56: #{tpu_custom_call.1} parent=5 // pred_fallthru
        _
    $region6: #{tpu_custom_call.1} parent=1 // loop_footer
      %s20 = sadd.s32 1, %s16
    $region7: #{tpu_custom_call.1} parent=1 // loop_footer_branch
      %15 = sbr.rel target = $region3
    $region8: #{tpu_custom_call.1} parent=1 // loop_exit
      _
    %4277 = vsyncpa [#allocation5], 1
    %s4278 = scalar_lea.sflag [#allocation5], 1
    %4279 = vsyncpa %s4278, 1
    %4280 = vsyncpa [#allocation8], 1
    %4281 = vsyncpa [#allocation6], 1
    %s4282 = scalar_lea.sflag [#allocation6], 1
    %4283 = vsyncpa %s4282, 1

// kernel: tpu_custom_call.1
$region0: #{tpu_custom_call.1}
  #allocation0 [shape = 'u32[]', space=smem, size = 0x4, offset = 0x4, fixed_abs, tag = 'smem constant byte address 0x4 - core index']
  #allocation1 [shape = 'u32[72,128]{1,0:T(1,128)}', space=vmem, size = 0x9000, scoped, tag = 'internal scratch']
  #allocation2 [shape = 'bf16[74,256]{1,0:T(8,128)(2,1)}', space=vmem, size = 0xa000, scoped, tag = 'scratch operand']
  #allocation3 [shape = 'f32[74,256]{1,0:T(8,128)}', space=vmem, size = 0x14000, scoped, tag = 'scratch operand']
  %s0 = inlined_call_operand.vmem [shape: f32[8,16,256], index: 0, kind: input, shape index: {}]
  %s1 = inlined_call_operand.hbm [shape: bf16[3,256,256], index: 1, kind: input, shape index: {}]
  %s2 = inlined_call_operand.hbm [shape: bf16[3,256,256], index: 2, kind: input, shape index: {}]
  %s3 = inlined_call_operand.vmem [shape: f32[256,4], index: 3, kind: input, shape index: {}]
  %s4 = inlined_call_operand.vmem [shape: f32[4,256], index: 4, kind: input, shape index: {}]
  %s5 = inlined_call_operand.hbm [shape: f32[8,16,256], index: 5, kind: output, shape index: {}]
  %s6 = sld [smem:[#allocation0]]
  $region61: #{tpu_custom_call.1} parent=0
    _
  %s8 = ssub.s32 1, %s6
  %s9 = scalar_select 0, %s8, %s6
  $region1: #{tpu_custom_call.1} parent=0
    #allocation4 [shape = 'u8[393216]{0}', space=vmem, size = 0x60000, scoped, tag = 'input window, operand 1, single buffered']
    #allocation5 [shape = 's32[2]{0}', space=sflag, size = 0x8, scoped, tag = 'scoped memory for tpu_custom_call.1']
    #allocation6 [shape = 's32[2]{0}', space=sflag, size = 0x8, scoped, tag = 'scoped memory for tpu_custom_call.1']
    #allocation7 [shape = 'u8[393216]{0}', space=vmem, size = 0x60000, scoped, tag = 'input window, operand 2, single buffered']
    #allocation8 [shape = 's32[1]{0}', space=sflag, size = 0x4, scoped, tag = 'scoped memory for tpu_custom_call.1']
    #allocation9 [shape = 'u8[131072]{0}', space=vmem, size = 0x20000, scoped, tag = 'output window, operand 0']
    %10 = vsyncpa [#allocation5], 0
    %11 = vsyncpa [#allocation8], 0
    %12 = vsyncpa [#allocation6], 0
    %s13 = scalar_lea.sflag [#allocation6], 1
    %14 = vsyncpa %s13, 0
    loop: start=0, step=1, limit=4
    $region2: #{tpu_custom_call.1} parent=1 // loop_pre_header
      _
    $region3: #{tpu_custom_call.1} parent=1 // loop_header
      %s16 = sphi 0, %s20
      %p17 = scmp.ge.s32.totalorder %s16, 4
      %s26 = sphi 0, %s28
      %s29 = sphi 0, %s26
      %s30 = sphi 0, %s29
      %s46 = sphi 0, %s30
      %s50 = sphi 0, %s50
      %s52 = sphi 0, %s50
      %s53 = sphi 0, %s52
      %s67 = sphi 0, %s53
      %s71 = sphi 0, %s71
      %s73 = sphi 0, %s71
      %s74 = sphi 0, %s73
      %s88 = sphi 0, %s74
      %s92 = sphi 0, %s92
      %s94 = sphi 0, %s92
      %s95 = sphi 0, %s94
      %s109 = sphi 0, %s95
      %s113 = sphi 0, %s113
      %s115 = sphi 0, %s113
      %s116 = sphi 0, %s115
      %s130 = sphi 0, %s116
      %s136 = sphi 0, %s138
      %s139 = sphi 0, %s136
      %s140 = sphi 0, %s139
      %s156 = sphi 0, %s140
    $region4: #{tpu_custom_call.1} parent=1 // loop_header_branch
      %19 = sbr.rel (%p17) target = $region8
    $region5: #{tpu_custom_call.1} parent=1 // loop_body
      %s21 = ssub.s32 %s16, 1
      %s22 = ssub.s32 %s16, 2
      %s23 = sadd.s32 %s16, 1
      %s24 = ssub.s32 %s16, %s23
      %p25 = scmp.eq.s32.totalorder %s24, 0
      %s27 = sadd.s32 %s26, 1
      %s28 = scalar_select %p25, %s26, %s27
      %p31 = pneg %p25
      %p32 = scmp.eq.s32.totalorder %s16, 1
      %p33 = por %p31, %p32
      %p34 = scmp.ne.s32.totalorder %s26, %s29
      %p35 = scmp.eq.s32.totalorder %s16, 0
      %p36 = por %p34, %p35
      %p37 = scmp.ne.s32.totalorder %s26, %s29
      %p38 = scmp.eq.s32.totalorder %s21, 1
      %p39 = por %p37, %p38
      %p40 = scmp.ne.s32.totalorder %s29, %s30
      %p41 = scmp.eq.s32.totalorder %s21, 0
      %p42 = por %p40, %p41
      %p43 = scmp.ne.s32.totalorder %s29, %s30
      %p44 = scmp.eq.s32.totalorder %s22, 1
      %p45 = por %p43, %p44
      %p47 = scmp.ne.s32.totalorder %s30, %s46
      %p48 = scmp.eq.s32.totalorder %s22, 0
      %p49 = por %p47, %p48
      %s51 = sadd.s32 %s50, 1
      %p54 = scmp.eq.s32.totalorder %s16, 1
      %p55 = scmp.ne.s32.totalorder %s50, %s52
      %p56 = scmp.eq.s32.totalorder %s16, 0
      %p57 = por %p55, %p56
      %p58 = scmp.ne.s32.totalorder %s50, %s52
      %p59 = scmp.eq.s32.totalorder %s21, 1
      %p60 = por %p58, %p59
      %p61 = scmp.ne.s32.totalorder %s52, %s53
      %p62 = scmp.eq.s32.totalorder %s21, 0
      %p63 = por %p61, %p62
      %p64 = scmp.ne.s32.totalorder %s52, %s53
      %p65 = scmp.eq.s32.totalorder %s22, 1
      %p66 = por %p64, %p65
      %p68 = scmp.ne.s32.totalorder %s53, %s67
      %p69 = scmp.eq.s32.totalorder %s22, 0
      %p70 = por %p68, %p69
      %s72 = sadd.s32 %s71, 1
      %p75 = scmp.eq.s32.totalorder %s16, 1
      %p76 = scmp.ne.s32.totalorder %s71, %s73
      %p77 = scmp.eq.s32.totalorder %s16, 0
      %p78 = por %p76, %p77
      %p79 = scmp.ne.s32.totalorder %s71, %s73
      %p80 = scmp.eq.s32.totalorder %s21, 1
      %p81 = por %p79, %p80
      %p82 = scmp.ne.s32.totalorder %s73, %s74
      %p83 = scmp.eq.s32.totalorder %s21, 0
      %p84 = por %p82, %p83
      %p85 = scmp.ne.s32.totalorder %s73, %s74
      %p86 = scmp.eq.s32.totalorder %s22, 1
      %p87 = por %p85, %p86
      %p89 = scmp.ne.s32.totalorder %s74, %s88
      %p90 = scmp.eq.s32.totalorder %s22, 0
      %p91 = por %p89, %p90
      %s93 = sadd.s32 %s92, 1
      %p96 = scmp.eq.s32.totalorder %s16, 1
      %p97 = scmp.ne.s32.totalorder %s92, %s94
      %p98 = scmp.eq.s32.totalorder %s16, 0
      %p99 = por %p97, %p98
      %p100 = scmp.ne.s32.totalorder %s92, %s94
      %p101 = scmp.eq.s32.totalorder %s21, 1
      %p102 = por %p100, %p101
      %p103 = scmp.ne.s32.totalorder %s94, %s95
      %p104 = scmp.eq.s32.totalorder %s21, 0
      %p105 = por %p103, %p104
      %p106 = scmp.ne.s32.totalorder %s94, %s95
      %p107 = scmp.eq.s32.totalorder %s22, 1
      %p108 = por %p106, %p107
      %p110 = scmp.ne.s32.totalorder %s95, %s109
      %p111 = scmp.eq.s32.totalorder %s22, 0
      %p112 = por %p110, %p111
      %s114 = sadd.s32 %s113, 1
      %p117 = scmp.eq.s32.totalorder %s16, 1
      %p118 = scmp.ne.s32.totalorder %s113, %s115
      %p119 = scmp.eq.s32.totalorder %s16, 0
      %p120 = por %p118, %p119
      %p121 = scmp.ne.s32.totalorder %s113, %s115
      %p122 = scmp.eq.s32.totalorder %s21, 1
      %p123 = por %p121, %p122
      %p124 = scmp.ne.s32.totalorder %s115, %s116
      %p125 = scmp.eq.s32.totalorder %s21, 0
      %p126 = por %p124, %p125
      %p127 = scmp.ne.s32.totalorder %s115, %s116
      %p128 = scmp.eq.s32.totalorder %s22, 1
      %p129 = por %p127, %p128
      %p131 = scmp.ne.s32.totalorder %s116, %s130
      %p132 = scmp.eq.s32.totalorder %s22, 0
      %p133 = por %p131, %p132
      %s134 = ssub.s32 %s16, %s23
      %p135 = scmp.eq.s32.totalorder %s134, 0
      %s137 = sadd.s32 %s136, 1
      %s138 = scalar_select %p135, %s136, %s137
      %p141 = pneg %p135
      %p142 = scmp.eq.s32.totalorder %s16, 1
      %p143 = por %p141, %p142
      %p144 = scmp.ne.s32.totalorder %s136, %s139
      %p145 = scmp.eq.s32.totalorder %s16, 0
      %p146 = por %p144, %p145
      %p147 = scmp.ne.s32.totalorder %s136, %s139
      %p148 = scmp.eq.s32.totalorder %s21, 1
      %p149 = por %p147, %p148
      %p150 = scmp.ne.s32.totalorder %s139, %s140
      %p151 = scmp.eq.s32.totalorder %s21, 0
      %p152 = por %p150, %p151
      %p153 = scmp.ne.s32.totalorder %s139, %s140
      %p154 = scmp.eq.s32.totalorder %s22, 1
      %p155 = por %p153, %p154
      %p157 = scmp.ne.s32.totalorder %s140, %s156
      %p158 = scmp.eq.s32.totalorder %s22, 0
      %p159 = por %p157, %p158
      %p160 = scmp.le.s32.totalorder 1, %s16
      %p161 = scmp.lt.s32.totalorder %s16, 3
      %p162 = pnand %p160, %p161
      %p163 = pneg %p162
      // Predicated region
      $region9: #{tpu_custom_call.1} parent=5 // pred_check
        _
      $region10: #{tpu_custom_call.1} parent=5 // pred_check_branch
        %165 = sbr.rel (%p162) target = $region12
      $region11: #{tpu_custom_call.1} parent=5 // pred_region
        %s166 = ssub.s32 %s16, 1
        // Predicated region
        $region13: #{tpu_custom_call.1} parent=11 // pred_check
          %p167 = pneg %p63
        $region14: #{tpu_custom_call.1} parent=11 // pred_check_branch
          %169 = sbr.rel (%p167) target = $region16
        $region15: #{tpu_custom_call.1} parent=11 // pred_region
          %171 = vsyncadd [#allocation5], 0
          %s172 = sshll.u32 %s1, 4
          %s173 = int_to_ptr.hbm [resolvable:$true] %s172
          %s174 = sshll.u32 [#allocation4], 4
          %s175 = int_to_ptr.vmem [resolvable:$true] %s174
          %180 = dma.hbm_to_vmem [thread:$0]  %s173, 12288, %s175, [#allocation5], 128, 128, 8
        $region16: #{tpu_custom_call.1} parent=11 // pred_fallthru
          _
        // Predicated region
        $region17: #{tpu_custom_call.1} parent=11 // pred_check
          %p181 = pneg %p84
        $region18: #{tpu_custom_call.1} parent=11 // pred_check_branch
          %183 = sbr.rel (%p181) target = $region20
        $region19: #{tpu_custom_call.1} parent=11 // pred_region
          %185 = vsyncadd [#allocation8], 0
          %s186 = sshll.u32 %s2, 4
          %s187 = int_to_ptr.hbm [resolvable:$true] %s186
          %s188 = sshll.u32 [#allocation7], 4
          %s189 = int_to_ptr.vmem [resolvable:$true] %s188
          %194 = dma.hbm_to_vmem [thread:$0]  %s187, 12288, %s189, [#allocation8], 128, 128, 8
        $region20: #{tpu_custom_call.1} parent=11 // pred_fallthru
          _
        // Predicated region
        $region21: #{tpu_custom_call.1} parent=11 // pred_check
          %p195 = pneg %p105
        $region22: #{tpu_custom_call.1} parent=11 // pred_check_branch
          %197 = sbr.rel (%p195) target = $region24
        $region23: #{tpu_custom_call.1} parent=11 // pred_region
          _
        $region24: #{tpu_custom_call.1} parent=11 // pred_fallthru
          _
        // Predicated region
        $region25: #{tpu_custom_call.1} parent=11 // pred_check
          %p198 = pneg %p126
        $region26: #{tpu_custom_call.1} parent=11 // pred_check_branch
          %200 = sbr.rel (%p198) target = $region28
        $region27: #{tpu_custom_call.1} parent=11 // pred_region
          _
        $region28: #{tpu_custom_call.1} parent=11 // pred_fallthru
          _
      $region12: #{tpu_custom_call.1} parent=5 // pred_fallthru
        _
      %p201 = scmp.lt.s32.totalorder %s16, 2
      // Predicated region
      $region29: #{tpu_custom_call.1} parent=5 // pred_check
        %p202 = pneg %p201
      $region30: #{tpu_custom_call.1} parent=5 // pred_check_branch
        %204 = sbr.rel (%p202) target = $region32
      $region31: #{tpu_custom_call.1} parent=5 // pred_region
        // Predicated region
        $region33: #{tpu_custom_call.1} parent=31 // pred_check
          %p205 = pneg %p36
        $region34: #{tpu_custom_call.1} parent=31 // pred_check_branch
          %207 = sbr.rel (%p205) target = $region36
        $region35: #{tpu_custom_call.1} parent=31 // pred_region
          %s208 = smul.u32 4, %s16
          %p209 = scmp.lt.s32.totalorder %s208, 7
          %s210 = scalar_select %p209, %s208, 7
          %s211 = smul.addr %s210, 4
          %s212 = smul.addr %s211, 8
          %s213 = scalar_lea.vmem %s0, %s212
          %s214 = smul.u32 4, %s16
        $region36: #{tpu_custom_call.1} parent=31 // pred_fallthru
          _
      $region32: #{tpu_custom_call.1} parent=5 // pred_fallthru
        _
      %p215 = scmp.le.s32.totalorder 1, %s16
      %p216 = scmp.lt.s32.totalorder %s16, 3
      %p217 = pnand %p215, %p216
      %p218 = pneg %p217
      // Predicated region
      $region37: #{tpu_custom_call.1} parent=5 // pred_check
        _
      $region38: #{tpu_custom_call.1} parent=5 // pred_check_branch
        %220 = sbr.rel (%p217) target = $region40
      $region39: #{tpu_custom_call.1} parent=5 // pred_region
        %s221 = ssub.s32 %s16, 1
        // Predicated region
        $region41: #{tpu_custom_call.1} parent=39 // pred_check
          %p222 = pneg %p63
        $region42: #{tpu_custom_call.1} parent=39 // pred_check_branch
          %224 = sbr.rel (%p222) target = $region44
        $region43: #{tpu_custom_call.1} parent=39 // pred_region
          %226 = dma.done [#allocation5], 12288
        $region44: #{tpu_custom_call.1} parent=39 // pred_fallthru
          _
        // Predicated region
        $region45: #{tpu_custom_call.1} parent=39 // pred_check
          %p227 = pneg %p84
        $region46: #{tpu_custom_call.1} parent=39 // pred_check_branch
          %229 = sbr.rel (%p227) target = $region48
        $region47: #{tpu_custom_call.1} parent=39 // pred_region
          %231 = dma.done [#allocation8], 12288
        $region48: #{tpu_custom_call.1} parent=39 // pred_fallthru
          _
        %s232 = smul.u32 4, %s21
        %p233 = scmp.lt.s32.totalorder %s232, 7
        %s234 = scalar_select %p233, %s232, 7
        %s235 = smul.addr %s234, 4
        %s236 = smul.addr %s235, 8
        %s237 = scalar_lea.vmem %s0, %s236
        %p238 = pneg %p42
        %p239 = pneg %p39
        %p240 = pneg %p63
        %p241 = pneg %p60
        %p242 = pneg %p84
        %p243 = pneg %p81
        %p244 = pneg %p105
        %p245 = pneg %p102
        %p246 = pneg %p126
        %p247 = pneg %p123
        %p248 = pneg %p152
        %p249 = pneg %p149
        %s250 = sand.u32 %s139, 1
        %s251 = scalar_lea.sflag [#allocation6], %s250
        %s252 = sand.u32 %s139, 1
        %s253 = smul.addr %s252, 128
        %s254 = scalar_lea.vmem [#allocation9], %s253
        %s255 = smul.u32 4, %s21
        %p256 = scmp.lt.s32.totalorder %s255, 7
        %s257 = scalar_select %p256, %s255, 7
        %s258 = smul.addr %s257, 4
        %s259 = smul.addr %s258, 8
        %s260 = scalar_lea.vmem %s0, %s259
        %s261 = smul.u32 4, %s21
        %s262 = smul.u32 4, %s21
        %vm264 = vcmask 1040384
        %vm265 = vsmask.f32 256
        %vm266 = vmand %vm264, %vm265
        %vm267 = vcmask 1044484
        %vm268 = vsmask.f32 4352
        %vm269 = vmand %vm267, %vm268
        %vm270 = vmor %vm269, %vm266
        %v271 = vld [vmem:[#allocation2] sm:$0x11]
        %v272 = vsel %vm270, 0, %v271
        %273 = vst [vmem:[#allocation2] sm:$0x11] %v272
        %vm274 = vsmask.f32 7938
        %vm275 = vmand %vm264, %vm274
        %vm276 = vsmask.f32 7954
        %vm277 = vmand %vm267, %vm276
        %vm278 = vmor %vm277, %vm275
        %v279 = vld [vmem:[#allocation2 + $0x48] sm:$0x11]
        %v280 = vsel %vm278, 0, %v279
        %281 = vst [vmem:[#allocation2 + $0x48] sm:$0x11] %v280
        %v282 = vld [vmem:[%s260] sm:$0xff]
        %v283 = vld [vmem:[%s260 + $0x8] sm:$0xff]
        %v284 = vld [vmem:[%s260 + $0x10] sm:$0xff]
        %v285 = vld [vmem:[%s260 + $0x18] sm:$0xff]
        %v286 = vpack.c.bf16 %v283, %v282
        %v287 = vpack.c.bf16 %v285, %v284
        %vm290 = vmor %vm264, %vm267
        %v291 = vrot.slane %v286, 7
        %v292 = vrot.slane %v291, 4
        %v293 = vrot.slane %v287, 7
        %v294 = vsel %vm290, %v292, %v293
        %v295 = vrot.slane %v293, 4
        %299 = vst [vmem:[#allocation2] sm:$0xee] %v291
        %300 = vst [vmem:[#allocation2 + $0x8] sm:$0xff] %v294
        %301 = vst [vmem:[#allocation2 + $0x10] sm:$0x11] %v295
        %s302 = scalar_lea.vmem %s260, 32
        %v303 = vld [vmem:[%s302] sm:$0xff]
        %v304 = vld [vmem:[%s302 + $0x8] sm:$0xff]
        %v305 = vld [vmem:[%s302 + $0x10] sm:$0xff]
        %v306 = vld [vmem:[%s302 + $0x18] sm:$0xff]
        %v307 = vpack.c.bf16 %v304, %v303
        %v308 = vpack.c.bf16 %v306, %v305
        %vm311 = vcmask 1041408
        %vm312 = vcmask 1045508
        %vm313 = vmor %vm311, %vm312
        %v314 = vrot.slane %v307, 6
        %v315 = vrot.slane %v314, 4
        %v316 = vrot.slane %v308, 6
        %v317 = vsel %vm313, %v315, %v316
        %v318 = vrot.slane %v316, 4
        %322 = vst [vmem:[#allocation2 + $0x10] sm:$0xcc] %v314
        %323 = vst [vmem:[#allocation2 + $0x18] sm:$0xff] %v317
        %324 = vst [vmem:[#allocation2 + $0x20] sm:$0x33] %v318
        %s325 = scalar_lea.vmem %s260, 64
        %v326 = vld [vmem:[%s325] sm:$0xff]
        %v327 = vld [vmem:[%s325 + $0x8] sm:$0xff]
        %v328 = vld [vmem:[%s325 + $0x10] sm:$0xff]
        %v329 = vld [vmem:[%s325 + $0x18] sm:$0xff]
        %v330 = vpack.c.bf16 %v327, %v326
        %v331 = vpack.c.bf16 %v329, %v328
        %vm334 = vcmask 1042432
        %vm335 = vcmask 1046532
        %vm336 = vmor %vm334, %vm335
        %v337 = vrot.slane %v330, 5
        %v338 = vrot.slane %v337, 4
        %v339 = vrot.slane %v331, 5
        %v340 = vsel %vm336, %v338, %v339
        %v341 = vrot.slane %v339, 4
        %345 = vst [vmem:[#allocation2 + $0x20] sm:$0x88] %v337
        %346 = vst [vmem:[#allocation2 + $0x28] sm:$0xff] %v340
        %347 = vst [vmem:[#allocation2 + $0x30] sm:$0x77] %v341
        %s348 = scalar_lea.vmem %s260, 96
        %v349 = vld [vmem:[%s348] sm:$0xff]
        %v350 = vld [vmem:[%s348 + $0x8] sm:$0xff]
        %v351 = vld [vmem:[%s348 + $0x10] sm:$0xff]
        %v352 = vld [vmem:[%s348 + $0x18] sm:$0xff]
        %v353 = vpack.c.bf16 %v350, %v349
        %v354 = vpack.c.bf16 %v352, %v351
        %355 = vst [vmem:[#allocation2 + $0x38] sm:$0xff] %v353
        %356 = vst [vmem:[#allocation2 + $0x40] sm:$0xff] %v354
        %v357 = vld [vmem:[#allocation2] sm:$0x11]
        %v358 = vsel %vm278, 0, %v357
        %359 = vst [vmem:[#allocation2] sm:$0x11] %v358
        %vm360 = vcmask 1041409
        %vm361 = vsmask.f32 1280
        %vm362 = vmand %vm360, %vm361
        %vm363 = vcmask 1045509
        %vm364 = vsmask.f32 5376
        %vm365 = vmand %vm363, %vm364
        %vm366 = vmor %vm365, %vm362
        %v367 = vld [vmem:[#allocation2 + $0x10] sm:$0x22]
        %v368 = vsel %vm366, 0, %v367
        %369 = vst [vmem:[#allocation2 + $0x10] sm:$0x22] %v368
        %vm370 = vsmask.f32 7942
        %vm371 = vmand %vm360, %vm370
        %vm372 = vsmask.f32 7958
        %vm373 = vmand %vm363, %vm372
        %vm374 = vmor %vm373, %vm371
        %v375 = vld [vmem:[#allocation2 + $0x10] sm:$0x22]
        %v376 = vsel %vm374, 0, %v375
        %377 = vst [vmem:[#allocation2 + $0x10] sm:$0x22] %v376
        %vm378 = vcmask 1042434
        %vm379 = vsmask.f32 2304
        %vm380 = vmand %vm378, %vm379
        %vm381 = vcmask 1046534
        %vm382 = vsmask.f32 6400
        %vm383 = vmand %vm381, %vm382
        %vm384 = vmor %vm383, %vm380
        %v385 = vld [vmem:[#allocation2 + $0x20] sm:$0x44]
        %v386 = vsel %vm384, 0, %v385
        %387 = vst [vmem:[#allocation2 + $0x20] sm:$0x44] %v386
        %vm388 = vsmask.f32 7946
        %vm389 = vmand %vm378, %vm388
        %vm390 = vsmask.f32 7962
        %vm391 = vmand %vm381, %vm390
        %vm392 = vmor %vm391, %vm389
        %v393 = vld [vmem:[#allocation2 + $0x20] sm:$0x44]
        %v394 = vsel %vm392, 0, %v393
        %395 = vst [vmem:[#allocation2 + $0x20] sm:$0x44] %v394
        %vm396 = vcmask 1043459
        %vm397 = vsmask.f32 3328
        %vm398 = vmand %vm396, %vm397
        %vm399 = vcmask 1047559
        %vm400 = vsmask.f32 7424
        %vm401 = vmand %vm399, %vm400
        %vm402 = vmor %vm401, %vm398
        %v403 = vld [vmem:[#allocation2 + $0x30] sm:$0x88]
        %v404 = vsel %vm402, 0, %v403
        %405 = vst [vmem:[#allocation2 + $0x30] sm:$0x88] %v404
        %vm406 = vsmask.f32 7950
        %vm407 = vmand %vm396, %vm406
        %vm408 = vsmask.f32 7966
        %vm409 = vmand %vm399, %vm408
        %vm410 = vmor %vm409, %vm407
        %v411 = vld [vmem:[#allocation2 + $0x30] sm:$0x88]
        %v412 = vsel %vm410, 0, %v411
        %413 = vst [vmem:[#allocation2 + $0x30] sm:$0x88] %v412
        %v414 = vld [vmem:[#allocation2 + $0x48] sm:$0x11]
        %v415 = vsel %vm270, 0, %v414
        %416 = vst [vmem:[#allocation2 + $0x48] sm:$0x11] %v415
        %v417 = vld [vmem:[#allocation2] sm:$0xff]
        %v418 = vld [vmem:[#allocation2 + $0x8] sm:$0xff]
        %v419 = vld [vmem:[#allocation2 + $0x10] sm:$0xff]
        %v420 = vld [vmem:[#allocation2 + $0x18] sm:$0xff]
        %v421 = vld [vmem:[#allocation2 + $0x20] sm:$0xff]
        %v422 = vld [vmem:[#allocation2 + $0x28] sm:$0xff]
        %v423 = vld [vmem:[#allocation2 + $0x30] sm:$0xff]
        %v424 = vld [vmem:[#allocation2 + $0x38] sm:$0xff]
        %v425 = vld [vmem:[#allocation2 + $0x40] sm:$0xff]
        %v426 = vld [vmem:[#allocation4] sm:$0xff]
        %v427 = vld [vmem:[#allocation4 + $0x8] sm:$0xff]
        %v428 = vld [vmem:[#allocation4 + $0x10] sm:$0xff]
        %v429 = vld [vmem:[#allocation4 + $0x18] sm:$0xff]
        %v430 = vld [vmem:[#allocation4 + $0x20] sm:$0xff]
        %v431 = vld [vmem:[#allocation4 + $0x28] sm:$0xff]
        %v432 = vld [vmem:[#allocation4 + $0x30] sm:$0xff]
        %v433 = vld [vmem:[#allocation4 + $0x38] sm:$0xff]
        %v434 = vld [vmem:[#allocation4 + $0x40] sm:$0xff]
        %v435 = vld [vmem:[#allocation4 + $0x48] sm:$0xff]
        %v436 = vld [vmem:[#allocation4 + $0x50] sm:$0xff]
        %v437 = vld [vmem:[#allocation4 + $0x58] sm:$0xff]
        %v438 = vld [vmem:[#allocation4 + $0x60] sm:$0xff]
        %v439 = vld [vmem:[#allocation4 + $0x68] sm:$0xff]
        %v440 = vld [vmem:[#allocation4 + $0x70] sm:$0xff]
        %v441 = vld [vmem:[#allocation4 + $0x78] sm:$0xff]
        %v442 = vld [vmem:[#allocation4 + $0x80] sm:$0xff]
        %v443 = vld [vmem:[#allocation4 + $0x88] sm:$0xff]
        %v444 = vld [vmem:[#allocation4 + $0x90] sm:$0xff]
        %v445 = vld [vmem:[#allocation4 + $0x98] sm:$0xff]
        %v446 = vld [vmem:[#allocation4 + $0xa0] sm:$0xff]
        %v447 = vld [vmem:[#allocation4 + $0xa8] sm:$0xff]
        %v448 = vld [vmem:[#allocation4 + $0xb0] sm:$0xff]
        %v449 = vld [vmem:[#allocation4 + $0xb8] sm:$0xff]
        %v450 = vld [vmem:[#allocation4 + $0xc0] sm:$0xff]
        %v451 = vld [vmem:[#allocation4 + $0xc8] sm:$0xff]
        %v452 = vld [vmem:[#allocation4 + $0xd0] sm:$0xff]
        %v453 = vld [vmem:[#allocation4 + $0xd8] sm:$0xff]
        %v454 = vld [vmem:[#allocation4 + $0xe0] sm:$0xff]
        %v455 = vld [vmem:[#allocation4 + $0xe8] sm:$0xff]
        %v456 = vld [vmem:[#allocation4 + $0xf0] sm:$0xff]
        %v457 = vld [vmem:[#allocation4 + $0xf8] sm:$0xff]
        %v467 = vunpack.c.l.b16 %v417
        %v468 = vunpack.c.h.b16 %v417
        %v469 = vunpack.c.l.b16 %v418
        %v470 = vunpack.c.h.b16 %v418
        %v471 = vunpack.c.l.b16 %v419
        %v472 = vunpack.c.h.b16 %v419
        %v473 = vunpack.c.l.b16 %v420
        %v474 = vunpack.c.h.b16 %v420
        %v475 = vunpack.c.l.b16 %v421
        %v476 = vunpack.c.h.b16 %v421
        %v477 = vunpack.c.l.b16 %v422
        %v478 = vunpack.c.h.b16 %v422
        %v479 = vunpack.c.l.b16 %v423
        %v480 = vunpack.c.h.b16 %v423
        %v481 = vunpack.c.l.b16 %v424
        %v482 = vunpack.c.h.b16 %v424
        %v483 = vunpack.c.l.b16 %v425
        %v484 = vunpack.c.h.b16 %v425
        %v485 = vpack.c.b16 %v469, %v467
        %v486 = vpack.c.b16 %v470, %v468
        %v487 = vpack.c.b16 %v473, %v471
        %v488 = vpack.c.b16 %v474, %v472
        %v489 = vpack.c.b16 %v477, %v475
        %v490 = vpack.c.b16 %v478, %v476
        %v491 = vpack.c.b16 %v481, %v479
        %v492 = vpack.c.b16 %v482, %v480
        %v493 = vpack.c.b16 %v483, %v483
        %v494 = vpack.c.b16 %v484, %v484
        %v537 = vunpack.c.l.b16 %v426
        %v538 = vunpack.c.h.b16 %v426
        %v539 = vunpack.c.l.b16 %v427
        %v540 = vunpack.c.h.b16 %v427
        %v541 = vunpack.c.l.b16 %v428
        %v542 = vunpack.c.h.b16 %v428
        %v543 = vunpack.c.l.b16 %v429
        %v544 = vunpack.c.h.b16 %v429
        %v545 = vunpack.c.l.b16 %v430
        %v546 = vunpack.c.h.b16 %v430
        %v547 = vunpack.c.l.b16 %v431
        %v548 = vunpack.c.h.b16 %v431
        %v549 = vunpack.c.l.b16 %v432
        %v550 = vunpack.c.h.b16 %v432
        %v551 = vunpack.c.l.b16 %v433
        %v552 = vunpack.c.h.b16 %v433
        %v553 = vunpack.c.l.b16 %v434
        %v554 = vunpack.c.h.b16 %v434
        %v555 = vunpack.c.l.b16 %v435
        %v556 = vunpack.c.h.b16 %v435
        %v557 = vunpack.c.l.b16 %v436
        %v558 = vunpack.c.h.b16 %v436
        %v559 = vunpack.c.l.b16 %v437
        %v560 = vunpack.c.h.b16 %v437
        %v561 = vunpack.c.l.b16 %v438
        %v562 = vunpack.c.h.b16 %v438
        %v563 = vunpack.c.l.b16 %v439
        %v564 = vunpack.c.h.b16 %v439
        %v565 = vunpack.c.l.b16 %v440
        %v566 = vunpack.c.h.b16 %v440
        %v567 = vunpack.c.l.b16 %v441
        %v568 = vunpack.c.h.b16 %v441
        %v569 = vunpack.c.l.b16 %v442
        %v570 = vunpack.c.h.b16 %v442
        %v571 = vunpack.c.l.b16 %v443
        %v572 = vunpack.c.h.b16 %v443
        %v573 = vunpack.c.l.b16 %v444
        %v574 = vunpack.c.h.b16 %v444
        %v575 = vunpack.c.l.b16 %v445
        %v576 = vunpack.c.h.b16 %v445
        %v577 = vunpack.c.l.b16 %v446
        %v578 = vunpack.c.h.b16 %v446
        %v579 = vunpack.c.l.b16 %v447
        %v580 = vunpack.c.h.b16 %v447
        %v581 = vunpack.c.l.b16 %v448
        %v582 = vunpack.c.h.b16 %v448
        %v583 = vunpack.c.l.b16 %v449
        %v584 = vunpack.c.h.b16 %v449
        %v585 = vunpack.c.l.b16 %v450
        %v586 = vunpack.c.h.b16 %v450
        %v587 = vunpack.c.l.b16 %v451
        %v588 = vunpack.c.h.b16 %v451
        %v589 = vunpack.c.l.b16 %v452
        %v590 = vunpack.c.h.b16 %v452
        %v591 = vunpack.c.l.b16 %v453
        %v592 = vunpack.c.h.b16 %v453
        %v593 = vunpack.c.l.b16 %v454
        %v594 = vunpack.c.h.b16 %v454
        %v595 = vunpack.c.l.b16 %v455
        %v596 = vunpack.c.h.b16 %v455
        %v597 = vunpack.c.l.b16 %v456
        %v598 = vunpack.c.h.b16 %v456
        %v599 = vunpack.c.l.b16 %v457
        %v600 = vunpack.c.h.b16 %v457
        %v601 = vpack.c.b16 %v539, %v537
        %v602 = vpack.c.b16 %v540, %v538
        %v603 = vpack.c.b16 %v543, %v541
        %v604 = vpack.c.b16 %v544, %v542
        %v605 = vpack.c.b16 %v547, %v545
        %v606 = vpack.c.b16 %v548, %v546
        %v607 = vpack.c.b16 %v551, %v549
        %v608 = vpack.c.b16 %v552, %v550
        %v609 = vpack.c.b16 %v555, %v553
        %v610 = vpack.c.b16 %v556, %v554
        %v611 = vpack.c.b16 %v559, %v557
        %v612 = vpack.c.b16 %v560, %v558
        %v613 = vpack.c.b16 %v563, %v561
        %v614 = vpack.c.b16 %v564, %v562
        %v615 = vpack.c.b16 %v567, %v565
        %v616 = vpack.c.b16 %v568, %v566
        %v617 = vpack.c.b16 %v571, %v569
        %v618 = vpack.c.b16 %v572, %v570
        %v619 = vpack.c.b16 %v575, %v573
        %v620 = vpack.c.b16 %v576, %v574
        %v621 = vpack.c.b16 %v579, %v577
        %v622 = vpack.c.b16 %v580, %v578
        %v623 = vpack.c.b16 %v583, %v581
        %v624 = vpack.c.b16 %v584, %v582
        %v625 = vpack.c.b16 %v587, %v585
        %v626 = vpack.c.b16 %v588, %v586
        %v627 = vpack.c.b16 %v591, %v589
        %v628 = vpack.c.b16 %v592, %v590
        %v629 = vpack.c.b16 %v595, %v593
        %v630 = vpack.c.b16 %v596, %v594
        %v631 = vpack.c.b16 %v599, %v597
        %v632 = vpack.c.b16 %v600, %v598
        %665 = vmatpush.bf16.msra.mxu0 %v615
        %666 = vmatpush.bf16.msra.mxu0 %v613
        %667 = vmatpush.bf16.msra.mxu0 %v611
        %668 = vmatpush.bf16.msra.mxu0 %v609
        %669 = vmatpush.bf16.msra.mxu0 %v607
        %670 = vmatpush.bf16.msra.mxu0 %v605
        %671 = vmatpush.bf16.msra.mxu0 %v603
        %672 = vmatpush.bf16.msra.mxu0 %v601
        %673 = vmatmul.bf16.gmra.mxu0 %v485
        %v674 = vpop.f32.mrf.mxu0
        %v675 = vadd.f32 0.0, %v674
        %v676 = vpop.f32.mrf.mxu0
        %v677 = vadd.f32 0.0, %v676
        %678 = vmatmul.bf16.gmra.mxu0 %v487
        %v679 = vpop.f32.mrf.mxu0
        %v680 = vadd.f32 0.0, %v679
        %v681 = vpop.f32.mrf.mxu0
        %v682 = vadd.f32 0.0, %v681
        %683 = vmatmul.bf16.gmra.mxu0 %v489
        %v684 = vpop.f32.mrf.mxu0
        %v685 = vadd.f32 0.0, %v684
        %v686 = vpop.f32.mrf.mxu0
        %v687 = vadd.f32 0.0, %v686
        %688 = vmatmul.bf16.gmra.mxu0 %v491
        %v689 = vpop.f32.mrf.mxu0
        %v690 = vadd.f32 0.0, %v689
        %v691 = vpop.f32.mrf.mxu0
        %v692 = vadd.f32 0.0, %v691
        %693 = vmatmul.bf16.gmra.mxu0 %v493
        %v694 = vpop.f32.mrf.mxu0
        %v695 = vadd.f32 0.0, %v694
        %v696 = vpop.f32.mrf.mxu0
        %697 = vdwg.mxu0
        %698 = vmatpush.bf16.msra.mxu0 %v631
        %699 = vmatpush.bf16.msra.mxu0 %v629
        %700 = vmatpush.bf16.msra.mxu0 %v627
        %701 = vmatpush.bf16.msra.mxu0 %v625
        %702 = vmatpush.bf16.msra.mxu0 %v623
        %703 = vmatpush.bf16.msra.mxu0 %v621
        %704 = vmatpush.bf16.msra.mxu0 %v619
        %705 = vmatpush.bf16.msra.mxu0 %v617
        %706 = vmatmul.bf16.gmra.mxu0 %v486
        %v707 = vpop.f32.mrf.mxu0
        %v708 = vadd.f32 %v675, %v707
        %v709 = vpop.f32.mrf.mxu0
        %v710 = vadd.f32 %v677, %v709
        %711 = vmatmul.bf16.gmra.mxu0 %v488
        %v712 = vpop.f32.mrf.mxu0
        %v713 = vadd.f32 %v680, %v712
        %v714 = vpop.f32.mrf.mxu0
        %v715 = vadd.f32 %v682, %v714
        %716 = vmatmul.bf16.gmra.mxu0 %v490
        %v717 = vpop.f32.mrf.mxu0
        %v718 = vadd.f32 %v685, %v717
        %v719 = vpop.f32.mrf.mxu0
        %v720 = vadd.f32 %v687, %v719
        %721 = vmatmul.bf16.gmra.mxu0 %v492
        %v722 = vpop.f32.mrf.mxu0
        %v723 = vadd.f32 %v690, %v722
        %v724 = vpop.f32.mrf.mxu0
        %v725 = vadd.f32 %v692, %v724
        %726 = vmatmul.bf16.gmra.mxu0 %v494
        %v727 = vpop.f32.mrf.mxu0
        %v728 = vadd.f32 %v695, %v727
        %v729 = vpop.f32.mrf.mxu0
        %730 = vdwg.mxu0
        %731 = vmatpush.bf16.msra.mxu0 %v616
        %732 = vmatpush.bf16.msra.mxu0 %v614
        %733 = vmatpush.bf16.msra.mxu0 %v612
        %734 = vmatpush.bf16.msra.mxu0 %v610
        %735 = vmatpush.bf16.msra.mxu0 %v608
        %736 = vmatpush.bf16.msra.mxu0 %v606
        %737 = vmatpush.bf16.msra.mxu0 %v604
        %738 = vmatpush.bf16.msra.mxu0 %v602
        %739 = vmatmul.bf16.gmra.mxu0 %v485
        %v740 = vpop.f32.mrf.mxu0
        %v741 = vadd.f32 0.0, %v740
        %v742 = vpop.f32.mrf.mxu0
        %v743 = vadd.f32 0.0, %v742
        %744 = vmatmul.bf16.gmra.mxu0 %v487
        %v745 = vpop.f32.mrf.mxu0
        %v746 = vadd.f32 0.0, %v745
        %v747 = vpop.f32.mrf.mxu0
        %v748 = vadd.f32 0.0, %v747
        %749 = vmatmul.bf16.gmra.mxu0 %v489
        %v750 = vpop.f32.mrf.mxu0
        %v751 = vadd.f32 0.0, %v750
        %v752 = vpop.f32.mrf.mxu0
        %v753 = vadd.f32 0.0, %v752
        %754 = vmatmul.bf16.gmra.mxu0 %v491
        %v755 = vpop.f32.mrf.mxu0
        %v756 = vadd.f32 0.0, %v755
        %v757 = vpop.f32.mrf.mxu0
        %v758 = vadd.f32 0.0, %v757
        %759 = vmatmul.bf16.gmra.mxu0 %v493
        %v760 = vpop.f32.mrf.mxu0
        %v761 = vadd.f32 0.0, %v760
        %v762 = vpop.f32.mrf.mxu0
        %763 = vdwg.mxu0
        %764 = vmatpush.bf16.msra.mxu0 %v632
        %765 = vmatpush.bf16.msra.mxu0 %v630
        %766 = vmatpush.bf16.msra.mxu0 %v628
        %767 = vmatpush.bf16.msra.mxu0 %v626
        %768 = vmatpush.bf16.msra.mxu0 %v624
        %769 = vmatpush.bf16.msra.mxu0 %v622
        %770 = vmatpush.bf16.msra.mxu0 %v620
        %771 = vmatpush.bf16.msra.mxu0 %v618
        %772 = vmatmul.bf16.gmra.mxu0 %v486
        %v773 = vpop.f32.mrf.mxu0
        %v774 = vadd.f32 %v741, %v773
        %v775 = vpop.f32.mrf.mxu0
        %v776 = vadd.f32 %v743, %v775
        %777 = vmatmul.bf16.gmra.mxu0 %v488
        %v778 = vpop.f32.mrf.mxu0
        %v779 = vadd.f32 %v746, %v778
        %v780 = vpop.f32.mrf.mxu0
        %v781 = vadd.f32 %v748, %v780
        %782 = vmatmul.bf16.gmra.mxu0 %v490
        %v783 = vpop.f32.mrf.mxu0
        %v784 = vadd.f32 %v751, %v783
        %v785 = vpop.f32.mrf.mxu0
        %v786 = vadd.f32 %v753, %v785
        %787 = vmatmul.bf16.gmra.mxu0 %v492
        %v788 = vpop.f32.mrf.mxu0
        %v789 = vadd.f32 %v756, %v788
        %v790 = vpop.f32.mrf.mxu0
        %v791 = vadd.f32 %v758, %v790
        %792 = vmatmul.bf16.gmra.mxu0 %v494
        %v793 = vpop.f32.mrf.mxu0
        %v794 = vadd.f32 %v761, %v793
        %v795 = vpop.f32.mrf.mxu0
        %796 = vdwg.mxu0
        %vm815 = vcmask 1040384
        %v816 = vrot.slane %v708, 7
        %v817 = vrot.slane %v774, 7
        %v818 = vrot.slane %v710, 7
        %v819 = vsel %vm815, %v816, %v818
        %v820 = vrot.slane %v776, 7
        %v821 = vsel %vm815, %v817, %v820
        %v822 = vrot.slane %v713, 7
        %v823 = vsel %vm815, %v818, %v822
        %v824 = vrot.slane %v779, 7
        %v825 = vsel %vm815, %v820, %v824
        %v826 = vrot.slane %v715, 7
        %v827 = vsel %vm815, %v822, %v826
        %v828 = vrot.slane %v781, 7
        %v829 = vsel %vm815, %v824, %v828
        %v830 = vrot.slane %v718, 7
        %v831 = vsel %vm815, %v826, %v830
        %v832 = vrot.slane %v784, 7
        %v833 = vsel %vm815, %v828, %v832
        %v834 = vrot.slane %v720, 7
        %v835 = vsel %vm815, %v830, %v834
        %v836 = vrot.slane %v786, 7
        %v837 = vsel %vm815, %v832, %v836
        %v838 = vrot.slane %v723, 7
        %v839 = vsel %vm815, %v834, %v838
        %v840 = vrot.slane %v789, 7
        %v841 = vsel %vm815, %v836, %v840
        %v842 = vrot.slane %v725, 7
        %v843 = vsel %vm815, %v838, %v842
        %v844 = vrot.slane %v791, 7
        %v845 = vsel %vm815, %v840, %v844
        %v846 = vrot.slane %v728, 7
        %v847 = vsel %vm815, %v842, %v846
        %v848 = vrot.slane %v794, 7
        %v849 = vsel %vm815, %v844, %v848
        %870 = vst [vmem:[#allocation3] sm:$0xfe] %v816
        %871 = vst [vmem:[#allocation3 + $0x8] sm:$0xfe] %v817
        %872 = vst [vmem:[#allocation3 + $0x10] sm:$0xff] %v819
        %873 = vst [vmem:[#allocation3 + $0x18] sm:$0xff] %v821
        %874 = vst [vmem:[#allocation3 + $0x20] sm:$0xff] %v823
        %875 = vst [vmem:[#allocation3 + $0x28] sm:$0xff] %v825
        %876 = vst [vmem:[#allocation3 + $0x30] sm:$0xff] %v827
        %877 = vst [vmem:[#allocation3 + $0x38] sm:$0xff] %v829
        %878 = vst [vmem:[#allocation3 + $0x40] sm:$0xff] %v831
        %879 = vst [vmem:[#allocation3 + $0x48] sm:$0xff] %v833
        %880 = vst [vmem:[#allocation3 + $0x50] sm:$0xff] %v835
        %881 = vst [vmem:[#allocation3 + $0x58] sm:$0xff] %v837
        %882 = vst [vmem:[#allocation3 + $0x60] sm:$0xff] %v839
        %883 = vst [vmem:[#allocation3 + $0x68] sm:$0xff] %v841
        %884 = vst [vmem:[#allocation3 + $0x70] sm:$0xff] %v843
        %885 = vst [vmem:[#allocation3 + $0x78] sm:$0xff] %v845
        %886 = vst [vmem:[#allocation3 + $0x80] sm:$0xff] %v847
        %887 = vst [vmem:[#allocation3 + $0x88] sm:$0xff] %v849
        %888 = vst [vmem:[#allocation3 + $0x90] sm:$0x1] %v846
        %889 = vst [vmem:[#allocation3 + $0x98] sm:$0x1] %v848
        %v890 = vld [vmem:[#allocation3] sm:$0xfe]
        %v891 = vld [vmem:[#allocation3 + $0x8] sm:$0xfe]
        %v892 = vld [vmem:[#allocation3 + $0x10] sm:$0xff]
        %v893 = vld [vmem:[#allocation3 + $0x18] sm:$0xff]
        %v894 = vld [vmem:[#allocation3 + $0x20] sm:$0xff]
        %v895 = vld [vmem:[#allocation3 + $0x28] sm:$0xff]
        %v896 = vld [vmem:[#allocation3 + $0x30] sm:$0xff]
        %v897 = vld [vmem:[#allocation3 + $0x38] sm:$0xff]
        %v898 = vld [vmem:[#allocation3 + $0x40] sm:$0xff]
        %v899 = vld [vmem:[#allocation3 + $0x48] sm:$0xff]
        %v900 = vld [vmem:[#allocation3 + $0x50] sm:$0xff]
        %v901 = vld [vmem:[#allocation3 + $0x58] sm:$0xff]
        %v902 = vld [vmem:[#allocation3 + $0x60] sm:$0xff]
        %v903 = vld [vmem:[#allocation3 + $0x68] sm:$0xff]
        %v904 = vld [vmem:[#allocation3 + $0x70] sm:$0xff]
        %v905 = vld [vmem:[#allocation3 + $0x78] sm:$0xff]
        %v906 = vld [vmem:[#allocation3 + $0x80] sm:$0xff]
        %v907 = vld [vmem:[#allocation3 + $0x88] sm:$0xff]
        %v908 = vld [vmem:[#allocation3 + $0x90] sm:$0x1]
        %v909 = vld [vmem:[#allocation3 + $0x98] sm:$0x1]
        %v910 = vld [vmem:[#allocation2] sm:$0xff]
        %v911 = vld [vmem:[#allocation2 + $0x8] sm:$0xff]
        %v912 = vld [vmem:[#allocation2 + $0x10] sm:$0xff]
        %v913 = vld [vmem:[#allocation2 + $0x18] sm:$0xff]
        %v914 = vld [vmem:[#allocation2 + $0x20] sm:$0xff]
        %v915 = vld [vmem:[#allocation2 + $0x28] sm:$0xff]
        %v916 = vld [vmem:[#allocation2 + $0x30] sm:$0xff]
        %v917 = vld [vmem:[#allocation2 + $0x38] sm:$0xff]
        %v918 = vld [vmem:[#allocation2 + $0x40] sm:$0xff]
        %v919 = vld [vmem:[#allocation2 + $0x48] sm:$0x11]
        %s920 = scalar_lea.vmem [#allocation4], 256
        %v921 = vld [vmem:[%s920] sm:$0xff]
        %v922 = vld [vmem:[%s920 + $0x8] sm:$0xff]
        %v923 = vld [vmem:[%s920 + $0x10] sm:$0xff]
        %v924 = vld [vmem:[%s920 + $0x18] sm:$0xff]
        %v925 = vld [vmem:[%s920 + $0x20] sm:$0xff]
        %v926 = vld [vmem:[%s920 + $0x28] sm:$0xff]
        %v927 = vld [vmem:[%s920 + $0x30] sm:$0xff]
        %v928 = vld [vmem:[%s920 + $0x38] sm:$0xff]
        %v929 = vld [vmem:[%s920 + $0x40] sm:$0xff]
        %v930 = vld [vmem:[%s920 + $0x48] sm:$0xff]
        %v931 = vld [vmem:[%s920 + $0x50] sm:$0xff]
        %v932 = vld [vmem:[%s920 + $0x58] sm:$0xff]
        %v933 = vld [vmem:[%s920 + $0x60] sm:$0xff]
        %v934 = vld [vmem:[%s920 + $0x68] sm:$0xff]
        %v935 = vld [vmem:[%s920 + $0x70] sm:$0xff]
        %v936 = vld [vmem:[%s920 + $0x78] sm:$0xff]
        %v937 = vld [vmem:[%s920 + $0x80] sm:$0xff]
        %v938 = vld [vmem:[%s920 + $0x88] sm:$0xff]
        %v939 = vld [vmem:[%s920 + $0x90] sm:$0xff]
        %v940 = vld [vmem:[%s920 + $0x98] sm:$0xff]
        %v941 = vld [vmem:[%s920 + $0xa0] sm:$0xff]
        %v942 = vld [vmem:[%s920 + $0xa8] sm:$0xff]
        %v943 = vld [vmem:[%s920 + $0xb0] sm:$0xff]
        %v944 = vld [vmem:[%s920 + $0xb8] sm:$0xff]
        %v945 = vld [vmem:[%s920 + $0xc0] sm:$0xff]
        %v946 = vld [vmem:[%s920 + $0xc8] sm:$0xff]
        %v947 = vld [vmem:[%s920 + $0xd0] sm:$0xff]
        %v948 = vld [vmem:[%s920 + $0xd8] sm:$0xff]
        %v949 = vld [vmem:[%s920 + $0xe0] sm:$0xff]
        %v950 = vld [vmem:[%s920 + $0xe8] sm:$0xff]
        %v951 = vld [vmem:[%s920 + $0xf0] sm:$0xff]
        %v952 = vld [vmem:[%s920 + $0xf8] sm:$0xff]
        %v963 = vunpack.c.l.b16 %v910
        %v964 = vunpack.c.h.b16 %v910
        %v965 = vunpack.c.l.b16 %v911
        %v966 = vunpack.c.h.b16 %v911
        %v967 = vunpack.c.l.b16 %v912
        %v968 = vunpack.c.h.b16 %v912
        %v969 = vunpack.c.l.b16 %v913
        %v970 = vunpack.c.h.b16 %v913
        %v971 = vunpack.c.l.b16 %v914
        %v972 = vunpack.c.h.b16 %v914
        %v973 = vunpack.c.l.b16 %v915
        %v974 = vunpack.c.h.b16 %v915
        %v975 = vunpack.c.l.b16 %v916
        %v976 = vunpack.c.h.b16 %v916
        %v977 = vunpack.c.l.b16 %v917
        %v978 = vunpack.c.h.b16 %v917
        %v979 = vunpack.c.l.b16 %v918
        %v980 = vunpack.c.h.b16 %v918
        %v981 = vunpack.c.l.b16 %v919
        %v982 = vunpack.c.h.b16 %v919
        %v983 = vpack.c.b16 %v965, %v963
        %v984 = vpack.c.b16 %v966, %v964
        %v985 = vpack.c.b16 %v969, %v967
        %v986 = vpack.c.b16 %v970, %v968
        %v987 = vpack.c.b16 %v973, %v971
        %v988 = vpack.c.b16 %v974, %v972
        %v989 = vpack.c.b16 %v977, %v975
        %v990 = vpack.c.b16 %v978, %v976
        %v991 = vpack.c.b16 %v981, %v979
        %v992 = vpack.c.b16 %v982, %v980
        %v994 = vshrl.u32 %v983, 16
        %v996 = vshll.u32 %v983, 16
        %v998 = vrot.slane %v996, 1
        %v999 = vor.u32 %v994, %v998
        %v1001 = vshll.u32 %v985, 16
        %v1003 = vrot.slane %v1001, 1
        %v1004 = vsel %vm400, %v999, %v1003
        %v1006 = vshrl.u32 %v984, 16
        %v1008 = vshll.u32 %v984, 16
        %v1010 = vrot.slane %v1008, 1
        %v1011 = vor.u32 %v1006, %v1010
        %v1013 = vshll.u32 %v986, 16
        %v1015 = vrot.slane %v1013, 1
        %v1016 = vsel %vm400, %v1011, %v1015
        %v1017 = vshrl.u32 %v985, 16
        %v1019 = vor.u32 %v1017, %v1003
        %v1021 = vshll.u32 %v987, 16
        %v1023 = vrot.slane %v1021, 1
        %v1024 = vsel %vm400, %v1019, %v1023
        %v1025 = vshrl.u32 %v986, 16
        %v1027 = vor.u32 %v1025, %v1015
        %v1029 = vshll.u32 %v988, 16
        %v1031 = vrot.slane %v1029, 1
        %v1032 = vsel %vm400, %v1027, %v1031
        %v1033 = vshrl.u32 %v987, 16
        %v1035 = vor.u32 %v1033, %v1023
        %v1037 = vshll.u32 %v989, 16
        %v1039 = vrot.slane %v1037, 1
        %v1040 = vsel %vm400, %v1035, %v1039
        %v1041 = vshrl.u32 %v988, 16
        %v1043 = vor.u32 %v1041, %v1031
        %v1045 = vshll.u32 %v990, 16
        %v1047 = vrot.slane %v1045, 1
        %v1048 = vsel %vm400, %v1043, %v1047
        %v1049 = vshrl.u32 %v989, 16
        %v1051 = vor.u32 %v1049, %v1039
        %v1053 = vshll.u32 %v991, 16
        %v1055 = vrot.slane %v1053, 1
        %v1056 = vsel %vm400, %v1051, %v1055
        %v1057 = vshrl.u32 %v990, 16
        %v1059 = vor.u32 %v1057, %v1047
        %v1061 = vshll.u32 %v992, 16
        %v1063 = vrot.slane %v1061, 1
        %v1064 = vsel %vm400, %v1059, %v1063
        %v1065 = vshrl.u32 %v991, 16
        %v1067 = vor.u32 %v1065, %v1055
        %v1068 = vshrl.u32 %v992, 16
        %v1070 = vor.u32 %v1068, %v1063
        %v1113 = vunpack.c.l.b16 %v921
        %v1114 = vunpack.c.h.b16 %v921
        %v1115 = vunpack.c.l.b16 %v922
        %v1116 = vunpack.c.h.b16 %v922
        %v1117 = vunpack.c.l.b16 %v923
        %v1118 = vunpack.c.h.b16 %v923
        %v1119 = vunpack.c.l.b16 %v924
        %v1120 = vunpack.c.h.b16 %v924
        %v1121 = vunpack.c.l.b16 %v925
        %v1122 = vunpack.c.h.b16 %v925
        %v1123 = vunpack.c.l.b16 %v926
        %v1124 = vunpack.c.h.b16 %v926
        %v1125 = vunpack.c.l.b16 %v927
        %v1126 = vunpack.c.h.b16 %v927
        %v1127 = vunpack.c.l.b16 %v928
        %v1128 = vunpack.c.h.b16 %v928
        %v1129 = vunpack.c.l.b16 %v929
        %v1130 = vunpack.c.h.b16 %v929
        %v1131 = vunpack.c.l.b16 %v930
        %v1132 = vunpack.c.h.b16 %v930
        %v1133 = vunpack.c.l.b16 %v931
        %v1134 = vunpack.c.h.b16 %v931
        %v1135 = vunpack.c.l.b16 %v932
        %v1136 = vunpack.c.h.b16 %v932
        %v1137 = vunpack.c.l.b16 %v933
        %v1138 = vunpack.c.h.b16 %v933
        %v1139 = vunpack.c.l.b16 %v934
        %v1140 = vunpack.c.h.b16 %v934
        %v1141 = vunpack.c.l.b16 %v935
        %v1142 = vunpack.c.h.b16 %v935
        %v1143 = vunpack.c.l.b16 %v936
        %v1144 = vunpack.c.h.b16 %v936
        %v1145 = vunpack.c.l.b16 %v937
        %v1146 = vunpack.c.h.b16 %v937
        %v1147 = vunpack.c.l.b16 %v938
        %v1148 = vunpack.c.h.b16 %v938
        %v1149 = vunpack.c.l.b16 %v939
        %v1150 = vunpack.c.h.b16 %v939
        %v1151 = vunpack.c.l.b16 %v940
        %v1152 = vunpack.c.h.b16 %v940
        %v1153 = vunpack.c.l.b16 %v941
        %v1154 = vunpack.c.h.b16 %v941
        %v1155 = vunpack.c.l.b16 %v942
        %v1156 = vunpack.c.h.b16 %v942
        %v1157 = vunpack.c.l.b16 %v943
        %v1158 = vunpack.c.h.b16 %v943
        %v1159 = vunpack.c.l.b16 %v944
        %v1160 = vunpack.c.h.b16 %v944
        %v1161 = vunpack.c.l.b16 %v945
        %v1162 = vunpack.c.h.b16 %v945
        %v1163 = vunpack.c.l.b16 %v946
        %v1164 = vunpack.c.h.b16 %v946
        %v1165 = vunpack.c.l.b16 %v947
        %v1166 = vunpack.c.h.b16 %v947
        %v1167 = vunpack.c.l.b16 %v948
        %v1168 = vunpack.c.h.b16 %v948
        %v1169 = vunpack.c.l.b16 %v949
        %v1170 = vunpack.c.h.b16 %v949
        %v1171 = vunpack.c.l.b16 %v950
        %v1172 = vunpack.c.h.b16 %v950
        %v1173 = vunpack.c.l.b16 %v951
        %v1174 = vunpack.c.h.b16 %v951
        %v1175 = vunpack.c.l.b16 %v952
        %v1176 = vunpack.c.h.b16 %v952
        %v1177 = vpack.c.b16 %v1115, %v1113
        %v1178 = vpack.c.b16 %v1116, %v1114
        %v1179 = vpack.c.b16 %v1119, %v1117
        %v1180 = vpack.c.b16 %v1120, %v1118
        %v1181 = vpack.c.b16 %v1123, %v1121
        %v1182 = vpack.c.b16 %v1124, %v1122
        %v1183 = vpack.c.b16 %v1127, %v1125
        %v1184 = vpack.c.b16 %v1128, %v1126
        %v1185 = vpack.c.b16 %v1131, %v1129
        %v1186 = vpack.c.b16 %v1132, %v1130
        %v1187 = vpack.c.b16 %v1135, %v1133
        %v1188 = vpack.c.b16 %v1136, %v1134
        %v1189 = vpack.c.b16 %v1139, %v1137
        %v1190 = vpack.c.b16 %v1140, %v1138
        %v1191 = vpack.c.b16 %v1143, %v1141
        %v1192 = vpack.c.b16 %v1144, %v1142
        %v1193 = vpack.c.b16 %v1147, %v1145
        %v1194 = vpack.c.b16 %v1148, %v1146
        %v1195 = vpack.c.b16 %v1151, %v1149
        %v1196 = vpack.c.b16 %v1152, %v1150
        %v1197 = vpack.c.b16 %v1155, %v1153
        %v1198 = vpack.c.b16 %v1156, %v1154
        %v1199 = vpack.c.b16 %v1159, %v1157
        %v1200 = vpack.c.b16 %v1160, %v1158
        %v1201 = vpack.c.b16 %v1163, %v1161
        %v1202 = vpack.c.b16 %v1164, %v1162
        %v1203 = vpack.c.b16 %v1167, %v1165
        %v1204 = vpack.c.b16 %v1168, %v1166
        %v1205 = vpack.c.b16 %v1171, %v1169
        %v1206 = vpack.c.b16 %v1172, %v1170
        %v1207 = vpack.c.b16 %v1175, %v1173
        %v1208 = vpack.c.b16 %v1176, %v1174
        %1241 = vmatpush.bf16.msra.mxu0 %v1191
        %1242 = vmatpush.bf16.msra.mxu0 %v1189
        %1243 = vmatpush.bf16.msra.mxu0 %v1187
        %1244 = vmatpush.bf16.msra.mxu0 %v1185
        %1245 = vmatpush.bf16.msra.mxu0 %v1183
        %1246 = vmatpush.bf16.msra.mxu0 %v1181
        %1247 = vmatpush.bf16.msra.mxu0 %v1179
        %1248 = vmatpush.bf16.msra.mxu0 %v1177
        %1249 = vmatmul.bf16.gmra.mxu0 %v1004
        %v1250 = vpop.f32.mrf.mxu0
        %v1251 = vadd.f32 0.0, %v1250
        %v1252 = vpop.f32.mrf.mxu0
        %v1253 = vadd.f32 0.0, %v1252
        %1254 = vmatmul.bf16.gmra.mxu0 %v1024
        %v1255 = vpop.f32.mrf.mxu0
        %v1256 = vadd.f32 0.0, %v1255
        %v1257 = vpop.f32.mrf.mxu0
        %v1258 = vadd.f32 0.0, %v1257
        %1259 = vmatmul.bf16.gmra.mxu0 %v1040
        %v1260 = vpop.f32.mrf.mxu0
        %v1261 = vadd.f32 0.0, %v1260
        %v1262 = vpop.f32.mrf.mxu0
        %v1263 = vadd.f32 0.0, %v1262
        %1264 = vmatmul.bf16.gmra.mxu0 %v1056
        %v1265 = vpop.f32.mrf.mxu0
        %v1266 = vadd.f32 0.0, %v1265
        %v1267 = vpop.f32.mrf.mxu0
        %v1268 = vadd.f32 0.0, %v1267
        %1269 = vmatmul.bf16.gmra.mxu0 %v1067
        %v1270 = vpop.f32.mrf.mxu0
        %v1271 = vadd.f32 0.0, %v1270
        %v1272 = vpop.f32.mrf.mxu0
        %1273 = vdwg.mxu0
        %1274 = vmatpush.bf16.msra.mxu0 %v1207
        %1275 = vmatpush.bf16.msra.mxu0 %v1205
        %1276 = vmatpush.bf16.msra.mxu0 %v1203
        %1277 = vmatpush.bf16.msra.mxu0 %v1201
        %1278 = vmatpush.bf16.msra.mxu0 %v1199
        %1279 = vmatpush.bf16.msra.mxu0 %v1197
        %1280 = vmatpush.bf16.msra.mxu0 %v1195
        %1281 = vmatpush.bf16.msra.mxu0 %v1193
        %1282 = vmatmul.bf16.gmra.mxu0 %v1016
        %v1283 = vpop.f32.mrf.mxu0
        %v1284 = vadd.f32 %v1251, %v1283
        %v1285 = vpop.f32.mrf.mxu0
        %v1286 = vadd.f32 %v1253, %v1285
        %1287 = vmatmul.bf16.gmra.mxu0 %v1032
        %v1288 = vpop.f32.mrf.mxu0
        %v1289 = vadd.f32 %v1256, %v1288
        %v1290 = vpop.f32.mrf.mxu0
        %v1291 = vadd.f32 %v1258, %v1290
        %1292 = vmatmul.bf16.gmra.mxu0 %v1048
        %v1293 = vpop.f32.mrf.mxu0
        %v1294 = vadd.f32 %v1261, %v1293
        %v1295 = vpop.f32.mrf.mxu0
        %v1296 = vadd.f32 %v1263, %v1295
        %1297 = vmatmul.bf16.gmra.mxu0 %v1064
        %v1298 = vpop.f32.mrf.mxu0
        %v1299 = vadd.f32 %v1266, %v1298
        %v1300 = vpop.f32.mrf.mxu0
        %v1301 = vadd.f32 %v1268, %v1300
        %1302 = vmatmul.bf16.gmra.mxu0 %v1070
        %v1303 = vpop.f32.mrf.mxu0
        %v1304 = vadd.f32 %v1271, %v1303
        %v1305 = vpop.f32.mrf.mxu0
        %1306 = vdwg.mxu0
        %1307 = vmatpush.bf16.msra.mxu0 %v1192
        %1308 = vmatpush.bf16.msra.mxu0 %v1190
        %1309 = vmatpush.bf16.msra.mxu0 %v1188
        %1310 = vmatpush.bf16.msra.mxu0 %v1186
        %1311 = vmatpush.bf16.msra.mxu0 %v1184
        %1312 = vmatpush.bf16.msra.mxu0 %v1182
        %1313 = vmatpush.bf16.msra.mxu0 %v1180
        %1314 = vmatpush.bf16.msra.mxu0 %v1178
        %1315 = vmatmul.bf16.gmra.mxu0 %v1004
        %v1316 = vpop.f32.mrf.mxu0
        %v1317 = vadd.f32 0.0, %v1316
        %v1318 = vpop.f32.mrf.mxu0
        %v1319 = vadd.f32 0.0, %v1318
        %1320 = vmatmul.bf16.gmra.mxu0 %v1024
        %v1321 = vpop.f32.mrf.mxu0
        %v1322 = vadd.f32 0.0, %v1321
        %v1323 = vpop.f32.mrf.mxu0
        %v1324 = vadd.f32 0.0, %v1323
        %1325 = vmatmul.bf16.gmra.mxu0 %v1040
        %v1326 = vpop.f32.mrf.mxu0
        %v1327 = vadd.f32 0.0, %v1326
        %v1328 = vpop.f32.mrf.mxu0
        %v1329 = vadd.f32 0.0, %v1328
        %1330 = vmatmul.bf16.gmra.mxu0 %v1056
        %v1331 = vpop.f32.mrf.mxu0
        %v1332 = vadd.f32 0.0, %v1331
        %v1333 = vpop.f32.mrf.mxu0
        %v1334 = vadd.f32 0.0, %v1333
        %1335 = vmatmul.bf16.gmra.mxu0 %v1067
        %v1336 = vpop.f32.mrf.mxu0
        %v1337 = vadd.f32 0.0, %v1336
        %v1338 = vpop.f32.mrf.mxu0
        %1339 = vdwg.mxu0
        %1340 = vmatpush.bf16.msra.mxu0 %v1208
        %1341 = vmatpush.bf16.msra.mxu0 %v1206
        %1342 = vmatpush.bf16.msra.mxu0 %v1204
        %1343 = vmatpush.bf16.msra.mxu0 %v1202
        %1344 = vmatpush.bf16.msra.mxu0 %v1200
        %1345 = vmatpush.bf16.msra.mxu0 %v1198
        %1346 = vmatpush.bf16.msra.mxu0 %v1196
        %1347 = vmatpush.bf16.msra.mxu0 %v1194
        %1348 = vmatmul.bf16.gmra.mxu0 %v1016
        %v1349 = vpop.f32.mrf.mxu0
        %v1350 = vadd.f32 %v1317, %v1349
        %v1351 = vpop.f32.mrf.mxu0
        %v1352 = vadd.f32 %v1319, %v1351
        %1353 = vmatmul.bf16.gmra.mxu0 %v1032
        %v1354 = vpop.f32.mrf.mxu0
        %v1355 = vadd.f32 %v1322, %v1354
        %v1356 = vpop.f32.mrf.mxu0
        %v1357 = vadd.f32 %v1324, %v1356
        %1358 = vmatmul.bf16.gmra.mxu0 %v1048
        %v1359 = vpop.f32.mrf.mxu0
        %v1360 = vadd.f32 %v1327, %v1359
        %v1361 = vpop.f32.mrf.mxu0
        %v1362 = vadd.f32 %v1329, %v1361
        %1363 = vmatmul.bf16.gmra.mxu0 %v1064
        %v1364 = vpop.f32.mrf.mxu0
        %v1365 = vadd.f32 %v1332, %v1364
        %v1366 = vpop.f32.mrf.mxu0
        %v1367 = vadd.f32 %v1334, %v1366
        %1368 = vmatmul.bf16.gmra.mxu0 %v1070
        %v1369 = vpop.f32.mrf.mxu0
        %v1370 = vadd.f32 %v1337, %v1369
        %v1371 = vpop.f32.mrf.mxu0
        %1372 = vdwg.mxu0
        %v1391 = vrot.slane %v1284, 7
        %v1392 = vrot.slane %v1350, 7
        %v1393 = vrot.slane %v1286, 7
        %v1394 = vsel %vm815, %v1391, %v1393
        %v1395 = vrot.slane %v1352, 7
        %v1396 = vsel %vm815, %v1392, %v1395
        %v1397 = vrot.slane %v1289, 7
        %v1398 = vsel %vm815, %v1393, %v1397
        %v1399 = vrot.slane %v1355, 7
        %v1400 = vsel %vm815, %v1395, %v1399
        %v1401 = vrot.slane %v1291, 7
        %v1402 = vsel %vm815, %v1397, %v1401
        %v1403 = vrot.slane %v1357, 7
        %v1404 = vsel %vm815, %v1399, %v1403
        %v1405 = vrot.slane %v1294, 7
        %v1406 = vsel %vm815, %v1401, %v1405
        %v1407 = vrot.slane %v1360, 7
        %v1408 = vsel %vm815, %v1403, %v1407
        %v1409 = vrot.slane %v1296, 7
        %v1410 = vsel %vm815, %v1405, %v1409
        %v1411 = vrot.slane %v1362, 7
        %v1412 = vsel %vm815, %v1407, %v1411
        %v1413 = vrot.slane %v1299, 7
        %v1414 = vsel %vm815, %v1409, %v1413
        %v1415 = vrot.slane %v1365, 7
        %v1416 = vsel %vm815, %v1411, %v1415
        %v1417 = vrot.slane %v1301, 7
        %v1418 = vsel %vm815, %v1413, %v1417
        %v1419 = vrot.slane %v1367, 7
        %v1420 = vsel %vm815, %v1415, %v1419
        %v1421 = vrot.slane %v1304, 7
        %v1422 = vsel %vm815, %v1417, %v1421
        %v1423 = vrot.slane %v1370, 7
        %v1424 = vsel %vm815, %v1419, %v1423
        %v1445 = vadd.f32 %v890, %v1391
        %v1446 = vadd.f32 %v891, %v1392
        %v1447 = vadd.f32 %v892, %v1394
        %v1448 = vadd.f32 %v893, %v1396
        %v1449 = vadd.f32 %v894, %v1398
        %v1450 = vadd.f32 %v895, %v1400
        %v1451 = vadd.f32 %v896, %v1402
        %v1452 = vadd.f32 %v897, %v1404
        %v1453 = vadd.f32 %v898, %v1406
        %v1454 = vadd.f32 %v899, %v1408
        %v1455 = vadd.f32 %v900, %v1410
        %v1456 = vadd.f32 %v901, %v1412
        %v1457 = vadd.f32 %v902, %v1414
        %v1458 = vadd.f32 %v903, %v1416
        %v1459 = vadd.f32 %v904, %v1418
        %v1460 = vadd.f32 %v905, %v1420
        %v1461 = vadd.f32 %v906, %v1422
        %v1462 = vadd.f32 %v907, %v1424
        %v1463 = vadd.f32 %v908, %v1421
        %v1464 = vadd.f32 %v909, %v1423
        %1465 = vst [vmem:[#allocation3] sm:$0xfe] %v1445
        %1466 = vst [vmem:[#allocation3 + $0x8] sm:$0xfe] %v1446
        %1467 = vst [vmem:[#allocation3 + $0x10] sm:$0xff] %v1447
        %1468 = vst [vmem:[#allocation3 + $0x18] sm:$0xff] %v1448
        %1469 = vst [vmem:[#allocation3 + $0x20] sm:$0xff] %v1449
        %1470 = vst [vmem:[#allocation3 + $0x28] sm:$0xff] %v1450
        %1471 = vst [vmem:[#allocation3 + $0x30] sm:$0xff] %v1451
        %1472 = vst [vmem:[#allocation3 + $0x38] sm:$0xff] %v1452
        %1473 = vst [vmem:[#allocation3 + $0x40] sm:$0xff] %v1453
        %1474 = vst [vmem:[#allocation3 + $0x48] sm:$0xff] %v1454
        %1475 = vst [vmem:[#allocation3 + $0x50] sm:$0xff] %v1455
        %1476 = vst [vmem:[#allocation3 + $0x58] sm:$0xff] %v1456
        %1477 = vst [vmem:[#allocation3 + $0x60] sm:$0xff] %v1457
        %1478 = vst [vmem:[#allocation3 + $0x68] sm:$0xff] %v1458
        %1479 = vst [vmem:[#allocation3 + $0x70] sm:$0xff] %v1459
        %1480 = vst [vmem:[#allocation3 + $0x78] sm:$0xff] %v1460
        %1481 = vst [vmem:[#allocation3 + $0x80] sm:$0xff] %v1461
        %1482 = vst [vmem:[#allocation3 + $0x88] sm:$0xff] %v1462
        %1483 = vst [vmem:[#allocation3 + $0x90] sm:$0x1] %v1463
        %1484 = vst [vmem:[#allocation3 + $0x98] sm:$0x1] %v1464
        %v1485 = vld [vmem:[#allocation3] sm:$0xfe]
        %v1486 = vld [vmem:[#allocation3 + $0x8] sm:$0xfe]
        %v1487 = vld [vmem:[#allocation3 + $0x10] sm:$0xff]
        %v1488 = vld [vmem:[#allocation3 + $0x18] sm:$0xff]
        %v1489 = vld [vmem:[#allocation3 + $0x20] sm:$0xff]
        %v1490 = vld [vmem:[#allocation3 + $0x28] sm:$0xff]
        %v1491 = vld [vmem:[#allocation3 + $0x30] sm:$0xff]
        %v1492 = vld [vmem:[#allocation3 + $0x38] sm:$0xff]
        %v1493 = vld [vmem:[#allocation3 + $0x40] sm:$0xff]
        %v1494 = vld [vmem:[#allocation3 + $0x48] sm:$0xff]
        %v1495 = vld [vmem:[#allocation3 + $0x50] sm:$0xff]
        %v1496 = vld [vmem:[#allocation3 + $0x58] sm:$0xff]
        %v1497 = vld [vmem:[#allocation3 + $0x60] sm:$0xff]
        %v1498 = vld [vmem:[#allocation3 + $0x68] sm:$0xff]
        %v1499 = vld [vmem:[#allocation3 + $0x70] sm:$0xff]
        %v1500 = vld [vmem:[#allocation3 + $0x78] sm:$0xff]
        %v1501 = vld [vmem:[#allocation3 + $0x80] sm:$0xff]
        %v1502 = vld [vmem:[#allocation3 + $0x88] sm:$0xff]
        %v1503 = vld [vmem:[#allocation3 + $0x90] sm:$0x1]
        %v1504 = vld [vmem:[#allocation3 + $0x98] sm:$0x1]
        %v1505 = vld [vmem:[#allocation2] sm:$0xee]
        %v1506 = vld [vmem:[#allocation2 + $0x8] sm:$0xff]
        %v1507 = vld [vmem:[#allocation2 + $0x10] sm:$0xff]
        %v1508 = vld [vmem:[#allocation2 + $0x18] sm:$0xff]
        %v1509 = vld [vmem:[#allocation2 + $0x20] sm:$0xff]
        %v1510 = vld [vmem:[#allocation2 + $0x28] sm:$0xff]
        %v1511 = vld [vmem:[#allocation2 + $0x30] sm:$0xff]
        %v1512 = vld [vmem:[#allocation2 + $0x38] sm:$0xff]
        %v1513 = vld [vmem:[#allocation2 + $0x40] sm:$0xff]
        %v1514 = vld [vmem:[#allocation2 + $0x48] sm:$0x11]
        %s1515 = scalar_lea.vmem [#allocation4], 512
        %v1516 = vld [vmem:[%s1515] sm:$0xff]
        %v1517 = vld [vmem:[%s1515 + $0x8] sm:$0xff]
        %v1518 = vld [vmem:[%s1515 + $0x10] sm:$0xff]
        %v1519 = vld [vmem:[%s1515 + $0x18] sm:$0xff]
        %v1520 = vld [vmem:[%s1515 + $0x20] sm:$0xff]
        %v1521 = vld [vmem:[%s1515 + $0x28] sm:$0xff]
        %v1522 = vld [vmem:[%s1515 + $0x30] sm:$0xff]
        %v1523 = vld [vmem:[%s1515 + $0x38] sm:$0xff]
        %v1524 = vld [vmem:[%s1515 + $0x40] sm:$0xff]
        %v1525 = vld [vmem:[%s1515 + $0x48] sm:$0xff]
        %v1526 = vld [vmem:[%s1515 + $0x50] sm:$0xff]
        %v1527 = vld [vmem:[%s1515 + $0x58] sm:$0xff]
        %v1528 = vld [vmem:[%s1515 + $0x60] sm:$0xff]
        %v1529 = vld [vmem:[%s1515 + $0x68] sm:$0xff]
        %v1530 = vld [vmem:[%s1515 + $0x70] sm:$0xff]
        %v1531 = vld [vmem:[%s1515 + $0x78] sm:$0xff]
        %v1532 = vld [vmem:[%s1515 + $0x80] sm:$0xff]
        %v1533 = vld [vmem:[%s1515 + $0x88] sm:$0xff]
        %v1534 = vld [vmem:[%s1515 + $0x90] sm:$0xff]
        %v1535 = vld [vmem:[%s1515 + $0x98] sm:$0xff]
        %v1536 = vld [vmem:[%s1515 + $0xa0] sm:$0xff]
        %v1537 = vld [vmem:[%s1515 + $0xa8] sm:$0xff]
        %v1538 = vld [vmem:[%s1515 + $0xb0] sm:$0xff]
        %v1539 = vld [vmem:[%s1515 + $0xb8] sm:$0xff]
        %v1540 = vld [vmem:[%s1515 + $0xc0] sm:$0xff]
        %v1541 = vld [vmem:[%s1515 + $0xc8] sm:$0xff]
        %v1542 = vld [vmem:[%s1515 + $0xd0] sm:$0xff]
        %v1543 = vld [vmem:[%s1515 + $0xd8] sm:$0xff]
        %v1544 = vld [vmem:[%s1515 + $0xe0] sm:$0xff]
        %v1545 = vld [vmem:[%s1515 + $0xe8] sm:$0xff]
        %v1546 = vld [vmem:[%s1515 + $0xf0] sm:$0xff]
        %v1547 = vld [vmem:[%s1515 + $0xf8] sm:$0xff]
        %v1558 = vunpack.c.l.b16 %v1505
        %v1559 = vunpack.c.h.b16 %v1505
        %v1560 = vunpack.c.l.b16 %v1506
        %v1561 = vunpack.c.h.b16 %v1506
        %v1562 = vunpack.c.l.b16 %v1507
        %v1563 = vunpack.c.h.b16 %v1507
        %v1564 = vunpack.c.l.b16 %v1508
        %v1565 = vunpack.c.h.b16 %v1508
        %v1566 = vunpack.c.l.b16 %v1509
        %v1567 = vunpack.c.h.b16 %v1509
        %v1568 = vunpack.c.l.b16 %v1510
        %v1569 = vunpack.c.h.b16 %v1510
        %v1570 = vunpack.c.l.b16 %v1511
        %v1571 = vunpack.c.h.b16 %v1511
        %v1572 = vunpack.c.l.b16 %v1512
        %v1573 = vunpack.c.h.b16 %v1512
        %v1574 = vunpack.c.l.b16 %v1513
        %v1575 = vunpack.c.h.b16 %v1513
        %v1576 = vunpack.c.l.b16 %v1514
        %v1577 = vunpack.c.h.b16 %v1514
        %v1578 = vpack.c.b16 %v1560, %v1558
        %v1579 = vpack.c.b16 %v1561, %v1559
        %v1580 = vpack.c.b16 %v1564, %v1562
        %v1581 = vpack.c.b16 %v1565, %v1563
        %v1582 = vpack.c.b16 %v1568, %v1566
        %v1583 = vpack.c.b16 %v1569, %v1567
        %v1584 = vpack.c.b16 %v1572, %v1570
        %v1585 = vpack.c.b16 %v1573, %v1571
        %v1586 = vpack.c.b16 %v1576, %v1574
        %v1587 = vpack.c.b16 %v1577, %v1575
        %vm1588 = vcmask 1046528
        %v1589 = vrot.slane %v1578, 1
        %v1590 = vrot.slane %v1580, 1
        %v1591 = vsel %vm1588, %v1589, %v1590
        %v1592 = vrot.slane %v1579, 1
        %v1593 = vrot.slane %v1581, 1
        %v1594 = vsel %vm1588, %v1592, %v1593
        %v1595 = vrot.slane %v1582, 1
        %v1596 = vsel %vm1588, %v1590, %v1595
        %v1597 = vrot.slane %v1583, 1
        %v1598 = vsel %vm1588, %v1593, %v1597
        %v1599 = vrot.slane %v1584, 1
        %v1600 = vsel %vm1588, %v1595, %v1599
        %v1601 = vrot.slane %v1585, 1
        %v1602 = vsel %vm1588, %v1597, %v1601
        %v1603 = vrot.slane %v1586, 1
        %v1604 = vsel %vm1588, %v1599, %v1603
        %v1605 = vrot.slane %v1587, 1
        %v1606 = vsel %vm1588, %v1601, %v1605
        %v1649 = vunpack.c.l.b16 %v1516
        %v1650 = vunpack.c.h.b16 %v1516
        %v1651 = vunpack.c.l.b16 %v1517
        %v1652 = vunpack.c.h.b16 %v1517
        %v1653 = vunpack.c.l.b16 %v1518
        %v1654 = vunpack.c.h.b16 %v1518
        %v1655 = vunpack.c.l.b16 %v1519
        %v1656 = vunpack.c.h.b16 %v1519
        %v1657 = vunpack.c.l.b16 %v1520
        %v1658 = vunpack.c.h.b16 %v1520
        %v1659 = vunpack.c.l.b16 %v1521
        %v1660 = vunpack.c.h.b16 %v1521
        %v1661 = vunpack.c.l.b16 %v1522
        %v1662 = vunpack.c.h.b16 %v1522
        %v1663 = vunpack.c.l.b16 %v1523
        %v1664 = vunpack.c.h.b16 %v1523
        %v1665 = vunpack.c.l.b16 %v1524
        %v1666 = vunpack.c.h.b16 %v1524
        %v1667 = vunpack.c.l.b16 %v1525
        %v1668 = vunpack.c.h.b16 %v1525
        %v1669 = vunpack.c.l.b16 %v1526
        %v1670 = vunpack.c.h.b16 %v1526
        %v1671 = vunpack.c.l.b16 %v1527
        %v1672 = vunpack.c.h.b16 %v1527
        %v1673 = vunpack.c.l.b16 %v1528
        %v1674 = vunpack.c.h.b16 %v1528
        %v1675 = vunpack.c.l.b16 %v1529
        %v1676 = vunpack.c.h.b16 %v1529
        %v1677 = vunpack.c.l.b16 %v1530
        %v1678 = vunpack.c.h.b16 %v1530
        %v1679 = vunpack.c.l.b16 %v1531
        %v1680 = vunpack.c.h.b16 %v1531
        %v1681 = vunpack.c.l.b16 %v1532
        %v1682 = vunpack.c.h.b16 %v1532
        %v1683 = vunpack.c.l.b16 %v1533
        %v1684 = vunpack.c.h.b16 %v1533
        %v1685 = vunpack.c.l.b16 %v1534
        %v1686 = vunpack.c.h.b16 %v1534
        %v1687 = vunpack.c.l.b16 %v1535
        %v1688 = vunpack.c.h.b16 %v1535
        %v1689 = vunpack.c.l.b16 %v1536
        %v1690 = vunpack.c.h.b16 %v1536
        %v1691 = vunpack.c.l.b16 %v1537
        %v1692 = vunpack.c.h.b16 %v1537
        %v1693 = vunpack.c.l.b16 %v1538
        %v1694 = vunpack.c.h.b16 %v1538
        %v1695 = vunpack.c.l.b16 %v1539
        %v1696 = vunpack.c.h.b16 %v1539
        %v1697 = vunpack.c.l.b16 %v1540
        %v1698 = vunpack.c.h.b16 %v1540
        %v1699 = vunpack.c.l.b16 %v1541
        %v1700 = vunpack.c.h.b16 %v1541
        %v1701 = vunpack.c.l.b16 %v1542
        %v1702 = vunpack.c.h.b16 %v1542
        %v1703 = vunpack.c.l.b16 %v1543
        %v1704 = vunpack.c.h.b16 %v1543
        %v1705 = vunpack.c.l.b16 %v1544
        %v1706 = vunpack.c.h.b16 %v1544
        %v1707 = vunpack.c.l.b16 %v1545
        %v1708 = vunpack.c.h.b16 %v1545
        %v1709 = vunpack.c.l.b16 %v1546
        %v1710 = vunpack.c.h.b16 %v1546
        %v1711 = vunpack.c.l.b16 %v1547
        %v1712 = vunpack.c.h.b16 %v1547
        %v1713 = vpack.c.b16 %v1651, %v1649
        %v1714 = vpack.c.b16 %v1652, %v1650
        %v1715 = vpack.c.b16 %v1655, %v1653
        %v1716 = vpack.c.b16 %v1656, %v1654
        %v1717 = vpack.c.b16 %v1659, %v1657
        %v1718 = vpack.c.b16 %v1660, %v1658
        %v1719 = vpack.c.b16 %v1663, %v1661
        %v1720 = vpack.c.b16 %v1664, %v1662
        %v1721 = vpack.c.b16 %v1667, %v1665
        %v1722 = vpack.c.b16 %v1668, %v1666
        %v1723 = vpack.c.b16 %v1671, %v1669
        %v1724 = vpack.c.b16 %v1672, %v1670
        %v1725 = vpack.c.b16 %v1675, %v1673
        %v1726 = vpack.c.b16 %v1676, %v1674
        %v1727 = vpack.c.b16 %v1679, %v1677
        %v1728 = vpack.c.b16 %v1680, %v1678
        %v1729 = vpack.c.b16 %v1683, %v1681
        %v1730 = vpack.c.b16 %v1684, %v1682
        %v1731 = vpack.c.b16 %v1687, %v1685
        %v1732 = vpack.c.b16 %v1688, %v1686
        %v1733 = vpack.c.b16 %v1691, %v1689
        %v1734 = vpack.c.b16 %v1692, %v1690
        %v1735 = vpack.c.b16 %v1695, %v1693
        %v1736 = vpack.c.b16 %v1696, %v1694
        %v1737 = vpack.c.b16 %v1699, %v1697
        %v1738 = vpack.c.b16 %v1700, %v1698
        %v1739 = vpack.c.b16 %v1703, %v1701
        %v1740 = vpack.c.b16 %v1704, %v1702
        %v1741 = vpack.c.b16 %v1707, %v1705
        %v1742 = vpack.c.b16 %v1708, %v1706
        %v1743 = vpack.c.b16 %v1711, %v1709
        %v1744 = vpack.c.b16 %v1712, %v1710
        %1777 = vmatpush.bf16.msra.mxu0 %v1727
        %1778 = vmatpush.bf16.msra.mxu0 %v1725
        %1779 = vmatpush.bf16.msra.mxu0 %v1723
        %1780 = vmatpush.bf16.msra.mxu0 %v1721
        %1781 = vmatpush.bf16.msra.mxu0 %v1719
        %1782 = vmatpush.bf16.msra.mxu0 %v1717
        %1783 = vmatpush.bf16.msra.mxu0 %v1715
        %1784 = vmatpush.bf16.msra.mxu0 %v1713
        %1785 = vmatmul.bf16.gmra.mxu0 %v1591
        %v1786 = vpop.f32.mrf.mxu0
        %v1787 = vadd.f32 0.0, %v1786
        %v1788 = vpop.f32.mrf.mxu0
        %v1789 = vadd.f32 0.0, %v1788
        %1790 = vmatmul.bf16.gmra.mxu0 %v1596
        %v1791 = vpop.f32.mrf.mxu0
        %v1792 = vadd.f32 0.0, %v1791
        %v1793 = vpop.f32.mrf.mxu0
        %v1794 = vadd.f32 0.0, %v1793
        %1795 = vmatmul.bf16.gmra.mxu0 %v1600
        %v1796 = vpop.f32.mrf.mxu0
        %v1797 = vadd.f32 0.0, %v1796
        %v1798 = vpop.f32.mrf.mxu0
        %v1799 = vadd.f32 0.0, %v1798
        %1800 = vmatmul.bf16.gmra.mxu0 %v1604
        %v1801 = vpop.f32.mrf.mxu0
        %v1802 = vadd.f32 0.0, %v1801
        %v1803 = vpop.f32.mrf.mxu0
        %v1804 = vadd.f32 0.0, %v1803
        %1805 = vmatmul.bf16.gmra.mxu0 %v1603
        %v1806 = vpop.f32.mrf.mxu0
        %v1807 = vadd.f32 0.0, %v1806
        %v1808 = vpop.f32.mrf.mxu0
        %1809 = vdwg.mxu0
        %1810 = vmatpush.bf16.msra.mxu0 %v1743
        %1811 = vmatpush.bf16.msra.mxu0 %v1741
        %1812 = vmatpush.bf16.msra.mxu0 %v1739
        %1813 = vmatpush.bf16.msra.mxu0 %v1737
        %1814 = vmatpush.bf16.msra.mxu0 %v1735
        %1815 = vmatpush.bf16.msra.mxu0 %v1733
        %1816 = vmatpush.bf16.msra.mxu0 %v1731
        %1817 = vmatpush.bf16.msra.mxu0 %v1729
        %1818 = vmatmul.bf16.gmra.mxu0 %v1594
        %v1819 = vpop.f32.mrf.mxu0
        %v1820 = vadd.f32 %v1787, %v1819
        %v1821 = vpop.f32.mrf.mxu0
        %v1822 = vadd.f32 %v1789, %v1821
        %1823 = vmatmul.bf16.gmra.mxu0 %v1598
        %v1824 = vpop.f32.mrf.mxu0
        %v1825 = vadd.f32 %v1792, %v1824
        %v1826 = vpop.f32.mrf.mxu0
        %v1827 = vadd.f32 %v1794, %v1826
        %1828 = vmatmul.bf16.gmra.mxu0 %v1602
        %v1829 = vpop.f32.mrf.mxu0
        %v1830 = vadd.f32 %v1797, %v1829
        %v1831 = vpop.f32.mrf.mxu0
        %v1832 = vadd.f32 %v1799, %v1831
        %1833 = vmatmul.bf16.gmra.mxu0 %v1606
        %v1834 = vpop.f32.mrf.mxu0
        %v1835 = vadd.f32 %v1802, %v1834
        %v1836 = vpop.f32.mrf.mxu0
        %v1837 = vadd.f32 %v1804, %v1836
        %1838 = vmatmul.bf16.gmra.mxu0 %v1605
        %v1839 = vpop.f32.mrf.mxu0
        %v1840 = vadd.f32 %v1807, %v1839
        %v1841 = vpop.f32.mrf.mxu0
        %1842 = vdwg.mxu0
        %1843 = vmatpush.bf16.msra.mxu0 %v1728
        %1844 = vmatpush.bf16.msra.mxu0 %v1726
        %1845 = vmatpush.bf16.msra.mxu0 %v1724
        %1846 = vmatpush.bf16.msra.mxu0 %v1722
        %1847 = vmatpush.bf16.msra.mxu0 %v1720
        %1848 = vmatpush.bf16.msra.mxu0 %v1718
        %1849 = vmatpush.bf16.msra.mxu0 %v1716
        %1850 = vmatpush.bf16.msra.mxu0 %v1714
        %1851 = vmatmul.bf16.gmra.mxu0 %v1591
        %v1852 = vpop.f32.mrf.mxu0
        %v1853 = vadd.f32 0.0, %v1852
        %v1854 = vpop.f32.mrf.mxu0
        %v1855 = vadd.f32 0.0, %v1854
        %1856 = vmatmul.bf16.gmra.mxu0 %v1596
        %v1857 = vpop.f32.mrf.mxu0
        %v1858 = vadd.f32 0.0, %v1857
        %v1859 = vpop.f32.mrf.mxu0
        %v1860 = vadd.f32 0.0, %v1859
        %1861 = vmatmul.bf16.gmra.mxu0 %v1600
        %v1862 = vpop.f32.mrf.mxu0
        %v1863 = vadd.f32 0.0, %v1862
        %v1864 = vpop.f32.mrf.mxu0
        %v1865 = vadd.f32 0.0, %v1864
        %1866 = vmatmul.bf16.gmra.mxu0 %v1604
        %v1867 = vpop.f32.mrf.mxu0
        %v1868 = vadd.f32 0.0, %v1867
        %v1869 = vpop.f32.mrf.mxu0
        %v1870 = vadd.f32 0.0, %v1869
        %1871 = vmatmul.bf16.gmra.mxu0 %v1603
        %v1872 = vpop.f32.mrf.mxu0
        %v1873 = vadd.f32 0.0, %v1872
        %v1874 = vpop.f32.mrf.mxu0
        %1875 = vdwg.mxu0
        %1876 = vmatpush.bf16.msra.mxu0 %v1744
        %1877 = vmatpush.bf16.msra.mxu0 %v1742
        %1878 = vmatpush.bf16.msra.mxu0 %v1740
        %1879 = vmatpush.bf16.msra.mxu0 %v1738
        %1880 = vmatpush.bf16.msra.mxu0 %v1736
        %1881 = vmatpush.bf16.msra.mxu0 %v1734
        %1882 = vmatpush.bf16.msra.mxu0 %v1732
        %1883 = vmatpush.bf16.msra.mxu0 %v1730
        %1884 = vmatmul.bf16.gmra.mxu0 %v1594
        %v1885 = vpop.f32.mrf.mxu0
        %v1886 = vadd.f32 %v1853, %v1885
        %v1887 = vpop.f32.mrf.mxu0
        %v1888 = vadd.f32 %v1855, %v1887
        %1889 = vmatmul.bf16.gmra.mxu0 %v1598
        %v1890 = vpop.f32.mrf.mxu0
        %v1891 = vadd.f32 %v1858, %v1890
        %v1892 = vpop.f32.mrf.mxu0
        %v1893 = vadd.f32 %v1860, %v1892
        %1894 = vmatmul.bf16.gmra.mxu0 %v1602
        %v1895 = vpop.f32.mrf.mxu0
        %v1896 = vadd.f32 %v1863, %v1895
        %v1897 = vpop.f32.mrf.mxu0
        %v1898 = vadd.f32 %v1865, %v1897
        %1899 = vmatmul.bf16.gmra.mxu0 %v1606
        %v1900 = vpop.f32.mrf.mxu0
        %v1901 = vadd.f32 %v1868, %v1900
        %v1902 = vpop.f32.mrf.mxu0
        %v1903 = vadd.f32 %v1870, %v1902
        %1904 = vmatmul.bf16.gmra.mxu0 %v1605
        %v1905 = vpop.f32.mrf.mxu0
        %v1906 = vadd.f32 %v1873, %v1905
        %v1907 = vpop.f32.mrf.mxu0
        %1908 = vdwg.mxu0
        %v1927 = vrot.slane %v1820, 7
        %v1928 = vrot.slane %v1886, 7
        %v1929 = vrot.slane %v1822, 7
        %v1930 = vsel %vm815, %v1927, %v1929
        %v1931 = vrot.slane %v1888, 7
        %v1932 = vsel %vm815, %v1928, %v1931
        %v1933 = vrot.slane %v1825, 7
        %v1934 = vsel %vm815, %v1929, %v1933
        %v1935 = vrot.slane %v1891, 7
        %v1936 = vsel %vm815, %v1931, %v1935
        %v1937 = vrot.slane %v1827, 7
        %v1938 = vsel %vm815, %v1933, %v1937
        %v1939 = vrot.slane %v1893, 7
        %v1940 = vsel %vm815, %v1935, %v1939
        %v1941 = vrot.slane %v1830, 7
        %v1942 = vsel %vm815, %v1937, %v1941
        %v1943 = vrot.slane %v1896, 7
        %v1944 = vsel %vm815, %v1939, %v1943
        %v1945 = vrot.slane %v1832, 7
        %v1946 = vsel %vm815, %v1941, %v1945
        %v1947 = vrot.slane %v1898, 7
        %v1948 = vsel %vm815, %v1943, %v1947
        %v1949 = vrot.slane %v1835, 7
        %v1950 = vsel %vm815, %v1945, %v1949
        %v1951 = vrot.slane %v1901, 7
        %v1952 = vsel %vm815, %v1947, %v1951
        %v1953 = vrot.slane %v1837, 7
        %v1954 = vsel %vm815, %v1949, %v1953
        %v1955 = vrot.slane %v1903, 7
        %v1956 = vsel %vm815, %v1951, %v1955
        %v1957 = vrot.slane %v1840, 7
        %v1958 = vsel %vm815, %v1953, %v1957
        %v1959 = vrot.slane %v1906, 7
        %v1960 = vsel %vm815, %v1955, %v1959
        %v1981 = vadd.f32 %v1485, %v1927
        %v1982 = vadd.f32 %v1486, %v1928
        %v1983 = vadd.f32 %v1487, %v1930
        %v1984 = vadd.f32 %v1488, %v1932
        %v1985 = vadd.f32 %v1489, %v1934
        %v1986 = vadd.f32 %v1490, %v1936
        %v1987 = vadd.f32 %v1491, %v1938
        %v1988 = vadd.f32 %v1492, %v1940
        %v1989 = vadd.f32 %v1493, %v1942
        %v1990 = vadd.f32 %v1494, %v1944
        %v1991 = vadd.f32 %v1495, %v1946
        %v1992 = vadd.f32 %v1496, %v1948
        %v1993 = vadd.f32 %v1497, %v1950
        %v1994 = vadd.f32 %v1498, %v1952
        %v1995 = vadd.f32 %v1499, %v1954
        %v1996 = vadd.f32 %v1500, %v1956
        %v1997 = vadd.f32 %v1501, %v1958
        %v1998 = vadd.f32 %v1502, %v1960
        %v1999 = vadd.f32 %v1503, %v1957
        %v2000 = vadd.f32 %v1504, %v1959
        %2001 = vst [vmem:[#allocation3] sm:$0xfe] %v1981
        %2002 = vst [vmem:[#allocation3 + $0x8] sm:$0xfe] %v1982
        %2003 = vst [vmem:[#allocation3 + $0x10] sm:$0xff] %v1983
        %2004 = vst [vmem:[#allocation3 + $0x18] sm:$0xff] %v1984
        %2005 = vst [vmem:[#allocation3 + $0x20] sm:$0xff] %v1985
        %2006 = vst [vmem:[#allocation3 + $0x28] sm:$0xff] %v1986
        %2007 = vst [vmem:[#allocation3 + $0x30] sm:$0xff] %v1987
        %2008 = vst [vmem:[#allocation3 + $0x38] sm:$0xff] %v1988
        %2009 = vst [vmem:[#allocation3 + $0x40] sm:$0xff] %v1989
        %2010 = vst [vmem:[#allocation3 + $0x48] sm:$0xff] %v1990
        %2011 = vst [vmem:[#allocation3 + $0x50] sm:$0xff] %v1991
        %2012 = vst [vmem:[#allocation3 + $0x58] sm:$0xff] %v1992
        %2013 = vst [vmem:[#allocation3 + $0x60] sm:$0xff] %v1993
        %2014 = vst [vmem:[#allocation3 + $0x68] sm:$0xff] %v1994
        %2015 = vst [vmem:[#allocation3 + $0x70] sm:$0xff] %v1995
        %2016 = vst [vmem:[#allocation3 + $0x78] sm:$0xff] %v1996
        %2017 = vst [vmem:[#allocation3 + $0x80] sm:$0xff] %v1997
        %2018 = vst [vmem:[#allocation3 + $0x88] sm:$0xff] %v1998
        %2019 = vst [vmem:[#allocation3 + $0x90] sm:$0x1] %v1999
        %2020 = vst [vmem:[#allocation3 + $0x98] sm:$0x1] %v2000
        %v2021 = vld [vmem:[#allocation3] sm:$0xfe]
        %v2022 = vld [vmem:[#allocation3 + $0x8] sm:$0xfe]
        %v2023 = vld [vmem:[#allocation3 + $0x10] sm:$0xff]
        %v2024 = vld [vmem:[#allocation3 + $0x18] sm:$0xff]
        %v2025 = vld [vmem:[#allocation3 + $0x20] sm:$0xff]
        %v2026 = vld [vmem:[#allocation3 + $0x28] sm:$0xff]
        %v2027 = vld [vmem:[#allocation3 + $0x30] sm:$0xff]
        %v2028 = vld [vmem:[#allocation3 + $0x38] sm:$0xff]
        %v2029 = vld [vmem:[#allocation3 + $0x40] sm:$0xff]
        %v2030 = vld [vmem:[#allocation3 + $0x48] sm:$0xff]
        %v2031 = vld [vmem:[#allocation3 + $0x50] sm:$0xff]
        %v2032 = vld [vmem:[#allocation3 + $0x58] sm:$0xff]
        %v2033 = vld [vmem:[#allocation3 + $0x60] sm:$0xff]
        %v2034 = vld [vmem:[#allocation3 + $0x68] sm:$0xff]
        %v2035 = vld [vmem:[#allocation3 + $0x70] sm:$0xff]
        %v2036 = vld [vmem:[#allocation3 + $0x78] sm:$0xff]
        %v2037 = vld [vmem:[#allocation3 + $0x80] sm:$0xff]
        %v2038 = vld [vmem:[#allocation3 + $0x88] sm:$0xff]
        %v2039 = vld [vmem:[#allocation3 + $0x90] sm:$0x1]
        %v2040 = vld [vmem:[#allocation3 + $0x98] sm:$0x1]
        %v2041 = vmax.f32 %v2021, 0.0
        %v2042 = vmax.f32 %v2022, 0.0
        %v2043 = vmax.f32 %v2023, 0.0
        %v2044 = vmax.f32 %v2024, 0.0
        %v2045 = vmax.f32 %v2025, 0.0
        %v2046 = vmax.f32 %v2026, 0.0
        %v2047 = vmax.f32 %v2027, 0.0
        %v2048 = vmax.f32 %v2028, 0.0
        %v2049 = vmax.f32 %v2029, 0.0
        %v2050 = vmax.f32 %v2030, 0.0
        %v2051 = vmax.f32 %v2031, 0.0
        %v2052 = vmax.f32 %v2032, 0.0
        %v2053 = vmax.f32 %v2033, 0.0
        %v2054 = vmax.f32 %v2034, 0.0
        %v2055 = vmax.f32 %v2035, 0.0
        %v2056 = vmax.f32 %v2036, 0.0
        %v2057 = vmax.f32 %v2037, 0.0
        %v2058 = vmax.f32 %v2038, 0.0
        %v2059 = vmax.f32 %v2039, 0.0
        %v2060 = vmax.f32 %v2040, 0.0
        %v2061 = vpack.c.bf16 %v2042, %v2041
        %v2062 = vpack.c.bf16 %v2044, %v2043
        %v2063 = vpack.c.bf16 %v2046, %v2045
        %v2064 = vpack.c.bf16 %v2048, %v2047
        %v2065 = vpack.c.bf16 %v2050, %v2049
        %v2066 = vpack.c.bf16 %v2052, %v2051
        %v2067 = vpack.c.bf16 %v2054, %v2053
        %v2068 = vpack.c.bf16 %v2056, %v2055
        %v2069 = vpack.c.bf16 %v2058, %v2057
        %v2070 = vpack.c.bf16 %v2060, %v2059
        %vm2071 = vcmask 1043456
        %vm2072 = vmand %vm2071, %vm274
        %vm2073 = vcmask 1047556
        %vm2074 = vmand %vm2073, %vm276
        %vm2075 = vmor %vm2074, %vm2072
        %v2076 = vld [vmem:[#allocation2] sm:$0xff]
        %v2077 = vsel %vm2075, %v2061, %v2076
        %2078 = vst [vmem:[#allocation2] sm:$0xff] %v2077
        %2079 = vst [vmem:[#allocation2 + $0x8] sm:$0xff] %v2062
        %2080 = vst [vmem:[#allocation2 + $0x10] sm:$0xff] %v2063
        %2081 = vst [vmem:[#allocation2 + $0x18] sm:$0xff] %v2064
        %2082 = vst [vmem:[#allocation2 + $0x20] sm:$0xff] %v2065
        %2083 = vst [vmem:[#allocation2 + $0x28] sm:$0xff] %v2066
        %2084 = vst [vmem:[#allocation2 + $0x30] sm:$0xff] %v2067
        %2085 = vst [vmem:[#allocation2 + $0x38] sm:$0xff] %v2068
        %2086 = vst [vmem:[#allocation2 + $0x40] sm:$0xff] %v2069
        %v2087 = vld [vmem:[#allocation2 + $0x48] sm:$0x11]
        %v2088 = vsel %vm270, %v2070, %v2087
        %2089 = vst [vmem:[#allocation2 + $0x48] sm:$0x11] %v2088
        %v2090 = vld [vmem:[#allocation2] sm:$0x11]
        %v2091 = vsel %vm278, 0, %v2090
        %2092 = vst [vmem:[#allocation2] sm:$0x11] %v2091
        %v2093 = vld [vmem:[#allocation2 + $0x10] sm:$0x22]
        %v2094 = vsel %vm366, 0, %v2093
        %2095 = vst [vmem:[#allocation2 + $0x10] sm:$0x22] %v2094
        %v2096 = vld [vmem:[#allocation2 + $0x10] sm:$0x22]
        %v2097 = vsel %vm374, 0, %v2096
        %2098 = vst [vmem:[#allocation2 + $0x10] sm:$0x22] %v2097
        %v2099 = vld [vmem:[#allocation2 + $0x20] sm:$0x44]
        %v2100 = vsel %vm384, 0, %v2099
        %2101 = vst [vmem:[#allocation2 + $0x20] sm:$0x44] %v2100
        %v2102 = vld [vmem:[#allocation2 + $0x20] sm:$0x44]
        %v2103 = vsel %vm392, 0, %v2102
        %2104 = vst [vmem:[#allocation2 + $0x20] sm:$0x44] %v2103
        %v2105 = vld [vmem:[#allocation2 + $0x30] sm:$0x88]
        %v2106 = vsel %vm402, 0, %v2105
        %2107 = vst [vmem:[#allocation2 + $0x30] sm:$0x88] %v2106
        %v2108 = vld [vmem:[#allocation2 + $0x30] sm:$0x88]
        %v2109 = vsel %vm410, 0, %v2108
        %2110 = vst [vmem:[#allocation2 + $0x30] sm:$0x88] %v2109
        %v2111 = vld [vmem:[#allocation2 + $0x48] sm:$0x11]
        %v2112 = vsel %vm270, 0, %v2111
        %2113 = vst [vmem:[#allocation2 + $0x48] sm:$0x11] %v2112
        %v2114 = vld [vmem:[#allocation2] sm:$0xff]
        %v2115 = vld [vmem:[#allocation2 + $0x8] sm:$0xff]
        %v2116 = vld [vmem:[#allocation2 + $0x10] sm:$0xff]
        %v2117 = vld [vmem:[#allocation2 + $0x18] sm:$0xff]
        %v2118 = vld [vmem:[#allocation2 + $0x20] sm:$0xff]
        %v2119 = vld [vmem:[#allocation2 + $0x28] sm:$0xff]
        %v2120 = vld [vmem:[#allocation2 + $0x30] sm:$0xff]
        %v2121 = vld [vmem:[#allocation2 + $0x38] sm:$0xff]
        %v2122 = vld [vmem:[#allocation2 + $0x40] sm:$0xff]
        %v2123 = vld [vmem:[#allocation7] sm:$0xff]
        %v2124 = vld [vmem:[#allocation7 + $0x8] sm:$0xff]
        %v2125 = vld [vmem:[#allocation7 + $0x10] sm:$0xff]
        %v2126 = vld [vmem:[#allocation7 + $0x18] sm:$0xff]
        %v2127 = vld [vmem:[#allocation7 + $0x20] sm:$0xff]
        %v2128 = vld [vmem:[#allocation7 + $0x28] sm:$0xff]
        %v2129 = vld [vmem:[#allocation7 + $0x30] sm:$0xff]
        %v2130 = vld [vmem:[#allocation7 + $0x38] sm:$0xff]
        %v2131 = vld [vmem:[#allocation7 + $0x40] sm:$0xff]
        %v2132 = vld [vmem:[#allocation7 + $0x48] sm:$0xff]
        %v2133 = vld [vmem:[#allocation7 + $0x50] sm:$0xff]
        %v2134 = vld [vmem:[#allocation7 + $0x58] sm:$0xff]
        %v2135 = vld [vmem:[#allocation7 + $0x60] sm:$0xff]
        %v2136 = vld [vmem:[#allocation7 + $0x68] sm:$0xff]
        %v2137 = vld [vmem:[#allocation7 + $0x70] sm:$0xff]
        %v2138 = vld [vmem:[#allocation7 + $0x78] sm:$0xff]
        %v2139 = vld [vmem:[#allocation7 + $0x80] sm:$0xff]
        %v2140 = vld [vmem:[#allocation7 + $0x88] sm:$0xff]
        %v2141 = vld [vmem:[#allocation7 + $0x90] sm:$0xff]
        %v2142 = vld [vmem:[#allocation7 + $0x98] sm:$0xff]
        %v2143 = vld [vmem:[#allocation7 + $0xa0] sm:$0xff]
        %v2144 = vld [vmem:[#allocation7 + $0xa8] sm:$0xff]
        %v2145 = vld [vmem:[#allocation7 + $0xb0] sm:$0xff]
        %v2146 = vld [vmem:[#allocation7 + $0xb8] sm:$0xff]
        %v2147 = vld [vmem:[#allocation7 + $0xc0] sm:$0xff]
        %v2148 = vld [vmem:[#allocation7 + $0xc8] sm:$0xff]
        %v2149 = vld [vmem:[#allocation7 + $0xd0] sm:$0xff]
        %v2150 = vld [vmem:[#allocation7 + $0xd8] sm:$0xff]
        %v2151 = vld [vmem:[#allocation7 + $0xe0] sm:$0xff]
        %v2152 = vld [vmem:[#allocation7 + $0xe8] sm:$0xff]
        %v2153 = vld [vmem:[#allocation7 + $0xf0] sm:$0xff]
        %v2154 = vld [vmem:[#allocation7 + $0xf8] sm:$0xff]
        %v2164 = vunpack.c.l.b16 %v2114
        %v2165 = vunpack.c.h.b16 %v2114
        %v2166 = vunpack.c.l.b16 %v2115
        %v2167 = vunpack.c.h.b16 %v2115
        %v2168 = vunpack.c.l.b16 %v2116
        %v2169 = vunpack.c.h.b16 %v2116
        %v2170 = vunpack.c.l.b16 %v2117
        %v2171 = vunpack.c.h.b16 %v2117
        %v2172 = vunpack.c.l.b16 %v2118
        %v2173 = vunpack.c.h.b16 %v2118
        %v2174 = vunpack.c.l.b16 %v2119
        %v2175 = vunpack.c.h.b16 %v2119
        %v2176 = vunpack.c.l.b16 %v2120
        %v2177 = vunpack.c.h.b16 %v2120
        %v2178 = vunpack.c.l.b16 %v2121
        %v2179 = vunpack.c.h.b16 %v2121
        %v2180 = vunpack.c.l.b16 %v2122
        %v2181 = vunpack.c.h.b16 %v2122
        %v2182 = vpack.c.b16 %v2166, %v2164
        %v2183 = vpack.c.b16 %v2167, %v2165
        %v2184 = vpack.c.b16 %v2170, %v2168
        %v2185 = vpack.c.b16 %v2171, %v2169
        %v2186 = vpack.c.b16 %v2174, %v2172
        %v2187 = vpack.c.b16 %v2175, %v2173
        %v2188 = vpack.c.b16 %v2178, %v2176
        %v2189 = vpack.c.b16 %v2179, %v2177
        %v2190 = vpack.c.b16 %v2180, %v2180
        %v2191 = vpack.c.b16 %v2181, %v2181
        %v2234 = vunpack.c.l.b16 %v2123
        %v2235 = vunpack.c.h.b16 %v2123
        %v2236 = vunpack.c.l.b16 %v2124
        %v2237 = vunpack.c.h.b16 %v2124
        %v2238 = vunpack.c.l.b16 %v2125
        %v2239 = vunpack.c.h.b16 %v2125
        %v2240 = vunpack.c.l.b16 %v2126
        %v2241 = vunpack.c.h.b16 %v2126
        %v2242 = vunpack.c.l.b16 %v2127
        %v2243 = vunpack.c.h.b16 %v2127
        %v2244 = vunpack.c.l.b16 %v2128
        %v2245 = vunpack.c.h.b16 %v2128
        %v2246 = vunpack.c.l.b16 %v2129
        %v2247 = vunpack.c.h.b16 %v2129
        %v2248 = vunpack.c.l.b16 %v2130
        %v2249 = vunpack.c.h.b16 %v2130
        %v2250 = vunpack.c.l.b16 %v2131
        %v2251 = vunpack.c.h.b16 %v2131
        %v2252 = vunpack.c.l.b16 %v2132
        %v2253 = vunpack.c.h.b16 %v2132
        %v2254 = vunpack.c.l.b16 %v2133
        %v2255 = vunpack.c.h.b16 %v2133
        %v2256 = vunpack.c.l.b16 %v2134
        %v2257 = vunpack.c.h.b16 %v2134
        %v2258 = vunpack.c.l.b16 %v2135
        %v2259 = vunpack.c.h.b16 %v2135
        %v2260 = vunpack.c.l.b16 %v2136
        %v2261 = vunpack.c.h.b16 %v2136
        %v2262 = vunpack.c.l.b16 %v2137
        %v2263 = vunpack.c.h.b16 %v2137
        %v2264 = vunpack.c.l.b16 %v2138
        %v2265 = vunpack.c.h.b16 %v2138
        %v2266 = vunpack.c.l.b16 %v2139
        %v2267 = vunpack.c.h.b16 %v2139
        %v2268 = vunpack.c.l.b16 %v2140
        %v2269 = vunpack.c.h.b16 %v2140
        %v2270 = vunpack.c.l.b16 %v2141
        %v2271 = vunpack.c.h.b16 %v2141
        %v2272 = vunpack.c.l.b16 %v2142
        %v2273 = vunpack.c.h.b16 %v2142
        %v2274 = vunpack.c.l.b16 %v2143
        %v2275 = vunpack.c.h.b16 %v2143
        %v2276 = vunpack.c.l.b16 %v2144
        %v2277 = vunpack.c.h.b16 %v2144
        %v2278 = vunpack.c.l.b16 %v2145
        %v2279 = vunpack.c.h.b16 %v2145
        %v2280 = vunpack.c.l.b16 %v2146
        %v2281 = vunpack.c.h.b16 %v2146
        %v2282 = vunpack.c.l.b16 %v2147
        %v2283 = vunpack.c.h.b16 %v2147
        %v2284 = vunpack.c.l.b16 %v2148
        %v2285 = vunpack.c.h.b16 %v2148
        %v2286 = vunpack.c.l.b16 %v2149
        %v2287 = vunpack.c.h.b16 %v2149
        %v2288 = vunpack.c.l.b16 %v2150
        %v2289 = vunpack.c.h.b16 %v2150
        %v2290 = vunpack.c.l.b16 %v2151
        %v2291 = vunpack.c.h.b16 %v2151
        %v2292 = vunpack.c.l.b16 %v2152
        %v2293 = vunpack.c.h.b16 %v2152
        %v2294 = vunpack.c.l.b16 %v2153
        %v2295 = vunpack.c.h.b16 %v2153
        %v2296 = vunpack.c.l.b16 %v2154
        %v2297 = vunpack.c.h.b16 %v2154
        %v2298 = vpack.c.b16 %v2236, %v2234
        %v2299 = vpack.c.b16 %v2237, %v2235
        %v2300 = vpack.c.b16 %v2240, %v2238
        %v2301 = vpack.c.b16 %v2241, %v2239
        %v2302 = vpack.c.b16 %v2244, %v2242
        %v2303 = vpack.c.b16 %v2245, %v2243
        %v2304 = vpack.c.b16 %v2248, %v2246
        %v2305 = vpack.c.b16 %v2249, %v2247
        %v2306 = vpack.c.b16 %v2252, %v2250
        %v2307 = vpack.c.b16 %v2253, %v2251
        %v2308 = vpack.c.b16 %v2256, %v2254
        %v2309 = vpack.c.b16 %v2257, %v2255
        %v2310 = vpack.c.b16 %v2260, %v2258
        %v2311 = vpack.c.b16 %v2261, %v2259
        %v2312 = vpack.c.b16 %v2264, %v2262
        %v2313 = vpack.c.b16 %v2265, %v2263
        %v2314 = vpack.c.b16 %v2268, %v2266
        %v2315 = vpack.c.b16 %v2269, %v2267
        %v2316 = vpack.c.b16 %v2272, %v2270
        %v2317 = vpack.c.b16 %v2273, %v2271
        %v2318 = vpack.c.b16 %v2276, %v2274
        %v2319 = vpack.c.b16 %v2277, %v2275
        %v2320 = vpack.c.b16 %v2280, %v2278
        %v2321 = vpack.c.b16 %v2281, %v2279
        %v2322 = vpack.c.b16 %v2284, %v2282
        %v2323 = vpack.c.b16 %v2285, %v2283
        %v2324 = vpack.c.b16 %v2288, %v2286
        %v2325 = vpack.c.b16 %v2289, %v2287
        %v2326 = vpack.c.b16 %v2292, %v2290
        %v2327 = vpack.c.b16 %v2293, %v2291
        %v2328 = vpack.c.b16 %v2296, %v2294
        %v2329 = vpack.c.b16 %v2297, %v2295
        %2362 = vmatpush.bf16.msra.mxu0 %v2312
        %2363 = vmatpush.bf16.msra.mxu0 %v2310
        %2364 = vmatpush.bf16.msra.mxu0 %v2308
        %2365 = vmatpush.bf16.msra.mxu0 %v2306
        %2366 = vmatpush.bf16.msra.mxu0 %v2304
        %2367 = vmatpush.bf16.msra.mxu0 %v2302
        %2368 = vmatpush.bf16.msra.mxu0 %v2300
        %2369 = vmatpush.bf16.msra.mxu0 %v2298
        %2370 = vmatmul.bf16.gmra.mxu0 %v2182
        %v2371 = vpop.f32.mrf.mxu0
        %v2372 = vadd.f32 0.0, %v2371
        %v2373 = vpop.f32.mrf.mxu0
        %v2374 = vadd.f32 0.0, %v2373
        %2375 = vmatmul.bf16.gmra.mxu0 %v2184
        %v2376 = vpop.f32.mrf.mxu0
        %v2377 = vadd.f32 0.0, %v2376
        %v2378 = vpop.f32.mrf.mxu0
        %v2379 = vadd.f32 0.0, %v2378
        %2380 = vmatmul.bf16.gmra.mxu0 %v2186
        %v2381 = vpop.f32.mrf.mxu0
        %v2382 = vadd.f32 0.0, %v2381
        %v2383 = vpop.f32.mrf.mxu0
        %v2384 = vadd.f32 0.0, %v2383
        %2385 = vmatmul.bf16.gmra.mxu0 %v2188
        %v2386 = vpop.f32.mrf.mxu0
        %v2387 = vadd.f32 0.0, %v2386
        %v2388 = vpop.f32.mrf.mxu0
        %v2389 = vadd.f32 0.0, %v2388
        %2390 = vmatmul.bf16.gmra.mxu0 %v2190
        %v2391 = vpop.f32.mrf.mxu0
        %v2392 = vadd.f32 0.0, %v2391
        %v2393 = vpop.f32.mrf.mxu0
        %2394 = vdwg.mxu0
        %2395 = vmatpush.bf16.msra.mxu0 %v2328
        %2396 = vmatpush.bf16.msra.mxu0 %v2326
        %2397 = vmatpush.bf16.msra.mxu0 %v2324
        %2398 = vmatpush.bf16.msra.mxu0 %v2322
        %2399 = vmatpush.bf16.msra.mxu0 %v2320
        %2400 = vmatpush.bf16.msra.mxu0 %v2318
        %2401 = vmatpush.bf16.msra.mxu0 %v2316
        %2402 = vmatpush.bf16.msra.mxu0 %v2314
        %2403 = vmatmul.bf16.gmra.mxu0 %v2183
        %v2404 = vpop.f32.mrf.mxu0
        %v2405 = vadd.f32 %v2372, %v2404
        %v2406 = vpop.f32.mrf.mxu0
        %v2407 = vadd.f32 %v2374, %v2406
        %2408 = vmatmul.bf16.gmra.mxu0 %v2185
        %v2409 = vpop.f32.mrf.mxu0
        %v2410 = vadd.f32 %v2377, %v2409
        %v2411 = vpop.f32.mrf.mxu0
        %v2412 = vadd.f32 %v2379, %v2411
        %2413 = vmatmul.bf16.gmra.mxu0 %v2187
        %v2414 = vpop.f32.mrf.mxu0
        %v2415 = vadd.f32 %v2382, %v2414
        %v2416 = vpop.f32.mrf.mxu0
        %v2417 = vadd.f32 %v2384, %v2416
        %2418 = vmatmul.bf16.gmra.mxu0 %v2189
        %v2419 = vpop.f32.mrf.mxu0
        %v2420 = vadd.f32 %v2387, %v2419
        %v2421 = vpop.f32.mrf.mxu0
        %v2422 = vadd.f32 %v2389, %v2421
        %2423 = vmatmul.bf16.gmra.mxu0 %v2191
        %v2424 = vpop.f32.mrf.mxu0
        %v2425 = vadd.f32 %v2392, %v2424
        %v2426 = vpop.f32.mrf.mxu0
        %2427 = vdwg.mxu0
        %2428 = vmatpush.bf16.msra.mxu0 %v2313
        %2429 = vmatpush.bf16.msra.mxu0 %v2311
        %2430 = vmatpush.bf16.msra.mxu0 %v2309
        %2431 = vmatpush.bf16.msra.mxu0 %v2307
        %2432 = vmatpush.bf16.msra.mxu0 %v2305
        %2433 = vmatpush.bf16.msra.mxu0 %v2303
        %2434 = vmatpush.bf16.msra.mxu0 %v2301
        %2435 = vmatpush.bf16.msra.mxu0 %v2299
        %2436 = vmatmul.bf16.gmra.mxu0 %v2182
        %v2437 = vpop.f32.mrf.mxu0
        %v2438 = vadd.f32 0.0, %v2437
        %v2439 = vpop.f32.mrf.mxu0
        %v2440 = vadd.f32 0.0, %v2439
        %2441 = vmatmul.bf16.gmra.mxu0 %v2184
        %v2442 = vpop.f32.mrf.mxu0
        %v2443 = vadd.f32 0.0, %v2442
        %v2444 = vpop.f32.mrf.mxu0
        %v2445 = vadd.f32 0.0, %v2444
        %2446 = vmatmul.bf16.gmra.mxu0 %v2186
        %v2447 = vpop.f32.mrf.mxu0
        %v2448 = vadd.f32 0.0, %v2447
        %v2449 = vpop.f32.mrf.mxu0
        %v2450 = vadd.f32 0.0, %v2449
        %2451 = vmatmul.bf16.gmra.mxu0 %v2188
        %v2452 = vpop.f32.mrf.mxu0
        %v2453 = vadd.f32 0.0, %v2452
        %v2454 = vpop.f32.mrf.mxu0
        %v2455 = vadd.f32 0.0, %v2454
        %2456 = vmatmul.bf16.gmra.mxu0 %v2190
        %v2457 = vpop.f32.mrf.mxu0
        %v2458 = vadd.f32 0.0, %v2457
        %v2459 = vpop.f32.mrf.mxu0
        %2460 = vdwg.mxu0
        %2461 = vmatpush.bf16.msra.mxu0 %v2329
        %2462 = vmatpush.bf16.msra.mxu0 %v2327
        %2463 = vmatpush.bf16.msra.mxu0 %v2325
        %2464 = vmatpush.bf16.msra.mxu0 %v2323
        %2465 = vmatpush.bf16.msra.mxu0 %v2321
        %2466 = vmatpush.bf16.msra.mxu0 %v2319
        %2467 = vmatpush.bf16.msra.mxu0 %v2317
        %2468 = vmatpush.bf16.msra.mxu0 %v2315
        %2469 = vmatmul.bf16.gmra.mxu0 %v2183
        %v2470 = vpop.f32.mrf.mxu0
        %v2471 = vadd.f32 %v2438, %v2470
        %v2472 = vpop.f32.mrf.mxu0
        %v2473 = vadd.f32 %v2440, %v2472
        %2474 = vmatmul.bf16.gmra.mxu0 %v2185
        %v2475 = vpop.f32.mrf.mxu0
        %v2476 = vadd.f32 %v2443, %v2475
        %v2477 = vpop.f32.mrf.mxu0
        %v2478 = vadd.f32 %v2445, %v2477
        %2479 = vmatmul.bf16.gmra.mxu0 %v2187
        %v2480 = vpop.f32.mrf.mxu0
        %v2481 = vadd.f32 %v2448, %v2480
        %v2482 = vpop.f32.mrf.mxu0
        %v2483 = vadd.f32 %v2450, %v2482
        %2484 = vmatmul.bf16.gmra.mxu0 %v2189
        %v2485 = vpop.f32.mrf.mxu0
        %v2486 = vadd.f32 %v2453, %v2485
        %v2487 = vpop.f32.mrf.mxu0
        %v2488 = vadd.f32 %v2455, %v2487
        %2489 = vmatmul.bf16.gmra.mxu0 %v2191
        %v2490 = vpop.f32.mrf.mxu0
        %v2491 = vadd.f32 %v2458, %v2490
        %v2492 = vpop.f32.mrf.mxu0
        %2493 = vdwg.mxu0
        %v2512 = vrot.slane %v2405, 7
        %v2513 = vrot.slane %v2471, 7
        %v2514 = vrot.slane %v2407, 7
        %v2515 = vsel %vm815, %v2512, %v2514
        %v2516 = vrot.slane %v2473, 7
        %v2517 = vsel %vm815, %v2513, %v2516
        %v2518 = vrot.slane %v2410, 7
        %v2519 = vsel %vm815, %v2514, %v2518
        %v2520 = vrot.slane %v2476, 7
        %v2521 = vsel %vm815, %v2516, %v2520
        %v2522 = vrot.slane %v2412, 7
        %v2523 = vsel %vm815, %v2518, %v2522
        %v2524 = vrot.slane %v2478, 7
        %v2525 = vsel %vm815, %v2520, %v2524
        %v2526 = vrot.slane %v2415, 7
        %v2527 = vsel %vm815, %v2522, %v2526
        %v2528 = vrot.slane %v2481, 7
        %v2529 = vsel %vm815, %v2524, %v2528
        %v2530 = vrot.slane %v2417, 7
        %v2531 = vsel %vm815, %v2526, %v2530
        %v2532 = vrot.slane %v2483, 7
        %v2533 = vsel %vm815, %v2528, %v2532
        %v2534 = vrot.slane %v2420, 7
        %v2535 = vsel %vm815, %v2530, %v2534
        %v2536 = vrot.slane %v2486, 7
        %v2537 = vsel %vm815, %v2532, %v2536
        %v2538 = vrot.slane %v2422, 7
        %v2539 = vsel %vm815, %v2534, %v2538
        %v2540 = vrot.slane %v2488, 7
        %v2541 = vsel %vm815, %v2536, %v2540
        %v2542 = vrot.slane %v2425, 7
        %v2543 = vsel %vm815, %v2538, %v2542
        %v2544 = vrot.slane %v2491, 7
        %v2545 = vsel %vm815, %v2540, %v2544
        %2566 = vst [vmem:[#allocation3] sm:$0xfe] %v2512
        %2567 = vst [vmem:[#allocation3 + $0x8] sm:$0xfe] %v2513
        %2568 = vst [vmem:[#allocation3 + $0x10] sm:$0xff] %v2515
        %2569 = vst [vmem:[#allocation3 + $0x18] sm:$0xff] %v2517
        %2570 = vst [vmem:[#allocation3 + $0x20] sm:$0xff] %v2519
        %2571 = vst [vmem:[#allocation3 + $0x28] sm:$0xff] %v2521
        %2572 = vst [vmem:[#allocation3 + $0x30] sm:$0xff] %v2523
        %2573 = vst [vmem:[#allocation3 + $0x38] sm:$0xff] %v2525
        %2574 = vst [vmem:[#allocation3 + $0x40] sm:$0xff] %v2527
        %2575 = vst [vmem:[#allocation3 + $0x48] sm:$0xff] %v2529
        %2576 = vst [vmem:[#allocation3 + $0x50] sm:$0xff] %v2531
        %2577 = vst [vmem:[#allocation3 + $0x58] sm:$0xff] %v2533
        %2578 = vst [vmem:[#allocation3 + $0x60] sm:$0xff] %v2535
        %2579 = vst [vmem:[#allocation3 + $0x68] sm:$0xff] %v2537
        %2580 = vst [vmem:[#allocation3 + $0x70] sm:$0xff] %v2539
        %2581 = vst [vmem:[#allocation3 + $0x78] sm:$0xff] %v2541
        %2582 = vst [vmem:[#allocation3 + $0x80] sm:$0xff] %v2543
        %2583 = vst [vmem:[#allocation3 + $0x88] sm:$0xff] %v2545
        %2584 = vst [vmem:[#allocation3 + $0x90] sm:$0x1] %v2542
        %2585 = vst [vmem:[#allocation3 + $0x98] sm:$0x1] %v2544
        %v2586 = vld [vmem:[#allocation3] sm:$0xfe]
        %v2587 = vld [vmem:[#allocation3 + $0x8] sm:$0xfe]
        %v2588 = vld [vmem:[#allocation3 + $0x10] sm:$0xff]
        %v2589 = vld [vmem:[#allocation3 + $0x18] sm:$0xff]
        %v2590 = vld [vmem:[#allocation3 + $0x20] sm:$0xff]
        %v2591 = vld [vmem:[#allocation3 + $0x28] sm:$0xff]
        %v2592 = vld [vmem:[#allocation3 + $0x30] sm:$0xff]
        %v2593 = vld [vmem:[#allocation3 + $0x38] sm:$0xff]
        %v2594 = vld [vmem:[#allocation3 + $0x40] sm:$0xff]
        %v2595 = vld [vmem:[#allocation3 + $0x48] sm:$0xff]
        %v2596 = vld [vmem:[#allocation3 + $0x50] sm:$0xff]
        %v2597 = vld [vmem:[#allocation3 + $0x58] sm:$0xff]
        %v2598 = vld [vmem:[#allocation3 + $0x60] sm:$0xff]
        %v2599 = vld [vmem:[#allocation3 + $0x68] sm:$0xff]
        %v2600 = vld [vmem:[#allocation3 + $0x70] sm:$0xff]
        %v2601 = vld [vmem:[#allocation3 + $0x78] sm:$0xff]
        %v2602 = vld [vmem:[#allocation3 + $0x80] sm:$0xff]
        %v2603 = vld [vmem:[#allocation3 + $0x88] sm:$0xff]
        %v2604 = vld [vmem:[#allocation3 + $0x90] sm:$0x1]
        %v2605 = vld [vmem:[#allocation3 + $0x98] sm:$0x1]
        %v2606 = vld [vmem:[#allocation2] sm:$0xff]
        %v2607 = vld [vmem:[#allocation2 + $0x8] sm:$0xff]
        %v2608 = vld [vmem:[#allocation2 + $0x10] sm:$0xff]
        %v2609 = vld [vmem:[#allocation2 + $0x18] sm:$0xff]
        %v2610 = vld [vmem:[#allocation2 + $0x20] sm:$0xff]
        %v2611 = vld [vmem:[#allocation2 + $0x28] sm:$0xff]
        %v2612 = vld [vmem:[#allocation2 + $0x30] sm:$0xff]
        %v2613 = vld [vmem:[#allocation2 + $0x38] sm:$0xff]
        %v2614 = vld [vmem:[#allocation2 + $0x40] sm:$0xff]
        %v2615 = vld [vmem:[#allocation2 + $0x48] sm:$0x11]
        %s2616 = scalar_lea.vmem [#allocation7], 256
        %v2617 = vld [vmem:[%s2616] sm:$0xff]
        %v2618 = vld [vmem:[%s2616 + $0x8] sm:$0xff]
        %v2619 = vld [vmem:[%s2616 + $0x10] sm:$0xff]
        %v2620 = vld [vmem:[%s2616 + $0x18] sm:$0xff]
        %v2621 = vld [vmem:[%s2616 + $0x20] sm:$0xff]
        %v2622 = vld [vmem:[%s2616 + $0x28] sm:$0xff]
        %v2623 = vld [vmem:[%s2616 + $0x30] sm:$0xff]
        %v2624 = vld [vmem:[%s2616 + $0x38] sm:$0xff]
        %v2625 = vld [vmem:[%s2616 + $0x40] sm:$0xff]
        %v2626 = vld [vmem:[%s2616 + $0x48] sm:$0xff]
        %v2627 = vld [vmem:[%s2616 + $0x50] sm:$0xff]
        %v2628 = vld [vmem:[%s2616 + $0x58] sm:$0xff]
        %v2629 = vld [vmem:[%s2616 + $0x60] sm:$0xff]
        %v2630 = vld [vmem:[%s2616 + $0x68] sm:$0xff]
        %v2631 = vld [vmem:[%s2616 + $0x70] sm:$0xff]
        %v2632 = vld [vmem:[%s2616 + $0x78] sm:$0xff]
        %v2633 = vld [vmem:[%s2616 + $0x80] sm:$0xff]
        %v2634 = vld [vmem:[%s2616 + $0x88] sm:$0xff]
        %v2635 = vld [vmem:[%s2616 + $0x90] sm:$0xff]
        %v2636 = vld [vmem:[%s2616 + $0x98] sm:$0xff]
        %v2637 = vld [vmem:[%s2616 + $0xa0] sm:$0xff]
        %v2638 = vld [vmem:[%s2616 + $0xa8] sm:$0xff]
        %v2639 = vld [vmem:[%s2616 + $0xb0] sm:$0xff]
        %v2640 = vld [vmem:[%s2616 + $0xb8] sm:$0xff]
        %v2641 = vld [vmem:[%s2616 + $0xc0] sm:$0xff]
        %v2642 = vld [vmem:[%s2616 + $0xc8] sm:$0xff]
        %v2643 = vld [vmem:[%s2616 + $0xd0] sm:$0xff]
        %v2644 = vld [vmem:[%s2616 + $0xd8] sm:$0xff]
        %v2645 = vld [vmem:[%s2616 + $0xe0] sm:$0xff]
        %v2646 = vld [vmem:[%s2616 + $0xe8] sm:$0xff]
        %v2647 = vld [vmem:[%s2616 + $0xf0] sm:$0xff]
        %v2648 = vld [vmem:[%s2616 + $0xf8] sm:$0xff]
        %v2659 = vunpack.c.l.b16 %v2606
        %v2660 = vunpack.c.h.b16 %v2606
        %v2661 = vunpack.c.l.b16 %v2607
        %v2662 = vunpack.c.h.b16 %v2607
        %v2663 = vunpack.c.l.b16 %v2608
        %v2664 = vunpack.c.h.b16 %v2608
        %v2665 = vunpack.c.l.b16 %v2609
        %v2666 = vunpack.c.h.b16 %v2609
        %v2667 = vunpack.c.l.b16 %v2610
        %v2668 = vunpack.c.h.b16 %v2610
        %v2669 = vunpack.c.l.b16 %v2611
        %v2670 = vunpack.c.h.b16 %v2611
        %v2671 = vunpack.c.l.b16 %v2612
        %v2672 = vunpack.c.h.b16 %v2612
        %v2673 = vunpack.c.l.b16 %v2613
        %v2674 = vunpack.c.h.b16 %v2613
        %v2675 = vunpack.c.l.b16 %v2614
        %v2676 = vunpack.c.h.b16 %v2614
        %v2677 = vunpack.c.l.b16 %v2615
        %v2678 = vunpack.c.h.b16 %v2615
        %v2679 = vpack.c.b16 %v2661, %v2659
        %v2680 = vpack.c.b16 %v2662, %v2660
        %v2681 = vpack.c.b16 %v2665, %v2663
        %v2682 = vpack.c.b16 %v2666, %v2664
        %v2683 = vpack.c.b16 %v2669, %v2667
        %v2684 = vpack.c.b16 %v2670, %v2668
        %v2685 = vpack.c.b16 %v2673, %v2671
        %v2686 = vpack.c.b16 %v2674, %v2672
        %v2687 = vpack.c.b16 %v2677, %v2675
        %v2688 = vpack.c.b16 %v2678, %v2676
        %v2690 = vshrl.u32 %v2679, 16
        %v2692 = vshll.u32 %v2679, 16
        %v2694 = vrot.slane %v2692, 1
        %v2695 = vor.u32 %v2690, %v2694
        %v2697 = vshll.u32 %v2681, 16
        %v2699 = vrot.slane %v2697, 1
        %v2700 = vsel %vm400, %v2695, %v2699
        %v2702 = vshrl.u32 %v2680, 16
        %v2704 = vshll.u32 %v2680, 16
        %v2706 = vrot.slane %v2704, 1
        %v2707 = vor.u32 %v2702, %v2706
        %v2709 = vshll.u32 %v2682, 16
        %v2711 = vrot.slane %v2709, 1
        %v2712 = vsel %vm400, %v2707, %v2711
        %v2713 = vshrl.u32 %v2681, 16
        %v2715 = vor.u32 %v2713, %v2699
        %v2717 = vshll.u32 %v2683, 16
        %v2719 = vrot.slane %v2717, 1
        %v2720 = vsel %vm400, %v2715, %v2719
        %v2721 = vshrl.u32 %v2682, 16
        %v2723 = vor.u32 %v2721, %v2711
        %v2725 = vshll.u32 %v2684, 16
        %v2727 = vrot.slane %v2725, 1
        %v2728 = vsel %vm400, %v2723, %v2727
        %v2729 = vshrl.u32 %v2683, 16
        %v2731 = vor.u32 %v2729, %v2719
        %v2733 = vshll.u32 %v2685, 16
        %v2735 = vrot.slane %v2733, 1
        %v2736 = vsel %vm400, %v2731, %v2735
        %v2737 = vshrl.u32 %v2684, 16
        %v2739 = vor.u32 %v2737, %v2727
        %v2741 = vshll.u32 %v2686, 16
        %v2743 = vrot.slane %v2741, 1
        %v2744 = vsel %vm400, %v2739, %v2743
        %v2745 = vshrl.u32 %v2685, 16
        %v2747 = vor.u32 %v2745, %v2735
        %v2749 = vshll.u32 %v2687, 16
        %v2751 = vrot.slane %v2749, 1
        %v2752 = vsel %vm400, %v2747, %v2751
        %v2753 = vshrl.u32 %v2686, 16
        %v2755 = vor.u32 %v2753, %v2743
        %v2757 = vshll.u32 %v2688, 16
        %v2759 = vrot.slane %v2757, 1
        %v2760 = vsel %vm400, %v2755, %v2759
        %v2761 = vshrl.u32 %v2687, 16
        %v2763 = vor.u32 %v2761, %v2751
        %v2764 = vshrl.u32 %v2688, 16
        %v2766 = vor.u32 %v2764, %v2759
        %v2809 = vunpack.c.l.b16 %v2617
        %v2810 = vunpack.c.h.b16 %v2617
        %v2811 = vunpack.c.l.b16 %v2618
        %v2812 = vunpack.c.h.b16 %v2618
        %v2813 = vunpack.c.l.b16 %v2619
        %v2814 = vunpack.c.h.b16 %v2619
        %v2815 = vunpack.c.l.b16 %v2620
        %v2816 = vunpack.c.h.b16 %v2620
        %v2817 = vunpack.c.l.b16 %v2621
        %v2818 = vunpack.c.h.b16 %v2621
        %v2819 = vunpack.c.l.b16 %v2622
        %v2820 = vunpack.c.h.b16 %v2622
        %v2821 = vunpack.c.l.b16 %v2623
        %v2822 = vunpack.c.h.b16 %v2623
        %v2823 = vunpack.c.l.b16 %v2624
        %v2824 = vunpack.c.h.b16 %v2624
        %v2825 = vunpack.c.l.b16 %v2625
        %v2826 = vunpack.c.h.b16 %v2625
        %v2827 = vunpack.c.l.b16 %v2626
        %v2828 = vunpack.c.h.b16 %v2626
        %v2829 = vunpack.c.l.b16 %v2627
        %v2830 = vunpack.c.h.b16 %v2627
        %v2831 = vunpack.c.l.b16 %v2628
        %v2832 = vunpack.c.h.b16 %v2628
        %v2833 = vunpack.c.l.b16 %v2629
        %v2834 = vunpack.c.h.b16 %v2629
        %v2835 = vunpack.c.l.b16 %v2630
        %v2836 = vunpack.c.h.b16 %v2630
        %v2837 = vunpack.c.l.b16 %v2631
        %v2838 = vunpack.c.h.b16 %v2631
        %v2839 = vunpack.c.l.b16 %v2632
        %v2840 = vunpack.c.h.b16 %v2632
        %v2841 = vunpack.c.l.b16 %v2633
        %v2842 = vunpack.c.h.b16 %v2633
        %v2843 = vunpack.c.l.b16 %v2634
        %v2844 = vunpack.c.h.b16 %v2634
        %v2845 = vunpack.c.l.b16 %v2635
        %v2846 = vunpack.c.h.b16 %v2635
        %v2847 = vunpack.c.l.b16 %v2636
        %v2848 = vunpack.c.h.b16 %v2636
        %v2849 = vunpack.c.l.b16 %v2637
        %v2850 = vunpack.c.h.b16 %v2637
        %v2851 = vunpack.c.l.b16 %v2638
        %v2852 = vunpack.c.h.b16 %v2638
        %v2853 = vunpack.c.l.b16 %v2639
        %v2854 = vunpack.c.h.b16 %v2639
        %v2855 = vunpack.c.l.b16 %v2640
        %v2856 = vunpack.c.h.b16 %v2640
        %v2857 = vunpack.c.l.b16 %v2641
        %v2858 = vunpack.c.h.b16 %v2641
        %v2859 = vunpack.c.l.b16 %v2642
        %v2860 = vunpack.c.h.b16 %v2642
        %v2861 = vunpack.c.l.b16 %v2643
        %v2862 = vunpack.c.h.b16 %v2643
        %v2863 = vunpack.c.l.b16 %v2644
        %v2864 = vunpack.c.h.b16 %v2644
        %v2865 = vunpack.c.l.b16 %v2645
        %v2866 = vunpack.c.h.b16 %v2645
        %v2867 = vunpack.c.l.b16 %v2646
        %v2868 = vunpack.c.h.b16 %v2646
        %v2869 = vunpack.c.l.b16 %v2647
        %v2870 = vunpack.c.h.b16 %v2647
        %v2871 = vunpack.c.l.b16 %v2648
        %v2872 = vunpack.c.h.b16 %v2648
        %v2873 = vpack.c.b16 %v2811, %v2809
        %v2874 = vpack.c.b16 %v2812, %v2810
        %v2875 = vpack.c.b16 %v2815, %v2813
        %v2876 = vpack.c.b16 %v2816, %v2814
        %v2877 = vpack.c.b16 %v2819, %v2817
        %v2878 = vpack.c.b16 %v2820, %v2818
        %v2879 = vpack.c.b16 %v2823, %v2821
        %v2880 = vpack.c.b16 %v2824, %v2822
        %v2881 = vpack.c.b16 %v2827, %v2825
        %v2882 = vpack.c.b16 %v2828, %v2826
        %v2883 = vpack.c.b16 %v2831, %v2829
        %v2884 = vpack.c.b16 %v2832, %v2830
        %v2885 = vpack.c.b16 %v2835, %v2833
        %v2886 = vpack.c.b16 %v2836, %v2834
        %v2887 = vpack.c.b16 %v2839, %v2837
        %v2888 = vpack.c.b16 %v2840, %v2838
        %v2889 = vpack.c.b16 %v2843, %v2841
        %v2890 = vpack.c.b16 %v2844, %v2842
        %v2891 = vpack.c.b16 %v2847, %v2845
        %v2892 = vpack.c.b16 %v2848, %v2846
        %v2893 = vpack.c.b16 %v2851, %v2849
        %v2894 = vpack.c.b16 %v2852, %v2850
        %v2895 = vpack.c.b16 %v2855, %v2853
        %v2896 = vpack.c.b16 %v2856, %v2854
        %v2897 = vpack.c.b16 %v2859, %v2857
        %v2898 = vpack.c.b16 %v2860, %v2858
        %v2899 = vpack.c.b16 %v2863, %v2861
        %v2900 = vpack.c.b16 %v2864, %v2862
        %v2901 = vpack.c.b16 %v2867, %v2865
        %v2902 = vpack.c.b16 %v2868, %v2866
        %v2903 = vpack.c.b16 %v2871, %v2869
        %v2904 = vpack.c.b16 %v2872, %v2870
        %2937 = vmatpush.bf16.msra.mxu0 %v2887
        %2938 = vmatpush.bf16.msra.mxu0 %v2885
        %2939 = vmatpush.bf16.msra.mxu0 %v2883
        %2940 = vmatpush.bf16.msra.mxu0 %v2881
        %2941 = vmatpush.bf16.msra.mxu0 %v2879
        %2942 = vmatpush.bf16.msra.mxu0 %v2877
        %2943 = vmatpush.bf16.msra.mxu0 %v2875
        %2944 = vmatpush.bf16.msra.mxu0 %v2873
        %2945 = vmatmul.bf16.gmra.mxu0 %v2700
        %v2946 = vpop.f32.mrf.mxu0
        %v2947 = vadd.f32 0.0, %v2946
        %v2948 = vpop.f32.mrf.mxu0
        %v2949 = vadd.f32 0.0, %v2948
        %2950 = vmatmul.bf16.gmra.mxu0 %v2720
        %v2951 = vpop.f32.mrf.mxu0
        %v2952 = vadd.f32 0.0, %v2951
        %v2953 = vpop.f32.mrf.mxu0
        %v2954 = vadd.f32 0.0, %v2953
        %2955 = vmatmul.bf16.gmra.mxu0 %v2736
        %v2956 = vpop.f32.mrf.mxu0
        %v2957 = vadd.f32 0.0, %v2956
        %v2958 = vpop.f32.mrf.mxu0
        %v2959 = vadd.f32 0.0, %v2958
        %2960 = vmatmul.bf16.gmra.mxu0 %v2752
        %v2961 = vpop.f32.mrf.mxu0
        %v2962 = vadd.f32 0.0, %v2961
        %v2963 = vpop.f32.mrf.mxu0
        %v2964 = vadd.f32 0.0, %v2963
        %2965 = vmatmul.bf16.gmra.mxu0 %v2763
        %v2966 = vpop.f32.mrf.mxu0
        %v2967 = vadd.f32 0.0, %v2966
        %v2968 = vpop.f32.mrf.mxu0
        %2969 = vdwg.mxu0
        %2970 = vmatpush.bf16.msra.mxu0 %v2903
        %2971 = vmatpush.bf16.msra.mxu0 %v2901
        %2972 = vmatpush.bf16.msra.mxu0 %v2899
        %2973 = vmatpush.bf16.msra.mxu0 %v2897
        %2974 = vmatpush.bf16.msra.mxu0 %v2895
        %2975 = vmatpush.bf16.msra.mxu0 %v2893
        %2976 = vmatpush.bf16.msra.mxu0 %v2891
        %2977 = vmatpush.bf16.msra.mxu0 %v2889
        %2978 = vmatmul.bf16.gmra.mxu0 %v2712
        %v2979 = vpop.f32.mrf.mxu0
        %v2980 = vadd.f32 %v2947, %v2979
        %v2981 = vpop.f32.mrf.mxu0
        %v2982 = vadd.f32 %v2949, %v2981
        %2983 = vmatmul.bf16.gmra.mxu0 %v2728
        %v2984 = vpop.f32.mrf.mxu0
        %v2985 = vadd.f32 %v2952, %v2984
        %v2986 = vpop.f32.mrf.mxu0
        %v2987 = vadd.f32 %v2954, %v2986
        %2988 = vmatmul.bf16.gmra.mxu0 %v2744
        %v2989 = vpop.f32.mrf.mxu0
        %v2990 = vadd.f32 %v2957, %v2989
        %v2991 = vpop.f32.mrf.mxu0
        %v2992 = vadd.f32 %v2959, %v2991
        %2993 = vmatmul.bf16.gmra.mxu0 %v2760
        %v2994 = vpop.f32.mrf.mxu0
        %v2995 = vadd.f32 %v2962, %v2994
        %v2996 = vpop.f32.mrf.mxu0
        %v2997 = vadd.f32 %v2964, %v2996
        %2998 = vmatmul.bf16.gmra.mxu0 %v2766
        %v2999 = vpop.f32.mrf.mxu0
        %v3000 = vadd.f32 %v2967, %v2999
        %v3001 = vpop.f32.mrf.mxu0
        %3002 = vdwg.mxu0
        %3003 = vmatpush.bf16.msra.mxu0 %v2888
        %3004 = vmatpush.bf16.msra.mxu0 %v2886
        %3005 = vmatpush.bf16.msra.mxu0 %v2884
        %3006 = vmatpush.bf16.msra.mxu0 %v2882
        %3007 = vmatpush.bf16.msra.mxu0 %v2880
        %3008 = vmatpush.bf16.msra.mxu0 %v2878
        %3009 = vmatpush.bf16.msra.mxu0 %v2876
        %3010 = vmatpush.bf16.msra.mxu0 %v2874
        %3011 = vmatmul.bf16.gmra.mxu0 %v2700
        %v3012 = vpop.f32.mrf.mxu0
        %v3013 = vadd.f32 0.0, %v3012
        %v3014 = vpop.f32.mrf.mxu0
        %v3015 = vadd.f32 0.0, %v3014
        %3016 = vmatmul.bf16.gmra.mxu0 %v2720
        %v3017 = vpop.f32.mrf.mxu0
        %v3018 = vadd.f32 0.0, %v3017
        %v3019 = vpop.f32.mrf.mxu0
        %v3020 = vadd.f32 0.0, %v3019
        %3021 = vmatmul.bf16.gmra.mxu0 %v2736
        %v3022 = vpop.f32.mrf.mxu0
        %v3023 = vadd.f32 0.0, %v3022
        %v3024 = vpop.f32.mrf.mxu0
        %v3025 = vadd.f32 0.0, %v3024
        %3026 = vmatmul.bf16.gmra.mxu0 %v2752
        %v3027 = vpop.f32.mrf.mxu0
        %v3028 = vadd.f32 0.0, %v3027
        %v3029 = vpop.f32.mrf.mxu0
        %v3030 = vadd.f32 0.0, %v3029
        %3031 = vmatmul.bf16.gmra.mxu0 %v2763
        %v3032 = vpop.f32.mrf.mxu0
        %v3033 = vadd.f32 0.0, %v3032
        %v3034 = vpop.f32.mrf.mxu0
        %3035 = vdwg.mxu0
        %3036 = vmatpush.bf16.msra.mxu0 %v2904
        %3037 = vmatpush.bf16.msra.mxu0 %v2902
        %3038 = vmatpush.bf16.msra.mxu0 %v2900
        %3039 = vmatpush.bf16.msra.mxu0 %v2898
        %3040 = vmatpush.bf16.msra.mxu0 %v2896
        %3041 = vmatpush.bf16.msra.mxu0 %v2894
        %3042 = vmatpush.bf16.msra.mxu0 %v2892
        %3043 = vmatpush.bf16.msra.mxu0 %v2890
        %3044 = vmatmul.bf16.gmra.mxu0 %v2712
        %v3045 = vpop.f32.mrf.mxu0
        %v3046 = vadd.f32 %v3013, %v3045
        %v3047 = vpop.f32.mrf.mxu0
        %v3048 = vadd.f32 %v3015, %v3047
        %3049 = vmatmul.bf16.gmra.mxu0 %v2728
        %v3050 = vpop.f32.mrf.mxu0
        %v3051 = vadd.f32 %v3018, %v3050
        %v3052 = vpop.f32.mrf.mxu0
        %v3053 = vadd.f32 %v3020, %v3052
        %3054 = vmatmul.bf16.gmra.mxu0 %v2744
        %v3055 = vpop.f32.mrf.mxu0
        %v3056 = vadd.f32 %v3023, %v3055
        %v3057 = vpop.f32.mrf.mxu0
        %v3058 = vadd.f32 %v3025, %v3057
        %3059 = vmatmul.bf16.gmra.mxu0 %v2760
        %v3060 = vpop.f32.mrf.mxu0
        %v3061 = vadd.f32 %v3028, %v3060
        %v3062 = vpop.f32.mrf.mxu0
        %v3063 = vadd.f32 %v3030, %v3062
        %3064 = vmatmul.bf16.gmra.mxu0 %v2766
        %v3065 = vpop.f32.mrf.mxu0
        %v3066 = vadd.f32 %v3033, %v3065
        %v3067 = vpop.f32.mrf.mxu0
        %3068 = vdwg.mxu0
        %v3087 = vrot.slane %v2980, 7
        %v3088 = vrot.slane %v3046, 7
        %v3089 = vrot.slane %v2982, 7
        %v3090 = vsel %vm815, %v3087, %v3089
        %v3091 = vrot.slane %v3048, 7
        %v3092 = vsel %vm815, %v3088, %v3091
        %v3093 = vrot.slane %v2985, 7
        %v3094 = vsel %vm815, %v3089, %v3093
        %v3095 = vrot.slane %v3051, 7
        %v3096 = vsel %vm815, %v3091, %v3095
        %v3097 = vrot.slane %v2987, 7
        %v3098 = vsel %vm815, %v3093, %v3097
        %v3099 = vrot.slane %v3053, 7
        %v3100 = vsel %vm815, %v3095, %v3099
        %v3101 = vrot.slane %v2990, 7
        %v3102 = vsel %vm815, %v3097, %v3101
        %v3103 = vrot.slane %v3056, 7
        %v3104 = vsel %vm815, %v3099, %v3103
        %v3105 = vrot.slane %v2992, 7
        %v3106 = vsel %vm815, %v3101, %v3105
        %v3107 = vrot.slane %v3058, 7
        %v3108 = vsel %vm815, %v3103, %v3107
        %v3109 = vrot.slane %v2995, 7
        %v3110 = vsel %vm815, %v3105, %v3109
        %v3111 = vrot.slane %v3061, 7
        %v3112 = vsel %vm815, %v3107, %v3111
        %v3113 = vrot.slane %v2997, 7
        %v3114 = vsel %vm815, %v3109, %v3113
        %v3115 = vrot.slane %v3063, 7
        %v3116 = vsel %vm815, %v3111, %v3115
        %v3117 = vrot.slane %v3000, 7
        %v3118 = vsel %vm815, %v3113, %v3117
        %v3119 = vrot.slane %v3066, 7
        %v3120 = vsel %vm815, %v3115, %v3119
        %v3141 = vadd.f32 %v2586, %v3087
        %v3142 = vadd.f32 %v2587, %v3088
        %v3143 = vadd.f32 %v2588, %v3090
        %v3144 = vadd.f32 %v2589, %v3092
        %v3145 = vadd.f32 %v2590, %v3094
        %v3146 = vadd.f32 %v2591, %v3096
        %v3147 = vadd.f32 %v2592, %v3098
        %v3148 = vadd.f32 %v2593, %v3100
        %v3149 = vadd.f32 %v2594, %v3102
        %v3150 = vadd.f32 %v2595, %v3104
        %v3151 = vadd.f32 %v2596, %v3106
        %v3152 = vadd.f32 %v2597, %v3108
        %v3153 = vadd.f32 %v2598, %v3110
        %v3154 = vadd.f32 %v2599, %v3112
        %v3155 = vadd.f32 %v2600, %v3114
        %v3156 = vadd.f32 %v2601, %v3116
        %v3157 = vadd.f32 %v2602, %v3118
        %v3158 = vadd.f32 %v2603, %v3120
        %v3159 = vadd.f32 %v2604, %v3117
        %v3160 = vadd.f32 %v2605, %v3119
        %3161 = vst [vmem:[#allocation3] sm:$0xfe] %v3141
        %3162 = vst [vmem:[#allocation3 + $0x8] sm:$0xfe] %v3142
        %3163 = vst [vmem:[#allocation3 + $0x10] sm:$0xff] %v3143
        %3164 = vst [vmem:[#allocation3 + $0x18] sm:$0xff] %v3144
        %3165 = vst [vmem:[#allocation3 + $0x20] sm:$0xff] %v3145
        %3166 = vst [vmem:[#allocation3 + $0x28] sm:$0xff] %v3146
        %3167 = vst [vmem:[#allocation3 + $0x30] sm:$0xff] %v3147
        %3168 = vst [vmem:[#allocation3 + $0x38] sm:$0xff] %v3148
        %3169 = vst [vmem:[#allocation3 + $0x40] sm:$0xff] %v3149
        %3170 = vst [vmem:[#allocation3 + $0x48] sm:$0xff] %v3150
        %3171 = vst [vmem:[#allocation3 + $0x50] sm:$0xff] %v3151
        %3172 = vst [vmem:[#allocation3 + $0x58] sm:$0xff] %v3152
        %3173 = vst [vmem:[#allocation3 + $0x60] sm:$0xff] %v3153
        %3174 = vst [vmem:[#allocation3 + $0x68] sm:$0xff] %v3154
        %3175 = vst [vmem:[#allocation3 + $0x70] sm:$0xff] %v3155
        %3176 = vst [vmem:[#allocation3 + $0x78] sm:$0xff] %v3156
        %3177 = vst [vmem:[#allocation3 + $0x80] sm:$0xff] %v3157
        %3178 = vst [vmem:[#allocation3 + $0x88] sm:$0xff] %v3158
        %3179 = vst [vmem:[#allocation3 + $0x90] sm:$0x1] %v3159
        %3180 = vst [vmem:[#allocation3 + $0x98] sm:$0x1] %v3160
        %v3181 = vld [vmem:[#allocation3] sm:$0xfe]
        %v3182 = vld [vmem:[#allocation3 + $0x8] sm:$0xfe]
        %v3183 = vld [vmem:[#allocation3 + $0x10] sm:$0xff]
        %v3184 = vld [vmem:[#allocation3 + $0x18] sm:$0xff]
        %v3185 = vld [vmem:[#allocation3 + $0x20] sm:$0xff]
        %v3186 = vld [vmem:[#allocation3 + $0x28] sm:$0xff]
        %v3187 = vld [vmem:[#allocation3 + $0x30] sm:$0xff]
        %v3188 = vld [vmem:[#allocation3 + $0x38] sm:$0xff]
        %v3189 = vld [vmem:[#allocation3 + $0x40] sm:$0xff]
        %v3190 = vld [vmem:[#allocation3 + $0x48] sm:$0xff]
        %v3191 = vld [vmem:[#allocation3 + $0x50] sm:$0xff]
        %v3192 = vld [vmem:[#allocation3 + $0x58] sm:$0xff]
        %v3193 = vld [vmem:[#allocation3 + $0x60] sm:$0xff]
        %v3194 = vld [vmem:[#allocation3 + $0x68] sm:$0xff]
        %v3195 = vld [vmem:[#allocation3 + $0x70] sm:$0xff]
        %v3196 = vld [vmem:[#allocation3 + $0x78] sm:$0xff]
        %v3197 = vld [vmem:[#allocation3 + $0x80] sm:$0xff]
        %v3198 = vld [vmem:[#allocation3 + $0x88] sm:$0xff]
        %v3199 = vld [vmem:[#allocation3 + $0x90] sm:$0x1]
        %v3200 = vld [vmem:[#allocation3 + $0x98] sm:$0x1]
        %v3201 = vld [vmem:[#allocation2] sm:$0xee]
        %v3202 = vld [vmem:[#allocation2 + $0x8] sm:$0xff]
        %v3203 = vld [vmem:[#allocation2 + $0x10] sm:$0xff]
        %v3204 = vld [vmem:[#allocation2 + $0x18] sm:$0xff]
        %v3205 = vld [vmem:[#allocation2 + $0x20] sm:$0xff]
        %v3206 = vld [vmem:[#allocation2 + $0x28] sm:$0xff]
        %v3207 = vld [vmem:[#allocation2 + $0x30] sm:$0xff]
        %v3208 = vld [vmem:[#allocation2 + $0x38] sm:$0xff]
        %v3209 = vld [vmem:[#allocation2 + $0x40] sm:$0xff]
        %v3210 = vld [vmem:[#allocation2 + $0x48] sm:$0x11]
        %s3211 = scalar_lea.vmem [#allocation7], 512
        %v3212 = vld [vmem:[%s3211] sm:$0xff]
        %v3213 = vld [vmem:[%s3211 + $0x8] sm:$0xff]
        %v3214 = vld [vmem:[%s3211 + $0x10] sm:$0xff]
        %v3215 = vld [vmem:[%s3211 + $0x18] sm:$0xff]
        %v3216 = vld [vmem:[%s3211 + $0x20] sm:$0xff]
        %v3217 = vld [vmem:[%s3211 + $0x28] sm:$0xff]
        %v3218 = vld [vmem:[%s3211 + $0x30] sm:$0xff]
        %v3219 = vld [vmem:[%s3211 + $0x38] sm:$0xff]
        %v3220 = vld [vmem:[%s3211 + $0x40] sm:$0xff]
        %v3221 = vld [vmem:[%s3211 + $0x48] sm:$0xff]
        %v3222 = vld [vmem:[%s3211 + $0x50] sm:$0xff]
        %v3223 = vld [vmem:[%s3211 + $0x58] sm:$0xff]
        %v3224 = vld [vmem:[%s3211 + $0x60] sm:$0xff]
        %v3225 = vld [vmem:[%s3211 + $0x68] sm:$0xff]
        %v3226 = vld [vmem:[%s3211 + $0x70] sm:$0xff]
        %v3227 = vld [vmem:[%s3211 + $0x78] sm:$0xff]
        %v3228 = vld [vmem:[%s3211 + $0x80] sm:$0xff]
        %v3229 = vld [vmem:[%s3211 + $0x88] sm:$0xff]
        %v3230 = vld [vmem:[%s3211 + $0x90] sm:$0xff]
        %v3231 = vld [vmem:[%s3211 + $0x98] sm:$0xff]
        %v3232 = vld [vmem:[%s3211 + $0xa0] sm:$0xff]
        %v3233 = vld [vmem:[%s3211 + $0xa8] sm:$0xff]
        %v3234 = vld [vmem:[%s3211 + $0xb0] sm:$0xff]
        %v3235 = vld [vmem:[%s3211 + $0xb8] sm:$0xff]
        %v3236 = vld [vmem:[%s3211 + $0xc0] sm:$0xff]
        %v3237 = vld [vmem:[%s3211 + $0xc8] sm:$0xff]
        %v3238 = vld [vmem:[%s3211 + $0xd0] sm:$0xff]
        %v3239 = vld [vmem:[%s3211 + $0xd8] sm:$0xff]
        %v3240 = vld [vmem:[%s3211 + $0xe0] sm:$0xff]
        %v3241 = vld [vmem:[%s3211 + $0xe8] sm:$0xff]
        %v3242 = vld [vmem:[%s3211 + $0xf0] sm:$0xff]
        %v3243 = vld [vmem:[%s3211 + $0xf8] sm:$0xff]
        %v3254 = vunpack.c.l.b16 %v3201
        %v3255 = vunpack.c.h.b16 %v3201
        %v3256 = vunpack.c.l.b16 %v3202
        %v3257 = vunpack.c.h.b16 %v3202
        %v3258 = vunpack.c.l.b16 %v3203
        %v3259 = vunpack.c.h.b16 %v3203
        %v3260 = vunpack.c.l.b16 %v3204
        %v3261 = vunpack.c.h.b16 %v3204
        %v3262 = vunpack.c.l.b16 %v3205
        %v3263 = vunpack.c.h.b16 %v3205
        %v3264 = vunpack.c.l.b16 %v3206
        %v3265 = vunpack.c.h.b16 %v3206
        %v3266 = vunpack.c.l.b16 %v3207
        %v3267 = vunpack.c.h.b16 %v3207
        %v3268 = vunpack.c.l.b16 %v3208
        %v3269 = vunpack.c.h.b16 %v3208
        %v3270 = vunpack.c.l.b16 %v3209
        %v3271 = vunpack.c.h.b16 %v3209
        %v3272 = vunpack.c.l.b16 %v3210
        %v3273 = vunpack.c.h.b16 %v3210
        %v3274 = vpack.c.b16 %v3256, %v3254
        %v3275 = vpack.c.b16 %v3257, %v3255
        %v3276 = vpack.c.b16 %v3260, %v3258
        %v3277 = vpack.c.b16 %v3261, %v3259
        %v3278 = vpack.c.b16 %v3264, %v3262
        %v3279 = vpack.c.b16 %v3265, %v3263
        %v3280 = vpack.c.b16 %v3268, %v3266
        %v3281 = vpack.c.b16 %v3269, %v3267
        %v3282 = vpack.c.b16 %v3272, %v3270
        %v3283 = vpack.c.b16 %v3273, %v3271
        %v3284 = vrot.slane %v3274, 1
        %v3285 = vrot.slane %v3276, 1
        %v3286 = vsel %vm1588, %v3284, %v3285
        %v3287 = vrot.slane %v3275, 1
        %v3288 = vrot.slane %v3277, 1
        %v3289 = vsel %vm1588, %v3287, %v3288
        %v3290 = vrot.slane %v3278, 1
        %v3291 = vsel %vm1588, %v3285, %v3290
        %v3292 = vrot.slane %v3279, 1
        %v3293 = vsel %vm1588, %v3288, %v3292
        %v3294 = vrot.slane %v3280, 1
        %v3295 = vsel %vm1588, %v3290, %v3294
        %v3296 = vrot.slane %v3281, 1
        %v3297 = vsel %vm1588, %v3292, %v3296
        %v3298 = vrot.slane %v3282, 1
        %v3299 = vsel %vm1588, %v3294, %v3298
        %v3300 = vrot.slane %v3283, 1
        %v3301 = vsel %vm1588, %v3296, %v3300
        %v3344 = vunpack.c.l.b16 %v3212
        %v3345 = vunpack.c.h.b16 %v3212
        %v3346 = vunpack.c.l.b16 %v3213
        %v3347 = vunpack.c.h.b16 %v3213
        %v3348 = vunpack.c.l.b16 %v3214
        %v3349 = vunpack.c.h.b16 %v3214
        %v3350 = vunpack.c.l.b16 %v3215
        %v3351 = vunpack.c.h.b16 %v3215
        %v3352 = vunpack.c.l.b16 %v3216
        %v3353 = vunpack.c.h.b16 %v3216
        %v3354 = vunpack.c.l.b16 %v3217
        %v3355 = vunpack.c.h.b16 %v3217
        %v3356 = vunpack.c.l.b16 %v3218
        %v3357 = vunpack.c.h.b16 %v3218
        %v3358 = vunpack.c.l.b16 %v3219
        %v3359 = vunpack.c.h.b16 %v3219
        %v3360 = vunpack.c.l.b16 %v3220
        %v3361 = vunpack.c.h.b16 %v3220
        %v3362 = vunpack.c.l.b16 %v3221
        %v3363 = vunpack.c.h.b16 %v3221
        %v3364 = vunpack.c.l.b16 %v3222
        %v3365 = vunpack.c.h.b16 %v3222
        %v3366 = vunpack.c.l.b16 %v3223
        %v3367 = vunpack.c.h.b16 %v3223
        %v3368 = vunpack.c.l.b16 %v3224
        %v3369 = vunpack.c.h.b16 %v3224
        %v3370 = vunpack.c.l.b16 %v3225
        %v3371 = vunpack.c.h.b16 %v3225
        %v3372 = vunpack.c.l.b16 %v3226
        %v3373 = vunpack.c.h.b16 %v3226
        %v3374 = vunpack.c.l.b16 %v3227
        %v3375 = vunpack.c.h.b16 %v3227
        %v3376 = vunpack.c.l.b16 %v3228
        %v3377 = vunpack.c.h.b16 %v3228
        %v3378 = vunpack.c.l.b16 %v3229
        %v3379 = vunpack.c.h.b16 %v3229
        %v3380 = vunpack.c.l.b16 %v3230
        %v3381 = vunpack.c.h.b16 %v3230
        %v3382 = vunpack.c.l.b16 %v3231
        %v3383 = vunpack.c.h.b16 %v3231
        %v3384 = vunpack.c.l.b16 %v3232
        %v3385 = vunpack.c.h.b16 %v3232
        %v3386 = vunpack.c.l.b16 %v3233
        %v3387 = vunpack.c.h.b16 %v3233
        %v3388 = vunpack.c.l.b16 %v3234
        %v3389 = vunpack.c.h.b16 %v3234
        %v3390 = vunpack.c.l.b16 %v3235
        %v3391 = vunpack.c.h.b16 %v3235
        %v3392 = vunpack.c.l.b16 %v3236
        %v3393 = vunpack.c.h.b16 %v3236
        %v3394 = vunpack.c.l.b16 %v3237
        %v3395 = vunpack.c.h.b16 %v3237
        %v3396 = vunpack.c.l.b16 %v3238
        %v3397 = vunpack.c.h.b16 %v3238
        %v3398 = vunpack.c.l.b16 %v3239
        %v3399 = vunpack.c.h.b16 %v3239
        %v3400 = vunpack.c.l.b16 %v3240
        %v3401 = vunpack.c.h.b16 %v3240
        %v3402 = vunpack.c.l.b16 %v3241
        %v3403 = vunpack.c.h.b16 %v3241
        %v3404 = vunpack.c.l.b16 %v3242
        %v3405 = vunpack.c.h.b16 %v3242
        %v3406 = vunpack.c.l.b16 %v3243
        %v3407 = vunpack.c.h.b16 %v3243
        %v3408 = vpack.c.b16 %v3346, %v3344
        %v3409 = vpack.c.b16 %v3347, %v3345
        %v3410 = vpack.c.b16 %v3350, %v3348
        %v3411 = vpack.c.b16 %v3351, %v3349
        %v3412 = vpack.c.b16 %v3354, %v3352
        %v3413 = vpack.c.b16 %v3355, %v3353
        %v3414 = vpack.c.b16 %v3358, %v3356
        %v3415 = vpack.c.b16 %v3359, %v3357
        %v3416 = vpack.c.b16 %v3362, %v3360
        %v3417 = vpack.c.b16 %v3363, %v3361
        %v3418 = vpack.c.b16 %v3366, %v3364
        %v3419 = vpack.c.b16 %v3367, %v3365
        %v3420 = vpack.c.b16 %v3370, %v3368
        %v3421 = vpack.c.b16 %v3371, %v3369
        %v3422 = vpack.c.b16 %v3374, %v3372
        %v3423 = vpack.c.b16 %v3375, %v3373
        %v3424 = vpack.c.b16 %v3378, %v3376
        %v3425 = vpack.c.b16 %v3379, %v3377
        %v3426 = vpack.c.b16 %v3382, %v3380
        %v3427 = vpack.c.b16 %v3383, %v3381
        %v3428 = vpack.c.b16 %v3386, %v3384
        %v3429 = vpack.c.b16 %v3387, %v3385
        %v3430 = vpack.c.b16 %v3390, %v3388
        %v3431 = vpack.c.b16 %v3391, %v3389
        %v3432 = vpack.c.b16 %v3394, %v3392
        %v3433 = vpack.c.b16 %v3395, %v3393
        %v3434 = vpack.c.b16 %v3398, %v3396
        %v3435 = vpack.c.b16 %v3399, %v3397
        %v3436 = vpack.c.b16 %v3402, %v3400
        %v3437 = vpack.c.b16 %v3403, %v3401
        %v3438 = vpack.c.b16 %v3406, %v3404
        %v3439 = vpack.c.b16 %v3407, %v3405
        %3472 = vmatpush.bf16.msra.mxu0 %v3422
        %3473 = vmatpush.bf16.msra.mxu0 %v3420
        %3474 = vmatpush.bf16.msra.mxu0 %v3418
        %3475 = vmatpush.bf16.msra.mxu0 %v3416
        %3476 = vmatpush.bf16.msra.mxu0 %v3414
        %3477 = vmatpush.bf16.msra.mxu0 %v3412
        %3478 = vmatpush.bf16.msra.mxu0 %v3410
        %3479 = vmatpush.bf16.msra.mxu0 %v3408
        %3480 = vmatmul.bf16.gmra.mxu0 %v3286
        %v3481 = vpop.f32.mrf.mxu0
        %v3482 = vadd.f32 0.0, %v3481
        %v3483 = vpop.f32.mrf.mxu0
        %v3484 = vadd.f32 0.0, %v3483
        %3485 = vmatmul.bf16.gmra.mxu0 %v3291
        %v3486 = vpop.f32.mrf.mxu0
        %v3487 = vadd.f32 0.0, %v3486
        %v3488 = vpop.f32.mrf.mxu0
        %v3489 = vadd.f32 0.0, %v3488
        %3490 = vmatmul.bf16.gmra.mxu0 %v3295
        %v3491 = vpop.f32.mrf.mxu0
        %v3492 = vadd.f32 0.0, %v3491
        %v3493 = vpop.f32.mrf.mxu0
        %v3494 = vadd.f32 0.0, %v3493
        %3495 = vmatmul.bf16.gmra.mxu0 %v3299
        %v3496 = vpop.f32.mrf.mxu0
        %v3497 = vadd.f32 0.0, %v3496
        %v3498 = vpop.f32.mrf.mxu0
        %v3499 = vadd.f32 0.0, %v3498
        %3500 = vmatmul.bf16.gmra.mxu0 %v3298
        %v3501 = vpop.f32.mrf.mxu0
        %v3502 = vadd.f32 0.0, %v3501
        %v3503 = vpop.f32.mrf.mxu0
        %3504 = vdwg.mxu0
        %3505 = vmatpush.bf16.msra.mxu0 %v3438
        %3506 = vmatpush.bf16.msra.mxu0 %v3436
        %3507 = vmatpush.bf16.msra.mxu0 %v3434
        %3508 = vmatpush.bf16.msra.mxu0 %v3432
        %3509 = vmatpush.bf16.msra.mxu0 %v3430
        %3510 = vmatpush.bf16.msra.mxu0 %v3428
        %3511 = vmatpush.bf16.msra.mxu0 %v3426
        %3512 = vmatpush.bf16.msra.mxu0 %v3424
        %3513 = vmatmul.bf16.gmra.mxu0 %v3289
        %v3514 = vpop.f32.mrf.mxu0
        %v3515 = vadd.f32 %v3482, %v3514
        %v3516 = vpop.f32.mrf.mxu0
        %v3517 = vadd.f32 %v3484, %v3516
        %3518 = vmatmul.bf16.gmra.mxu0 %v3293
        %v3519 = vpop.f32.mrf.mxu0
        %v3520 = vadd.f32 %v3487, %v3519
        %v3521 = vpop.f32.mrf.mxu0
        %v3522 = vadd.f32 %v3489, %v3521
        %3523 = vmatmul.bf16.gmra.mxu0 %v3297
        %v3524 = vpop.f32.mrf.mxu0
        %v3525 = vadd.f32 %v3492, %v3524
        %v3526 = vpop.f32.mrf.mxu0
        %v3527 = vadd.f32 %v3494, %v3526
        %3528 = vmatmul.bf16.gmra.mxu0 %v3301
        %v3529 = vpop.f32.mrf.mxu0
        %v3530 = vadd.f32 %v3497, %v3529
        %v3531 = vpop.f32.mrf.mxu0
        %v3532 = vadd.f32 %v3499, %v3531
        %3533 = vmatmul.bf16.gmra.mxu0 %v3300
        %v3534 = vpop.f32.mrf.mxu0
        %v3535 = vadd.f32 %v3502, %v3534
        %v3536 = vpop.f32.mrf.mxu0
        %3537 = vdwg.mxu0
        %3538 = vmatpush.bf16.msra.mxu0 %v3423
        %3539 = vmatpush.bf16.msra.mxu0 %v3421
        %3540 = vmatpush.bf16.msra.mxu0 %v3419
        %3541 = vmatpush.bf16.msra.mxu0 %v3417
        %3542 = vmatpush.bf16.msra.mxu0 %v3415
        %3543 = vmatpush.bf16.msra.mxu0 %v3413
        %3544 = vmatpush.bf16.msra.mxu0 %v3411
        %3545 = vmatpush.bf16.msra.mxu0 %v3409
        %3546 = vmatmul.bf16.gmra.mxu0 %v3286
        %v3547 = vpop.f32.mrf.mxu0
        %v3548 = vadd.f32 0.0, %v3547
        %v3549 = vpop.f32.mrf.mxu0
        %v3550 = vadd.f32 0.0, %v3549
        %3551 = vmatmul.bf16.gmra.mxu0 %v3291
        %v3552 = vpop.f32.mrf.mxu0
        %v3553 = vadd.f32 0.0, %v3552
        %v3554 = vpop.f32.mrf.mxu0
        %v3555 = vadd.f32 0.0, %v3554
        %3556 = vmatmul.bf16.gmra.mxu0 %v3295
        %v3557 = vpop.f32.mrf.mxu0
        %v3558 = vadd.f32 0.0, %v3557
        %v3559 = vpop.f32.mrf.mxu0
        %v3560 = vadd.f32 0.0, %v3559
        %3561 = vmatmul.bf16.gmra.mxu0 %v3299
        %v3562 = vpop.f32.mrf.mxu0
        %v3563 = vadd.f32 0.0, %v3562
        %v3564 = vpop.f32.mrf.mxu0
        %v3565 = vadd.f32 0.0, %v3564
        %3566 = vmatmul.bf16.gmra.mxu0 %v3298
        %v3567 = vpop.f32.mrf.mxu0
        %v3568 = vadd.f32 0.0, %v3567
        %v3569 = vpop.f32.mrf.mxu0
        %3570 = vdwg.mxu0
        %3571 = vmatpush.bf16.msra.mxu0 %v3439
        %3572 = vmatpush.bf16.msra.mxu0 %v3437
        %3573 = vmatpush.bf16.msra.mxu0 %v3435
        %3574 = vmatpush.bf16.msra.mxu0 %v3433
        %3575 = vmatpush.bf16.msra.mxu0 %v3431
        %3576 = vmatpush.bf16.msra.mxu0 %v3429
        %3577 = vmatpush.bf16.msra.mxu0 %v3427
        %3578 = vmatpush.bf16.msra.mxu0 %v3425
        %3579 = vmatmul.bf16.gmra.mxu0 %v3289
        %v3580 = vpop.f32.mrf.mxu0
        %v3581 = vadd.f32 %v3548, %v3580
        %v3582 = vpop.f32.mrf.mxu0
        %v3583 = vadd.f32 %v3550, %v3582
        %3584 = vmatmul.bf16.gmra.mxu0 %v3293
        %v3585 = vpop.f32.mrf.mxu0
        %v3586 = vadd.f32 %v3553, %v3585
        %v3587 = vpop.f32.mrf.mxu0
        %v3588 = vadd.f32 %v3555, %v3587
        %3589 = vmatmul.bf16.gmra.mxu0 %v3297
        %v3590 = vpop.f32.mrf.mxu0
        %v3591 = vadd.f32 %v3558, %v3590
        %v3592 = vpop.f32.mrf.mxu0
        %v3593 = vadd.f32 %v3560, %v3592
        %3594 = vmatmul.bf16.gmra.mxu0 %v3301
        %v3595 = vpop.f32.mrf.mxu0
        %v3596 = vadd.f32 %v3563, %v3595
        %v3597 = vpop.f32.mrf.mxu0
        %v3598 = vadd.f32 %v3565, %v3597
        %3599 = vmatmul.bf16.gmra.mxu0 %v3300
        %v3600 = vpop.f32.mrf.mxu0
        %v3601 = vadd.f32 %v3568, %v3600
        %v3602 = vpop.f32.mrf.mxu0
        %3603 = vdwg.mxu0
        %v3622 = vrot.slane %v3515, 7
        %v3623 = vrot.slane %v3581, 7
        %v3624 = vrot.slane %v3517, 7
        %v3625 = vsel %vm815, %v3622, %v3624
        %v3626 = vrot.slane %v3583, 7
        %v3627 = vsel %vm815, %v3623, %v3626
        %v3628 = vrot.slane %v3520, 7
        %v3629 = vsel %vm815, %v3624, %v3628
        %v3630 = vrot.slane %v3586, 7
        %v3631 = vsel %vm815, %v3626, %v3630
        %v3632 = vrot.slane %v3522, 7
        %v3633 = vsel %vm815, %v3628, %v3632
        %v3634 = vrot.slane %v3588, 7
        %v3635 = vsel %vm815, %v3630, %v3634
        %v3636 = vrot.slane %v3525, 7
        %v3637 = vsel %vm815, %v3632, %v3636
        %v3638 = vrot.slane %v3591, 7
        %v3639 = vsel %vm815, %v3634, %v3638
        %v3640 = vrot.slane %v3527, 7
        %v3641 = vsel %vm815, %v3636, %v3640
        %v3642 = vrot.slane %v3593, 7
        %v3643 = vsel %vm815, %v3638, %v3642
        %v3644 = vrot.slane %v3530, 7
        %v3645 = vsel %vm815, %v3640, %v3644
        %v3646 = vrot.slane %v3596, 7
        %v3647 = vsel %vm815, %v3642, %v3646
        %v3648 = vrot.slane %v3532, 7
        %v3649 = vsel %vm815, %v3644, %v3648
        %v3650 = vrot.slane %v3598, 7
        %v3651 = vsel %vm815, %v3646, %v3650
        %v3652 = vrot.slane %v3535, 7
        %v3653 = vsel %vm815, %v3648, %v3652
        %v3654 = vrot.slane %v3601, 7
        %v3655 = vsel %vm815, %v3650, %v3654
        %v3676 = vadd.f32 %v3181, %v3622
        %v3677 = vadd.f32 %v3182, %v3623
        %v3678 = vadd.f32 %v3183, %v3625
        %v3679 = vadd.f32 %v3184, %v3627
        %v3680 = vadd.f32 %v3185, %v3629
        %v3681 = vadd.f32 %v3186, %v3631
        %v3682 = vadd.f32 %v3187, %v3633
        %v3683 = vadd.f32 %v3188, %v3635
        %v3684 = vadd.f32 %v3189, %v3637
        %v3685 = vadd.f32 %v3190, %v3639
        %v3686 = vadd.f32 %v3191, %v3641
        %v3687 = vadd.f32 %v3192, %v3643
        %v3688 = vadd.f32 %v3193, %v3645
        %v3689 = vadd.f32 %v3194, %v3647
        %v3690 = vadd.f32 %v3195, %v3649
        %v3691 = vadd.f32 %v3196, %v3651
        %v3692 = vadd.f32 %v3197, %v3653
        %v3693 = vadd.f32 %v3198, %v3655
        %v3694 = vadd.f32 %v3199, %v3652
        %v3695 = vadd.f32 %v3200, %v3654
        %3696 = vst [vmem:[#allocation3] sm:$0xfe] %v3676
        %3697 = vst [vmem:[#allocation3 + $0x8] sm:$0xfe] %v3677
        %3698 = vst [vmem:[#allocation3 + $0x10] sm:$0xff] %v3678
        %3699 = vst [vmem:[#allocation3 + $0x18] sm:$0xff] %v3679
        %3700 = vst [vmem:[#allocation3 + $0x20] sm:$0xff] %v3680
        %3701 = vst [vmem:[#allocation3 + $0x28] sm:$0xff] %v3681
        %3702 = vst [vmem:[#allocation3 + $0x30] sm:$0xff] %v3682
        %3703 = vst [vmem:[#allocation3 + $0x38] sm:$0xff] %v3683
        %3704 = vst [vmem:[#allocation3 + $0x40] sm:$0xff] %v3684
        %3705 = vst [vmem:[#allocation3 + $0x48] sm:$0xff] %v3685
        %3706 = vst [vmem:[#allocation3 + $0x50] sm:$0xff] %v3686
        %3707 = vst [vmem:[#allocation3 + $0x58] sm:$0xff] %v3687
        %3708 = vst [vmem:[#allocation3 + $0x60] sm:$0xff] %v3688
        %3709 = vst [vmem:[#allocation3 + $0x68] sm:$0xff] %v3689
        %3710 = vst [vmem:[#allocation3 + $0x70] sm:$0xff] %v3690
        %3711 = vst [vmem:[#allocation3 + $0x78] sm:$0xff] %v3691
        %3712 = vst [vmem:[#allocation3 + $0x80] sm:$0xff] %v3692
        %3713 = vst [vmem:[#allocation3 + $0x88] sm:$0xff] %v3693
        %3714 = vst [vmem:[#allocation3 + $0x90] sm:$0x1] %v3694
        %3715 = vst [vmem:[#allocation3 + $0x98] sm:$0x1] %v3695
        %v3716 = vld [vmem:[#allocation3] sm:$0xfc]
        %v3717 = vld [vmem:[#allocation3 + $0x8] sm:$0xfc]
        %v3718 = vld [vmem:[#allocation3 + $0x10] sm:$0xff]
        %v3719 = vld [vmem:[#allocation3 + $0x18] sm:$0xff]
        %v3720 = vld [vmem:[#allocation3 + $0x20] sm:$0x3]
        %v3721 = vld [vmem:[#allocation3 + $0x28] sm:$0x3]
        %vm3728 = vcmask 1045504
        %v3729 = vrot.slane %v3716, 2
        %v3730 = vrot.slane %v3718, 2
        %v3731 = vsel %vm3728, %v3729, %v3730
        %v3732 = vrot.slane %v3717, 2
        %v3733 = vrot.slane %v3719, 2
        %v3734 = vsel %vm3728, %v3732, %v3733
        %v3735 = vrot.slane %v3720, 2
        %v3736 = vsel %vm3728, %v3730, %v3735
        %v3737 = vrot.slane %v3721, 2
        %v3738 = vsel %vm3728, %v3733, %v3737
        %v3743 = vadd.f32 %v3731, %v3736
        %v3744 = vrot.slane %v3743, 4
        %v3745 = vadd.f32 %v3743, %v3744
        %v3746 = vrot.slane %v3745, 2
        %v3747 = vadd.f32 %v3745, %v3746
        %v3748 = vrot.slane %v3747, 1
        %v3749 = vadd.f32 %v3747, %v3748
        %v3750 = vadd.f32 %v3734, %v3738
        %v3751 = vrot.slane %v3750, 4
        %v3752 = vadd.f32 %v3750, %v3751
        %v3753 = vrot.slane %v3752, 2
        %v3754 = vadd.f32 %v3752, %v3753
        %v3755 = vrot.slane %v3754, 1
        %v3756 = vadd.f32 %v3754, %v3755
        %v3757 = vld [vmem:[#allocation3 + $0x20] sm:$0xf0]
        %v3758 = vld [vmem:[#allocation3 + $0x28] sm:$0xf0]
        %v3759 = vld [vmem:[#allocation3 + $0x30] sm:$0xff]
        %v3760 = vld [vmem:[#allocation3 + $0x38] sm:$0xff]
        %v3761 = vld [vmem:[#allocation3 + $0x40] sm:$0xf]
        %v3762 = vld [vmem:[#allocation3 + $0x48] sm:$0xf]
        %vm3769 = vcmask 1043456
        %v3770 = vrot.slane %v3757, 4
        %v3771 = vrot.slane %v3759, 4
        %v3772 = vsel %vm3769, %v3770, %v3771
        %v3773 = vrot.slane %v3758, 4
        %v3774 = vrot.slane %v3760, 4
        %v3775 = vsel %vm3769, %v3773, %v3774
        %v3776 = vrot.slane %v3761, 4
        %v3777 = vsel %vm3769, %v3771, %v3776
        %v3778 = vrot.slane %v3762, 4
        %v3779 = vsel %vm3769, %v3774, %v3778
        %v3784 = vadd.f32 %v3772, %v3777
        %v3785 = vrot.slane %v3784, 4
        %v3786 = vadd.f32 %v3784, %v3785
        %v3787 = vrot.slane %v3786, 2
        %v3788 = vadd.f32 %v3786, %v3787
        %v3789 = vrot.slane %v3788, 1
        %v3790 = vadd.f32 %v3788, %v3789
        %v3791 = vadd.f32 %v3775, %v3779
        %v3792 = vrot.slane %v3791, 4
        %v3793 = vadd.f32 %v3791, %v3792
        %v3794 = vrot.slane %v3793, 2
        %v3795 = vadd.f32 %v3793, %v3794
        %v3796 = vrot.slane %v3795, 1
        %v3797 = vadd.f32 %v3795, %v3796
        %v3798 = vld [vmem:[#allocation3 + $0x40] sm:$0xc0]
        %v3799 = vld [vmem:[#allocation3 + $0x48] sm:$0xc0]
        %v3800 = vld [vmem:[#allocation3 + $0x50] sm:$0xff]
        %v3801 = vld [vmem:[#allocation3 + $0x58] sm:$0xff]
        %v3802 = vld [vmem:[#allocation3 + $0x60] sm:$0x3f]
        %v3803 = vld [vmem:[#allocation3 + $0x68] sm:$0x3f]
        %vm3810 = vcmask 1041408
        %v3811 = vrot.slane %v3798, 6
        %v3812 = vrot.slane %v3800, 6
        %v3813 = vsel %vm3810, %v3811, %v3812
        %v3814 = vrot.slane %v3799, 6
        %v3815 = vrot.slane %v3801, 6
        %v3816 = vsel %vm3810, %v3814, %v3815
        %v3817 = vrot.slane %v3802, 6
        %v3818 = vsel %vm3810, %v3812, %v3817
        %v3819 = vrot.slane %v3803, 6
        %v3820 = vsel %vm3810, %v3815, %v3819
        %v3825 = vadd.f32 %v3813, %v3818
        %v3826 = vrot.slane %v3825, 4
        %v3827 = vadd.f32 %v3825, %v3826
        %v3828 = vrot.slane %v3827, 2
        %v3829 = vadd.f32 %v3827, %v3828
        %v3830 = vrot.slane %v3829, 1
        %v3831 = vadd.f32 %v3829, %v3830
        %v3832 = vadd.f32 %v3816, %v3820
        %v3833 = vrot.slane %v3832, 4
        %v3834 = vadd.f32 %v3832, %v3833
        %v3835 = vrot.slane %v3834, 2
        %v3836 = vadd.f32 %v3834, %v3835
        %v3837 = vrot.slane %v3836, 1
        %v3838 = vadd.f32 %v3836, %v3837
        %v3839 = vld [vmem:[#allocation3 + $0x70] sm:$0xff]
        %v3840 = vld [vmem:[#allocation3 + $0x78] sm:$0xff]
        %v3841 = vld [vmem:[#allocation3 + $0x80] sm:$0xff]
        %v3842 = vld [vmem:[#allocation3 + $0x88] sm:$0xff]
        %v3843 = vadd.f32 %v3839, %v3841
        %v3844 = vrot.slane %v3843, 4
        %v3845 = vadd.f32 %v3843, %v3844
        %v3846 = vrot.slane %v3845, 2
        %v3847 = vadd.f32 %v3845, %v3846
        %v3848 = vrot.slane %v3847, 1
        %v3849 = vadd.f32 %v3847, %v3848
        %v3850 = vadd.f32 %v3840, %v3842
        %v3851 = vrot.slane %v3850, 4
        %v3852 = vadd.f32 %v3850, %v3851
        %v3853 = vrot.slane %v3852, 2
        %v3854 = vadd.f32 %v3852, %v3853
        %v3855 = vrot.slane %v3854, 1
        %v3856 = vadd.f32 %v3854, %v3855
        %v3857 = vsel %vm815, %v3749, %v3790
        %v3858 = vsel %vm815, %v3756, %v3797
        %v3859 = vsel %vm3810, %v3857, %v3831
        %v3860 = vsel %vm3810, %v3858, %v3838
        %vm3861 = vcmask 1042432
        %v3862 = vsel %vm3861, %v3859, %v3849
        %v3863 = vsel %vm3861, %v3860, %v3856
        %v3864 = vld [vmem:[%s3] sm:$0xff]
        %v3865 = vld [vmem:[%s3 + $0x8] sm:$0xff]
        %v3866 = vld [vmem:[%s3 + $0x10] sm:$0xff]
        %v3867 = vld [vmem:[%s3 + $0x18] sm:$0xff]
        %v3868 = vld [vmem:[%s3 + $0x20] sm:$0xff]
        %v3869 = vld [vmem:[%s3 + $0x28] sm:$0xff]
        %v3870 = vld [vmem:[%s3 + $0x30] sm:$0xff]
        %v3871 = vld [vmem:[%s3 + $0x38] sm:$0xff]
        %v3872 = vld [vmem:[%s3 + $0x40] sm:$0xff]
        %v3873 = vld [vmem:[%s3 + $0x48] sm:$0xff]
        %v3874 = vld [vmem:[%s3 + $0x50] sm:$0xff]
        %v3875 = vld [vmem:[%s3 + $0x58] sm:$0xff]
        %v3876 = vld [vmem:[%s3 + $0x60] sm:$0xff]
        %v3877 = vld [vmem:[%s3 + $0x68] sm:$0xff]
        %v3878 = vld [vmem:[%s3 + $0x70] sm:$0xff]
        %v3879 = vld [vmem:[%s3 + $0x78] sm:$0xff]
        %v3880 = vld [vmem:[%s3 + $0x80] sm:$0xff]
        %v3881 = vld [vmem:[%s3 + $0x88] sm:$0xff]
        %v3882 = vld [vmem:[%s3 + $0x90] sm:$0xff]
        %v3883 = vld [vmem:[%s3 + $0x98] sm:$0xff]
        %v3884 = vld [vmem:[%s3 + $0xa0] sm:$0xff]
        %v3885 = vld [vmem:[%s3 + $0xa8] sm:$0xff]
        %v3886 = vld [vmem:[%s3 + $0xb0] sm:$0xff]
        %v3887 = vld [vmem:[%s3 + $0xb8] sm:$0xff]
        %v3888 = vld [vmem:[%s3 + $0xc0] sm:$0xff]
        %v3889 = vld [vmem:[%s3 + $0xc8] sm:$0xff]
        %v3890 = vld [vmem:[%s3 + $0xd0] sm:$0xff]
        %v3891 = vld [vmem:[%s3 + $0xd8] sm:$0xff]
        %v3892 = vld [vmem:[%s3 + $0xe0] sm:$0xff]
        %v3893 = vld [vmem:[%s3 + $0xe8] sm:$0xff]
        %v3894 = vld [vmem:[%s3 + $0xf0] sm:$0xff]
        %v3895 = vld [vmem:[%s3 + $0xf8] sm:$0xff]
        %3896 = vmatpush.msra.mxu0 %v3879
        %3897 = vmatpush.msra.mxu0 %v3878
        %3898 = vmatpush.msra.mxu0 %v3877
        %3899 = vmatpush.msra.mxu0 %v3876
        %3900 = vmatpush.msra.mxu0 %v3875
        %3901 = vmatpush.msra.mxu0 %v3874
        %3902 = vmatpush.msra.mxu0 %v3873
        %3903 = vmatpush.msra.mxu0 %v3872
        %3904 = vmatpush.msra.mxu0 %v3871
        %3905 = vmatpush.msra.mxu0 %v3870
        %3906 = vmatpush.msra.mxu0 %v3869
        %3907 = vmatpush.msra.mxu0 %v3868
        %3908 = vmatpush.msra.mxu0 %v3867
        %3909 = vmatpush.msra.mxu0 %v3866
        %3910 = vmatpush.msra.mxu0 %v3865
        %3911 = vmatpush.msra.mxu0 %v3864
        %3912 = vmatmul.f32.gmra.mxu0 %v3862
        %v3913 = vpop.f32.mrf.mxu0
        %v3914 = vadd.f32 0.0, %v3913
        %3915 = vdwg.mxu0
        %3916 = vmatpush.msra.mxu0 %v3895
        %3917 = vmatpush.msra.mxu0 %v3894
        %3918 = vmatpush.msra.mxu0 %v3893
        %3919 = vmatpush.msra.mxu0 %v3892
        %3920 = vmatpush.msra.mxu0 %v3891
        %3921 = vmatpush.msra.mxu0 %v3890
        %3922 = vmatpush.msra.mxu0 %v3889
        %3923 = vmatpush.msra.mxu0 %v3888
        %3924 = vmatpush.msra.mxu0 %v3887
        %3925 = vmatpush.msra.mxu0 %v3886
        %3926 = vmatpush.msra.mxu0 %v3885
        %3927 = vmatpush.msra.mxu0 %v3884
        %3928 = vmatpush.msra.mxu0 %v3883
        %3929 = vmatpush.msra.mxu0 %v3882
        %3930 = vmatpush.msra.mxu0 %v3881
        %3931 = vmatpush.msra.mxu0 %v3880
        %3932 = vmatmul.f32.gmra.mxu0 %v3863
        %v3933 = vpop.f32.mrf.mxu0
        %v3934 = vadd.f32 %v3914, %v3933
        %3935 = vdwg.mxu0
        %v3936 = vmax.f32 %v3934, 0.0
        %v3937 = vld [vmem:[%s4] sm:$0xff]
        %3939 = vst [vmem:[#allocation1] ss:$2 sm:$0xff] %v3937
        %v3940 = vld.sshfl [vmem:[#allocation1] sm:$0xff pattern:$0x75316420]
        %v3941 = vld.sshfl [vmem:[#allocation1 + $0x8] sm:$0xff pattern:$0x75316420]
        %vm3942 = vcmask 31744
        %v3944 = vsel %vm3942, %v3936, 0
        %v3946 = vsel %vm3769, %v3940, 0
        %v3948 = vsel %vm3769, %v3941, 0
        %3950 = vmatpush.msra.mxu0 0.0
        %3951 = vmatpush.msra.mxu0 0.0
        %3952 = vmatpush.msra.mxu0 0.0
        %3953 = vmatpush.msra.mxu0 0.0
        %3954 = vmatpush.msra.mxu0 0.0
        %3955 = vmatpush.msra.mxu0 0.0
        %3956 = vmatpush.msra.mxu0 0.0
        %3957 = vmatpush.msra.mxu0 0.0
        %3958 = vmatpush.msra.mxu0 0.0
        %3959 = vmatpush.msra.mxu0 0.0
        %3960 = vmatpush.msra.mxu0 0.0
        %3961 = vmatpush.msra.mxu0 0.0
        %3962 = vmatpush.msra.mxu0 0.0
        %3963 = vmatpush.msra.mxu0 0.0
        %3964 = vmatpush.msra.mxu0 0.0
        %3965 = vmatpush.msra.mxu0 %v3946
        %3966 = vmatmul.f32.gmra.mxu0 %v3944
        %v3967 = vpop.f32.mrf.mxu0
        %v3968 = vadd.f32 0.0, %v3967
        %3969 = vdwg.mxu0
        %3970 = vmatpush.msra.mxu0 0.0
        %3971 = vmatpush.msra.mxu0 0.0
        %3972 = vmatpush.msra.mxu0 0.0
        %3973 = vmatpush.msra.mxu0 0.0
        %3974 = vmatpush.msra.mxu0 0.0
        %3975 = vmatpush.msra.mxu0 0.0
        %3976 = vmatpush.msra.mxu0 0.0
        %3977 = vmatpush.msra.mxu0 0.0
        %3978 = vmatpush.msra.mxu0 0.0
        %3979 = vmatpush.msra.mxu0 0.0
        %3980 = vmatpush.msra.mxu0 0.0
        %3981 = vmatpush.msra.mxu0 0.0
        %3982 = vmatpush.msra.mxu0 0.0
        %3983 = vmatpush.msra.mxu0 0.0
        %3984 = vmatpush.msra.mxu0 0.0
        %3985 = vmatpush.msra.mxu0 %v3948
        %3986 = vmatmul.f32.gmra.mxu0 %v3944
        %v3987 = vpop.f32.mrf.mxu0
        %v3988 = vadd.f32 0.0, %v3987
        %3989 = vdwg.mxu0
        %v3990 = vxor.u32 %v3968, 2147483648
        %v3991 = vxor.u32 %v3988, 2147483648
        %v3992 = vmul.f32 %v3990, 1.442695
        %v3993 = vpow.pop %v3992
        %v3994 = vmul.f32 %v3991, 1.442695
        %v3995 = vpow.pop %v3994
        %v3996 = vadd.f32 %v3993, 1.0
        %v3997 = vadd.f32 %v3995, 1.0
        %v3998 = vrcp.pop %v3996
        %v3999 = vmul.f32 %v3996, %v3998
        %v4000 = vsub.f32 1.0, %v3999
        %v4001 = vmul.f32 %v3998, %v4000
        %v4002 = vadd.f32 %v3998, %v4001
        %vm4003 = vweird.f32 %v3996
        %vm4004 = vweird.f32 %v3998
        %vm4005 = vmor %vm4003, %vm4004
        %v4006 = vsel %vm4005, %v3998, %v4002
        %v4007 = vand.u32 2147483647, %v3996
        %vm4008 = vcmp.eq.f32.partialorder %v4007, 8.507059e+37
        %v4009 = vand.u32 %v3996, 2147483648
        %v4010 = vor.u32 1.1754944e-38, %v4009
        %v4011 = vsel %vm4008, %v4010, %v4006
        %v4012 = vmul.f32 1.0, %v4011
        %v4013 = vrcp.pop %v3997
        %v4014 = vmul.f32 %v3997, %v4013
        %v4015 = vsub.f32 1.0, %v4014
        %v4016 = vmul.f32 %v4013, %v4015
        %v4017 = vadd.f32 %v4013, %v4016
        %vm4018 = vweird.f32 %v3997
        %vm4019 = vweird.f32 %v4013
        %vm4020 = vmor %vm4018, %vm4019
        %v4021 = vsel %vm4020, %v4013, %v4017
        %v4022 = vand.u32 2147483647, %v3997
        %vm4023 = vcmp.eq.f32.partialorder %v4022, 8.507059e+37
        %v4024 = vand.u32 %v3997, 2147483648
        %v4025 = vor.u32 1.1754944e-38, %v4024
        %v4026 = vsel %vm4023, %v4025, %v4021
        %v4027 = vmul.f32 1.0, %v4026
        %v4028 = vperm.slane %v4012, 0
        %v4029 = vperm.slane %v4027, 0
        %v4030 = vmul.f32 %v3716, %v4028
        %v4031 = vmul.f32 %v3717, %v4029
        %v4032 = vmul.f32 %v3718, %v4028
        %v4033 = vmul.f32 %v3719, %v4029
        %v4034 = vmul.f32 %v3720, %v4028
        %v4035 = vmul.f32 %v3721, %v4029
        %v4036 = vld [vmem:[%s260] sm:$0xff]
        %v4037 = vld [vmem:[%s260 + $0x8] sm:$0xff]
        %v4038 = vld [vmem:[%s260 + $0x10] sm:$0xff]
        %v4039 = vld [vmem:[%s260 + $0x18] sm:$0xff]
        %v4044 = vrot.slane %v4036, 6
        %v4045 = vrot.slane %v4037, 6
        %v4046 = vrot.slane %v4038, 6
        %v4047 = vsel %vm3810, %v4044, %v4046
        %v4048 = vrot.slane %v4039, 6
        %v4049 = vsel %vm3810, %v4045, %v4048
        %v4056 = vadd.f32 %v4030, %v4044
        %v4057 = vadd.f32 %v4031, %v4045
        %v4058 = vadd.f32 %v4032, %v4047
        %v4059 = vadd.f32 %v4033, %v4049
        %v4060 = vadd.f32 %v4034, %v4046
        %v4061 = vadd.f32 %v4035, %v4048
        %v4068 = vrot.slane %v4056, 2
        %v4069 = vrot.slane %v4058, 2
        %v4070 = vsel %vm3728, %v4068, %v4069
        %v4071 = vrot.slane %v4057, 2
        %v4072 = vrot.slane %v4059, 2
        %v4073 = vsel %vm3728, %v4071, %v4072
        %v4074 = vrot.slane %v4060, 2
        %v4075 = vsel %vm3728, %v4069, %v4074
        %v4076 = vrot.slane %v4061, 2
        %v4077 = vsel %vm3728, %v4072, %v4076
        %4082 = vst [vmem:[%s254] sm:$0xff] %v4070
        %4083 = vst [vmem:[%s254 + $0x8] sm:$0xff] %v4073
        %4084 = vst [vmem:[%s254 + $0x10] sm:$0xff] %v4075
        %4085 = vst [vmem:[%s254 + $0x18] sm:$0xff] %v4077
        %v4086 = vld [vmem:[#allocation3 + $0x20] sm:$0xf0]
        %v4087 = vld [vmem:[#allocation3 + $0x28] sm:$0xf0]
        %v4088 = vld [vmem:[#allocation3 + $0x30] sm:$0xff]
        %v4089 = vld [vmem:[#allocation3 + $0x38] sm:$0xff]
        %v4090 = vld [vmem:[#allocation3 + $0x40] sm:$0xf]
        %v4091 = vld [vmem:[#allocation3 + $0x48] sm:$0xf]
        %v4092 = vperm.slane %v4012, 1
        %v4093 = vperm.slane %v4027, 1
        %v4094 = vmul.f32 %v4086, %v4092
        %v4095 = vmul.f32 %v4087, %v4093
        %v4096 = vmul.f32 %v4088, %v4092
        %v4097 = vmul.f32 %v4089, %v4093
        %v4098 = vmul.f32 %v4090, %v4092
        %v4099 = vmul.f32 %v4091, %v4093
        %v4100 = vld [vmem:[%s302] sm:$0xff]
        %v4101 = vld [vmem:[%s302 + $0x8] sm:$0xff]
        %v4102 = vld [vmem:[%s302 + $0x10] sm:$0xff]
        %v4103 = vld [vmem:[%s302 + $0x18] sm:$0xff]
        %v4108 = vrot.slane %v4100, 4
        %v4109 = vrot.slane %v4101, 4
        %v4110 = vrot.slane %v4102, 4
        %v4111 = vsel %vm3769, %v4108, %v4110
        %v4112 = vrot.slane %v4103, 4
        %v4113 = vsel %vm3769, %v4109, %v4112
        %v4120 = vadd.f32 %v4094, %v4108
        %v4121 = vadd.f32 %v4095, %v4109
        %v4122 = vadd.f32 %v4096, %v4111
        %v4123 = vadd.f32 %v4097, %v4113
        %v4124 = vadd.f32 %v4098, %v4110
        %v4125 = vadd.f32 %v4099, %v4112
        %v4132 = vrot.slane %v4120, 4
        %v4133 = vrot.slane %v4122, 4
        %v4134 = vsel %vm3769, %v4132, %v4133
        %v4135 = vrot.slane %v4121, 4
        %v4136 = vrot.slane %v4123, 4
        %v4137 = vsel %vm3769, %v4135, %v4136
        %v4138 = vrot.slane %v4124, 4
        %v4139 = vsel %vm3769, %v4133, %v4138
        %v4140 = vrot.slane %v4125, 4
        %v4141 = vsel %vm3769, %v4136, %v4140
        %s4146 = scalar_lea.vmem %s254, 32 [#allocation9]
        %4147 = vst [vmem:[%s4146] sm:$0xff] %v4134
        %4148 = vst [vmem:[%s4146 + $0x8] sm:$0xff] %v4137
        %4149 = vst [vmem:[%s4146 + $0x10] sm:$0xff] %v4139
        %4150 = vst [vmem:[%s4146 + $0x18] sm:$0xff] %v4141
        %v4151 = vld [vmem:[#allocation3 + $0x40] sm:$0xc0]
        %v4152 = vld [vmem:[#allocation3 + $0x48] sm:$0xc0]
        %v4153 = vld [vmem:[#allocation3 + $0x50] sm:$0xff]
        %v4154 = vld [vmem:[#allocation3 + $0x58] sm:$0xff]
        %v4155 = vld [vmem:[#allocation3 + $0x60] sm:$0x3f]
        %v4156 = vld [vmem:[#allocation3 + $0x68] sm:$0x3f]
        %v4157 = vperm.slane %v4012, 2
        %v4158 = vperm.slane %v4027, 2
        %v4159 = vmul.f32 %v4151, %v4157
        %v4160 = vmul.f32 %v4152, %v4158
        %v4161 = vmul.f32 %v4153, %v4157
        %v4162 = vmul.f32 %v4154, %v4158
        %v4163 = vmul.f32 %v4155, %v4157
        %v4164 = vmul.f32 %v4156, %v4158
        %v4165 = vld [vmem:[%s325] sm:$0xff]
        %v4166 = vld [vmem:[%s325 + $0x8] sm:$0xff]
        %v4167 = vld [vmem:[%s325 + $0x10] sm:$0xff]
        %v4168 = vld [vmem:[%s325 + $0x18] sm:$0xff]
        %v4173 = vrot.slane %v4165, 2
        %v4174 = vrot.slane %v4166, 2
        %v4175 = vrot.slane %v4167, 2
        %v4176 = vsel %vm3728, %v4173, %v4175
        %v4177 = vrot.slane %v4168, 2
        %v4178 = vsel %vm3728, %v4174, %v4177
        %v4185 = vadd.f32 %v4159, %v4173
        %v4186 = vadd.f32 %v4160, %v4174
        %v4187 = vadd.f32 %v4161, %v4176
        %v4188 = vadd.f32 %v4162, %v4178
        %v4189 = vadd.f32 %v4163, %v4175
        %v4190 = vadd.f32 %v4164, %v4177
        %v4197 = vrot.slane %v4185, 6
        %v4198 = vrot.slane %v4187, 6
        %v4199 = vsel %vm3810, %v4197, %v4198
        %v4200 = vrot.slane %v4186, 6
        %v4201 = vrot.slane %v4188, 6
        %v4202 = vsel %vm3810, %v4200, %v4201
        %v4203 = vrot.slane %v4189, 6
        %v4204 = vsel %vm3810, %v4198, %v4203
        %v4205 = vrot.slane %v4190, 6
        %v4206 = vsel %vm3810, %v4201, %v4205
        %s4211 = scalar_lea.vmem %s254, 64 [#allocation9]
        %4212 = vst [vmem:[%s4211] sm:$0xff] %v4199
        %4213 = vst [vmem:[%s4211 + $0x8] sm:$0xff] %v4202
        %4214 = vst [vmem:[%s4211 + $0x10] sm:$0xff] %v4204
        %4215 = vst [vmem:[%s4211 + $0x18] sm:$0xff] %v4206
        %v4216 = vld [vmem:[#allocation3 + $0x70] sm:$0xff]
        %v4217 = vld [vmem:[#allocation3 + $0x78] sm:$0xff]
        %v4218 = vld [vmem:[#allocation3 + $0x80] sm:$0xff]
        %v4219 = vld [vmem:[#allocation3 + $0x88] sm:$0xff]
        %v4220 = vperm.slane %v4012, 3
        %v4221 = vperm.slane %v4027, 3
        %v4222 = vmul.f32 %v4216, %v4220
        %v4223 = vmul.f32 %v4217, %v4221
        %v4224 = vmul.f32 %v4218, %v4220
        %v4225 = vmul.f32 %v4219, %v4221
        %v4226 = vld [vmem:[%s348] sm:$0xff]
        %v4227 = vld [vmem:[%s348 + $0x8] sm:$0xff]
        %v4228 = vld [vmem:[%s348 + $0x10] sm:$0xff]
        %v4229 = vld [vmem:[%s348 + $0x18] sm:$0xff]
        %v4230 = vadd.f32 %v4222, %v4226
        %v4231 = vadd.f32 %v4223, %v4227
        %v4232 = vadd.f32 %v4224, %v4228
        %v4233 = vadd.f32 %v4225, %v4229
        %s4234 = scalar_lea.vmem %s254, 96 [#allocation9]
        %4235 = vst [vmem:[%s4234] sm:$0xff] %v4230
        %4236 = vst [vmem:[%s4234 + $0x8] sm:$0xff] %v4231
        %4237 = vst [vmem:[%s4234 + $0x10] sm:$0xff] %v4232
        %4238 = vst [vmem:[%s4234 + $0x18] sm:$0xff] %v4233
        %s4239 = sand.u32 %s139, 1
        %s4240 = scalar_lea.sflag [#allocation6], %s4239
        %s4241 = sand.u32 %s139, 1
        %s4242 = smul.addr %s4241, 128
        %s4243 = scalar_lea.vmem [#allocation9], %s4242
        // Predicated region
        $region49: #{tpu_custom_call.1} parent=39 // pred_check
          %p4244 = pneg %p149
        $region50: #{tpu_custom_call.1} parent=39 // pred_check_branch
          %4246 = sbr.rel (%p4244) target = $region52
        $region51: #{tpu_custom_call.1} parent=39 // pred_region
          %s4247 = smul.u32 4, %s21
          %4249 = vsyncadd %s4240, 0
          %s4250 = smul.addr %s4247, 4
          %s4251 = smul.addr %s4250, 8
          %s4252 = scalar_lea.hbm %s5, %s4251
          %s4253 = sshll.u32 %s4243, 4
          %s4254 = int_to_ptr.vmem [resolvable:$true] %s4253
          %s4255 = sshll.u32 %s4252, 4
          %s4256 = int_to_ptr.hbm [resolvable:$true] %s4255
          %4261 = dma.vmem_to_hbm [thread:$0]  %s4254, 2048, %s4256, %s4240, 256, 256, 16
        $region52: #{tpu_custom_call.1} parent=39 // pred_fallthru
          _
      $region40: #{tpu_custom_call.1} parent=5 // pred_fallthru
        _
      %p4262 = scmp.le.s32.totalorder 2, %s16
      // Predicated region
      $region53: #{tpu_custom_call.1} parent=5 // pred_check
        %p4263 = pneg %p4262
      $region54: #{tpu_custom_call.1} parent=5 // pred_check_branch
        %4265 = sbr.rel (%p4263) target = $region56
      $region55: #{tpu_custom_call.1} parent=5 // pred_region
        %s4266 = ssub.s32 %s16, 2
        // Predicated region
        $region57: #{tpu_custom_call.1} parent=55 // pred_check
          %p4267 = pneg %p155
        $region58: #{tpu_custom_call.1} parent=55 // pred_check_branch
          %4269 = sbr.rel (%p4267) target = $region60
        $region59: #{tpu_custom_call.1} parent=55 // pred_region
          %s4270 = sand.u32 %s140, 1
          %s4271 = scalar_lea.sflag [#allocation6], %s4270
          %s4272 = sand.u32 %s140, 1
          %s4273 = smul.addr %s4272, 128
          %s4274 = scalar_lea.vmem [#allocation9], %s4273
          %4276 = dma.done %s4271, 2048
        $region60: #{tpu_custom_call.1} parent=55 // pred_fallthru
          _
      $region56: #{tpu_custom_call.1} parent=5 // pred_fallthru
        _
    $region6: #{tpu_custom_call.1} parent=1 // loop_footer
      %s20 = sadd.s32 1, %s16
    $region7: #{tpu_custom_call.1} parent=1 // loop_footer_branch
      %15 = sbr.rel target = $region3
    $region8: #{tpu_custom_call.1} parent=1 // loop_exit
      _
    %4277 = vsyncpa [#allocation5], 1
    %s4278 = scalar_lea.sflag [#allocation5], 1
    %4279 = vsyncpa %s4278, 1
    %4280 = vsyncpa [#allocation8], 1
    %4281 = vsyncpa [#allocation6], 1
    %s4282 = scalar_lea.sflag [#allocation6], 1
    %4283 = vsyncpa %s4282, 1

</llo_original>
